<compile_context>
chip_gen: v7x
topology: tpu7x:2x2x1
jax: 0.10.0
libtpu: 0.0.40
codegen_flags: <defaults>
</compile_context>

<pallas_src>
import jax
import jax.numpy as jnp
from jax import lax
from jax.experimental import pallas as pl
from jax.experimental.pallas import tpu as pltpu

LANE = 128


def _round_up(a, b):
    return -(-a // b) * b


# ----------------------------------------------------------------------------
# In-kernel helpers
# ----------------------------------------------------------------------------
def _zero_border(pad_ref, Bt, Hn, Wn, C):
    """Zero only the 1-pixel halo of a (Bt, Hn+2, Wn+2, C) VMEM scratch."""
    dt = pad_ref.dtype
    row = jnp.zeros((Bt, 1, Wn + 2, C), dt)
    col = jnp.zeros((Bt, Hn + 2, 1, C), dt)
    pad_ref[:, 0:1, :, :] = row
    pad_ref[:, Hn + 1:Hn + 2, :, :] = row
    pad_ref[:, :, 0:1, :] = col
    pad_ref[:, :, Wn + 1:Wn + 2, :] = col


def _conv3x3(pad_ref, w_ref, bias, *, Bt, Hn, Wn, C, stride, patch_ref):
    """3x3 conv read from a zero-padded VMEM scratch; returns (Bt*Hn*Wn, Nout) f32.

    patch_ref is None  -> 9 accumulating MXU matmuls on shifted views (C >= 128),
                          no im2col materialization.
    patch_ref is a Ref -> im2col matrix built by 9 in-place lane-offset stores
                          (no jnp.concatenate), then a single big-K matmul.
    Folded-BN bias is added before returning.
    """
    M = Bt * Hn * Wn
    Np = w_ref.shape[-1]
    mxu_dt = w_ref.dtype

    def tap(kh, kw):
        if stride == 1:
            v = pad_ref[:, kh:kh + Hn, kw:kw + Wn, :]
        else:
            v = pad_ref[:, pl.ds(kh, Hn, stride=stride),
                        pl.ds(kw, Wn, stride=stride), :]
        return v.reshape(M, C)

    if patch_ref is None:
        acc = jnp.zeros((M, Np), jnp.float32)
        for k in range(9):
            kh, kw = divmod(k, 3)
            acc = acc + jnp.dot(tap(kh, kw).astype(mxu_dt),
                                w_ref[k * C:(k + 1) * C, :],
                                preferred_element_type=jnp.float32)
        return acc + bias

    for k in range(9):
        kh, kw = divmod(k, 3)
        patch_ref[:, k * C:(k + 1) * C] = tap(kh, kw).astype(patch_ref.dtype)
    return jnp.dot(patch_ref[...], w_ref[...],
                   preferred_element_type=jnp.float32) + bias


def _make_residual_block_kernel(*, stride, H, W, Ho, Wo, use_patch1, use_patch2):

    def kernel(x_ref, w1_ref, b1_ref, w2_ref, b2_ref, wd_ref, bd_ref,
               o_ref, xpad_ref, ypad_ref, *patch_refs):
        patch_refs = list(patch_refs)
        p1_ref = patch_refs.pop(0) if use_patch1 else None
        p2_ref = patch_refs.pop(0) if use_patch2 else None

        Bt = x_ref.shape[0]
        Cin = x_ref.shape[3]
        Cout = ypad_ref.shape[3]
        Cout_pad = o_ref.shape[3]
        M = Bt * Ho * Wo

        # ---- stage x into the zero-halo scratch (zero only the border)
        _zero_border(xpad_ref, Bt, H, W, Cin)
        xpad_ref[:, 1:H + 1, 1:W + 1, :] = x_ref[...].astype(xpad_ref.dtype)

        # ---- conv1: 3x3 / stride, folded BN1 + ReLU
        y = _conv3x3(xpad_ref, w1_ref, b1_ref[...], Bt=Bt, Hn=Ho, Wn=Wo,
                     C=Cin, stride=stride, patch_ref=p1_ref)
        y = jnp.maximum(y, 0.0)

        # ---- conv1 activation never leaves VMEM: stage into second padded scratch
        _zero_border(ypad_ref, Bt, Ho, Wo, Cout)
        ypad_ref[:, 1:Ho + 1, 1:Wo + 1, :] = (
            y.reshape(Bt, Ho, Wo, Cout).astype(ypad_ref.dtype))

        # ---- conv2: 3x3 / 1, folded BN2
        y2 = _conv3x3(ypad_ref, w2_ref, b2_ref[...], Bt=Bt, Hn=Ho, Wn=Wo,
                      C=Cout, stride=1, patch_ref=p2_ref)

        # ---- shortcut: folded conv1x1(stride)+BN, or identity projection matrix
        if stride == 1:
            xs = xpad_ref[:, 1:H + 1, 1:W + 1, :]
        else:
            xs = xpad_ref[:, pl.ds(1, Ho, stride=stride),
                          pl.ds(1, Wo, stride=stride), :]
        res = jnp.dot(xs.reshape(M, Cin).astype(wd_ref.dtype), wd_ref[...],
                      preferred_element_type=jnp.float32) + bd_ref[...]

        out = jnp.maximum(y2 + res, 0.0)                       # add + final ReLU
        o_ref[...] = out.reshape(Bt, Ho, Wo, Cout_pad).astype(o_ref.dtype)

    return kernel


# ----------------------------------------------------------------------------
# Wrapper: fold BN into the convs, pad to lane-dense output, launch the kernel
# ----------------------------------------------------------------------------
def _fold_bn_into_conv(w_oihw, bn, eps):
    """BN(conv(x, w)) == conv(x, w_scaled) + bias  (inference-mode BN)."""
    scale = bn["gamma"] / jnp.sqrt(bn["var"] + eps)                  # (Cout,)
    bias = bn["beta"] - bn["mean"] * scale                           # (Cout,)
    return w_oihw * scale[:, None, None, None], bias


def _pad_out_channels(mat, n_out):
    pad = n_out - mat.shape[-1]
    if pad == 0:
        return mat
    return jnp.pad(mat, [(0, 0)] * (mat.ndim - 1) + [(0, pad)])


def residual_block_forward(x_nchw, params, *, stride, downsample, eps=1e-5,
                           mxu_dtype=jnp.bfloat16):
    """Fused ResidualBlock forward (eval-mode BatchNorm), NCHW in / NCHW out."""
    N, Cin, H, W = x_nchw.shape
    Cout = params["w1"].shape[0]
    Ho = (H - 1) // stride + 1
    Wo = (W - 1) // stride + 1
    if not downsample:
        assert stride == 1 and Cin == Cout, (
            "identity shortcut needs stride=1 and in_channels == out_channels")

    # Lane-dense HBM-facing output: pad final output channels to a 128 multiple.
    Cout_pad = _round_up(Cout, LANE)

    # Fold BN; reshape to im2col-friendly (rows = (kh,kw,ci), cols = co) layouts.
    w1f, b1 = _fold_bn_into_conv(params["w1"], params["bn1"], eps)
    w2f, b2 = _fold_bn_into_conv(params["w2"], params["bn2"], eps)
    w1_mat = jnp.transpose(w1f, (2, 3, 1, 0)).reshape(9 * Cin, Cout)
    w2_mat = _pad_out_channels(
        jnp.transpose(w2f, (2, 3, 1, 0)).reshape(9 * Cout, Cout), Cout_pad)
    b1p = b1.reshape(1, Cout).astype(jnp.float32)
    b2p = _pad_out_channels(b2.reshape(1, Cout), Cout_pad).astype(jnp.float32)

    if downsample:
        wdf, bd = _fold_bn_into_conv(params["wd"], params["bnd"], eps)
        wd_mat = jnp.transpose(wdf[:, :, 0, 0], (1, 0))              # (Cin, Cout)
    else:
        wd_mat = jnp.eye(Cin, dtype=jnp.float32)     # identity shortcut as projection
        bd = jnp.zeros((Cout,), jnp.float32)
    wd_mat = _pad_out_channels(wd_mat, Cout_pad)
    bdp = _pad_out_channels(bd.reshape(1, Cout), Cout_pad).astype(jnp.float32)

    # bf16 MXU operands (f32 accumulation in-kernel).
    w1_mat = w1_mat.astype(mxu_dtype)
    w2_mat = w2_mat.astype(mxu_dtype)
    wd_mat = wd_mat.astype(mxu_dtype)

    x_nhwc = jnp.transpose(x_nchw, (0, 2, 3, 1))      # channels on the lane axis

    # Per-generation VMEM budget.
    try:
        vmem_cap = int(getattr(pltpu.get_tpu_info(), "vmem_capacity_bytes",
                               64 * 2**20))
    except Exception:
        vmem_cap = 64 * 2**20
    vmem_limit = max(32 * 2**20, min(vmem_cap * 3 // 4, 100 * 2**20))

    # Conv strategy per conv + batch-tile (Bt images per grid step) sizing.
    use_patch1 = Cin < LANE
    use_patch2 = Cout < LANE
    mxu_bytes = jnp.dtype(mxu_dtype).itemsize
    cin_l, cout_l = _round_up(Cin, LANE), _round_up(Cout, LANE)
    per_img = 4 * ((H + 2) * (W + 2) * cin_l + (Ho + 2) * (Wo + 2) * cout_l)
    per_img += 2 * 4 * (H * W * cin_l + Ho * Wo * Cout_pad)   # 2x-buffered blocks
    if use_patch1:
        per_img += mxu_bytes * Ho * Wo * _round_up(9 * Cin, LANE)
    if use_patch2:
        per_img += mxu_bytes * Ho * Wo * _round_up(9 * Cout, LANE)
    Bt = 1
    for cand in range(1, min(N, 8) + 1):
        if N % cand == 0 and cand * per_img <= vmem_limit // 2:
            Bt = cand
    M = Bt * Ho * Wo

    in_specs = [
        pl.BlockSpec((Bt, H, W, Cin), lambda n: (n, 0, 0, 0)),
        pl.BlockSpec((9 * Cin, Cout), lambda n: (0, 0)),
        pl.BlockSpec((1, Cout), lambda n: (0, 0)),
        pl.BlockSpec((9 * Cout, Cout_pad), lambda n: (0, 0)),
        pl.BlockSpec((1, Cout_pad), lambda n: (0, 0)),
        pl.BlockSpec((Cin, Cout_pad), lambda n: (0, 0)),
        pl.BlockSpec((1, Cout_pad), lambda n: (0, 0)),
    ]
    scratch_shapes = [
        pltpu.VMEM((Bt, H + 2, W + 2, Cin), jnp.float32),    # zero-halo x
        pltpu.VMEM((Bt, Ho + 2, Wo + 2, Cout), jnp.float32), # zero-halo conv1 act
    ]
    if use_patch1:
        scratch_shapes.append(pltpu.VMEM((M, 9 * Cin), mxu_dtype))
    if use_patch2:
        scratch_shapes.append(pltpu.VMEM((M, 9 * Cout), mxu_dtype))

    flops = N * Ho * Wo * (2 * 9 * Cin * Cout + 2 * 9 * Cout * Cout_pad
                           + 2 * Cin * Cout_pad)
    bytes_accessed = (4 * int(x_nhwc.size) + 4 * N * Ho * Wo * Cout_pad
                      + mxu_bytes * (int(w1_mat.size) + int(w2_mat.size)
                                     + int(wd_mat.size))
                      + 4 * (int(b1p.size) + int(b2p.size) + int(bdp.size)))

    kernel = _make_residual_block_kernel(
        stride=stride, H=H, W=W, Ho=Ho, Wo=Wo,
        use_patch1=use_patch1, use_patch2=use_patch2)

    out_nhwc = pl.pallas_call(
        kernel,
        out_shape=jax.ShapeDtypeStruct((N, Ho, Wo, Cout_pad), x_nchw.dtype),
        grid_spec=pltpu.PrefetchScalarGridSpec(
            num_scalar_prefetch=0,
            grid=(N // Bt,),
            in_specs=in_specs,
            out_specs=pl.BlockSpec((Bt, Ho, Wo, Cout_pad),
                                   lambda n: (n, 0, 0, 0)),
            scratch_shapes=scratch_shapes,
        ),
        compiler_params=pltpu.CompilerParams(
            dimension_semantics=("parallel",),
            vmem_limit_bytes=int(vmem_limit),
        ),
        cost_estimate=pl.CostEstimate(
            flops=int(flops), transcendentals=0,
            bytes_accessed=int(bytes_accessed)),
    )(x_nhwc, w1_mat, b1p, w2_mat, b2p, wd_mat, bdp)

    out_nhwc = out_nhwc[..., :Cout]                   # drop lane padding
    return jnp.transpose(out_nhwc, (0, 3, 1, 2))      # back to NCHW


# ----------------------------------------------------------------------------
# Pure-JAX reference (mirrors the PyTorch module in eval mode, op for op)
# ----------------------------------------------------------------------------
def _bn_ref(z_nchw, bn, eps):
    inv = 1.0 / jnp.sqrt(bn["var"] + eps)
    return ((z_nchw - bn["mean"][None, :, None, None]) * inv[None, :, None, None]
            * bn["gamma"][None, :, None, None] + bn["beta"][None, :, None, None])


def _conv_ref(x, w, stride, padding):
    dn = lax.conv_dimension_numbers(x.shape, w.shape, ("NCHW", "OIHW", "NCHW"))
    return lax.conv_general_dilated(x, w, (stride, stride), padding,
                                    dimension_numbers=dn)


def residual_block_reference(x, params, *, stride, downsample, eps=1e-5):
    y = _conv_ref(x, params["w1"], stride, ((1, 1), (1, 1)))
    y = jax.nn.relu(_bn_ref(y, params["bn1"], eps))
    y = _conv_ref(y, params["w2"], 1, ((1, 1), (1, 1)))
    y = _bn_ref(y, params["bn2"], eps)
    if downsample:
        r = _conv_ref(x, params["wd"], stride, ((0, 0), (0, 0)))
        r = _bn_ref(r, params["bnd"], eps)
    else:
        r = x
    return jax.nn.relu(y + r)


# ----------------------------------------------------------------------------
# Demo / self-test
# ----------------------------------------------------------------------------
def _make_params(key, cin, cout, downsample):
    def bn_params(k):
        k1, k2, k3, k4 = jax.random.split(k, 4)
        return dict(
            gamma=1.0 + 0.1 * jax.random.normal(k1, (cout,), jnp.float32),
            beta=0.1 * jax.random.normal(k2, (cout,), jnp.float32),
            mean=0.1 * jax.random.normal(k3, (cout,), jnp.float32),
            var=jax.random.uniform(k4, (cout,), jnp.float32,
                                   minval=0.5, maxval=1.5),
        )
    ks = jax.random.split(key, 6)
    params = dict(
        w1=0.1 * jax.random.normal(ks[0], (cout, cin, 3, 3), jnp.float32),
        bn1=bn_params(ks[1]),
        w2=0.1 * jax.random.normal(ks[2], (cout, cout, 3, 3), jnp.float32),
        bn2=bn_params(ks[3]),
    )
    if downsample:
        params["wd"] = 0.1 * jax.random.normal(ks[4], (cout, cin, 1, 1), jnp.float32)
        params["bnd"] = bn_params(ks[5])
    return params


if __name__ == "__main__":
    root = jax.random.PRNGKey(0)
    kx1, kp1, kx2, kp2 = jax.random.split(root, 4)

    # bf16 MXU operands -> compare against the f32 reference with loose tolerance.
    ATOL = RTOL = 5e-2

    # Case 1: identity shortcut (stride=1, in_channels == out_channels).
    N, C, H, W = 2, 8, 16, 16
    x1 = jax.random.normal(kx1, (N, C, H, W), jnp.float32)
    p1 = _make_params(kp1, C, C, downsample=False)
    out1 = jax.block_until_ready(
        residual_block_forward(x1, p1, stride=1, downsample=False))
    ref1 = residual_block_reference(x1, p1, stride=1, downsample=False)
    assert out1.shape == (N, C, H, W)
    assert jnp.allclose(out1, ref1, atol=ATOL, rtol=RTOL), (
        float(jnp.max(jnp.abs(out1 - ref1))))

    # Case 2: 1x1-projection ("downsample") shortcut, channel expansion 4 -> 8.
    N, Cin, Cout, H, W = 2, 4, 8, 16, 16
    x2 = jax.random.normal(kx2, (N, Cin, H, W), jnp.float32)
    p2 = _make_params(kp2, Cin, Cout, downsample=True)
    out2 = jax.block_until_ready(
        residual_block_forward(x2, p2, stride=1, downsample=True))
    ref2 = residual_block_reference(x2, p2, stride=1, downsample=True)
    assert out2.shape == (N, Cout, H, W)
    assert jnp.allclose(out2, ref2, atol=ATOL, rtol=RTOL), (
        float(jnp.max(jnp.abs(out2 - ref2))))

    print("KERNEL_OK")
</pallas_src>

<mosaic_0001>
module attributes {stable_mosaic.version = 11 : i64} {
  func.func @kernel(%arg0: i32, %arg1: memref<2x16x16x8xf32, #tpu.memory_space<vmem>>, %arg2: memref<72x8xbf16, #tpu.memory_space<vmem>>, %arg3: memref<1x8xf32, #tpu.memory_space<vmem>>, %arg4: memref<72x128xbf16, #tpu.memory_space<vmem>>, %arg5: memref<1x128xf32, #tpu.memory_space<vmem>>, %arg6: memref<8x128xbf16, #tpu.memory_space<vmem>>, %arg7: memref<1x128xf32, #tpu.memory_space<vmem>>, %arg8: memref<2x16x16x128xf32, #tpu.memory_space<vmem>>, %arg9: memref<2x18x18x8xf32, #tpu.memory_space<vmem>>, %arg10: memref<2x18x18x8xf32, #tpu.memory_space<vmem>>, %arg11: memref<512x72xbf16, #tpu.memory_space<vmem>>, %arg12: memref<512x72xbf16, #tpu.memory_space<vmem>>) attributes {dimension_semantics = [#tpu.dimension_semantics<parallel>], iteration_bounds = array<i64: 1>, scalar_prefetch = 0 : i64, scratch_operands = 4 : i64, tpu.core_type = #tpu.core_type<tc>, window_params = [{transform_indices = @transform_0, window_bounds = array<i64: 2, 16, 16, 8>}, {pipeline_mode = #tpu.pipeline_mode<synchronous>, transform_indices = @transform_1, window_bounds = array<i64: 72, 8>}, {pipeline_mode = #tpu.pipeline_mode<synchronous>, transform_indices = @transform_2, window_bounds = array<i64: 1, 8>}, {pipeline_mode = #tpu.pipeline_mode<synchronous>, transform_indices = @transform_3, window_bounds = array<i64: 72, 128>}, {pipeline_mode = #tpu.pipeline_mode<synchronous>, transform_indices = @transform_4, window_bounds = array<i64: 1, 128>}, {pipeline_mode = #tpu.pipeline_mode<synchronous>, transform_indices = @transform_5, window_bounds = array<i64: 8, 128>}, {pipeline_mode = #tpu.pipeline_mode<synchronous>, transform_indices = @transform_6, window_bounds = array<i64: 1, 128>}, {transform_indices = @transform_7, window_bounds = array<i64: 2, 16, 16, 128>}]} {
    %cst = arith.constant 0.000000e+00 : f32
    %0 = vector.broadcast %cst : f32 to vector<2x1x18x8xf32>
    %cst_0 = arith.constant 0.000000e+00 : f32
    %1 = vector.broadcast %cst_0 : f32 to vector<2x18x1x8xf32>
    %c0 = arith.constant 0 : index
    %c0_1 = arith.constant 0 : index
    %c0_2 = arith.constant 0 : index
    %c0_3 = arith.constant 0 : index
    %2 = vector.load %arg9[%c0, %c0_1, %c0_2, %c0_3] : memref<2x18x18x8xf32, #tpu.memory_space<vmem>>, vector<2x1x18x8xf32>
    tpu.vector_store %arg9[%c0, %c0_1, %c0_2, %c0_3], %0 {strides = array<i32>} : memref<2x18x18x8xf32, #tpu.memory_space<vmem>>, vector<2x1x18x8xf32>,
    %c0_4 = arith.constant 0 : index
    %c17 = arith.constant 17 : index
    %c0_5 = arith.constant 0 : index
    %c0_6 = arith.constant 0 : index
    %3 = vector.load %arg9[%c0_4, %c17, %c0_5, %c0_6] : memref<2x18x18x8xf32, #tpu.memory_space<vmem>>, vector<2x1x18x8xf32>
    tpu.vector_store %arg9[%c0_4, %c17, %c0_5, %c0_6], %0 {strides = array<i32>} : memref<2x18x18x8xf32, #tpu.memory_space<vmem>>, vector<2x1x18x8xf32>,
    %c0_7 = arith.constant 0 : index
    %c0_8 = arith.constant 0 : index
    %c0_9 = arith.constant 0 : index
    %c0_10 = arith.constant 0 : index
    %4 = vector.load %arg9[%c0_7, %c0_8, %c0_9, %c0_10] : memref<2x18x18x8xf32, #tpu.memory_space<vmem>>, vector<2x18x1x8xf32>
    tpu.vector_store %arg9[%c0_7, %c0_8, %c0_9, %c0_10], %1 {strides = array<i32>} : memref<2x18x18x8xf32, #tpu.memory_space<vmem>>, vector<2x18x1x8xf32>,
    %c0_11 = arith.constant 0 : index
    %c0_12 = arith.constant 0 : index
    %c17_13 = arith.constant 17 : index
    %c0_14 = arith.constant 0 : index
    %5 = vector.load %arg9[%c0_11, %c0_12, %c17_13, %c0_14] : memref<2x18x18x8xf32, #tpu.memory_space<vmem>>, vector<2x18x1x8xf32>
    tpu.vector_store %arg9[%c0_11, %c0_12, %c17_13, %c0_14], %1 {strides = array<i32>} : memref<2x18x18x8xf32, #tpu.memory_space<vmem>>, vector<2x18x1x8xf32>,
    %c0_15 = arith.constant 0 : index
    %c0_16 = arith.constant 0 : index
    %c0_17 = arith.constant 0 : index
    %c0_18 = arith.constant 0 : index
    %6 = vector.load %arg1[%c0_15, %c0_16, %c0_17, %c0_18] : memref<2x16x16x8xf32, #tpu.memory_space<vmem>>, vector<2x16x16x8xf32>
    %c0_19 = arith.constant 0 : index
    %c1 = arith.constant 1 : index
    %c1_20 = arith.constant 1 : index
    %c0_21 = arith.constant 0 : index
    %7 = vector.load %arg9[%c0_19, %c1, %c1_20, %c0_21] : memref<2x18x18x8xf32, #tpu.memory_space<vmem>>, vector<2x16x16x8xf32>
    tpu.vector_store %arg9[%c0_19, %c1, %c1_20, %c0_21], %6 {strides = array<i32>} : memref<2x18x18x8xf32, #tpu.memory_space<vmem>>, vector<2x16x16x8xf32>,
    %c0_22 = arith.constant 0 : index
    %c0_23 = arith.constant 0 : index
    %8 = vector.load %arg3[%c0_22, %c0_23] : memref<1x8xf32, #tpu.memory_space<vmem>>, vector<1x8xf32>
    %c0_24 = arith.constant 0 : index
    %c0_25 = arith.constant 0 : index
    %c0_26 = arith.constant 0 : index
    %c0_27 = arith.constant 0 : index
    %9 = vector.load %arg9[%c0_24, %c0_25, %c0_26, %c0_27] : memref<2x18x18x8xf32, #tpu.memory_space<vmem>>, vector<2x16x16x8xf32>
    %10 = vector.shape_cast %9 : vector<2x16x16x8xf32> to vector<512x8xf32>
    %11 = arith.truncf %10 : vector<512x8xf32> to vector<512x8xbf16>
    %c0_28 = arith.constant 0 : index
    %c0_29 = arith.constant 0 : index
    %12 = vector.load %arg11[%c0_28, %c0_29] : memref<512x72xbf16, #tpu.memory_space<vmem>>, vector<512x8xbf16>
    tpu.vector_store %arg11[%c0_28, %c0_29], %11 {strides = array<i32>} : memref<512x72xbf16, #tpu.memory_space<vmem>>, vector<512x8xbf16>,
    %c0_30 = arith.constant 0 : index
    %c0_31 = arith.constant 0 : index
    %c1_32 = arith.constant 1 : index
    %c0_33 = arith.constant 0 : index
    %13 = vector.load %arg9[%c0_30, %c0_31, %c1_32, %c0_33] : memref<2x18x18x8xf32, #tpu.memory_space<vmem>>, vector<2x16x16x8xf32>
    %14 = vector.shape_cast %13 : vector<2x16x16x8xf32> to vector<512x8xf32>
    %15 = arith.truncf %14 : vector<512x8xf32> to vector<512x8xbf16>
    %c0_34 = arith.constant 0 : index
    %c8 = arith.constant 8 : index
    %16 = vector.load %arg11[%c0_34, %c8] : memref<512x72xbf16, #tpu.memory_space<vmem>>, vector<512x8xbf16>
    tpu.vector_store %arg11[%c0_34, %c8], %15 {strides = array<i32>} : memref<512x72xbf16, #tpu.memory_space<vmem>>, vector<512x8xbf16>,
    %c0_35 = arith.constant 0 : index
    %c0_36 = arith.constant 0 : index
    %c2 = arith.constant 2 : index
    %c0_37 = arith.constant 0 : index
    %17 = vector.load %arg9[%c0_35, %c0_36, %c2, %c0_37] : memref<2x18x18x8xf32, #tpu.memory_space<vmem>>, vector<2x16x16x8xf32>
    %18 = vector.shape_cast %17 : vector<2x16x16x8xf32> to vector<512x8xf32>
    %19 = arith.truncf %18 : vector<512x8xf32> to vector<512x8xbf16>
    %c0_38 = arith.constant 0 : index
    %c16 = arith.constant 16 : index
    %20 = vector.load %arg11[%c0_38, %c16] : memref<512x72xbf16, #tpu.memory_space<vmem>>, vector<512x8xbf16>
    tpu.vector_store %arg11[%c0_38, %c16], %19 {strides = array<i32>} : memref<512x72xbf16, #tpu.memory_space<vmem>>, vector<512x8xbf16>,
    %c0_39 = arith.constant 0 : index
    %c1_40 = arith.constant 1 : index
    %c0_41 = arith.constant 0 : index
    %c0_42 = arith.constant 0 : index
    %21 = vector.load %arg9[%c0_39, %c1_40, %c0_41, %c0_42] : memref<2x18x18x8xf32, #tpu.memory_space<vmem>>, vector<2x16x16x8xf32>
    %22 = vector.shape_cast %21 : vector<2x16x16x8xf32> to vector<512x8xf32>
    %23 = arith.truncf %22 : vector<512x8xf32> to vector<512x8xbf16>
    %c0_43 = arith.constant 0 : index
    %c24 = arith.constant 24 : index
    %24 = vector.load %arg11[%c0_43, %c24] : memref<512x72xbf16, #tpu.memory_space<vmem>>, vector<512x8xbf16>
    tpu.vector_store %arg11[%c0_43, %c24], %23 {strides = array<i32>} : memref<512x72xbf16, #tpu.memory_space<vmem>>, vector<512x8xbf16>,
    %c0_44 = arith.constant 0 : index
    %c1_45 = arith.constant 1 : index
    %c1_46 = arith.constant 1 : index
    %c0_47 = arith.constant 0 : index
    %25 = vector.load %arg9[%c0_44, %c1_45, %c1_46, %c0_47] : memref<2x18x18x8xf32, #tpu.memory_space<vmem>>, vector<2x16x16x8xf32>
    %26 = vector.shape_cast %25 : vector<2x16x16x8xf32> to vector<512x8xf32>
    %27 = arith.truncf %26 : vector<512x8xf32> to vector<512x8xbf16>
    %c0_48 = arith.constant 0 : index
    %c32 = arith.constant 32 : index
    %28 = vector.load %arg11[%c0_48, %c32] : memref<512x72xbf16, #tpu.memory_space<vmem>>, vector<512x8xbf16>
    tpu.vector_store %arg11[%c0_48, %c32], %27 {strides = array<i32>} : memref<512x72xbf16, #tpu.memory_space<vmem>>, vector<512x8xbf16>,
    %c0_49 = arith.constant 0 : index
    %c1_50 = arith.constant 1 : index
    %c2_51 = arith.constant 2 : index
    %c0_52 = arith.constant 0 : index
    %29 = vector.load %arg9[%c0_49, %c1_50, %c2_51, %c0_52] : memref<2x18x18x8xf32, #tpu.memory_space<vmem>>, vector<2x16x16x8xf32>
    %30 = vector.shape_cast %29 : vector<2x16x16x8xf32> to vector<512x8xf32>
    %31 = arith.truncf %30 : vector<512x8xf32> to vector<512x8xbf16>
    %c0_53 = arith.constant 0 : index
    %c40 = arith.constant 40 : index
    %32 = vector.load %arg11[%c0_53, %c40] : memref<512x72xbf16, #tpu.memory_space<vmem>>, vector<512x8xbf16>
    tpu.vector_store %arg11[%c0_53, %c40], %31 {strides = array<i32>} : memref<512x72xbf16, #tpu.memory_space<vmem>>, vector<512x8xbf16>,
    %c0_54 = arith.constant 0 : index
    %c2_55 = arith.constant 2 : index
    %c0_56 = arith.constant 0 : index
    %c0_57 = arith.constant 0 : index
    %33 = vector.load %arg9[%c0_54, %c2_55, %c0_56, %c0_57] : memref<2x18x18x8xf32, #tpu.memory_space<vmem>>, vector<2x16x16x8xf32>
    %34 = vector.shape_cast %33 : vector<2x16x16x8xf32> to vector<512x8xf32>
    %35 = arith.truncf %34 : vector<512x8xf32> to vector<512x8xbf16>
    %c0_58 = arith.constant 0 : index
    %c48 = arith.constant 48 : index
    %36 = vector.load %arg11[%c0_58, %c48] : memref<512x72xbf16, #tpu.memory_space<vmem>>, vector<512x8xbf16>
    tpu.vector_store %arg11[%c0_58, %c48], %35 {strides = array<i32>} : memref<512x72xbf16, #tpu.memory_space<vmem>>, vector<512x8xbf16>,
    %c0_59 = arith.constant 0 : index
    %c2_60 = arith.constant 2 : index
    %c1_61 = arith.constant 1 : index
    %c0_62 = arith.constant 0 : index
    %37 = vector.load %arg9[%c0_59, %c2_60, %c1_61, %c0_62] : memref<2x18x18x8xf32, #tpu.memory_space<vmem>>, vector<2x16x16x8xf32>
    %38 = vector.shape_cast %37 : vector<2x16x16x8xf32> to vector<512x8xf32>
    %39 = arith.truncf %38 : vector<512x8xf32> to vector<512x8xbf16>
    %c0_63 = arith.constant 0 : index
    %c56 = arith.constant 56 : index
    %40 = vector.load %arg11[%c0_63, %c56] : memref<512x72xbf16, #tpu.memory_space<vmem>>, vector<512x8xbf16>
    tpu.vector_store %arg11[%c0_63, %c56], %39 {strides = array<i32>} : memref<512x72xbf16, #tpu.memory_space<vmem>>, vector<512x8xbf16>,
    %c0_64 = arith.constant 0 : index
    %c2_65 = arith.constant 2 : index
    %c2_66 = arith.constant 2 : index
    %c0_67 = arith.constant 0 : index
    %41 = vector.load %arg9[%c0_64, %c2_65, %c2_66, %c0_67] : memref<2x18x18x8xf32, #tpu.memory_space<vmem>>, vector<2x16x16x8xf32>
    %42 = vector.shape_cast %41 : vector<2x16x16x8xf32> to vector<512x8xf32>
    %43 = arith.truncf %42 : vector<512x8xf32> to vector<512x8xbf16>
    %c0_68 = arith.constant 0 : index
    %c64 = arith.constant 64 : index
    %44 = vector.load %arg11[%c0_68, %c64] : memref<512x72xbf16, #tpu.memory_space<vmem>>, vector<512x8xbf16>
    tpu.vector_store %arg11[%c0_68, %c64], %43 {strides = array<i32>} : memref<512x72xbf16, #tpu.memory_space<vmem>>, vector<512x8xbf16>,
    %c0_69 = arith.constant 0 : index
    %c0_70 = arith.constant 0 : index
    %45 = vector.load %arg11[%c0_69, %c0_70] : memref<512x72xbf16, #tpu.memory_space<vmem>>, vector<512x72xbf16>
    %c0_71 = arith.constant 0 : index
    %c0_72 = arith.constant 0 : index
    %46 = vector.load %arg2[%c0_71, %c0_72] : memref<72x8xbf16, #tpu.memory_space<vmem>>, vector<72x8xbf16>
    %cst_73 = arith.constant dense<0.000000e+00> : vector<512x8xf32>
    %47 = tpu.matmul %45, %46, %cst_73 {dimension_numbers = #tpu.dot_dimension_numbers<[1], [0], [0], [1], [0, 0, 1, 1], [], []>} : vector<512x72xbf16>, vector<72x8xbf16>, vector<512x8xf32> -> vector<512x8xf32>
    %48 = vector.broadcast %8 : vector<1x8xf32> to vector<512x8xf32>
    %49 = arith.addf %47, %48 : vector<512x8xf32>
    %cst_74 = arith.constant 0.000000e+00 : f32
    %50 = vector.broadcast %cst_74 : f32 to vector<512x8xf32>
    %51 = arith.maximumf %49, %50 : vector<512x8xf32>
    %cst_75 = arith.constant 0.000000e+00 : f32
    %52 = vector.broadcast %cst_75 : f32 to vector<2x1x18x8xf32>
    %cst_76 = arith.constant 0.000000e+00 : f32
    %53 = vector.broadcast %cst_76 : f32 to vector<2x18x1x8xf32>
    %c0_77 = arith.constant 0 : index
    %c0_78 = arith.constant 0 : index
    %c0_79 = arith.constant 0 : index
    %c0_80 = arith.constant 0 : index
    %54 = vector.load %arg10[%c0_77, %c0_78, %c0_79, %c0_80] : memref<2x18x18x8xf32, #tpu.memory_space<vmem>>, vector<2x1x18x8xf32>
    tpu.vector_store %arg10[%c0_77, %c0_78, %c0_79, %c0_80], %52 {strides = array<i32>} : memref<2x18x18x8xf32, #tpu.memory_space<vmem>>, vector<2x1x18x8xf32>,
    %c0_81 = arith.constant 0 : index
    %c17_82 = arith.constant 17 : index
    %c0_83 = arith.constant 0 : index
    %c0_84 = arith.constant 0 : index
    %55 = vector.load %arg10[%c0_81, %c17_82, %c0_83, %c0_84] : memref<2x18x18x8xf32, #tpu.memory_space<vmem>>, vector<2x1x18x8xf32>
    tpu.vector_store %arg10[%c0_81, %c17_82, %c0_83, %c0_84], %52 {strides = array<i32>} : memref<2x18x18x8xf32, #tpu.memory_space<vmem>>, vector<2x1x18x8xf32>,
    %c0_85 = arith.constant 0 : index
    %c0_86 = arith.constant 0 : index
    %c0_87 = arith.constant 0 : index
    %c0_88 = arith.constant 0 : index
    %56 = vector.load %arg10[%c0_85, %c0_86, %c0_87, %c0_88] : memref<2x18x18x8xf32, #tpu.memory_space<vmem>>, vector<2x18x1x8xf32>
    tpu.vector_store %arg10[%c0_85, %c0_86, %c0_87, %c0_88], %53 {strides = array<i32>} : memref<2x18x18x8xf32, #tpu.memory_space<vmem>>, vector<2x18x1x8xf32>,
    %c0_89 = arith.constant 0 : index
    %c0_90 = arith.constant 0 : index
    %c17_91 = arith.constant 17 : index
    %c0_92 = arith.constant 0 : index
    %57 = vector.load %arg10[%c0_89, %c0_90, %c17_91, %c0_92] : memref<2x18x18x8xf32, #tpu.memory_space<vmem>>, vector<2x18x1x8xf32>
    tpu.vector_store %arg10[%c0_89, %c0_90, %c17_91, %c0_92], %53 {strides = array<i32>} : memref<2x18x18x8xf32, #tpu.memory_space<vmem>>, vector<2x18x1x8xf32>,
    %58 = vector.shape_cast %51 : vector<512x8xf32> to vector<2x16x16x8xf32>
    %c0_93 = arith.constant 0 : index
    %c1_94 = arith.constant 1 : index
    %c1_95 = arith.constant 1 : index
    %c0_96 = arith.constant 0 : index
    %59 = vector.load %arg10[%c0_93, %c1_94, %c1_95, %c0_96] : memref<2x18x18x8xf32, #tpu.memory_space<vmem>>, vector<2x16x16x8xf32>
    tpu.vector_store %arg10[%c0_93, %c1_94, %c1_95, %c0_96], %58 {strides = array<i32>} : memref<2x18x18x8xf32, #tpu.memory_space<vmem>>, vector<2x16x16x8xf32>,
    %c0_97 = arith.constant 0 : index
    %c0_98 = arith.constant 0 : index
    %60 = vector.load %arg5[%c0_97, %c0_98] : memref<1x128xf32, #tpu.memory_space<vmem>>, vector<1x128xf32>
    %c0_99 = arith.constant 0 : index
    %c0_100 = arith.constant 0 : index
    %c0_101 = arith.constant 0 : index
    %c0_102 = arith.constant 0 : index
    %61 = vector.load %arg10[%c0_99, %c0_100, %c0_101, %c0_102] : memref<2x18x18x8xf32, #tpu.memory_space<vmem>>, vector<2x16x16x8xf32>
    %62 = vector.shape_cast %61 : vector<2x16x16x8xf32> to vector<512x8xf32>
    %63 = arith.truncf %62 : vector<512x8xf32> to vector<512x8xbf16>
    %c0_103 = arith.constant 0 : index
    %c0_104 = arith.constant 0 : index
    %64 = vector.load %arg12[%c0_103, %c0_104] : memref<512x72xbf16, #tpu.memory_space<vmem>>, vector<512x8xbf16>
    tpu.vector_store %arg12[%c0_103, %c0_104], %63 {strides = array<i32>} : memref<512x72xbf16, #tpu.memory_space<vmem>>, vector<512x8xbf16>,
    %c0_105 = arith.constant 0 : index
    %c0_106 = arith.constant 0 : index
    %c1_107 = arith.constant 1 : index
    %c0_108 = arith.constant 0 : index
    %65 = vector.load %arg10[%c0_105, %c0_106, %c1_107, %c0_108] : memref<2x18x18x8xf32, #tpu.memory_space<vmem>>, vector<2x16x16x8xf32>
    %66 = vector.shape_cast %65 : vector<2x16x16x8xf32> to vector<512x8xf32>
    %67 = arith.truncf %66 : vector<512x8xf32> to vector<512x8xbf16>
    %c0_109 = arith.constant 0 : index
    %c8_110 = arith.constant 8 : index
    %68 = vector.load %arg12[%c0_109, %c8_110] : memref<512x72xbf16, #tpu.memory_space<vmem>>, vector<512x8xbf16>
    tpu.vector_store %arg12[%c0_109, %c8_110], %67 {strides = array<i32>} : memref<512x72xbf16, #tpu.memory_space<vmem>>, vector<512x8xbf16>,
    %c0_111 = arith.constant 0 : index
    %c0_112 = arith.constant 0 : index
    %c2_113 = arith.constant 2 : index
    %c0_114 = arith.constant 0 : index
    %69 = vector.load %arg10[%c0_111, %c0_112, %c2_113, %c0_114] : memref<2x18x18x8xf32, #tpu.memory_space<vmem>>, vector<2x16x16x8xf32>
    %70 = vector.shape_cast %69 : vector<2x16x16x8xf32> to vector<512x8xf32>
    %71 = arith.truncf %70 : vector<512x8xf32> to vector<512x8xbf16>
    %c0_115 = arith.constant 0 : index
    %c16_116 = arith.constant 16 : index
    %72 = vector.load %arg12[%c0_115, %c16_116] : memref<512x72xbf16, #tpu.memory_space<vmem>>, vector<512x8xbf16>
    tpu.vector_store %arg12[%c0_115, %c16_116], %71 {strides = array<i32>} : memref<512x72xbf16, #tpu.memory_space<vmem>>, vector<512x8xbf16>,
    %c0_117 = arith.constant 0 : index
    %c1_118 = arith.constant 1 : index
    %c0_119 = arith.constant 0 : index
    %c0_120 = arith.constant 0 : index
    %73 = vector.load %arg10[%c0_117, %c1_118, %c0_119, %c0_120] : memref<2x18x18x8xf32, #tpu.memory_space<vmem>>, vector<2x16x16x8xf32>
    %74 = vector.shape_cast %73 : vector<2x16x16x8xf32> to vector<512x8xf32>
    %75 = arith.truncf %74 : vector<512x8xf32> to vector<512x8xbf16>
    %c0_121 = arith.constant 0 : index
    %c24_122 = arith.constant 24 : index
    %76 = vector.load %arg12[%c0_121, %c24_122] : memref<512x72xbf16, #tpu.memory_space<vmem>>, vector<512x8xbf16>
    tpu.vector_store %arg12[%c0_121, %c24_122], %75 {strides = array<i32>} : memref<512x72xbf16, #tpu.memory_space<vmem>>, vector<512x8xbf16>,
    %c0_123 = arith.constant 0 : index
    %c1_124 = arith.constant 1 : index
    %c1_125 = arith.constant 1 : index
    %c0_126 = arith.constant 0 : index
    %77 = vector.load %arg10[%c0_123, %c1_124, %c1_125, %c0_126] : memref<2x18x18x8xf32, #tpu.memory_space<vmem>>, vector<2x16x16x8xf32>
    %78 = vector.shape_cast %77 : vector<2x16x16x8xf32> to vector<512x8xf32>
    %79 = arith.truncf %78 : vector<512x8xf32> to vector<512x8xbf16>
    %c0_127 = arith.constant 0 : index
    %c32_128 = arith.constant 32 : index
    %80 = vector.load %arg12[%c0_127, %c32_128] : memref<512x72xbf16, #tpu.memory_space<vmem>>, vector<512x8xbf16>
    tpu.vector_store %arg12[%c0_127, %c32_128], %79 {strides = array<i32>} : memref<512x72xbf16, #tpu.memory_space<vmem>>, vector<512x8xbf16>,
    %c0_129 = arith.constant 0 : index
    %c1_130 = arith.constant 1 : index
    %c2_131 = arith.constant 2 : index
    %c0_132 = arith.constant 0 : index
    %81 = vector.load %arg10[%c0_129, %c1_130, %c2_131, %c0_132] : memref<2x18x18x8xf32, #tpu.memory_space<vmem>>, vector<2x16x16x8xf32>
    %82 = vector.shape_cast %81 : vector<2x16x16x8xf32> to vector<512x8xf32>
    %83 = arith.truncf %82 : vector<512x8xf32> to vector<512x8xbf16>
    %c0_133 = arith.constant 0 : index
    %c40_134 = arith.constant 40 : index
    %84 = vector.load %arg12[%c0_133, %c40_134] : memref<512x72xbf16, #tpu.memory_space<vmem>>, vector<512x8xbf16>
    tpu.vector_store %arg12[%c0_133, %c40_134], %83 {strides = array<i32>} : memref<512x72xbf16, #tpu.memory_space<vmem>>, vector<512x8xbf16>,
    %c0_135 = arith.constant 0 : index
    %c2_136 = arith.constant 2 : index
    %c0_137 = arith.constant 0 : index
    %c0_138 = arith.constant 0 : index
    %85 = vector.load %arg10[%c0_135, %c2_136, %c0_137, %c0_138] : memref<2x18x18x8xf32, #tpu.memory_space<vmem>>, vector<2x16x16x8xf32>
    %86 = vector.shape_cast %85 : vector<2x16x16x8xf32> to vector<512x8xf32>
    %87 = arith.truncf %86 : vector<512x8xf32> to vector<512x8xbf16>
    %c0_139 = arith.constant 0 : index
    %c48_140 = arith.constant 48 : index
    %88 = vector.load %arg12[%c0_139, %c48_140] : memref<512x72xbf16, #tpu.memory_space<vmem>>, vector<512x8xbf16>
    tpu.vector_store %arg12[%c0_139, %c48_140], %87 {strides = array<i32>} : memref<512x72xbf16, #tpu.memory_space<vmem>>, vector<512x8xbf16>,
    %c0_141 = arith.constant 0 : index
    %c2_142 = arith.constant 2 : index
    %c1_143 = arith.constant 1 : index
    %c0_144 = arith.constant 0 : index
    %89 = vector.load %arg10[%c0_141, %c2_142, %c1_143, %c0_144] : memref<2x18x18x8xf32, #tpu.memory_space<vmem>>, vector<2x16x16x8xf32>
    %90 = vector.shape_cast %89 : vector<2x16x16x8xf32> to vector<512x8xf32>
    %91 = arith.truncf %90 : vector<512x8xf32> to vector<512x8xbf16>
    %c0_145 = arith.constant 0 : index
    %c56_146 = arith.constant 56 : index
    %92 = vector.load %arg12[%c0_145, %c56_146] : memref<512x72xbf16, #tpu.memory_space<vmem>>, vector<512x8xbf16>
    tpu.vector_store %arg12[%c0_145, %c56_146], %91 {strides = array<i32>} : memref<512x72xbf16, #tpu.memory_space<vmem>>, vector<512x8xbf16>,
    %c0_147 = arith.constant 0 : index
    %c2_148 = arith.constant 2 : index
    %c2_149 = arith.constant 2 : index
    %c0_150 = arith.constant 0 : index
    %93 = vector.load %arg10[%c0_147, %c2_148, %c2_149, %c0_150] : memref<2x18x18x8xf32, #tpu.memory_space<vmem>>, vector<2x16x16x8xf32>
    %94 = vector.shape_cast %93 : vector<2x16x16x8xf32> to vector<512x8xf32>
    %95 = arith.truncf %94 : vector<512x8xf32> to vector<512x8xbf16>
    %c0_151 = arith.constant 0 : index
    %c64_152 = arith.constant 64 : index
    %96 = vector.load %arg12[%c0_151, %c64_152] : memref<512x72xbf16, #tpu.memory_space<vmem>>, vector<512x8xbf16>
    tpu.vector_store %arg12[%c0_151, %c64_152], %95 {strides = array<i32>} : memref<512x72xbf16, #tpu.memory_space<vmem>>, vector<512x8xbf16>,
    %c0_153 = arith.constant 0 : index
    %c0_154 = arith.constant 0 : index
    %97 = vector.load %arg12[%c0_153, %c0_154] : memref<512x72xbf16, #tpu.memory_space<vmem>>, vector<512x72xbf16>
    %c0_155 = arith.constant 0 : index
    %c0_156 = arith.constant 0 : index
    %98 = vector.load %arg4[%c0_155, %c0_156] : memref<72x128xbf16, #tpu.memory_space<vmem>>, vector<72x128xbf16>
    %cst_157 = arith.constant dense<0.000000e+00> : vector<512x128xf32>
    %99 = tpu.matmul %97, %98, %cst_157 {dimension_numbers = #tpu.dot_dimension_numbers<[1], [0], [0], [1], [0, 0, 1, 1], [], []>} : vector<512x72xbf16>, vector<72x128xbf16>, vector<512x128xf32> -> vector<512x128xf32>
    %100 = vector.broadcast %60 : vector<1x128xf32> to vector<512x128xf32>
    %101 = arith.addf %99, %100 : vector<512x128xf32>
    %c0_158 = arith.constant 0 : index
    %c1_159 = arith.constant 1 : index
    %c1_160 = arith.constant 1 : index
    %c0_161 = arith.constant 0 : index
    %102 = vector.load %arg9[%c0_158, %c1_159, %c1_160, %c0_161] : memref<2x18x18x8xf32, #tpu.memory_space<vmem>>, vector<2x16x16x8xf32>
    %103 = vector.shape_cast %102 : vector<2x16x16x8xf32> to vector<512x8xf32>
    %104 = arith.truncf %103 : vector<512x8xf32> to vector<512x8xbf16>
    %c0_162 = arith.constant 0 : index
    %c0_163 = arith.constant 0 : index
    %105 = vector.load %arg6[%c0_162, %c0_163] : memref<8x128xbf16, #tpu.memory_space<vmem>>, vector<8x128xbf16>
    %cst_164 = arith.constant dense<0.000000e+00> : vector<512x128xf32>
    %106 = tpu.matmul %104, %105, %cst_164 {dimension_numbers = #tpu.dot_dimension_numbers<[1], [0], [0], [1], [0, 0, 1, 1], [], []>} : vector<512x8xbf16>, vector<8x128xbf16>, vector<512x128xf32> -> vector<512x128xf32>
    %c0_165 = arith.constant 0 : index
    %c0_166 = arith.constant 0 : index
    %107 = vector.load %arg7[%c0_165, %c0_166] : memref<1x128xf32, #tpu.memory_space<vmem>>, vector<1x128xf32>
    %108 = vector.broadcast %107 : vector<1x128xf32> to vector<512x128xf32>
    %109 = arith.addf %106, %108 : vector<512x128xf32>
    %110 = arith.addf %101, %109 : vector<512x128xf32>
    %cst_167 = arith.constant 0.000000e+00 : f32
    %111 = vector.broadcast %cst_167 : f32 to vector<512x128xf32>
    %112 = arith.maximumf %110, %111 : vector<512x128xf32>
    %113 = vector.shape_cast %112 : vector<512x128xf32> to vector<2x16x16x128xf32>
    %c0_168 = arith.constant 0 : index
    %c0_169 = arith.constant 0 : index
    %c0_170 = arith.constant 0 : index
    %c0_171 = arith.constant 0 : index
    %114 = vector.load %arg8[%c0_168, %c0_169, %c0_170, %c0_171] : memref<2x16x16x128xf32, #tpu.memory_space<vmem>>, vector<2x16x16x128xf32>
    tpu.vector_store %arg8[%c0_168, %c0_169, %c0_170, %c0_171], %113 {strides = array<i32>} : memref<2x16x16x128xf32, #tpu.memory_space<vmem>>, vector<2x16x16x128xf32>,
    return
  }
  func.func @transform_0(%arg0: i32) -> (i32, i32, i32, i32) {
    %c0_i32 = arith.constant 0 : i32
    %c0_i32_0 = arith.constant 0 : i32
    %c0_i32_1 = arith.constant 0 : i32
    %c0_i32_2 = arith.constant 0 : i32
    return %arg0, %c0_i32, %c0_i32_0, %c0_i32_1 : i32, i32, i32, i32
  }
  func.func @transform_1(%arg0: i32) -> (i32, i32) {
    %c0_i32 = arith.constant 0 : i32
    %c0_i32_0 = arith.constant 0 : i32
    %c0_i32_1 = arith.constant 0 : i32
    return %c0_i32, %c0_i32_0 : i32, i32
  }
  func.func @transform_2(%arg0: i32) -> (i32, i32) {
    %c0_i32 = arith.constant 0 : i32
    %c0_i32_0 = arith.constant 0 : i32
    %c0_i32_1 = arith.constant 0 : i32
    return %c0_i32, %c0_i32_0 : i32, i32
  }
  func.func @transform_3(%arg0: i32) -> (i32, i32) {
    %c0_i32 = arith.constant 0 : i32
    %c0_i32_0 = arith.constant 0 : i32
    %c0_i32_1 = arith.constant 0 : i32
    return %c0_i32, %c0_i32_0 : i32, i32
  }
  func.func @transform_4(%arg0: i32) -> (i32, i32) {
    %c0_i32 = arith.constant 0 : i32
    %c0_i32_0 = arith.constant 0 : i32
    %c0_i32_1 = arith.constant 0 : i32
    return %c0_i32, %c0_i32_0 : i32, i32
  }
  func.func @transform_5(%arg0: i32) -> (i32, i32) {
    %c0_i32 = arith.constant 0 : i32
    %c0_i32_0 = arith.constant 0 : i32
    %c0_i32_1 = arith.constant 0 : i32
    return %c0_i32, %c0_i32_0 : i32, i32
  }
  func.func @transform_6(%arg0: i32) -> (i32, i32) {
    %c0_i32 = arith.constant 0 : i32
    %c0_i32_0 = arith.constant 0 : i32
    %c0_i32_1 = arith.constant 0 : i32
    return %c0_i32, %c0_i32_0 : i32, i32
  }
  func.func @transform_7(%arg0: i32) -> (i32, i32, i32, i32) {
    %c0_i32 = arith.constant 0 : i32
    %c0_i32_0 = arith.constant 0 : i32
    %c0_i32_1 = arith.constant 0 : i32
    %c0_i32_2 = arith.constant 0 : i32
    return %arg0, %c0_i32, %c0_i32_0, %c0_i32_1 : i32, i32, i32, i32
  }
}

</mosaic_0001>

<llo_original>
// kernel: tpu_custom_call.1
$region0: #{tpu_custom_call.1}
  #allocation0 [shape = 'u32[]', space=smem, size = 0x4, offset = 0x4, fixed_abs, tag = 'smem constant byte address 0x4 - core index']
  #allocation1 [shape = 'u32[144,128]{1,0:T(1,128)}', space=vmem, size = 0x12000, scoped, tag = 'internal scratch']
  #allocation2 [shape = 'f32[2,18,18,8]{3,2,1,0:T(8,128)}', space=vmem, size = 0x6c000, scoped, tag = 'scratch operand']
  #allocation3 [shape = 'f32[2,18,18,8]{3,2,1,0:T(8,128)}', space=vmem, size = 0x6c000, scoped, tag = 'scratch operand']
  #allocation4 [shape = 'bf16[512,72]{1,0:T(16,128)(2,1)}', space=vmem, size = 0x20000, scoped, tag = 'scratch operand']
  #allocation5 [shape = 'bf16[512,72]{1,0:T(16,128)(2,1)}', space=vmem, size = 0x20000, scoped, tag = 'scratch operand']
  %s0 = inlined_call_operand.vmem [shape: f32[2,16,16,8], index: 0, kind: input, shape index: {}]
  %s1 = inlined_call_operand.vmem [shape: bf16[72,8], index: 1, kind: input, shape index: {}]
  %s2 = inlined_call_operand.vmem [shape: f32[1,8], index: 2, kind: input, shape index: {}]
  %s3 = inlined_call_operand.vmem [shape: bf16[72,128], index: 3, kind: input, shape index: {}]
  %s4 = inlined_call_operand.vmem [shape: f32[1,128], index: 4, kind: input, shape index: {}]
  %s5 = inlined_call_operand.vmem [shape: bf16[8,128], index: 5, kind: input, shape index: {}]
  %s6 = inlined_call_operand.vmem [shape: f32[1,128], index: 6, kind: input, shape index: {}]
  %s7 = inlined_call_operand.hbm [shape: f32[2,16,16,128], index: 7, kind: output, shape index: {}]
  %s8 = sld [smem:[#allocation0]]
  $region38: #{tpu_custom_call.1} parent=0
    _
  %s10 = ssub.s32 1, %s8
  %s11 = scalar_select 0, %s10, %s8
  $region1: #{tpu_custom_call.1} parent=0
    #allocation6 [shape = 'u8[262144]{0}', space=vmem, size = 0x40000, scoped, tag = 'output window, operand 0, single buffered']
    #allocation7 [shape = 's32[1]{0}', space=sflag, size = 0x4, scoped, tag = 'scoped memory for tpu_custom_call.1']
    %12 = vsyncpa [#allocation7], 0
    // Predicated region
    $region2: #{tpu_custom_call.1} parent=1 // pred_check
      _
    $region3: #{tpu_custom_call.1} parent=1 // pred_check_branch
      %14 = sbr.rel (0) target = $region5
    $region4: #{tpu_custom_call.1} parent=1 // pred_region
      _
    $region5: #{tpu_custom_call.1} parent=1 // pred_fallthru
      _
    // Predicated region
    $region6: #{tpu_custom_call.1} parent=1 // pred_check
      _
    $region7: #{tpu_custom_call.1} parent=1 // pred_check_branch
      %16 = sbr.rel (0) target = $region9
    $region8: #{tpu_custom_call.1} parent=1 // pred_region
      _
    $region9: #{tpu_custom_call.1} parent=1 // pred_fallthru
      _
    // Predicated region
    $region10: #{tpu_custom_call.1} parent=1 // pred_check
      _
    $region11: #{tpu_custom_call.1} parent=1 // pred_check_branch
      %18 = sbr.rel (0) target = $region13
    $region12: #{tpu_custom_call.1} parent=1 // pred_region
      _
    $region13: #{tpu_custom_call.1} parent=1 // pred_fallthru
      _
    // Predicated region
    $region14: #{tpu_custom_call.1} parent=1 // pred_check
      _
    $region15: #{tpu_custom_call.1} parent=1 // pred_check_branch
      %20 = sbr.rel (0) target = $region17
    $region16: #{tpu_custom_call.1} parent=1 // pred_region
      _
    $region17: #{tpu_custom_call.1} parent=1 // pred_fallthru
      _
    // Predicated region
    $region18: #{tpu_custom_call.1} parent=1 // pred_check
      _
    $region19: #{tpu_custom_call.1} parent=1 // pred_check_branch
      %22 = sbr.rel (0) target = $region21
    $region20: #{tpu_custom_call.1} parent=1 // pred_region
      _
    $region21: #{tpu_custom_call.1} parent=1 // pred_fallthru
      _
    // Predicated region
    $region22: #{tpu_custom_call.1} parent=1 // pred_check
      _
    $region23: #{tpu_custom_call.1} parent=1 // pred_check_branch
      %24 = sbr.rel (0) target = $region25
    $region24: #{tpu_custom_call.1} parent=1 // pred_region
      _
    $region25: #{tpu_custom_call.1} parent=1 // pred_fallthru
      _
    // Predicated region
    $region26: #{tpu_custom_call.1} parent=1 // pred_check
      _
    $region27: #{tpu_custom_call.1} parent=1 // pred_check_branch
      %26 = sbr.rel (0) target = $region29
    $region28: #{tpu_custom_call.1} parent=1 // pred_region
      _
    $region29: #{tpu_custom_call.1} parent=1 // pred_fallthru
      _
    %vm28 = vcmask 64512
    %29 = vst.msk [vmem:[#allocation2] sm:$0xff] %vm28, 0.0
    %30 = vst.msk [vmem:[#allocation2 + $0x8] sm:$0xff] %vm28, 0.0
    %vm31 = vcmask 58368
    %32 = vst.msk [vmem:[#allocation2 + $0x10] sm:$0x3] %vm31, 0.0
    %33 = vst.msk [vmem:[#allocation2 + $0x1b0] sm:$0xff] %vm28, 0.0
    %34 = vst.msk [vmem:[#allocation2 + $0x1b8] sm:$0xff] %vm28, 0.0
    %35 = vst.msk [vmem:[#allocation2 + $0x1c0] sm:$0x3] %vm31, 0.0
    %s36 = scalar_lea.vmem [#allocation2], 408
    %37 = vst.msk [vmem:[%s36] sm:$0xff] %vm28, 0.0
    %38 = vst.msk [vmem:[%s36 + $0x8] sm:$0xff] %vm28, 0.0
    %39 = vst.msk [vmem:[%s36 + $0x10] sm:$0x3] %vm31, 0.0
    %40 = vst.msk [vmem:[%s36 + $0x1b0] sm:$0xff] %vm28, 0.0
    %41 = vst.msk [vmem:[%s36 + $0x1b8] sm:$0xff] %vm28, 0.0
    %42 = vst.msk [vmem:[%s36 + $0x1c0] sm:$0x3] %vm31, 0.0
    %vm43 = vcmask 57344
    %44 = vst.msk [vmem:[#allocation2] sm:$0x1] %vm43, 0.0
    %45 = vst.msk [vmem:[#allocation2 + $0x18] sm:$0x1] %vm43, 0.0
    %46 = vst.msk [vmem:[#allocation2 + $0x30] sm:$0x1] %vm43, 0.0
    %47 = vst.msk [vmem:[#allocation2 + $0x48] sm:$0x1] %vm43, 0.0
    %48 = vst.msk [vmem:[#allocation2 + $0x60] sm:$0x1] %vm43, 0.0
    %49 = vst.msk [vmem:[#allocation2 + $0x78] sm:$0x1] %vm43, 0.0
    %50 = vst.msk [vmem:[#allocation2 + $0x90] sm:$0x1] %vm43, 0.0
    %51 = vst.msk [vmem:[#allocation2 + $0xa8] sm:$0x1] %vm43, 0.0
    %52 = vst.msk [vmem:[#allocation2 + $0xc0] sm:$0x1] %vm43, 0.0
    %53 = vst.msk [vmem:[#allocation2 + $0xd8] sm:$0x1] %vm43, 0.0
    %54 = vst.msk [vmem:[#allocation2 + $0xf0] sm:$0x1] %vm43, 0.0
    %55 = vst.msk [vmem:[#allocation2 + $0x108] sm:$0x1] %vm43, 0.0
    %56 = vst.msk [vmem:[#allocation2 + $0x120] sm:$0x1] %vm43, 0.0
    %57 = vst.msk [vmem:[#allocation2 + $0x138] sm:$0x1] %vm43, 0.0
    %58 = vst.msk [vmem:[#allocation2 + $0x150] sm:$0x1] %vm43, 0.0
    %59 = vst.msk [vmem:[#allocation2 + $0x168] sm:$0x1] %vm43, 0.0
    %60 = vst.msk [vmem:[#allocation2 + $0x180] sm:$0x1] %vm43, 0.0
    %61 = vst.msk [vmem:[#allocation2 + $0x198] sm:$0x1] %vm43, 0.0
    %62 = vst.msk [vmem:[#allocation2 + $0x1b0] sm:$0x1] %vm43, 0.0
    %63 = vst.msk [vmem:[#allocation2 + $0x1c8] sm:$0x1] %vm43, 0.0
    %64 = vst.msk [vmem:[#allocation2 + $0x1e0] sm:$0x1] %vm43, 0.0
    %65 = vst.msk [vmem:[#allocation2 + $0x1f8] sm:$0x1] %vm43, 0.0
    %66 = vst.msk [vmem:[#allocation2 + $0x210] sm:$0x1] %vm43, 0.0
    %67 = vst.msk [vmem:[#allocation2 + $0x228] sm:$0x1] %vm43, 0.0
    %68 = vst.msk [vmem:[#allocation2 + $0x240] sm:$0x1] %vm43, 0.0
    %69 = vst.msk [vmem:[#allocation2 + $0x258] sm:$0x1] %vm43, 0.0
    %70 = vst.msk [vmem:[#allocation2 + $0x270] sm:$0x1] %vm43, 0.0
    %71 = vst.msk [vmem:[#allocation2 + $0x288] sm:$0x1] %vm43, 0.0
    %72 = vst.msk [vmem:[#allocation2 + $0x2a0] sm:$0x1] %vm43, 0.0
    %73 = vst.msk [vmem:[#allocation2 + $0x2b8] sm:$0x1] %vm43, 0.0
    %74 = vst.msk [vmem:[#allocation2 + $0x2d0] sm:$0x1] %vm43, 0.0
    %75 = vst.msk [vmem:[#allocation2 + $0x2e8] sm:$0x1] %vm43, 0.0
    %76 = vst.msk [vmem:[#allocation2 + $0x300] sm:$0x1] %vm43, 0.0
    %77 = vst.msk [vmem:[#allocation2 + $0x318] sm:$0x1] %vm43, 0.0
    %78 = vst.msk [vmem:[#allocation2 + $0x330] sm:$0x1] %vm43, 0.0
    %79 = vst.msk [vmem:[#allocation2 + $0x348] sm:$0x1] %vm43, 0.0
    %80 = vst.msk [vmem:[#allocation2 + $0x11] sm:$0x1] %vm43, 0.0
    %81 = vst.msk [vmem:[#allocation2 + $0x29] sm:$0x1] %vm43, 0.0
    %82 = vst.msk [vmem:[#allocation2 + $0x41] sm:$0x1] %vm43, 0.0
    %83 = vst.msk [vmem:[#allocation2 + $0x59] sm:$0x1] %vm43, 0.0
    %84 = vst.msk [vmem:[#allocation2 + $0x71] sm:$0x1] %vm43, 0.0
    %85 = vst.msk [vmem:[#allocation2 + $0x89] sm:$0x1] %vm43, 0.0
    %86 = vst.msk [vmem:[#allocation2 + $0xa1] sm:$0x1] %vm43, 0.0
    %87 = vst.msk [vmem:[#allocation2 + $0xb9] sm:$0x1] %vm43, 0.0
    %88 = vst.msk [vmem:[#allocation2 + $0xd1] sm:$0x1] %vm43, 0.0
    %89 = vst.msk [vmem:[#allocation2 + $0xe9] sm:$0x1] %vm43, 0.0
    %90 = vst.msk [vmem:[#allocation2 + $0x101] sm:$0x1] %vm43, 0.0
    %91 = vst.msk [vmem:[#allocation2 + $0x119] sm:$0x1] %vm43, 0.0
    %92 = vst.msk [vmem:[#allocation2 + $0x131] sm:$0x1] %vm43, 0.0
    %93 = vst.msk [vmem:[#allocation2 + $0x149] sm:$0x1] %vm43, 0.0
    %94 = vst.msk [vmem:[#allocation2 + $0x161] sm:$0x1] %vm43, 0.0
    %95 = vst.msk [vmem:[#allocation2 + $0x179] sm:$0x1] %vm43, 0.0
    %96 = vst.msk [vmem:[#allocation2 + $0x191] sm:$0x1] %vm43, 0.0
    %97 = vst.msk [vmem:[#allocation2 + $0x1a9] sm:$0x1] %vm43, 0.0
    %98 = vst.msk [vmem:[#allocation2 + $0x1c1] sm:$0x1] %vm43, 0.0
    %99 = vst.msk [vmem:[#allocation2 + $0x1d9] sm:$0x1] %vm43, 0.0
    %100 = vst.msk [vmem:[#allocation2 + $0x1f1] sm:$0x1] %vm43, 0.0
    %101 = vst.msk [vmem:[#allocation2 + $0x209] sm:$0x1] %vm43, 0.0
    %102 = vst.msk [vmem:[#allocation2 + $0x221] sm:$0x1] %vm43, 0.0
    %103 = vst.msk [vmem:[#allocation2 + $0x239] sm:$0x1] %vm43, 0.0
    %104 = vst.msk [vmem:[#allocation2 + $0x251] sm:$0x1] %vm43, 0.0
    %105 = vst.msk [vmem:[#allocation2 + $0x269] sm:$0x1] %vm43, 0.0
    %106 = vst.msk [vmem:[#allocation2 + $0x281] sm:$0x1] %vm43, 0.0
    %107 = vst.msk [vmem:[#allocation2 + $0x299] sm:$0x1] %vm43, 0.0
    %108 = vst.msk [vmem:[#allocation2 + $0x2b1] sm:$0x1] %vm43, 0.0
    %109 = vst.msk [vmem:[#allocation2 + $0x2c9] sm:$0x1] %vm43, 0.0
    %110 = vst.msk [vmem:[#allocation2 + $0x2e1] sm:$0x1] %vm43, 0.0
    %111 = vst.msk [vmem:[#allocation2 + $0x2f9] sm:$0x1] %vm43, 0.0
    %112 = vst.msk [vmem:[#allocation2 + $0x311] sm:$0x1] %vm43, 0.0
    %113 = vst.msk [vmem:[#allocation2 + $0x329] sm:$0x1] %vm43, 0.0
    %114 = vst.msk [vmem:[#allocation2 + $0x341] sm:$0x1] %vm43, 0.0
    %115 = vst.msk [vmem:[#allocation2 + $0x359] sm:$0x1] %vm43, 0.0
    %v116 = vld [vmem:[%s0] sm:$0xff]
    %v117 = vld [vmem:[%s0 + $0x8] sm:$0xff]
    %v118 = vld [vmem:[%s0 + $0x10] sm:$0xff]
    %v119 = vld [vmem:[%s0 + $0x18] sm:$0xff]
    %v120 = vld [vmem:[%s0 + $0x20] sm:$0xff]
    %v121 = vld [vmem:[%s0 + $0x28] sm:$0xff]
    %v122 = vld [vmem:[%s0 + $0x30] sm:$0xff]
    %v123 = vld [vmem:[%s0 + $0x38] sm:$0xff]
    %v124 = vld [vmem:[%s0 + $0x40] sm:$0xff]
    %v125 = vld [vmem:[%s0 + $0x48] sm:$0xff]
    %v126 = vld [vmem:[%s0 + $0x50] sm:$0xff]
    %v127 = vld [vmem:[%s0 + $0x58] sm:$0xff]
    %v128 = vld [vmem:[%s0 + $0x60] sm:$0xff]
    %v129 = vld [vmem:[%s0 + $0x68] sm:$0xff]
    %v130 = vld [vmem:[%s0 + $0x70] sm:$0xff]
    %v131 = vld [vmem:[%s0 + $0x78] sm:$0xff]
    %v132 = vld [vmem:[%s0 + $0x80] sm:$0xff]
    %v133 = vld [vmem:[%s0 + $0x88] sm:$0xff]
    %v134 = vld [vmem:[%s0 + $0x90] sm:$0xff]
    %v135 = vld [vmem:[%s0 + $0x98] sm:$0xff]
    %v136 = vld [vmem:[%s0 + $0xa0] sm:$0xff]
    %v137 = vld [vmem:[%s0 + $0xa8] sm:$0xff]
    %v138 = vld [vmem:[%s0 + $0xb0] sm:$0xff]
    %v139 = vld [vmem:[%s0 + $0xb8] sm:$0xff]
    %v140 = vld [vmem:[%s0 + $0xc0] sm:$0xff]
    %v141 = vld [vmem:[%s0 + $0xc8] sm:$0xff]
    %v142 = vld [vmem:[%s0 + $0xd0] sm:$0xff]
    %v143 = vld [vmem:[%s0 + $0xd8] sm:$0xff]
    %v144 = vld [vmem:[%s0 + $0xe0] sm:$0xff]
    %v145 = vld [vmem:[%s0 + $0xe8] sm:$0xff]
    %v146 = vld [vmem:[%s0 + $0xf0] sm:$0xff]
    %v147 = vld [vmem:[%s0 + $0xf8] sm:$0xff]
    %v148 = vld [vmem:[%s0 + $0x100] sm:$0xff]
    %v149 = vld [vmem:[%s0 + $0x108] sm:$0xff]
    %v150 = vld [vmem:[%s0 + $0x110] sm:$0xff]
    %v151 = vld [vmem:[%s0 + $0x118] sm:$0xff]
    %v152 = vld [vmem:[%s0 + $0x120] sm:$0xff]
    %v153 = vld [vmem:[%s0 + $0x128] sm:$0xff]
    %v154 = vld [vmem:[%s0 + $0x130] sm:$0xff]
    %v155 = vld [vmem:[%s0 + $0x138] sm:$0xff]
    %v156 = vld [vmem:[%s0 + $0x140] sm:$0xff]
    %v157 = vld [vmem:[%s0 + $0x148] sm:$0xff]
    %v158 = vld [vmem:[%s0 + $0x150] sm:$0xff]
    %v159 = vld [vmem:[%s0 + $0x158] sm:$0xff]
    %v160 = vld [vmem:[%s0 + $0x160] sm:$0xff]
    %v161 = vld [vmem:[%s0 + $0x168] sm:$0xff]
    %v162 = vld [vmem:[%s0 + $0x170] sm:$0xff]
    %v163 = vld [vmem:[%s0 + $0x178] sm:$0xff]
    %v164 = vld [vmem:[%s0 + $0x180] sm:$0xff]
    %v165 = vld [vmem:[%s0 + $0x188] sm:$0xff]
    %v166 = vld [vmem:[%s0 + $0x190] sm:$0xff]
    %v167 = vld [vmem:[%s0 + $0x198] sm:$0xff]
    %v168 = vld [vmem:[%s0 + $0x1a0] sm:$0xff]
    %v169 = vld [vmem:[%s0 + $0x1a8] sm:$0xff]
    %v170 = vld [vmem:[%s0 + $0x1b0] sm:$0xff]
    %v171 = vld [vmem:[%s0 + $0x1b8] sm:$0xff]
    %v172 = vld [vmem:[%s0 + $0x1c0] sm:$0xff]
    %v173 = vld [vmem:[%s0 + $0x1c8] sm:$0xff]
    %v174 = vld [vmem:[%s0 + $0x1d0] sm:$0xff]
    %v175 = vld [vmem:[%s0 + $0x1d8] sm:$0xff]
    %v176 = vld [vmem:[%s0 + $0x1e0] sm:$0xff]
    %v177 = vld [vmem:[%s0 + $0x1e8] sm:$0xff]
    %v178 = vld [vmem:[%s0 + $0x1f0] sm:$0xff]
    %v179 = vld [vmem:[%s0 + $0x1f8] sm:$0xff]
    %s180 = scalar_lea.vmem [#allocation2], 24
    %181 = vst.msk [vmem:[%s180 + $0x1] sm:$0xff] %vm28, %v116
    %182 = vst.msk [vmem:[%s180 + $0x9] sm:$0xff] %vm28, %v117
    %183 = vst.msk [vmem:[%s180 + $0x19] sm:$0xff] %vm28, %v118
    %184 = vst.msk [vmem:[%s180 + $0x21] sm:$0xff] %vm28, %v119
    %185 = vst.msk [vmem:[%s180 + $0x31] sm:$0xff] %vm28, %v120
    %186 = vst.msk [vmem:[%s180 + $0x39] sm:$0xff] %vm28, %v121
    %187 = vst.msk [vmem:[%s180 + $0x49] sm:$0xff] %vm28, %v122
    %188 = vst.msk [vmem:[%s180 + $0x51] sm:$0xff] %vm28, %v123
    %189 = vst.msk [vmem:[%s180 + $0x61] sm:$0xff] %vm28, %v124
    %190 = vst.msk [vmem:[%s180 + $0x69] sm:$0xff] %vm28, %v125
    %191 = vst.msk [vmem:[%s180 + $0x79] sm:$0xff] %vm28, %v126
    %192 = vst.msk [vmem:[%s180 + $0x81] sm:$0xff] %vm28, %v127
    %193 = vst.msk [vmem:[%s180 + $0x91] sm:$0xff] %vm28, %v128
    %194 = vst.msk [vmem:[%s180 + $0x99] sm:$0xff] %vm28, %v129
    %195 = vst.msk [vmem:[%s180 + $0xa9] sm:$0xff] %vm28, %v130
    %196 = vst.msk [vmem:[%s180 + $0xb1] sm:$0xff] %vm28, %v131
    %197 = vst.msk [vmem:[%s180 + $0xc1] sm:$0xff] %vm28, %v132
    %198 = vst.msk [vmem:[%s180 + $0xc9] sm:$0xff] %vm28, %v133
    %199 = vst.msk [vmem:[%s180 + $0xd9] sm:$0xff] %vm28, %v134
    %200 = vst.msk [vmem:[%s180 + $0xe1] sm:$0xff] %vm28, %v135
    %201 = vst.msk [vmem:[%s180 + $0xf1] sm:$0xff] %vm28, %v136
    %202 = vst.msk [vmem:[%s180 + $0xf9] sm:$0xff] %vm28, %v137
    %203 = vst.msk [vmem:[%s180 + $0x109] sm:$0xff] %vm28, %v138
    %204 = vst.msk [vmem:[%s180 + $0x111] sm:$0xff] %vm28, %v139
    %205 = vst.msk [vmem:[%s180 + $0x121] sm:$0xff] %vm28, %v140
    %206 = vst.msk [vmem:[%s180 + $0x129] sm:$0xff] %vm28, %v141
    %207 = vst.msk [vmem:[%s180 + $0x139] sm:$0xff] %vm28, %v142
    %208 = vst.msk [vmem:[%s180 + $0x141] sm:$0xff] %vm28, %v143
    %209 = vst.msk [vmem:[%s180 + $0x151] sm:$0xff] %vm28, %v144
    %210 = vst.msk [vmem:[%s180 + $0x159] sm:$0xff] %vm28, %v145
    %211 = vst.msk [vmem:[%s180 + $0x169] sm:$0xff] %vm28, %v146
    %212 = vst.msk [vmem:[%s180 + $0x171] sm:$0xff] %vm28, %v147
    %213 = vst.msk [vmem:[%s180 + $0x1b1] sm:$0xff] %vm28, %v148
    %214 = vst.msk [vmem:[%s180 + $0x1b9] sm:$0xff] %vm28, %v149
    %215 = vst.msk [vmem:[%s180 + $0x1c9] sm:$0xff] %vm28, %v150
    %216 = vst.msk [vmem:[%s180 + $0x1d1] sm:$0xff] %vm28, %v151
    %217 = vst.msk [vmem:[%s180 + $0x1e1] sm:$0xff] %vm28, %v152
    %218 = vst.msk [vmem:[%s180 + $0x1e9] sm:$0xff] %vm28, %v153
    %219 = vst.msk [vmem:[%s180 + $0x1f9] sm:$0xff] %vm28, %v154
    %220 = vst.msk [vmem:[%s180 + $0x201] sm:$0xff] %vm28, %v155
    %221 = vst.msk [vmem:[%s180 + $0x211] sm:$0xff] %vm28, %v156
    %222 = vst.msk [vmem:[%s180 + $0x219] sm:$0xff] %vm28, %v157
    %223 = vst.msk [vmem:[%s180 + $0x229] sm:$0xff] %vm28, %v158
    %224 = vst.msk [vmem:[%s180 + $0x231] sm:$0xff] %vm28, %v159
    %225 = vst.msk [vmem:[%s180 + $0x241] sm:$0xff] %vm28, %v160
    %226 = vst.msk [vmem:[%s180 + $0x249] sm:$0xff] %vm28, %v161
    %227 = vst.msk [vmem:[%s180 + $0x259] sm:$0xff] %vm28, %v162
    %228 = vst.msk [vmem:[%s180 + $0x261] sm:$0xff] %vm28, %v163
    %229 = vst.msk [vmem:[%s180 + $0x271] sm:$0xff] %vm28, %v164
    %230 = vst.msk [vmem:[%s180 + $0x279] sm:$0xff] %vm28, %v165
    %231 = vst.msk [vmem:[%s180 + $0x289] sm:$0xff] %vm28, %v166
    %232 = vst.msk [vmem:[%s180 + $0x291] sm:$0xff] %vm28, %v167
    %233 = vst.msk [vmem:[%s180 + $0x2a1] sm:$0xff] %vm28, %v168
    %234 = vst.msk [vmem:[%s180 + $0x2a9] sm:$0xff] %vm28, %v169
    %235 = vst.msk [vmem:[%s180 + $0x2b9] sm:$0xff] %vm28, %v170
    %236 = vst.msk [vmem:[%s180 + $0x2c1] sm:$0xff] %vm28, %v171
    %237 = vst.msk [vmem:[%s180 + $0x2d1] sm:$0xff] %vm28, %v172
    %238 = vst.msk [vmem:[%s180 + $0x2d9] sm:$0xff] %vm28, %v173
    %239 = vst.msk [vmem:[%s180 + $0x2e9] sm:$0xff] %vm28, %v174
    %240 = vst.msk [vmem:[%s180 + $0x2f1] sm:$0xff] %vm28, %v175
    %241 = vst.msk [vmem:[%s180 + $0x301] sm:$0xff] %vm28, %v176
    %242 = vst.msk [vmem:[%s180 + $0x309] sm:$0xff] %vm28, %v177
    %243 = vst.msk [vmem:[%s180 + $0x319] sm:$0xff] %vm28, %v178
    %244 = vst.msk [vmem:[%s180 + $0x321] sm:$0xff] %vm28, %v179
    %v245 = vld [vmem:[%s2] sm:$0x1]
    %v246 = vld [vmem:[#allocation2] sm:$0xff]
    %v247 = vld [vmem:[#allocation2 + $0x8] sm:$0xff]
    %v248 = vld [vmem:[#allocation2 + $0x18] sm:$0xff]
    %v249 = vld [vmem:[#allocation2 + $0x20] sm:$0xff]
    %v250 = vld [vmem:[#allocation2 + $0x30] sm:$0xff]
    %v251 = vld [vmem:[#allocation2 + $0x38] sm:$0xff]
    %v252 = vld [vmem:[#allocation2 + $0x48] sm:$0xff]
    %v253 = vld [vmem:[#allocation2 + $0x50] sm:$0xff]
    %v254 = vld [vmem:[#allocation2 + $0x60] sm:$0xff]
    %v255 = vld [vmem:[#allocation2 + $0x68] sm:$0xff]
    %v256 = vld [vmem:[#allocation2 + $0x78] sm:$0xff]
    %v257 = vld [vmem:[#allocation2 + $0x80] sm:$0xff]
    %v258 = vld [vmem:[#allocation2 + $0x90] sm:$0xff]
    %v259 = vld [vmem:[#allocation2 + $0x98] sm:$0xff]
    %v260 = vld [vmem:[#allocation2 + $0xa8] sm:$0xff]
    %v261 = vld [vmem:[#allocation2 + $0xb0] sm:$0xff]
    %v262 = vld [vmem:[#allocation2 + $0xc0] sm:$0xff]
    %v263 = vld [vmem:[#allocation2 + $0xc8] sm:$0xff]
    %v264 = vld [vmem:[#allocation2 + $0xd8] sm:$0xff]
    %v265 = vld [vmem:[#allocation2 + $0xe0] sm:$0xff]
    %v266 = vld [vmem:[#allocation2 + $0xf0] sm:$0xff]
    %v267 = vld [vmem:[#allocation2 + $0xf8] sm:$0xff]
    %v268 = vld [vmem:[#allocation2 + $0x108] sm:$0xff]
    %v269 = vld [vmem:[#allocation2 + $0x110] sm:$0xff]
    %v270 = vld [vmem:[#allocation2 + $0x120] sm:$0xff]
    %v271 = vld [vmem:[#allocation2 + $0x128] sm:$0xff]
    %v272 = vld [vmem:[#allocation2 + $0x138] sm:$0xff]
    %v273 = vld [vmem:[#allocation2 + $0x140] sm:$0xff]
    %v274 = vld [vmem:[#allocation2 + $0x150] sm:$0xff]
    %v275 = vld [vmem:[#allocation2 + $0x158] sm:$0xff]
    %v276 = vld [vmem:[#allocation2 + $0x168] sm:$0xff]
    %v277 = vld [vmem:[#allocation2 + $0x170] sm:$0xff]
    %v278 = vld [vmem:[#allocation2 + $0x1b0] sm:$0xff]
    %v279 = vld [vmem:[#allocation2 + $0x1b8] sm:$0xff]
    %v280 = vld [vmem:[#allocation2 + $0x1c8] sm:$0xff]
    %v281 = vld [vmem:[#allocation2 + $0x1d0] sm:$0xff]
    %v282 = vld [vmem:[#allocation2 + $0x1e0] sm:$0xff]
    %v283 = vld [vmem:[#allocation2 + $0x1e8] sm:$0xff]
    %v284 = vld [vmem:[#allocation2 + $0x1f8] sm:$0xff]
    %v285 = vld [vmem:[#allocation2 + $0x200] sm:$0xff]
    %v286 = vld [vmem:[#allocation2 + $0x210] sm:$0xff]
    %v287 = vld [vmem:[#allocation2 + $0x218] sm:$0xff]
    %v288 = vld [vmem:[#allocation2 + $0x228] sm:$0xff]
    %v289 = vld [vmem:[#allocation2 + $0x230] sm:$0xff]
    %v290 = vld [vmem:[#allocation2 + $0x240] sm:$0xff]
    %v291 = vld [vmem:[#allocation2 + $0x248] sm:$0xff]
    %v292 = vld [vmem:[#allocation2 + $0x258] sm:$0xff]
    %v293 = vld [vmem:[#allocation2 + $0x260] sm:$0xff]
    %v294 = vld [vmem:[#allocation2 + $0x270] sm:$0xff]
    %v295 = vld [vmem:[#allocation2 + $0x278] sm:$0xff]
    %v296 = vld [vmem:[#allocation2 + $0x288] sm:$0xff]
    %v297 = vld [vmem:[#allocation2 + $0x290] sm:$0xff]
    %v298 = vld [vmem:[#allocation2 + $0x2a0] sm:$0xff]
    %v299 = vld [vmem:[#allocation2 + $0x2a8] sm:$0xff]
    %v300 = vld [vmem:[#allocation2 + $0x2b8] sm:$0xff]
    %v301 = vld [vmem:[#allocation2 + $0x2c0] sm:$0xff]
    %v302 = vld [vmem:[#allocation2 + $0x2d0] sm:$0xff]
    %v303 = vld [vmem:[#allocation2 + $0x2d8] sm:$0xff]
    %v304 = vld [vmem:[#allocation2 + $0x2e8] sm:$0xff]
    %v305 = vld [vmem:[#allocation2 + $0x2f0] sm:$0xff]
    %v306 = vld [vmem:[#allocation2 + $0x300] sm:$0xff]
    %v307 = vld [vmem:[#allocation2 + $0x308] sm:$0xff]
    %v308 = vld [vmem:[#allocation2 + $0x318] sm:$0xff]
    %v309 = vld [vmem:[#allocation2 + $0x320] sm:$0xff]
    %v310 = vpack.c.bf16 %v247, %v246
    %v311 = vpack.c.bf16 %v249, %v248
    %v312 = vpack.c.bf16 %v251, %v250
    %v313 = vpack.c.bf16 %v253, %v252
    %v314 = vpack.c.bf16 %v255, %v254
    %v315 = vpack.c.bf16 %v257, %v256
    %v316 = vpack.c.bf16 %v259, %v258
    %v317 = vpack.c.bf16 %v261, %v260
    %v318 = vpack.c.bf16 %v263, %v262
    %v319 = vpack.c.bf16 %v265, %v264
    %v320 = vpack.c.bf16 %v267, %v266
    %v321 = vpack.c.bf16 %v269, %v268
    %v322 = vpack.c.bf16 %v271, %v270
    %v323 = vpack.c.bf16 %v273, %v272
    %v324 = vpack.c.bf16 %v275, %v274
    %v325 = vpack.c.bf16 %v277, %v276
    %v326 = vpack.c.bf16 %v279, %v278
    %v327 = vpack.c.bf16 %v281, %v280
    %v328 = vpack.c.bf16 %v283, %v282
    %v329 = vpack.c.bf16 %v285, %v284
    %v330 = vpack.c.bf16 %v287, %v286
    %v331 = vpack.c.bf16 %v289, %v288
    %v332 = vpack.c.bf16 %v291, %v290
    %v333 = vpack.c.bf16 %v293, %v292
    %v334 = vpack.c.bf16 %v295, %v294
    %v335 = vpack.c.bf16 %v297, %v296
    %v336 = vpack.c.bf16 %v299, %v298
    %v337 = vpack.c.bf16 %v301, %v300
    %v338 = vpack.c.bf16 %v303, %v302
    %v339 = vpack.c.bf16 %v305, %v304
    %v340 = vpack.c.bf16 %v307, %v306
    %v341 = vpack.c.bf16 %v309, %v308
    %342 = vst.msk [vmem:[#allocation4] sm:$0xff] %vm28, %v310
    %343 = vst.msk [vmem:[#allocation4 + $0x8] sm:$0xff] %vm28, %v311
    %344 = vst.msk [vmem:[#allocation4 + $0x10] sm:$0xff] %vm28, %v312
    %345 = vst.msk [vmem:[#allocation4 + $0x18] sm:$0xff] %vm28, %v313
    %346 = vst.msk [vmem:[#allocation4 + $0x20] sm:$0xff] %vm28, %v314
    %347 = vst.msk [vmem:[#allocation4 + $0x28] sm:$0xff] %vm28, %v315
    %348 = vst.msk [vmem:[#allocation4 + $0x30] sm:$0xff] %vm28, %v316
    %349 = vst.msk [vmem:[#allocation4 + $0x38] sm:$0xff] %vm28, %v317
    %350 = vst.msk [vmem:[#allocation4 + $0x40] sm:$0xff] %vm28, %v318
    %351 = vst.msk [vmem:[#allocation4 + $0x48] sm:$0xff] %vm28, %v319
    %352 = vst.msk [vmem:[#allocation4 + $0x50] sm:$0xff] %vm28, %v320
    %353 = vst.msk [vmem:[#allocation4 + $0x58] sm:$0xff] %vm28, %v321
    %354 = vst.msk [vmem:[#allocation4 + $0x60] sm:$0xff] %vm28, %v322
    %355 = vst.msk [vmem:[#allocation4 + $0x68] sm:$0xff] %vm28, %v323
    %356 = vst.msk [vmem:[#allocation4 + $0x70] sm:$0xff] %vm28, %v324
    %357 = vst.msk [vmem:[#allocation4 + $0x78] sm:$0xff] %vm28, %v325
    %358 = vst.msk [vmem:[#allocation4 + $0x80] sm:$0xff] %vm28, %v326
    %359 = vst.msk [vmem:[#allocation4 + $0x88] sm:$0xff] %vm28, %v327
    %360 = vst.msk [vmem:[#allocation4 + $0x90] sm:$0xff] %vm28, %v328
    %361 = vst.msk [vmem:[#allocation4 + $0x98] sm:$0xff] %vm28, %v329
    %362 = vst.msk [vmem:[#allocation4 + $0xa0] sm:$0xff] %vm28, %v330
    %363 = vst.msk [vmem:[#allocation4 + $0xa8] sm:$0xff] %vm28, %v331
    %364 = vst.msk [vmem:[#allocation4 + $0xb0] sm:$0xff] %vm28, %v332
    %365 = vst.msk [vmem:[#allocation4 + $0xb8] sm:$0xff] %vm28, %v333
    %366 = vst.msk [vmem:[#allocation4 + $0xc0] sm:$0xff] %vm28, %v334
    %367 = vst.msk [vmem:[#allocation4 + $0xc8] sm:$0xff] %vm28, %v335
    %368 = vst.msk [vmem:[#allocation4 + $0xd0] sm:$0xff] %vm28, %v336
    %369 = vst.msk [vmem:[#allocation4 + $0xd8] sm:$0xff] %vm28, %v337
    %370 = vst.msk [vmem:[#allocation4 + $0xe0] sm:$0xff] %vm28, %v338
    %371 = vst.msk [vmem:[#allocation4 + $0xe8] sm:$0xff] %vm28, %v339
    %372 = vst.msk [vmem:[#allocation4 + $0xf0] sm:$0xff] %vm28, %v340
    %373 = vst.msk [vmem:[#allocation4 + $0xf8] sm:$0xff] %vm28, %v341
    %v374 = vld [vmem:[#allocation2 + $0x1] sm:$0xff]
    %v375 = vld [vmem:[#allocation2 + $0x9] sm:$0xff]
    %v376 = vld [vmem:[#allocation2 + $0x19] sm:$0xff]
    %v377 = vld [vmem:[#allocation2 + $0x21] sm:$0xff]
    %v378 = vld [vmem:[#allocation2 + $0x31] sm:$0xff]
    %v379 = vld [vmem:[#allocation2 + $0x39] sm:$0xff]
    %v380 = vld [vmem:[#allocation2 + $0x49] sm:$0xff]
    %v381 = vld [vmem:[#allocation2 + $0x51] sm:$0xff]
    %v382 = vld [vmem:[#allocation2 + $0x61] sm:$0xff]
    %v383 = vld [vmem:[#allocation2 + $0x69] sm:$0xff]
    %v384 = vld [vmem:[#allocation2 + $0x79] sm:$0xff]
    %v385 = vld [vmem:[#allocation2 + $0x81] sm:$0xff]
    %v386 = vld [vmem:[#allocation2 + $0x91] sm:$0xff]
    %v387 = vld [vmem:[#allocation2 + $0x99] sm:$0xff]
    %v388 = vld [vmem:[#allocation2 + $0xa9] sm:$0xff]
    %v389 = vld [vmem:[#allocation2 + $0xb1] sm:$0xff]
    %v390 = vld [vmem:[#allocation2 + $0xc1] sm:$0xff]
    %v391 = vld [vmem:[#allocation2 + $0xc9] sm:$0xff]
    %v392 = vld [vmem:[#allocation2 + $0xd9] sm:$0xff]
    %v393 = vld [vmem:[#allocation2 + $0xe1] sm:$0xff]
    %v394 = vld [vmem:[#allocation2 + $0xf1] sm:$0xff]
    %v395 = vld [vmem:[#allocation2 + $0xf9] sm:$0xff]
    %v396 = vld [vmem:[#allocation2 + $0x109] sm:$0xff]
    %v397 = vld [vmem:[#allocation2 + $0x111] sm:$0xff]
    %v398 = vld [vmem:[#allocation2 + $0x121] sm:$0xff]
    %v399 = vld [vmem:[#allocation2 + $0x129] sm:$0xff]
    %v400 = vld [vmem:[#allocation2 + $0x139] sm:$0xff]
    %v401 = vld [vmem:[#allocation2 + $0x141] sm:$0xff]
    %v402 = vld [vmem:[#allocation2 + $0x151] sm:$0xff]
    %v403 = vld [vmem:[#allocation2 + $0x159] sm:$0xff]
    %v404 = vld [vmem:[#allocation2 + $0x169] sm:$0xff]
    %v405 = vld [vmem:[#allocation2 + $0x171] sm:$0xff]
    %v406 = vld [vmem:[#allocation2 + $0x1b1] sm:$0xff]
    %v407 = vld [vmem:[#allocation2 + $0x1b9] sm:$0xff]
    %v408 = vld [vmem:[#allocation2 + $0x1c9] sm:$0xff]
    %v409 = vld [vmem:[#allocation2 + $0x1d1] sm:$0xff]
    %v410 = vld [vmem:[#allocation2 + $0x1e1] sm:$0xff]
    %v411 = vld [vmem:[#allocation2 + $0x1e9] sm:$0xff]
    %v412 = vld [vmem:[#allocation2 + $0x1f9] sm:$0xff]
    %v413 = vld [vmem:[#allocation2 + $0x201] sm:$0xff]
    %v414 = vld [vmem:[#allocation2 + $0x211] sm:$0xff]
    %v415 = vld [vmem:[#allocation2 + $0x219] sm:$0xff]
    %v416 = vld [vmem:[#allocation2 + $0x229] sm:$0xff]
    %v417 = vld [vmem:[#allocation2 + $0x231] sm:$0xff]
    %v418 = vld [vmem:[#allocation2 + $0x241] sm:$0xff]
    %v419 = vld [vmem:[#allocation2 + $0x249] sm:$0xff]
    %v420 = vld [vmem:[#allocation2 + $0x259] sm:$0xff]
    %v421 = vld [vmem:[#allocation2 + $0x261] sm:$0xff]
    %v422 = vld [vmem:[#allocation2 + $0x271] sm:$0xff]
    %v423 = vld [vmem:[#allocation2 + $0x279] sm:$0xff]
    %v424 = vld [vmem:[#allocation2 + $0x289] sm:$0xff]
    %v425 = vld [vmem:[#allocation2 + $0x291] sm:$0xff]
    %v426 = vld [vmem:[#allocation2 + $0x2a1] sm:$0xff]
    %v427 = vld [vmem:[#allocation2 + $0x2a9] sm:$0xff]
    %v428 = vld [vmem:[#allocation2 + $0x2b9] sm:$0xff]
    %v429 = vld [vmem:[#allocation2 + $0x2c1] sm:$0xff]
    %v430 = vld [vmem:[#allocation2 + $0x2d1] sm:$0xff]
    %v431 = vld [vmem:[#allocation2 + $0x2d9] sm:$0xff]
    %v432 = vld [vmem:[#allocation2 + $0x2e9] sm:$0xff]
    %v433 = vld [vmem:[#allocation2 + $0x2f1] sm:$0xff]
    %v434 = vld [vmem:[#allocation2 + $0x301] sm:$0xff]
    %v435 = vld [vmem:[#allocation2 + $0x309] sm:$0xff]
    %v436 = vld [vmem:[#allocation2 + $0x319] sm:$0xff]
    %v437 = vld [vmem:[#allocation2 + $0x321] sm:$0xff]
    %v438 = vpack.c.bf16 %v375, %v374
    %v439 = vpack.c.bf16 %v377, %v376
    %v440 = vpack.c.bf16 %v379, %v378
    %v441 = vpack.c.bf16 %v381, %v380
    %v442 = vpack.c.bf16 %v383, %v382
    %v443 = vpack.c.bf16 %v385, %v384
    %v444 = vpack.c.bf16 %v387, %v386
    %v445 = vpack.c.bf16 %v389, %v388
    %v446 = vpack.c.bf16 %v391, %v390
    %v447 = vpack.c.bf16 %v393, %v392
    %v448 = vpack.c.bf16 %v395, %v394
    %v449 = vpack.c.bf16 %v397, %v396
    %v450 = vpack.c.bf16 %v399, %v398
    %v451 = vpack.c.bf16 %v401, %v400
    %v452 = vpack.c.bf16 %v403, %v402
    %v453 = vpack.c.bf16 %v405, %v404
    %v454 = vpack.c.bf16 %v407, %v406
    %v455 = vpack.c.bf16 %v409, %v408
    %v456 = vpack.c.bf16 %v411, %v410
    %v457 = vpack.c.bf16 %v413, %v412
    %v458 = vpack.c.bf16 %v415, %v414
    %v459 = vpack.c.bf16 %v417, %v416
    %v460 = vpack.c.bf16 %v419, %v418
    %v461 = vpack.c.bf16 %v421, %v420
    %v462 = vpack.c.bf16 %v423, %v422
    %v463 = vpack.c.bf16 %v425, %v424
    %v464 = vpack.c.bf16 %v427, %v426
    %v465 = vpack.c.bf16 %v429, %v428
    %v466 = vpack.c.bf16 %v431, %v430
    %v467 = vpack.c.bf16 %v433, %v432
    %v468 = vpack.c.bf16 %v435, %v434
    %v469 = vpack.c.bf16 %v437, %v436
    %502 = vrot.lane.b32.xlu0 %v438, 8
    %v503 = vpop.permute.xlu0 %502
    %504 = vrot.lane.b32.xlu0 %v439, 8
    %v505 = vpop.permute.xlu0 %504
    %506 = vrot.lane.b32.xlu0 %v440, 8
    %v507 = vpop.permute.xlu0 %506
    %508 = vrot.lane.b32.xlu0 %v441, 8
    %v509 = vpop.permute.xlu0 %508
    %510 = vrot.lane.b32.xlu0 %v442, 8
    %v511 = vpop.permute.xlu0 %510
    %512 = vrot.lane.b32.xlu0 %v443, 8
    %v513 = vpop.permute.xlu0 %512
    %514 = vrot.lane.b32.xlu0 %v444, 8
    %v515 = vpop.permute.xlu0 %514
    %516 = vrot.lane.b32.xlu0 %v445, 8
    %v517 = vpop.permute.xlu0 %516
    %518 = vrot.lane.b32.xlu0 %v446, 8
    %v519 = vpop.permute.xlu0 %518
    %520 = vrot.lane.b32.xlu0 %v447, 8
    %v521 = vpop.permute.xlu0 %520
    %522 = vrot.lane.b32.xlu0 %v448, 8
    %v523 = vpop.permute.xlu0 %522
    %524 = vrot.lane.b32.xlu0 %v449, 8
    %v525 = vpop.permute.xlu0 %524
    %526 = vrot.lane.b32.xlu0 %v450, 8
    %v527 = vpop.permute.xlu0 %526
    %528 = vrot.lane.b32.xlu0 %v451, 8
    %v529 = vpop.permute.xlu0 %528
    %530 = vrot.lane.b32.xlu0 %v452, 8
    %v531 = vpop.permute.xlu0 %530
    %532 = vrot.lane.b32.xlu0 %v453, 8
    %v533 = vpop.permute.xlu0 %532
    %534 = vrot.lane.b32.xlu0 %v454, 8
    %v535 = vpop.permute.xlu0 %534
    %536 = vrot.lane.b32.xlu0 %v455, 8
    %v537 = vpop.permute.xlu0 %536
    %538 = vrot.lane.b32.xlu0 %v456, 8
    %v539 = vpop.permute.xlu0 %538
    %540 = vrot.lane.b32.xlu0 %v457, 8
    %v541 = vpop.permute.xlu0 %540
    %542 = vrot.lane.b32.xlu0 %v458, 8
    %v543 = vpop.permute.xlu0 %542
    %544 = vrot.lane.b32.xlu0 %v459, 8
    %v545 = vpop.permute.xlu0 %544
    %546 = vrot.lane.b32.xlu0 %v460, 8
    %v547 = vpop.permute.xlu0 %546
    %548 = vrot.lane.b32.xlu0 %v461, 8
    %v549 = vpop.permute.xlu0 %548
    %550 = vrot.lane.b32.xlu0 %v462, 8
    %v551 = vpop.permute.xlu0 %550
    %552 = vrot.lane.b32.xlu0 %v463, 8
    %v553 = vpop.permute.xlu0 %552
    %554 = vrot.lane.b32.xlu0 %v464, 8
    %v555 = vpop.permute.xlu0 %554
    %556 = vrot.lane.b32.xlu0 %v465, 8
    %v557 = vpop.permute.xlu0 %556
    %558 = vrot.lane.b32.xlu0 %v466, 8
    %v559 = vpop.permute.xlu0 %558
    %560 = vrot.lane.b32.xlu0 %v467, 8
    %v561 = vpop.permute.xlu0 %560
    %562 = vrot.lane.b32.xlu0 %v468, 8
    %v563 = vpop.permute.xlu0 %562
    %564 = vrot.lane.b32.xlu0 %v469, 8
    %v565 = vpop.permute.xlu0 %564
    %vm598 = vcmask 130112
    %599 = vst.msk [vmem:[#allocation4] sm:$0xff] %vm598, %v503
    %600 = vst.msk [vmem:[#allocation4 + $0x8] sm:$0xff] %vm598, %v505
    %601 = vst.msk [vmem:[#allocation4 + $0x10] sm:$0xff] %vm598, %v507
    %602 = vst.msk [vmem:[#allocation4 + $0x18] sm:$0xff] %vm598, %v509
    %603 = vst.msk [vmem:[#allocation4 + $0x20] sm:$0xff] %vm598, %v511
    %604 = vst.msk [vmem:[#allocation4 + $0x28] sm:$0xff] %vm598, %v513
    %605 = vst.msk [vmem:[#allocation4 + $0x30] sm:$0xff] %vm598, %v515
    %606 = vst.msk [vmem:[#allocation4 + $0x38] sm:$0xff] %vm598, %v517
    %607 = vst.msk [vmem:[#allocation4 + $0x40] sm:$0xff] %vm598, %v519
    %608 = vst.msk [vmem:[#allocation4 + $0x48] sm:$0xff] %vm598, %v521
    %609 = vst.msk [vmem:[#allocation4 + $0x50] sm:$0xff] %vm598, %v523
    %610 = vst.msk [vmem:[#allocation4 + $0x58] sm:$0xff] %vm598, %v525
    %611 = vst.msk [vmem:[#allocation4 + $0x60] sm:$0xff] %vm598, %v527
    %612 = vst.msk [vmem:[#allocation4 + $0x68] sm:$0xff] %vm598, %v529
    %613 = vst.msk [vmem:[#allocation4 + $0x70] sm:$0xff] %vm598, %v531
    %614 = vst.msk [vmem:[#allocation4 + $0x78] sm:$0xff] %vm598, %v533
    %615 = vst.msk [vmem:[#allocation4 + $0x80] sm:$0xff] %vm598, %v535
    %616 = vst.msk [vmem:[#allocation4 + $0x88] sm:$0xff] %vm598, %v537
    %617 = vst.msk [vmem:[#allocation4 + $0x90] sm:$0xff] %vm598, %v539
    %618 = vst.msk [vmem:[#allocation4 + $0x98] sm:$0xff] %vm598, %v541
    %619 = vst.msk [vmem:[#allocation4 + $0xa0] sm:$0xff] %vm598, %v543
    %620 = vst.msk [vmem:[#allocation4 + $0xa8] sm:$0xff] %vm598, %v545
    %621 = vst.msk [vmem:[#allocation4 + $0xb0] sm:$0xff] %vm598, %v547
    %622 = vst.msk [vmem:[#allocation4 + $0xb8] sm:$0xff] %vm598, %v549
    %623 = vst.msk [vmem:[#allocation4 + $0xc0] sm:$0xff] %vm598, %v551
    %624 = vst.msk [vmem:[#allocation4 + $0xc8] sm:$0xff] %vm598, %v553
    %625 = vst.msk [vmem:[#allocation4 + $0xd0] sm:$0xff] %vm598, %v555
    %626 = vst.msk [vmem:[#allocation4 + $0xd8] sm:$0xff] %vm598, %v557
    %627 = vst.msk [vmem:[#allocation4 + $0xe0] sm:$0xff] %vm598, %v559
    %628 = vst.msk [vmem:[#allocation4 + $0xe8] sm:$0xff] %vm598, %v561
    %629 = vst.msk [vmem:[#allocation4 + $0xf0] sm:$0xff] %vm598, %v563
    %630 = vst.msk [vmem:[#allocation4 + $0xf8] sm:$0xff] %vm598, %v565
    %v631 = vld [vmem:[#allocation2 + $0x2] sm:$0xff]
    %v632 = vld [vmem:[#allocation2 + $0xa] sm:$0xff]
    %v633 = vld [vmem:[#allocation2 + $0x1a] sm:$0xff]
    %v634 = vld [vmem:[#allocation2 + $0x22] sm:$0xff]
    %v635 = vld [vmem:[#allocation2 + $0x32] sm:$0xff]
    %v636 = vld [vmem:[#allocation2 + $0x3a] sm:$0xff]
    %v637 = vld [vmem:[#allocation2 + $0x4a] sm:$0xff]
    %v638 = vld [vmem:[#allocation2 + $0x52] sm:$0xff]
    %v639 = vld [vmem:[#allocation2 + $0x62] sm:$0xff]
    %v640 = vld [vmem:[#allocation2 + $0x6a] sm:$0xff]
    %v641 = vld [vmem:[#allocation2 + $0x7a] sm:$0xff]
    %v642 = vld [vmem:[#allocation2 + $0x82] sm:$0xff]
    %v643 = vld [vmem:[#allocation2 + $0x92] sm:$0xff]
    %v644 = vld [vmem:[#allocation2 + $0x9a] sm:$0xff]
    %v645 = vld [vmem:[#allocation2 + $0xaa] sm:$0xff]
    %v646 = vld [vmem:[#allocation2 + $0xb2] sm:$0xff]
    %v647 = vld [vmem:[#allocation2 + $0xc2] sm:$0xff]
    %v648 = vld [vmem:[#allocation2 + $0xca] sm:$0xff]
    %v649 = vld [vmem:[#allocation2 + $0xda] sm:$0xff]
    %v650 = vld [vmem:[#allocation2 + $0xe2] sm:$0xff]
    %v651 = vld [vmem:[#allocation2 + $0xf2] sm:$0xff]
    %v652 = vld [vmem:[#allocation2 + $0xfa] sm:$0xff]
    %v653 = vld [vmem:[#allocation2 + $0x10a] sm:$0xff]
    %v654 = vld [vmem:[#allocation2 + $0x112] sm:$0xff]
    %v655 = vld [vmem:[#allocation2 + $0x122] sm:$0xff]
    %v656 = vld [vmem:[#allocation2 + $0x12a] sm:$0xff]
    %v657 = vld [vmem:[#allocation2 + $0x13a] sm:$0xff]
    %v658 = vld [vmem:[#allocation2 + $0x142] sm:$0xff]
    %v659 = vld [vmem:[#allocation2 + $0x152] sm:$0xff]
    %v660 = vld [vmem:[#allocation2 + $0x15a] sm:$0xff]
    %v661 = vld [vmem:[#allocation2 + $0x16a] sm:$0xff]
    %v662 = vld [vmem:[#allocation2 + $0x172] sm:$0xff]
    %v663 = vld [vmem:[#allocation2 + $0x1b2] sm:$0xff]
    %v664 = vld [vmem:[#allocation2 + $0x1ba] sm:$0xff]
    %v665 = vld [vmem:[#allocation2 + $0x1ca] sm:$0xff]
    %v666 = vld [vmem:[#allocation2 + $0x1d2] sm:$0xff]
    %v667 = vld [vmem:[#allocation2 + $0x1e2] sm:$0xff]
    %v668 = vld [vmem:[#allocation2 + $0x1ea] sm:$0xff]
    %v669 = vld [vmem:[#allocation2 + $0x1fa] sm:$0xff]
    %v670 = vld [vmem:[#allocation2 + $0x202] sm:$0xff]
    %v671 = vld [vmem:[#allocation2 + $0x212] sm:$0xff]
    %v672 = vld [vmem:[#allocation2 + $0x21a] sm:$0xff]
    %v673 = vld [vmem:[#allocation2 + $0x22a] sm:$0xff]
    %v674 = vld [vmem:[#allocation2 + $0x232] sm:$0xff]
    %v675 = vld [vmem:[#allocation2 + $0x242] sm:$0xff]
    %v676 = vld [vmem:[#allocation2 + $0x24a] sm:$0xff]
    %v677 = vld [vmem:[#allocation2 + $0x25a] sm:$0xff]
    %v678 = vld [vmem:[#allocation2 + $0x262] sm:$0xff]
    %v679 = vld [vmem:[#allocation2 + $0x272] sm:$0xff]
    %v680 = vld [vmem:[#allocation2 + $0x27a] sm:$0xff]
    %v681 = vld [vmem:[#allocation2 + $0x28a] sm:$0xff]
    %v682 = vld [vmem:[#allocation2 + $0x292] sm:$0xff]
    %v683 = vld [vmem:[#allocation2 + $0x2a2] sm:$0xff]
    %v684 = vld [vmem:[#allocation2 + $0x2aa] sm:$0xff]
    %v685 = vld [vmem:[#allocation2 + $0x2ba] sm:$0xff]
    %v686 = vld [vmem:[#allocation2 + $0x2c2] sm:$0xff]
    %v687 = vld [vmem:[#allocation2 + $0x2d2] sm:$0xff]
    %v688 = vld [vmem:[#allocation2 + $0x2da] sm:$0xff]
    %v689 = vld [vmem:[#allocation2 + $0x2ea] sm:$0xff]
    %v690 = vld [vmem:[#allocation2 + $0x2f2] sm:$0xff]
    %v691 = vld [vmem:[#allocation2 + $0x302] sm:$0xff]
    %v692 = vld [vmem:[#allocation2 + $0x30a] sm:$0xff]
    %v693 = vld [vmem:[#allocation2 + $0x31a] sm:$0xff]
    %v694 = vld [vmem:[#allocation2 + $0x322] sm:$0xff]
    %v695 = vpack.c.bf16 %v632, %v631
    %v696 = vpack.c.bf16 %v634, %v633
    %v697 = vpack.c.bf16 %v636, %v635
    %v698 = vpack.c.bf16 %v638, %v637
    %v699 = vpack.c.bf16 %v640, %v639
    %v700 = vpack.c.bf16 %v642, %v641
    %v701 = vpack.c.bf16 %v644, %v643
    %v702 = vpack.c.bf16 %v646, %v645
    %v703 = vpack.c.bf16 %v648, %v647
    %v704 = vpack.c.bf16 %v650, %v649
    %v705 = vpack.c.bf16 %v652, %v651
    %v706 = vpack.c.bf16 %v654, %v653
    %v707 = vpack.c.bf16 %v656, %v655
    %v708 = vpack.c.bf16 %v658, %v657
    %v709 = vpack.c.bf16 %v660, %v659
    %v710 = vpack.c.bf16 %v662, %v661
    %v711 = vpack.c.bf16 %v664, %v663
    %v712 = vpack.c.bf16 %v666, %v665
    %v713 = vpack.c.bf16 %v668, %v667
    %v714 = vpack.c.bf16 %v670, %v669
    %v715 = vpack.c.bf16 %v672, %v671
    %v716 = vpack.c.bf16 %v674, %v673
    %v717 = vpack.c.bf16 %v676, %v675
    %v718 = vpack.c.bf16 %v678, %v677
    %v719 = vpack.c.bf16 %v680, %v679
    %v720 = vpack.c.bf16 %v682, %v681
    %v721 = vpack.c.bf16 %v684, %v683
    %v722 = vpack.c.bf16 %v686, %v685
    %v723 = vpack.c.bf16 %v688, %v687
    %v724 = vpack.c.bf16 %v690, %v689
    %v725 = vpack.c.bf16 %v692, %v691
    %v726 = vpack.c.bf16 %v694, %v693
    %759 = vrot.lane.b32.xlu0 %v695, 16
    %v760 = vpop.permute.xlu0 %759
    %761 = vrot.lane.b32.xlu0 %v696, 16
    %v762 = vpop.permute.xlu0 %761
    %763 = vrot.lane.b32.xlu0 %v697, 16
    %v764 = vpop.permute.xlu0 %763
    %765 = vrot.lane.b32.xlu0 %v698, 16
    %v766 = vpop.permute.xlu0 %765
    %767 = vrot.lane.b32.xlu0 %v699, 16
    %v768 = vpop.permute.xlu0 %767
    %769 = vrot.lane.b32.xlu0 %v700, 16
    %v770 = vpop.permute.xlu0 %769
    %771 = vrot.lane.b32.xlu0 %v701, 16
    %v772 = vpop.permute.xlu0 %771
    %773 = vrot.lane.b32.xlu0 %v702, 16
    %v774 = vpop.permute.xlu0 %773
    %775 = vrot.lane.b32.xlu0 %v703, 16
    %v776 = vpop.permute.xlu0 %775
    %777 = vrot.lane.b32.xlu0 %v704, 16
    %v778 = vpop.permute.xlu0 %777
    %779 = vrot.lane.b32.xlu0 %v705, 16
    %v780 = vpop.permute.xlu0 %779
    %781 = vrot.lane.b32.xlu0 %v706, 16
    %v782 = vpop.permute.xlu0 %781
    %783 = vrot.lane.b32.xlu0 %v707, 16
    %v784 = vpop.permute.xlu0 %783
    %785 = vrot.lane.b32.xlu0 %v708, 16
    %v786 = vpop.permute.xlu0 %785
    %787 = vrot.lane.b32.xlu0 %v709, 16
    %v788 = vpop.permute.xlu0 %787
    %789 = vrot.lane.b32.xlu0 %v710, 16
    %v790 = vpop.permute.xlu0 %789
    %791 = vrot.lane.b32.xlu0 %v711, 16
    %v792 = vpop.permute.xlu0 %791
    %793 = vrot.lane.b32.xlu0 %v712, 16
    %v794 = vpop.permute.xlu0 %793
    %795 = vrot.lane.b32.xlu0 %v713, 16
    %v796 = vpop.permute.xlu0 %795
    %797 = vrot.lane.b32.xlu0 %v714, 16
    %v798 = vpop.permute.xlu0 %797
    %799 = vrot.lane.b32.xlu0 %v715, 16
    %v800 = vpop.permute.xlu0 %799
    %801 = vrot.lane.b32.xlu0 %v716, 16
    %v802 = vpop.permute.xlu0 %801
    %803 = vrot.lane.b32.xlu0 %v717, 16
    %v804 = vpop.permute.xlu0 %803
    %805 = vrot.lane.b32.xlu0 %v718, 16
    %v806 = vpop.permute.xlu0 %805
    %807 = vrot.lane.b32.xlu0 %v719, 16
    %v808 = vpop.permute.xlu0 %807
    %809 = vrot.lane.b32.xlu0 %v720, 16
    %v810 = vpop.permute.xlu0 %809
    %811 = vrot.lane.b32.xlu0 %v721, 16
    %v812 = vpop.permute.xlu0 %811
    %813 = vrot.lane.b32.xlu0 %v722, 16
    %v814 = vpop.permute.xlu0 %813
    %815 = vrot.lane.b32.xlu0 %v723, 16
    %v816 = vpop.permute.xlu0 %815
    %817 = vrot.lane.b32.xlu0 %v724, 16
    %v818 = vpop.permute.xlu0 %817
    %819 = vrot.lane.b32.xlu0 %v725, 16
    %v820 = vpop.permute.xlu0 %819
    %821 = vrot.lane.b32.xlu0 %v726, 16
    %v822 = vpop.permute.xlu0 %821
    %vm855 = vcmask 195712
    %856 = vst.msk [vmem:[#allocation4] sm:$0xff] %vm855, %v760
    %857 = vst.msk [vmem:[#allocation4 + $0x8] sm:$0xff] %vm855, %v762
    %858 = vst.msk [vmem:[#allocation4 + $0x10] sm:$0xff] %vm855, %v764
    %859 = vst.msk [vmem:[#allocation4 + $0x18] sm:$0xff] %vm855, %v766
    %860 = vst.msk [vmem:[#allocation4 + $0x20] sm:$0xff] %vm855, %v768
    %861 = vst.msk [vmem:[#allocation4 + $0x28] sm:$0xff] %vm855, %v770
    %862 = vst.msk [vmem:[#allocation4 + $0x30] sm:$0xff] %vm855, %v772
    %863 = vst.msk [vmem:[#allocation4 + $0x38] sm:$0xff] %vm855, %v774
    %864 = vst.msk [vmem:[#allocation4 + $0x40] sm:$0xff] %vm855, %v776
    %865 = vst.msk [vmem:[#allocation4 + $0x48] sm:$0xff] %vm855, %v778
    %866 = vst.msk [vmem:[#allocation4 + $0x50] sm:$0xff] %vm855, %v780
    %867 = vst.msk [vmem:[#allocation4 + $0x58] sm:$0xff] %vm855, %v782
    %868 = vst.msk [vmem:[#allocation4 + $0x60] sm:$0xff] %vm855, %v784
    %869 = vst.msk [vmem:[#allocation4 + $0x68] sm:$0xff] %vm855, %v786
    %870 = vst.msk [vmem:[#allocation4 + $0x70] sm:$0xff] %vm855, %v788
    %871 = vst.msk [vmem:[#allocation4 + $0x78] sm:$0xff] %vm855, %v790
    %872 = vst.msk [vmem:[#allocation4 + $0x80] sm:$0xff] %vm855, %v792
    %873 = vst.msk [vmem:[#allocation4 + $0x88] sm:$0xff] %vm855, %v794
    %874 = vst.msk [vmem:[#allocation4 + $0x90] sm:$0xff] %vm855, %v796
    %875 = vst.msk [vmem:[#allocation4 + $0x98] sm:$0xff] %vm855, %v798
    %876 = vst.msk [vmem:[#allocation4 + $0xa0] sm:$0xff] %vm855, %v800
    %877 = vst.msk [vmem:[#allocation4 + $0xa8] sm:$0xff] %vm855, %v802
    %878 = vst.msk [vmem:[#allocation4 + $0xb0] sm:$0xff] %vm855, %v804
    %879 = vst.msk [vmem:[#allocation4 + $0xb8] sm:$0xff] %vm855, %v806
    %880 = vst.msk [vmem:[#allocation4 + $0xc0] sm:$0xff] %vm855, %v808
    %881 = vst.msk [vmem:[#allocation4 + $0xc8] sm:$0xff] %vm855, %v810
    %882 = vst.msk [vmem:[#allocation4 + $0xd0] sm:$0xff] %vm855, %v812
    %883 = vst.msk [vmem:[#allocation4 + $0xd8] sm:$0xff] %vm855, %v814
    %884 = vst.msk [vmem:[#allocation4 + $0xe0] sm:$0xff] %vm855, %v816
    %885 = vst.msk [vmem:[#allocation4 + $0xe8] sm:$0xff] %vm855, %v818
    %886 = vst.msk [vmem:[#allocation4 + $0xf0] sm:$0xff] %vm855, %v820
    %887 = vst.msk [vmem:[#allocation4 + $0xf8] sm:$0xff] %vm855, %v822
    %v888 = vld [vmem:[%s180] sm:$0xff]
    %v889 = vld [vmem:[%s180 + $0x8] sm:$0xff]
    %v890 = vld [vmem:[%s180 + $0x18] sm:$0xff]
    %v891 = vld [vmem:[%s180 + $0x20] sm:$0xff]
    %v892 = vld [vmem:[%s180 + $0x30] sm:$0xff]
    %v893 = vld [vmem:[%s180 + $0x38] sm:$0xff]
    %v894 = vld [vmem:[%s180 + $0x48] sm:$0xff]
    %v895 = vld [vmem:[%s180 + $0x50] sm:$0xff]
    %v896 = vld [vmem:[%s180 + $0x60] sm:$0xff]
    %v897 = vld [vmem:[%s180 + $0x68] sm:$0xff]
    %v898 = vld [vmem:[%s180 + $0x78] sm:$0xff]
    %v899 = vld [vmem:[%s180 + $0x80] sm:$0xff]
    %v900 = vld [vmem:[%s180 + $0x90] sm:$0xff]
    %v901 = vld [vmem:[%s180 + $0x98] sm:$0xff]
    %v902 = vld [vmem:[%s180 + $0xa8] sm:$0xff]
    %v903 = vld [vmem:[%s180 + $0xb0] sm:$0xff]
    %v904 = vld [vmem:[%s180 + $0xc0] sm:$0xff]
    %v905 = vld [vmem:[%s180 + $0xc8] sm:$0xff]
    %v906 = vld [vmem:[%s180 + $0xd8] sm:$0xff]
    %v907 = vld [vmem:[%s180 + $0xe0] sm:$0xff]
    %v908 = vld [vmem:[%s180 + $0xf0] sm:$0xff]
    %v909 = vld [vmem:[%s180 + $0xf8] sm:$0xff]
    %v910 = vld [vmem:[%s180 + $0x108] sm:$0xff]
    %v911 = vld [vmem:[%s180 + $0x110] sm:$0xff]
    %v912 = vld [vmem:[%s180 + $0x120] sm:$0xff]
    %v913 = vld [vmem:[%s180 + $0x128] sm:$0xff]
    %v914 = vld [vmem:[%s180 + $0x138] sm:$0xff]
    %v915 = vld [vmem:[%s180 + $0x140] sm:$0xff]
    %v916 = vld [vmem:[%s180 + $0x150] sm:$0xff]
    %v917 = vld [vmem:[%s180 + $0x158] sm:$0xff]
    %v918 = vld [vmem:[%s180 + $0x168] sm:$0xff]
    %v919 = vld [vmem:[%s180 + $0x170] sm:$0xff]
    %v920 = vld [vmem:[%s180 + $0x1b0] sm:$0xff]
    %v921 = vld [vmem:[%s180 + $0x1b8] sm:$0xff]
    %v922 = vld [vmem:[%s180 + $0x1c8] sm:$0xff]
    %v923 = vld [vmem:[%s180 + $0x1d0] sm:$0xff]
    %v924 = vld [vmem:[%s180 + $0x1e0] sm:$0xff]
    %v925 = vld [vmem:[%s180 + $0x1e8] sm:$0xff]
    %v926 = vld [vmem:[%s180 + $0x1f8] sm:$0xff]
    %v927 = vld [vmem:[%s180 + $0x200] sm:$0xff]
    %v928 = vld [vmem:[%s180 + $0x210] sm:$0xff]
    %v929 = vld [vmem:[%s180 + $0x218] sm:$0xff]
    %v930 = vld [vmem:[%s180 + $0x228] sm:$0xff]
    %v931 = vld [vmem:[%s180 + $0x230] sm:$0xff]
    %v932 = vld [vmem:[%s180 + $0x240] sm:$0xff]
    %v933 = vld [vmem:[%s180 + $0x248] sm:$0xff]
    %v934 = vld [vmem:[%s180 + $0x258] sm:$0xff]
    %v935 = vld [vmem:[%s180 + $0x260] sm:$0xff]
    %v936 = vld [vmem:[%s180 + $0x270] sm:$0xff]
    %v937 = vld [vmem:[%s180 + $0x278] sm:$0xff]
    %v938 = vld [vmem:[%s180 + $0x288] sm:$0xff]
    %v939 = vld [vmem:[%s180 + $0x290] sm:$0xff]
    %v940 = vld [vmem:[%s180 + $0x2a0] sm:$0xff]
    %v941 = vld [vmem:[%s180 + $0x2a8] sm:$0xff]
    %v942 = vld [vmem:[%s180 + $0x2b8] sm:$0xff]
    %v943 = vld [vmem:[%s180 + $0x2c0] sm:$0xff]
    %v944 = vld [vmem:[%s180 + $0x2d0] sm:$0xff]
    %v945 = vld [vmem:[%s180 + $0x2d8] sm:$0xff]
    %v946 = vld [vmem:[%s180 + $0x2e8] sm:$0xff]
    %v947 = vld [vmem:[%s180 + $0x2f0] sm:$0xff]
    %v948 = vld [vmem:[%s180 + $0x300] sm:$0xff]
    %v949 = vld [vmem:[%s180 + $0x308] sm:$0xff]
    %v950 = vld [vmem:[%s180 + $0x318] sm:$0xff]
    %v951 = vld [vmem:[%s180 + $0x320] sm:$0xff]
    %v952 = vpack.c.bf16 %v889, %v888
    %v953 = vpack.c.bf16 %v891, %v890
    %v954 = vpack.c.bf16 %v893, %v892
    %v955 = vpack.c.bf16 %v895, %v894
    %v956 = vpack.c.bf16 %v897, %v896
    %v957 = vpack.c.bf16 %v899, %v898
    %v958 = vpack.c.bf16 %v901, %v900
    %v959 = vpack.c.bf16 %v903, %v902
    %v960 = vpack.c.bf16 %v905, %v904
    %v961 = vpack.c.bf16 %v907, %v906
    %v962 = vpack.c.bf16 %v909, %v908
    %v963 = vpack.c.bf16 %v911, %v910
    %v964 = vpack.c.bf16 %v913, %v912
    %v965 = vpack.c.bf16 %v915, %v914
    %v966 = vpack.c.bf16 %v917, %v916
    %v967 = vpack.c.bf16 %v919, %v918
    %v968 = vpack.c.bf16 %v921, %v920
    %v969 = vpack.c.bf16 %v923, %v922
    %v970 = vpack.c.bf16 %v925, %v924
    %v971 = vpack.c.bf16 %v927, %v926
    %v972 = vpack.c.bf16 %v929, %v928
    %v973 = vpack.c.bf16 %v931, %v930
    %v974 = vpack.c.bf16 %v933, %v932
    %v975 = vpack.c.bf16 %v935, %v934
    %v976 = vpack.c.bf16 %v937, %v936
    %v977 = vpack.c.bf16 %v939, %v938
    %v978 = vpack.c.bf16 %v941, %v940
    %v979 = vpack.c.bf16 %v943, %v942
    %v980 = vpack.c.bf16 %v945, %v944
    %v981 = vpack.c.bf16 %v947, %v946
    %v982 = vpack.c.bf16 %v949, %v948
    %v983 = vpack.c.bf16 %v951, %v950
    %1016 = vrot.lane.b32.xlu0 %v952, 24
    %v1017 = vpop.permute.xlu0 %1016
    %1018 = vrot.lane.b32.xlu0 %v953, 24
    %v1019 = vpop.permute.xlu0 %1018
    %1020 = vrot.lane.b32.xlu0 %v954, 24
    %v1021 = vpop.permute.xlu0 %1020
    %1022 = vrot.lane.b32.xlu0 %v955, 24
    %v1023 = vpop.permute.xlu0 %1022
    %1024 = vrot.lane.b32.xlu0 %v956, 24
    %v1025 = vpop.permute.xlu0 %1024
    %1026 = vrot.lane.b32.xlu0 %v957, 24
    %v1027 = vpop.permute.xlu0 %1026
    %1028 = vrot.lane.b32.xlu0 %v958, 24
    %v1029 = vpop.permute.xlu0 %1028
    %1030 = vrot.lane.b32.xlu0 %v959, 24
    %v1031 = vpop.permute.xlu0 %1030
    %1032 = vrot.lane.b32.xlu0 %v960, 24
    %v1033 = vpop.permute.xlu0 %1032
    %1034 = vrot.lane.b32.xlu0 %v961, 24
    %v1035 = vpop.permute.xlu0 %1034
    %1036 = vrot.lane.b32.xlu0 %v962, 24
    %v1037 = vpop.permute.xlu0 %1036
    %1038 = vrot.lane.b32.xlu0 %v963, 24
    %v1039 = vpop.permute.xlu0 %1038
    %1040 = vrot.lane.b32.xlu0 %v964, 24
    %v1041 = vpop.permute.xlu0 %1040
    %1042 = vrot.lane.b32.xlu0 %v965, 24
    %v1043 = vpop.permute.xlu0 %1042
    %1044 = vrot.lane.b32.xlu0 %v966, 24
    %v1045 = vpop.permute.xlu0 %1044
    %1046 = vrot.lane.b32.xlu0 %v967, 24
    %v1047 = vpop.permute.xlu0 %1046
    %1048 = vrot.lane.b32.xlu0 %v968, 24
    %v1049 = vpop.permute.xlu0 %1048
    %1050 = vrot.lane.b32.xlu0 %v969, 24
    %v1051 = vpop.permute.xlu0 %1050
    %1052 = vrot.lane.b32.xlu0 %v970, 24
    %v1053 = vpop.permute.xlu0 %1052
    %1054 = vrot.lane.b32.xlu0 %v971, 24
    %v1055 = vpop.permute.xlu0 %1054
    %1056 = vrot.lane.b32.xlu0 %v972, 24
    %v1057 = vpop.permute.xlu0 %1056
    %1058 = vrot.lane.b32.xlu0 %v973, 24
    %v1059 = vpop.permute.xlu0 %1058
    %1060 = vrot.lane.b32.xlu0 %v974, 24
    %v1061 = vpop.permute.xlu0 %1060
    %1062 = vrot.lane.b32.xlu0 %v975, 24
    %v1063 = vpop.permute.xlu0 %1062
    %1064 = vrot.lane.b32.xlu0 %v976, 24
    %v1065 = vpop.permute.xlu0 %1064
    %1066 = vrot.lane.b32.xlu0 %v977, 24
    %v1067 = vpop.permute.xlu0 %1066
    %1068 = vrot.lane.b32.xlu0 %v978, 24
    %v1069 = vpop.permute.xlu0 %1068
    %1070 = vrot.lane.b32.xlu0 %v979, 24
    %v1071 = vpop.permute.xlu0 %1070
    %1072 = vrot.lane.b32.xlu0 %v980, 24
    %v1073 = vpop.permute.xlu0 %1072
    %1074 = vrot.lane.b32.xlu0 %v981, 24
    %v1075 = vpop.permute.xlu0 %1074
    %1076 = vrot.lane.b32.xlu0 %v982, 24
    %v1077 = vpop.permute.xlu0 %1076
    %1078 = vrot.lane.b32.xlu0 %v983, 24
    %v1079 = vpop.permute.xlu0 %1078
    %vm1112 = vcmask 261312
    %1113 = vst.msk [vmem:[#allocation4] sm:$0xff] %vm1112, %v1017
    %1114 = vst.msk [vmem:[#allocation4 + $0x8] sm:$0xff] %vm1112, %v1019
    %1115 = vst.msk [vmem:[#allocation4 + $0x10] sm:$0xff] %vm1112, %v1021
    %1116 = vst.msk [vmem:[#allocation4 + $0x18] sm:$0xff] %vm1112, %v1023
    %1117 = vst.msk [vmem:[#allocation4 + $0x20] sm:$0xff] %vm1112, %v1025
    %1118 = vst.msk [vmem:[#allocation4 + $0x28] sm:$0xff] %vm1112, %v1027
    %1119 = vst.msk [vmem:[#allocation4 + $0x30] sm:$0xff] %vm1112, %v1029
    %1120 = vst.msk [vmem:[#allocation4 + $0x38] sm:$0xff] %vm1112, %v1031
    %1121 = vst.msk [vmem:[#allocation4 + $0x40] sm:$0xff] %vm1112, %v1033
    %1122 = vst.msk [vmem:[#allocation4 + $0x48] sm:$0xff] %vm1112, %v1035
    %1123 = vst.msk [vmem:[#allocation4 + $0x50] sm:$0xff] %vm1112, %v1037
    %1124 = vst.msk [vmem:[#allocation4 + $0x58] sm:$0xff] %vm1112, %v1039
    %1125 = vst.msk [vmem:[#allocation4 + $0x60] sm:$0xff] %vm1112, %v1041
    %1126 = vst.msk [vmem:[#allocation4 + $0x68] sm:$0xff] %vm1112, %v1043
    %1127 = vst.msk [vmem:[#allocation4 + $0x70] sm:$0xff] %vm1112, %v1045
    %1128 = vst.msk [vmem:[#allocation4 + $0x78] sm:$0xff] %vm1112, %v1047
    %1129 = vst.msk [vmem:[#allocation4 + $0x80] sm:$0xff] %vm1112, %v1049
    %1130 = vst.msk [vmem:[#allocation4 + $0x88] sm:$0xff] %vm1112, %v1051
    %1131 = vst.msk [vmem:[#allocation4 + $0x90] sm:$0xff] %vm1112, %v1053
    %1132 = vst.msk [vmem:[#allocation4 + $0x98] sm:$0xff] %vm1112, %v1055
    %1133 = vst.msk [vmem:[#allocation4 + $0xa0] sm:$0xff] %vm1112, %v1057
    %1134 = vst.msk [vmem:[#allocation4 + $0xa8] sm:$0xff] %vm1112, %v1059
    %1135 = vst.msk [vmem:[#allocation4 + $0xb0] sm:$0xff] %vm1112, %v1061
    %1136 = vst.msk [vmem:[#allocation4 + $0xb8] sm:$0xff] %vm1112, %v1063
    %1137 = vst.msk [vmem:[#allocation4 + $0xc0] sm:$0xff] %vm1112, %v1065
    %1138 = vst.msk [vmem:[#allocation4 + $0xc8] sm:$0xff] %vm1112, %v1067
    %1139 = vst.msk [vmem:[#allocation4 + $0xd0] sm:$0xff] %vm1112, %v1069
    %1140 = vst.msk [vmem:[#allocation4 + $0xd8] sm:$0xff] %vm1112, %v1071
    %1141 = vst.msk [vmem:[#allocation4 + $0xe0] sm:$0xff] %vm1112, %v1073
    %1142 = vst.msk [vmem:[#allocation4 + $0xe8] sm:$0xff] %vm1112, %v1075
    %1143 = vst.msk [vmem:[#allocation4 + $0xf0] sm:$0xff] %vm1112, %v1077
    %1144 = vst.msk [vmem:[#allocation4 + $0xf8] sm:$0xff] %vm1112, %v1079
    %v1145 = vld [vmem:[%s180 + $0x1] sm:$0xff]
    %v1146 = vld [vmem:[%s180 + $0x9] sm:$0xff]
    %v1147 = vld [vmem:[%s180 + $0x19] sm:$0xff]
    %v1148 = vld [vmem:[%s180 + $0x21] sm:$0xff]
    %v1149 = vld [vmem:[%s180 + $0x31] sm:$0xff]
    %v1150 = vld [vmem:[%s180 + $0x39] sm:$0xff]
    %v1151 = vld [vmem:[%s180 + $0x49] sm:$0xff]
    %v1152 = vld [vmem:[%s180 + $0x51] sm:$0xff]
    %v1153 = vld [vmem:[%s180 + $0x61] sm:$0xff]
    %v1154 = vld [vmem:[%s180 + $0x69] sm:$0xff]
    %v1155 = vld [vmem:[%s180 + $0x79] sm:$0xff]
    %v1156 = vld [vmem:[%s180 + $0x81] sm:$0xff]
    %v1157 = vld [vmem:[%s180 + $0x91] sm:$0xff]
    %v1158 = vld [vmem:[%s180 + $0x99] sm:$0xff]
    %v1159 = vld [vmem:[%s180 + $0xa9] sm:$0xff]
    %v1160 = vld [vmem:[%s180 + $0xb1] sm:$0xff]
    %v1161 = vld [vmem:[%s180 + $0xc1] sm:$0xff]
    %v1162 = vld [vmem:[%s180 + $0xc9] sm:$0xff]
    %v1163 = vld [vmem:[%s180 + $0xd9] sm:$0xff]
    %v1164 = vld [vmem:[%s180 + $0xe1] sm:$0xff]
    %v1165 = vld [vmem:[%s180 + $0xf1] sm:$0xff]
    %v1166 = vld [vmem:[%s180 + $0xf9] sm:$0xff]
    %v1167 = vld [vmem:[%s180 + $0x109] sm:$0xff]
    %v1168 = vld [vmem:[%s180 + $0x111] sm:$0xff]
    %v1169 = vld [vmem:[%s180 + $0x121] sm:$0xff]
    %v1170 = vld [vmem:[%s180 + $0x129] sm:$0xff]
    %v1171 = vld [vmem:[%s180 + $0x139] sm:$0xff]
    %v1172 = vld [vmem:[%s180 + $0x141] sm:$0xff]
    %v1173 = vld [vmem:[%s180 + $0x151] sm:$0xff]
    %v1174 = vld [vmem:[%s180 + $0x159] sm:$0xff]
    %v1175 = vld [vmem:[%s180 + $0x169] sm:$0xff]
    %v1176 = vld [vmem:[%s180 + $0x171] sm:$0xff]
    %v1177 = vld [vmem:[%s180 + $0x1b1] sm:$0xff]
    %v1178 = vld [vmem:[%s180 + $0x1b9] sm:$0xff]
    %v1179 = vld [vmem:[%s180 + $0x1c9] sm:$0xff]
    %v1180 = vld [vmem:[%s180 + $0x1d1] sm:$0xff]
    %v1181 = vld [vmem:[%s180 + $0x1e1] sm:$0xff]
    %v1182 = vld [vmem:[%s180 + $0x1e9] sm:$0xff]
    %v1183 = vld [vmem:[%s180 + $0x1f9] sm:$0xff]
    %v1184 = vld [vmem:[%s180 + $0x201] sm:$0xff]
    %v1185 = vld [vmem:[%s180 + $0x211] sm:$0xff]
    %v1186 = vld [vmem:[%s180 + $0x219] sm:$0xff]
    %v1187 = vld [vmem:[%s180 + $0x229] sm:$0xff]
    %v1188 = vld [vmem:[%s180 + $0x231] sm:$0xff]
    %v1189 = vld [vmem:[%s180 + $0x241] sm:$0xff]
    %v1190 = vld [vmem:[%s180 + $0x249] sm:$0xff]
    %v1191 = vld [vmem:[%s180 + $0x259] sm:$0xff]
    %v1192 = vld [vmem:[%s180 + $0x261] sm:$0xff]
    %v1193 = vld [vmem:[%s180 + $0x271] sm:$0xff]
    %v1194 = vld [vmem:[%s180 + $0x279] sm:$0xff]
    %v1195 = vld [vmem:[%s180 + $0x289] sm:$0xff]
    %v1196 = vld [vmem:[%s180 + $0x291] sm:$0xff]
    %v1197 = vld [vmem:[%s180 + $0x2a1] sm:$0xff]
    %v1198 = vld [vmem:[%s180 + $0x2a9] sm:$0xff]
    %v1199 = vld [vmem:[%s180 + $0x2b9] sm:$0xff]
    %v1200 = vld [vmem:[%s180 + $0x2c1] sm:$0xff]
    %v1201 = vld [vmem:[%s180 + $0x2d1] sm:$0xff]
    %v1202 = vld [vmem:[%s180 + $0x2d9] sm:$0xff]
    %v1203 = vld [vmem:[%s180 + $0x2e9] sm:$0xff]
    %v1204 = vld [vmem:[%s180 + $0x2f1] sm:$0xff]
    %v1205 = vld [vmem:[%s180 + $0x301] sm:$0xff]
    %v1206 = vld [vmem:[%s180 + $0x309] sm:$0xff]
    %v1207 = vld [vmem:[%s180 + $0x319] sm:$0xff]
    %v1208 = vld [vmem:[%s180 + $0x321] sm:$0xff]
    %v1209 = vpack.c.bf16 %v1146, %v1145
    %v1210 = vpack.c.bf16 %v1148, %v1147
    %v1211 = vpack.c.bf16 %v1150, %v1149
    %v1212 = vpack.c.bf16 %v1152, %v1151
    %v1213 = vpack.c.bf16 %v1154, %v1153
    %v1214 = vpack.c.bf16 %v1156, %v1155
    %v1215 = vpack.c.bf16 %v1158, %v1157
    %v1216 = vpack.c.bf16 %v1160, %v1159
    %v1217 = vpack.c.bf16 %v1162, %v1161
    %v1218 = vpack.c.bf16 %v1164, %v1163
    %v1219 = vpack.c.bf16 %v1166, %v1165
    %v1220 = vpack.c.bf16 %v1168, %v1167
    %v1221 = vpack.c.bf16 %v1170, %v1169
    %v1222 = vpack.c.bf16 %v1172, %v1171
    %v1223 = vpack.c.bf16 %v1174, %v1173
    %v1224 = vpack.c.bf16 %v1176, %v1175
    %v1225 = vpack.c.bf16 %v1178, %v1177
    %v1226 = vpack.c.bf16 %v1180, %v1179
    %v1227 = vpack.c.bf16 %v1182, %v1181
    %v1228 = vpack.c.bf16 %v1184, %v1183
    %v1229 = vpack.c.bf16 %v1186, %v1185
    %v1230 = vpack.c.bf16 %v1188, %v1187
    %v1231 = vpack.c.bf16 %v1190, %v1189
    %v1232 = vpack.c.bf16 %v1192, %v1191
    %v1233 = vpack.c.bf16 %v1194, %v1193
    %v1234 = vpack.c.bf16 %v1196, %v1195
    %v1235 = vpack.c.bf16 %v1198, %v1197
    %v1236 = vpack.c.bf16 %v1200, %v1199
    %v1237 = vpack.c.bf16 %v1202, %v1201
    %v1238 = vpack.c.bf16 %v1204, %v1203
    %v1239 = vpack.c.bf16 %v1206, %v1205
    %v1240 = vpack.c.bf16 %v1208, %v1207
    %1273 = vrot.lane.b32.xlu0 %v1209, 32
    %v1274 = vpop.permute.xlu0 %1273
    %1275 = vrot.lane.b32.xlu0 %v1210, 32
    %v1276 = vpop.permute.xlu0 %1275
    %1277 = vrot.lane.b32.xlu0 %v1211, 32
    %v1278 = vpop.permute.xlu0 %1277
    %1279 = vrot.lane.b32.xlu0 %v1212, 32
    %v1280 = vpop.permute.xlu0 %1279
    %1281 = vrot.lane.b32.xlu0 %v1213, 32
    %v1282 = vpop.permute.xlu0 %1281
    %1283 = vrot.lane.b32.xlu0 %v1214, 32
    %v1284 = vpop.permute.xlu0 %1283
    %1285 = vrot.lane.b32.xlu0 %v1215, 32
    %v1286 = vpop.permute.xlu0 %1285
    %1287 = vrot.lane.b32.xlu0 %v1216, 32
    %v1288 = vpop.permute.xlu0 %1287
    %1289 = vrot.lane.b32.xlu0 %v1217, 32
    %v1290 = vpop.permute.xlu0 %1289
    %1291 = vrot.lane.b32.xlu0 %v1218, 32
    %v1292 = vpop.permute.xlu0 %1291
    %1293 = vrot.lane.b32.xlu0 %v1219, 32
    %v1294 = vpop.permute.xlu0 %1293
    %1295 = vrot.lane.b32.xlu0 %v1220, 32
    %v1296 = vpop.permute.xlu0 %1295
    %1297 = vrot.lane.b32.xlu0 %v1221, 32
    %v1298 = vpop.permute.xlu0 %1297
    %1299 = vrot.lane.b32.xlu0 %v1222, 32
    %v1300 = vpop.permute.xlu0 %1299
    %1301 = vrot.lane.b32.xlu0 %v1223, 32
    %v1302 = vpop.permute.xlu0 %1301
    %1303 = vrot.lane.b32.xlu0 %v1224, 32
    %v1304 = vpop.permute.xlu0 %1303
    %1305 = vrot.lane.b32.xlu0 %v1225, 32
    %v1306 = vpop.permute.xlu0 %1305
    %1307 = vrot.lane.b32.xlu0 %v1226, 32
    %v1308 = vpop.permute.xlu0 %1307
    %1309 = vrot.lane.b32.xlu0 %v1227, 32
    %v1310 = vpop.permute.xlu0 %1309
    %1311 = vrot.lane.b32.xlu0 %v1228, 32
    %v1312 = vpop.permute.xlu0 %1311
    %1313 = vrot.lane.b32.xlu0 %v1229, 32
    %v1314 = vpop.permute.xlu0 %1313
    %1315 = vrot.lane.b32.xlu0 %v1230, 32
    %v1316 = vpop.permute.xlu0 %1315
    %1317 = vrot.lane.b32.xlu0 %v1231, 32
    %v1318 = vpop.permute.xlu0 %1317
    %1319 = vrot.lane.b32.xlu0 %v1232, 32
    %v1320 = vpop.permute.xlu0 %1319
    %1321 = vrot.lane.b32.xlu0 %v1233, 32
    %v1322 = vpop.permute.xlu0 %1321
    %1323 = vrot.lane.b32.xlu0 %v1234, 32
    %v1324 = vpop.permute.xlu0 %1323
    %1325 = vrot.lane.b32.xlu0 %v1235, 32
    %v1326 = vpop.permute.xlu0 %1325
    %1327 = vrot.lane.b32.xlu0 %v1236, 32
    %v1328 = vpop.permute.xlu0 %1327
    %1329 = vrot.lane.b32.xlu0 %v1237, 32
    %v1330 = vpop.permute.xlu0 %1329
    %1331 = vrot.lane.b32.xlu0 %v1238, 32
    %v1332 = vpop.permute.xlu0 %1331
    %1333 = vrot.lane.b32.xlu0 %v1239, 32
    %v1334 = vpop.permute.xlu0 %1333
    %1335 = vrot.lane.b32.xlu0 %v1240, 32
    %v1336 = vpop.permute.xlu0 %1335
    %vm1369 = vcmask 326912
    %1370 = vst.msk [vmem:[#allocation4] sm:$0xff] %vm1369, %v1274
    %1371 = vst.msk [vmem:[#allocation4 + $0x8] sm:$0xff] %vm1369, %v1276
    %1372 = vst.msk [vmem:[#allocation4 + $0x10] sm:$0xff] %vm1369, %v1278
    %1373 = vst.msk [vmem:[#allocation4 + $0x18] sm:$0xff] %vm1369, %v1280
    %1374 = vst.msk [vmem:[#allocation4 + $0x20] sm:$0xff] %vm1369, %v1282
    %1375 = vst.msk [vmem:[#allocation4 + $0x28] sm:$0xff] %vm1369, %v1284
    %1376 = vst.msk [vmem:[#allocation4 + $0x30] sm:$0xff] %vm1369, %v1286
    %1377 = vst.msk [vmem:[#allocation4 + $0x38] sm:$0xff] %vm1369, %v1288
    %1378 = vst.msk [vmem:[#allocation4 + $0x40] sm:$0xff] %vm1369, %v1290
    %1379 = vst.msk [vmem:[#allocation4 + $0x48] sm:$0xff] %vm1369, %v1292
    %1380 = vst.msk [vmem:[#allocation4 + $0x50] sm:$0xff] %vm1369, %v1294
    %1381 = vst.msk [vmem:[#allocation4 + $0x58] sm:$0xff] %vm1369, %v1296
    %1382 = vst.msk [vmem:[#allocation4 + $0x60] sm:$0xff] %vm1369, %v1298
    %1383 = vst.msk [vmem:[#allocation4 + $0x68] sm:$0xff] %vm1369, %v1300
    %1384 = vst.msk [vmem:[#allocation4 + $0x70] sm:$0xff] %vm1369, %v1302
    %1385 = vst.msk [vmem:[#allocation4 + $0x78] sm:$0xff] %vm1369, %v1304
    %1386 = vst.msk [vmem:[#allocation4 + $0x80] sm:$0xff] %vm1369, %v1306
    %1387 = vst.msk [vmem:[#allocation4 + $0x88] sm:$0xff] %vm1369, %v1308
    %1388 = vst.msk [vmem:[#allocation4 + $0x90] sm:$0xff] %vm1369, %v1310
    %1389 = vst.msk [vmem:[#allocation4 + $0x98] sm:$0xff] %vm1369, %v1312
    %1390 = vst.msk [vmem:[#allocation4 + $0xa0] sm:$0xff] %vm1369, %v1314
    %1391 = vst.msk [vmem:[#allocation4 + $0xa8] sm:$0xff] %vm1369, %v1316
    %1392 = vst.msk [vmem:[#allocation4 + $0xb0] sm:$0xff] %vm1369, %v1318
    %1393 = vst.msk [vmem:[#allocation4 + $0xb8] sm:$0xff] %vm1369, %v1320
    %1394 = vst.msk [vmem:[#allocation4 + $0xc0] sm:$0xff] %vm1369, %v1322
    %1395 = vst.msk [vmem:[#allocation4 + $0xc8] sm:$0xff] %vm1369, %v1324
    %1396 = vst.msk [vmem:[#allocation4 + $0xd0] sm:$0xff] %vm1369, %v1326
    %1397 = vst.msk [vmem:[#allocation4 + $0xd8] sm:$0xff] %vm1369, %v1328
    %1398 = vst.msk [vmem:[#allocation4 + $0xe0] sm:$0xff] %vm1369, %v1330
    %1399 = vst.msk [vmem:[#allocation4 + $0xe8] sm:$0xff] %vm1369, %v1332
    %1400 = vst.msk [vmem:[#allocation4 + $0xf0] sm:$0xff] %vm1369, %v1334
    %1401 = vst.msk [vmem:[#allocation4 + $0xf8] sm:$0xff] %vm1369, %v1336
    %v1402 = vld [vmem:[%s180 + $0x2] sm:$0xff]
    %v1403 = vld [vmem:[%s180 + $0xa] sm:$0xff]
    %v1404 = vld [vmem:[%s180 + $0x1a] sm:$0xff]
    %v1405 = vld [vmem:[%s180 + $0x22] sm:$0xff]
    %v1406 = vld [vmem:[%s180 + $0x32] sm:$0xff]
    %v1407 = vld [vmem:[%s180 + $0x3a] sm:$0xff]
    %v1408 = vld [vmem:[%s180 + $0x4a] sm:$0xff]
    %v1409 = vld [vmem:[%s180 + $0x52] sm:$0xff]
    %v1410 = vld [vmem:[%s180 + $0x62] sm:$0xff]
    %v1411 = vld [vmem:[%s180 + $0x6a] sm:$0xff]
    %v1412 = vld [vmem:[%s180 + $0x7a] sm:$0xff]
    %v1413 = vld [vmem:[%s180 + $0x82] sm:$0xff]
    %v1414 = vld [vmem:[%s180 + $0x92] sm:$0xff]
    %v1415 = vld [vmem:[%s180 + $0x9a] sm:$0xff]
    %v1416 = vld [vmem:[%s180 + $0xaa] sm:$0xff]
    %v1417 = vld [vmem:[%s180 + $0xb2] sm:$0xff]
    %v1418 = vld [vmem:[%s180 + $0xc2] sm:$0xff]
    %v1419 = vld [vmem:[%s180 + $0xca] sm:$0xff]
    %v1420 = vld [vmem:[%s180 + $0xda] sm:$0xff]
    %v1421 = vld [vmem:[%s180 + $0xe2] sm:$0xff]
    %v1422 = vld [vmem:[%s180 + $0xf2] sm:$0xff]
    %v1423 = vld [vmem:[%s180 + $0xfa] sm:$0xff]
    %v1424 = vld [vmem:[%s180 + $0x10a] sm:$0xff]
    %v1425 = vld [vmem:[%s180 + $0x112] sm:$0xff]
    %v1426 = vld [vmem:[%s180 + $0x122] sm:$0xff]
    %v1427 = vld [vmem:[%s180 + $0x12a] sm:$0xff]
    %v1428 = vld [vmem:[%s180 + $0x13a] sm:$0xff]
    %v1429 = vld [vmem:[%s180 + $0x142] sm:$0xff]
    %v1430 = vld [vmem:[%s180 + $0x152] sm:$0xff]
    %v1431 = vld [vmem:[%s180 + $0x15a] sm:$0xff]
    %v1432 = vld [vmem:[%s180 + $0x16a] sm:$0xff]
    %v1433 = vld [vmem:[%s180 + $0x172] sm:$0xff]
    %v1434 = vld [vmem:[%s180 + $0x1b2] sm:$0xff]
    %v1435 = vld [vmem:[%s180 + $0x1ba] sm:$0xff]
    %v1436 = vld [vmem:[%s180 + $0x1ca] sm:$0xff]
    %v1437 = vld [vmem:[%s180 + $0x1d2] sm:$0xff]
    %v1438 = vld [vmem:[%s180 + $0x1e2] sm:$0xff]
    %v1439 = vld [vmem:[%s180 + $0x1ea] sm:$0xff]
    %v1440 = vld [vmem:[%s180 + $0x1fa] sm:$0xff]
    %v1441 = vld [vmem:[%s180 + $0x202] sm:$0xff]
    %v1442 = vld [vmem:[%s180 + $0x212] sm:$0xff]
    %v1443 = vld [vmem:[%s180 + $0x21a] sm:$0xff]
    %v1444 = vld [vmem:[%s180 + $0x22a] sm:$0xff]
    %v1445 = vld [vmem:[%s180 + $0x232] sm:$0xff]
    %v1446 = vld [vmem:[%s180 + $0x242] sm:$0xff]
    %v1447 = vld [vmem:[%s180 + $0x24a] sm:$0xff]
    %v1448 = vld [vmem:[%s180 + $0x25a] sm:$0xff]
    %v1449 = vld [vmem:[%s180 + $0x262] sm:$0xff]
    %v1450 = vld [vmem:[%s180 + $0x272] sm:$0xff]
    %v1451 = vld [vmem:[%s180 + $0x27a] sm:$0xff]
    %v1452 = vld [vmem:[%s180 + $0x28a] sm:$0xff]
    %v1453 = vld [vmem:[%s180 + $0x292] sm:$0xff]
    %v1454 = vld [vmem:[%s180 + $0x2a2] sm:$0xff]
    %v1455 = vld [vmem:[%s180 + $0x2aa] sm:$0xff]
    %v1456 = vld [vmem:[%s180 + $0x2ba] sm:$0xff]
    %v1457 = vld [vmem:[%s180 + $0x2c2] sm:$0xff]
    %v1458 = vld [vmem:[%s180 + $0x2d2] sm:$0xff]
    %v1459 = vld [vmem:[%s180 + $0x2da] sm:$0xff]
    %v1460 = vld [vmem:[%s180 + $0x2ea] sm:$0xff]
    %v1461 = vld [vmem:[%s180 + $0x2f2] sm:$0xff]
    %v1462 = vld [vmem:[%s180 + $0x302] sm:$0xff]
    %v1463 = vld [vmem:[%s180 + $0x30a] sm:$0xff]
    %v1464 = vld [vmem:[%s180 + $0x31a] sm:$0xff]
    %v1465 = vld [vmem:[%s180 + $0x322] sm:$0xff]
    %v1466 = vpack.c.bf16 %v1403, %v1402
    %v1467 = vpack.c.bf16 %v1405, %v1404
    %v1468 = vpack.c.bf16 %v1407, %v1406
    %v1469 = vpack.c.bf16 %v1409, %v1408
    %v1470 = vpack.c.bf16 %v1411, %v1410
    %v1471 = vpack.c.bf16 %v1413, %v1412
    %v1472 = vpack.c.bf16 %v1415, %v1414
    %v1473 = vpack.c.bf16 %v1417, %v1416
    %v1474 = vpack.c.bf16 %v1419, %v1418
    %v1475 = vpack.c.bf16 %v1421, %v1420
    %v1476 = vpack.c.bf16 %v1423, %v1422
    %v1477 = vpack.c.bf16 %v1425, %v1424
    %v1478 = vpack.c.bf16 %v1427, %v1426
    %v1479 = vpack.c.bf16 %v1429, %v1428
    %v1480 = vpack.c.bf16 %v1431, %v1430
    %v1481 = vpack.c.bf16 %v1433, %v1432
    %v1482 = vpack.c.bf16 %v1435, %v1434
    %v1483 = vpack.c.bf16 %v1437, %v1436
    %v1484 = vpack.c.bf16 %v1439, %v1438
    %v1485 = vpack.c.bf16 %v1441, %v1440
    %v1486 = vpack.c.bf16 %v1443, %v1442
    %v1487 = vpack.c.bf16 %v1445, %v1444
    %v1488 = vpack.c.bf16 %v1447, %v1446
    %v1489 = vpack.c.bf16 %v1449, %v1448
    %v1490 = vpack.c.bf16 %v1451, %v1450
    %v1491 = vpack.c.bf16 %v1453, %v1452
    %v1492 = vpack.c.bf16 %v1455, %v1454
    %v1493 = vpack.c.bf16 %v1457, %v1456
    %v1494 = vpack.c.bf16 %v1459, %v1458
    %v1495 = vpack.c.bf16 %v1461, %v1460
    %v1496 = vpack.c.bf16 %v1463, %v1462
    %v1497 = vpack.c.bf16 %v1465, %v1464
    %1530 = vrot.lane.b32.xlu0 %v1466, 40
    %v1531 = vpop.permute.xlu0 %1530
    %1532 = vrot.lane.b32.xlu0 %v1467, 40
    %v1533 = vpop.permute.xlu0 %1532
    %1534 = vrot.lane.b32.xlu0 %v1468, 40
    %v1535 = vpop.permute.xlu0 %1534
    %1536 = vrot.lane.b32.xlu0 %v1469, 40
    %v1537 = vpop.permute.xlu0 %1536
    %1538 = vrot.lane.b32.xlu0 %v1470, 40
    %v1539 = vpop.permute.xlu0 %1538
    %1540 = vrot.lane.b32.xlu0 %v1471, 40
    %v1541 = vpop.permute.xlu0 %1540
    %1542 = vrot.lane.b32.xlu0 %v1472, 40
    %v1543 = vpop.permute.xlu0 %1542
    %1544 = vrot.lane.b32.xlu0 %v1473, 40
    %v1545 = vpop.permute.xlu0 %1544
    %1546 = vrot.lane.b32.xlu0 %v1474, 40
    %v1547 = vpop.permute.xlu0 %1546
    %1548 = vrot.lane.b32.xlu0 %v1475, 40
    %v1549 = vpop.permute.xlu0 %1548
    %1550 = vrot.lane.b32.xlu0 %v1476, 40
    %v1551 = vpop.permute.xlu0 %1550
    %1552 = vrot.lane.b32.xlu0 %v1477, 40
    %v1553 = vpop.permute.xlu0 %1552
    %1554 = vrot.lane.b32.xlu0 %v1478, 40
    %v1555 = vpop.permute.xlu0 %1554
    %1556 = vrot.lane.b32.xlu0 %v1479, 40
    %v1557 = vpop.permute.xlu0 %1556
    %1558 = vrot.lane.b32.xlu0 %v1480, 40
    %v1559 = vpop.permute.xlu0 %1558
    %1560 = vrot.lane.b32.xlu0 %v1481, 40
    %v1561 = vpop.permute.xlu0 %1560
    %1562 = vrot.lane.b32.xlu0 %v1482, 40
    %v1563 = vpop.permute.xlu0 %1562
    %1564 = vrot.lane.b32.xlu0 %v1483, 40
    %v1565 = vpop.permute.xlu0 %1564
    %1566 = vrot.lane.b32.xlu0 %v1484, 40
    %v1567 = vpop.permute.xlu0 %1566
    %1568 = vrot.lane.b32.xlu0 %v1485, 40
    %v1569 = vpop.permute.xlu0 %1568
    %1570 = vrot.lane.b32.xlu0 %v1486, 40
    %v1571 = vpop.permute.xlu0 %1570
    %1572 = vrot.lane.b32.xlu0 %v1487, 40
    %v1573 = vpop.permute.xlu0 %1572
    %1574 = vrot.lane.b32.xlu0 %v1488, 40
    %v1575 = vpop.permute.xlu0 %1574
    %1576 = vrot.lane.b32.xlu0 %v1489, 40
    %v1577 = vpop.permute.xlu0 %1576
    %1578 = vrot.lane.b32.xlu0 %v1490, 40
    %v1579 = vpop.permute.xlu0 %1578
    %1580 = vrot.lane.b32.xlu0 %v1491, 40
    %v1581 = vpop.permute.xlu0 %1580
    %1582 = vrot.lane.b32.xlu0 %v1492, 40
    %v1583 = vpop.permute.xlu0 %1582
    %1584 = vrot.lane.b32.xlu0 %v1493, 40
    %v1585 = vpop.permute.xlu0 %1584
    %1586 = vrot.lane.b32.xlu0 %v1494, 40
    %v1587 = vpop.permute.xlu0 %1586
    %1588 = vrot.lane.b32.xlu0 %v1495, 40
    %v1589 = vpop.permute.xlu0 %1588
    %1590 = vrot.lane.b32.xlu0 %v1496, 40
    %v1591 = vpop.permute.xlu0 %1590
    %1592 = vrot.lane.b32.xlu0 %v1497, 40
    %v1593 = vpop.permute.xlu0 %1592
    %vm1626 = vcmask 392512
    %1627 = vst.msk [vmem:[#allocation4] sm:$0xff] %vm1626, %v1531
    %1628 = vst.msk [vmem:[#allocation4 + $0x8] sm:$0xff] %vm1626, %v1533
    %1629 = vst.msk [vmem:[#allocation4 + $0x10] sm:$0xff] %vm1626, %v1535
    %1630 = vst.msk [vmem:[#allocation4 + $0x18] sm:$0xff] %vm1626, %v1537
    %1631 = vst.msk [vmem:[#allocation4 + $0x20] sm:$0xff] %vm1626, %v1539
    %1632 = vst.msk [vmem:[#allocation4 + $0x28] sm:$0xff] %vm1626, %v1541
    %1633 = vst.msk [vmem:[#allocation4 + $0x30] sm:$0xff] %vm1626, %v1543
    %1634 = vst.msk [vmem:[#allocation4 + $0x38] sm:$0xff] %vm1626, %v1545
    %1635 = vst.msk [vmem:[#allocation4 + $0x40] sm:$0xff] %vm1626, %v1547
    %1636 = vst.msk [vmem:[#allocation4 + $0x48] sm:$0xff] %vm1626, %v1549
    %1637 = vst.msk [vmem:[#allocation4 + $0x50] sm:$0xff] %vm1626, %v1551
    %1638 = vst.msk [vmem:[#allocation4 + $0x58] sm:$0xff] %vm1626, %v1553
    %1639 = vst.msk [vmem:[#allocation4 + $0x60] sm:$0xff] %vm1626, %v1555
    %1640 = vst.msk [vmem:[#allocation4 + $0x68] sm:$0xff] %vm1626, %v1557
    %1641 = vst.msk [vmem:[#allocation4 + $0x70] sm:$0xff] %vm1626, %v1559
    %1642 = vst.msk [vmem:[#allocation4 + $0x78] sm:$0xff] %vm1626, %v1561
    %1643 = vst.msk [vmem:[#allocation4 + $0x80] sm:$0xff] %vm1626, %v1563
    %1644 = vst.msk [vmem:[#allocation4 + $0x88] sm:$0xff] %vm1626, %v1565
    %1645 = vst.msk [vmem:[#allocation4 + $0x90] sm:$0xff] %vm1626, %v1567
    %1646 = vst.msk [vmem:[#allocation4 + $0x98] sm:$0xff] %vm1626, %v1569
    %1647 = vst.msk [vmem:[#allocation4 + $0xa0] sm:$0xff] %vm1626, %v1571
    %1648 = vst.msk [vmem:[#allocation4 + $0xa8] sm:$0xff] %vm1626, %v1573
    %1649 = vst.msk [vmem:[#allocation4 + $0xb0] sm:$0xff] %vm1626, %v1575
    %1650 = vst.msk [vmem:[#allocation4 + $0xb8] sm:$0xff] %vm1626, %v1577
    %1651 = vst.msk [vmem:[#allocation4 + $0xc0] sm:$0xff] %vm1626, %v1579
    %1652 = vst.msk [vmem:[#allocation4 + $0xc8] sm:$0xff] %vm1626, %v1581
    %1653 = vst.msk [vmem:[#allocation4 + $0xd0] sm:$0xff] %vm1626, %v1583
    %1654 = vst.msk [vmem:[#allocation4 + $0xd8] sm:$0xff] %vm1626, %v1585
    %1655 = vst.msk [vmem:[#allocation4 + $0xe0] sm:$0xff] %vm1626, %v1587
    %1656 = vst.msk [vmem:[#allocation4 + $0xe8] sm:$0xff] %vm1626, %v1589
    %1657 = vst.msk [vmem:[#allocation4 + $0xf0] sm:$0xff] %vm1626, %v1591
    %1658 = vst.msk [vmem:[#allocation4 + $0xf8] sm:$0xff] %vm1626, %v1593
    %s1659 = scalar_lea.vmem [#allocation2], 48
    %v1660 = vld [vmem:[%s1659] sm:$0xff]
    %v1661 = vld [vmem:[%s1659 + $0x8] sm:$0xff]
    %v1662 = vld [vmem:[%s1659 + $0x18] sm:$0xff]
    %v1663 = vld [vmem:[%s1659 + $0x20] sm:$0xff]
    %v1664 = vld [vmem:[%s1659 + $0x30] sm:$0xff]
    %v1665 = vld [vmem:[%s1659 + $0x38] sm:$0xff]
    %v1666 = vld [vmem:[%s1659 + $0x48] sm:$0xff]
    %v1667 = vld [vmem:[%s1659 + $0x50] sm:$0xff]
    %v1668 = vld [vmem:[%s1659 + $0x60] sm:$0xff]
    %v1669 = vld [vmem:[%s1659 + $0x68] sm:$0xff]
    %v1670 = vld [vmem:[%s1659 + $0x78] sm:$0xff]
    %v1671 = vld [vmem:[%s1659 + $0x80] sm:$0xff]
    %v1672 = vld [vmem:[%s1659 + $0x90] sm:$0xff]
    %v1673 = vld [vmem:[%s1659 + $0x98] sm:$0xff]
    %v1674 = vld [vmem:[%s1659 + $0xa8] sm:$0xff]
    %v1675 = vld [vmem:[%s1659 + $0xb0] sm:$0xff]
    %v1676 = vld [vmem:[%s1659 + $0xc0] sm:$0xff]
    %v1677 = vld [vmem:[%s1659 + $0xc8] sm:$0xff]
    %v1678 = vld [vmem:[%s1659 + $0xd8] sm:$0xff]
    %v1679 = vld [vmem:[%s1659 + $0xe0] sm:$0xff]
    %v1680 = vld [vmem:[%s1659 + $0xf0] sm:$0xff]
    %v1681 = vld [vmem:[%s1659 + $0xf8] sm:$0xff]
    %v1682 = vld [vmem:[%s1659 + $0x108] sm:$0xff]
    %v1683 = vld [vmem:[%s1659 + $0x110] sm:$0xff]
    %v1684 = vld [vmem:[%s1659 + $0x120] sm:$0xff]
    %v1685 = vld [vmem:[%s1659 + $0x128] sm:$0xff]
    %v1686 = vld [vmem:[%s1659 + $0x138] sm:$0xff]
    %v1687 = vld [vmem:[%s1659 + $0x140] sm:$0xff]
    %v1688 = vld [vmem:[%s1659 + $0x150] sm:$0xff]
    %v1689 = vld [vmem:[%s1659 + $0x158] sm:$0xff]
    %v1690 = vld [vmem:[%s1659 + $0x168] sm:$0xff]
    %v1691 = vld [vmem:[%s1659 + $0x170] sm:$0xff]
    %v1692 = vld [vmem:[%s1659 + $0x1b0] sm:$0xff]
    %v1693 = vld [vmem:[%s1659 + $0x1b8] sm:$0xff]
    %v1694 = vld [vmem:[%s1659 + $0x1c8] sm:$0xff]
    %v1695 = vld [vmem:[%s1659 + $0x1d0] sm:$0xff]
    %v1696 = vld [vmem:[%s1659 + $0x1e0] sm:$0xff]
    %v1697 = vld [vmem:[%s1659 + $0x1e8] sm:$0xff]
    %v1698 = vld [vmem:[%s1659 + $0x1f8] sm:$0xff]
    %v1699 = vld [vmem:[%s1659 + $0x200] sm:$0xff]
    %v1700 = vld [vmem:[%s1659 + $0x210] sm:$0xff]
    %v1701 = vld [vmem:[%s1659 + $0x218] sm:$0xff]
    %v1702 = vld [vmem:[%s1659 + $0x228] sm:$0xff]
    %v1703 = vld [vmem:[%s1659 + $0x230] sm:$0xff]
    %v1704 = vld [vmem:[%s1659 + $0x240] sm:$0xff]
    %v1705 = vld [vmem:[%s1659 + $0x248] sm:$0xff]
    %v1706 = vld [vmem:[%s1659 + $0x258] sm:$0xff]
    %v1707 = vld [vmem:[%s1659 + $0x260] sm:$0xff]
    %v1708 = vld [vmem:[%s1659 + $0x270] sm:$0xff]
    %v1709 = vld [vmem:[%s1659 + $0x278] sm:$0xff]
    %v1710 = vld [vmem:[%s1659 + $0x288] sm:$0xff]
    %v1711 = vld [vmem:[%s1659 + $0x290] sm:$0xff]
    %v1712 = vld [vmem:[%s1659 + $0x2a0] sm:$0xff]
    %v1713 = vld [vmem:[%s1659 + $0x2a8] sm:$0xff]
    %v1714 = vld [vmem:[%s1659 + $0x2b8] sm:$0xff]
    %v1715 = vld [vmem:[%s1659 + $0x2c0] sm:$0xff]
    %v1716 = vld [vmem:[%s1659 + $0x2d0] sm:$0xff]
    %v1717 = vld [vmem:[%s1659 + $0x2d8] sm:$0xff]
    %v1718 = vld [vmem:[%s1659 + $0x2e8] sm:$0xff]
    %v1719 = vld [vmem:[%s1659 + $0x2f0] sm:$0xff]
    %v1720 = vld [vmem:[%s1659 + $0x300] sm:$0xff]
    %v1721 = vld [vmem:[%s1659 + $0x308] sm:$0xff]
    %v1722 = vld [vmem:[%s1659 + $0x318] sm:$0xff]
    %v1723 = vld [vmem:[%s1659 + $0x320] sm:$0xff]
    %v1724 = vpack.c.bf16 %v1661, %v1660
    %v1725 = vpack.c.bf16 %v1663, %v1662
    %v1726 = vpack.c.bf16 %v1665, %v1664
    %v1727 = vpack.c.bf16 %v1667, %v1666
    %v1728 = vpack.c.bf16 %v1669, %v1668
    %v1729 = vpack.c.bf16 %v1671, %v1670
    %v1730 = vpack.c.bf16 %v1673, %v1672
    %v1731 = vpack.c.bf16 %v1675, %v1674
    %v1732 = vpack.c.bf16 %v1677, %v1676
    %v1733 = vpack.c.bf16 %v1679, %v1678
    %v1734 = vpack.c.bf16 %v1681, %v1680
    %v1735 = vpack.c.bf16 %v1683, %v1682
    %v1736 = vpack.c.bf16 %v1685, %v1684
    %v1737 = vpack.c.bf16 %v1687, %v1686
    %v1738 = vpack.c.bf16 %v1689, %v1688
    %v1739 = vpack.c.bf16 %v1691, %v1690
    %v1740 = vpack.c.bf16 %v1693, %v1692
    %v1741 = vpack.c.bf16 %v1695, %v1694
    %v1742 = vpack.c.bf16 %v1697, %v1696
    %v1743 = vpack.c.bf16 %v1699, %v1698
    %v1744 = vpack.c.bf16 %v1701, %v1700
    %v1745 = vpack.c.bf16 %v1703, %v1702
    %v1746 = vpack.c.bf16 %v1705, %v1704
    %v1747 = vpack.c.bf16 %v1707, %v1706
    %v1748 = vpack.c.bf16 %v1709, %v1708
    %v1749 = vpack.c.bf16 %v1711, %v1710
    %v1750 = vpack.c.bf16 %v1713, %v1712
    %v1751 = vpack.c.bf16 %v1715, %v1714
    %v1752 = vpack.c.bf16 %v1717, %v1716
    %v1753 = vpack.c.bf16 %v1719, %v1718
    %v1754 = vpack.c.bf16 %v1721, %v1720
    %v1755 = vpack.c.bf16 %v1723, %v1722
    %1788 = vrot.lane.b32.xlu0 %v1724, 48
    %v1789 = vpop.permute.xlu0 %1788
    %1790 = vrot.lane.b32.xlu0 %v1725, 48
    %v1791 = vpop.permute.xlu0 %1790
    %1792 = vrot.lane.b32.xlu0 %v1726, 48
    %v1793 = vpop.permute.xlu0 %1792
    %1794 = vrot.lane.b32.xlu0 %v1727, 48
    %v1795 = vpop.permute.xlu0 %1794
    %1796 = vrot.lane.b32.xlu0 %v1728, 48
    %v1797 = vpop.permute.xlu0 %1796
    %1798 = vrot.lane.b32.xlu0 %v1729, 48
    %v1799 = vpop.permute.xlu0 %1798
    %1800 = vrot.lane.b32.xlu0 %v1730, 48
    %v1801 = vpop.permute.xlu0 %1800
    %1802 = vrot.lane.b32.xlu0 %v1731, 48
    %v1803 = vpop.permute.xlu0 %1802
    %1804 = vrot.lane.b32.xlu0 %v1732, 48
    %v1805 = vpop.permute.xlu0 %1804
    %1806 = vrot.lane.b32.xlu0 %v1733, 48
    %v1807 = vpop.permute.xlu0 %1806
    %1808 = vrot.lane.b32.xlu0 %v1734, 48
    %v1809 = vpop.permute.xlu0 %1808
    %1810 = vrot.lane.b32.xlu0 %v1735, 48
    %v1811 = vpop.permute.xlu0 %1810
    %1812 = vrot.lane.b32.xlu0 %v1736, 48
    %v1813 = vpop.permute.xlu0 %1812
    %1814 = vrot.lane.b32.xlu0 %v1737, 48
    %v1815 = vpop.permute.xlu0 %1814
    %1816 = vrot.lane.b32.xlu0 %v1738, 48
    %v1817 = vpop.permute.xlu0 %1816
    %1818 = vrot.lane.b32.xlu0 %v1739, 48
    %v1819 = vpop.permute.xlu0 %1818
    %1820 = vrot.lane.b32.xlu0 %v1740, 48
    %v1821 = vpop.permute.xlu0 %1820
    %1822 = vrot.lane.b32.xlu0 %v1741, 48
    %v1823 = vpop.permute.xlu0 %1822
    %1824 = vrot.lane.b32.xlu0 %v1742, 48
    %v1825 = vpop.permute.xlu0 %1824
    %1826 = vrot.lane.b32.xlu0 %v1743, 48
    %v1827 = vpop.permute.xlu0 %1826
    %1828 = vrot.lane.b32.xlu0 %v1744, 48
    %v1829 = vpop.permute.xlu0 %1828
    %1830 = vrot.lane.b32.xlu0 %v1745, 48
    %v1831 = vpop.permute.xlu0 %1830
    %1832 = vrot.lane.b32.xlu0 %v1746, 48
    %v1833 = vpop.permute.xlu0 %1832
    %1834 = vrot.lane.b32.xlu0 %v1747, 48
    %v1835 = vpop.permute.xlu0 %1834
    %1836 = vrot.lane.b32.xlu0 %v1748, 48
    %v1837 = vpop.permute.xlu0 %1836
    %1838 = vrot.lane.b32.xlu0 %v1749, 48
    %v1839 = vpop.permute.xlu0 %1838
    %1840 = vrot.lane.b32.xlu0 %v1750, 48
    %v1841 = vpop.permute.xlu0 %1840
    %1842 = vrot.lane.b32.xlu0 %v1751, 48
    %v1843 = vpop.permute.xlu0 %1842
    %1844 = vrot.lane.b32.xlu0 %v1752, 48
    %v1845 = vpop.permute.xlu0 %1844
    %1846 = vrot.lane.b32.xlu0 %v1753, 48
    %v1847 = vpop.permute.xlu0 %1846
    %1848 = vrot.lane.b32.xlu0 %v1754, 48
    %v1849 = vpop.permute.xlu0 %1848
    %1850 = vrot.lane.b32.xlu0 %v1755, 48
    %v1851 = vpop.permute.xlu0 %1850
    %vm1884 = vcmask 458112
    %1885 = vst.msk [vmem:[#allocation4] sm:$0xff] %vm1884, %v1789
    %1886 = vst.msk [vmem:[#allocation4 + $0x8] sm:$0xff] %vm1884, %v1791
    %1887 = vst.msk [vmem:[#allocation4 + $0x10] sm:$0xff] %vm1884, %v1793
    %1888 = vst.msk [vmem:[#allocation4 + $0x18] sm:$0xff] %vm1884, %v1795
    %1889 = vst.msk [vmem:[#allocation4 + $0x20] sm:$0xff] %vm1884, %v1797
    %1890 = vst.msk [vmem:[#allocation4 + $0x28] sm:$0xff] %vm1884, %v1799
    %1891 = vst.msk [vmem:[#allocation4 + $0x30] sm:$0xff] %vm1884, %v1801
    %1892 = vst.msk [vmem:[#allocation4 + $0x38] sm:$0xff] %vm1884, %v1803
    %1893 = vst.msk [vmem:[#allocation4 + $0x40] sm:$0xff] %vm1884, %v1805
    %1894 = vst.msk [vmem:[#allocation4 + $0x48] sm:$0xff] %vm1884, %v1807
    %1895 = vst.msk [vmem:[#allocation4 + $0x50] sm:$0xff] %vm1884, %v1809
    %1896 = vst.msk [vmem:[#allocation4 + $0x58] sm:$0xff] %vm1884, %v1811
    %1897 = vst.msk [vmem:[#allocation4 + $0x60] sm:$0xff] %vm1884, %v1813
    %1898 = vst.msk [vmem:[#allocation4 + $0x68] sm:$0xff] %vm1884, %v1815
    %1899 = vst.msk [vmem:[#allocation4 + $0x70] sm:$0xff] %vm1884, %v1817
    %1900 = vst.msk [vmem:[#allocation4 + $0x78] sm:$0xff] %vm1884, %v1819
    %1901 = vst.msk [vmem:[#allocation4 + $0x80] sm:$0xff] %vm1884, %v1821
    %1902 = vst.msk [vmem:[#allocation4 + $0x88] sm:$0xff] %vm1884, %v1823
    %1903 = vst.msk [vmem:[#allocation4 + $0x90] sm:$0xff] %vm1884, %v1825
    %1904 = vst.msk [vmem:[#allocation4 + $0x98] sm:$0xff] %vm1884, %v1827
    %1905 = vst.msk [vmem:[#allocation4 + $0xa0] sm:$0xff] %vm1884, %v1829
    %1906 = vst.msk [vmem:[#allocation4 + $0xa8] sm:$0xff] %vm1884, %v1831
    %1907 = vst.msk [vmem:[#allocation4 + $0xb0] sm:$0xff] %vm1884, %v1833
    %1908 = vst.msk [vmem:[#allocation4 + $0xb8] sm:$0xff] %vm1884, %v1835
    %1909 = vst.msk [vmem:[#allocation4 + $0xc0] sm:$0xff] %vm1884, %v1837
    %1910 = vst.msk [vmem:[#allocation4 + $0xc8] sm:$0xff] %vm1884, %v1839
    %1911 = vst.msk [vmem:[#allocation4 + $0xd0] sm:$0xff] %vm1884, %v1841
    %1912 = vst.msk [vmem:[#allocation4 + $0xd8] sm:$0xff] %vm1884, %v1843
    %1913 = vst.msk [vmem:[#allocation4 + $0xe0] sm:$0xff] %vm1884, %v1845
    %1914 = vst.msk [vmem:[#allocation4 + $0xe8] sm:$0xff] %vm1884, %v1847
    %1915 = vst.msk [vmem:[#allocation4 + $0xf0] sm:$0xff] %vm1884, %v1849
    %1916 = vst.msk [vmem:[#allocation4 + $0xf8] sm:$0xff] %vm1884, %v1851
    %v1917 = vld [vmem:[%s1659 + $0x1] sm:$0xff]
    %v1918 = vld [vmem:[%s1659 + $0x9] sm:$0xff]
    %v1919 = vld [vmem:[%s1659 + $0x19] sm:$0xff]
    %v1920 = vld [vmem:[%s1659 + $0x21] sm:$0xff]
    %v1921 = vld [vmem:[%s1659 + $0x31] sm:$0xff]
    %v1922 = vld [vmem:[%s1659 + $0x39] sm:$0xff]
    %v1923 = vld [vmem:[%s1659 + $0x49] sm:$0xff]
    %v1924 = vld [vmem:[%s1659 + $0x51] sm:$0xff]
    %v1925 = vld [vmem:[%s1659 + $0x61] sm:$0xff]
    %v1926 = vld [vmem:[%s1659 + $0x69] sm:$0xff]
    %v1927 = vld [vmem:[%s1659 + $0x79] sm:$0xff]
    %v1928 = vld [vmem:[%s1659 + $0x81] sm:$0xff]
    %v1929 = vld [vmem:[%s1659 + $0x91] sm:$0xff]
    %v1930 = vld [vmem:[%s1659 + $0x99] sm:$0xff]
    %v1931 = vld [vmem:[%s1659 + $0xa9] sm:$0xff]
    %v1932 = vld [vmem:[%s1659 + $0xb1] sm:$0xff]
    %v1933 = vld [vmem:[%s1659 + $0xc1] sm:$0xff]
    %v1934 = vld [vmem:[%s1659 + $0xc9] sm:$0xff]
    %v1935 = vld [vmem:[%s1659 + $0xd9] sm:$0xff]
    %v1936 = vld [vmem:[%s1659 + $0xe1] sm:$0xff]
    %v1937 = vld [vmem:[%s1659 + $0xf1] sm:$0xff]
    %v1938 = vld [vmem:[%s1659 + $0xf9] sm:$0xff]
    %v1939 = vld [vmem:[%s1659 + $0x109] sm:$0xff]
    %v1940 = vld [vmem:[%s1659 + $0x111] sm:$0xff]
    %v1941 = vld [vmem:[%s1659 + $0x121] sm:$0xff]
    %v1942 = vld [vmem:[%s1659 + $0x129] sm:$0xff]
    %v1943 = vld [vmem:[%s1659 + $0x139] sm:$0xff]
    %v1944 = vld [vmem:[%s1659 + $0x141] sm:$0xff]
    %v1945 = vld [vmem:[%s1659 + $0x151] sm:$0xff]
    %v1946 = vld [vmem:[%s1659 + $0x159] sm:$0xff]
    %v1947 = vld [vmem:[%s1659 + $0x169] sm:$0xff]
    %v1948 = vld [vmem:[%s1659 + $0x171] sm:$0xff]
    %v1949 = vld [vmem:[%s1659 + $0x1b1] sm:$0xff]
    %v1950 = vld [vmem:[%s1659 + $0x1b9] sm:$0xff]
    %v1951 = vld [vmem:[%s1659 + $0x1c9] sm:$0xff]
    %v1952 = vld [vmem:[%s1659 + $0x1d1] sm:$0xff]
    %v1953 = vld [vmem:[%s1659 + $0x1e1] sm:$0xff]
    %v1954 = vld [vmem:[%s1659 + $0x1e9] sm:$0xff]
    %v1955 = vld [vmem:[%s1659 + $0x1f9] sm:$0xff]
    %v1956 = vld [vmem:[%s1659 + $0x201] sm:$0xff]
    %v1957 = vld [vmem:[%s1659 + $0x211] sm:$0xff]
    %v1958 = vld [vmem:[%s1659 + $0x219] sm:$0xff]
    %v1959 = vld [vmem:[%s1659 + $0x229] sm:$0xff]
    %v1960 = vld [vmem:[%s1659 + $0x231] sm:$0xff]
    %v1961 = vld [vmem:[%s1659 + $0x241] sm:$0xff]
    %v1962 = vld [vmem:[%s1659 + $0x249] sm:$0xff]
    %v1963 = vld [vmem:[%s1659 + $0x259] sm:$0xff]
    %v1964 = vld [vmem:[%s1659 + $0x261] sm:$0xff]
    %v1965 = vld [vmem:[%s1659 + $0x271] sm:$0xff]
    %v1966 = vld [vmem:[%s1659 + $0x279] sm:$0xff]
    %v1967 = vld [vmem:[%s1659 + $0x289] sm:$0xff]
    %v1968 = vld [vmem:[%s1659 + $0x291] sm:$0xff]
    %v1969 = vld [vmem:[%s1659 + $0x2a1] sm:$0xff]
    %v1970 = vld [vmem:[%s1659 + $0x2a9] sm:$0xff]
    %v1971 = vld [vmem:[%s1659 + $0x2b9] sm:$0xff]
    %v1972 = vld [vmem:[%s1659 + $0x2c1] sm:$0xff]
    %v1973 = vld [vmem:[%s1659 + $0x2d1] sm:$0xff]
    %v1974 = vld [vmem:[%s1659 + $0x2d9] sm:$0xff]
    %v1975 = vld [vmem:[%s1659 + $0x2e9] sm:$0xff]
    %v1976 = vld [vmem:[%s1659 + $0x2f1] sm:$0xff]
    %v1977 = vld [vmem:[%s1659 + $0x301] sm:$0xff]
    %v1978 = vld [vmem:[%s1659 + $0x309] sm:$0xff]
    %v1979 = vld [vmem:[%s1659 + $0x319] sm:$0xff]
    %v1980 = vld [vmem:[%s1659 + $0x321] sm:$0xff]
    %v1981 = vpack.c.bf16 %v1918, %v1917
    %v1982 = vpack.c.bf16 %v1920, %v1919
    %v1983 = vpack.c.bf16 %v1922, %v1921
    %v1984 = vpack.c.bf16 %v1924, %v1923
    %v1985 = vpack.c.bf16 %v1926, %v1925
    %v1986 = vpack.c.bf16 %v1928, %v1927
    %v1987 = vpack.c.bf16 %v1930, %v1929
    %v1988 = vpack.c.bf16 %v1932, %v1931
    %v1989 = vpack.c.bf16 %v1934, %v1933
    %v1990 = vpack.c.bf16 %v1936, %v1935
    %v1991 = vpack.c.bf16 %v1938, %v1937
    %v1992 = vpack.c.bf16 %v1940, %v1939
    %v1993 = vpack.c.bf16 %v1942, %v1941
    %v1994 = vpack.c.bf16 %v1944, %v1943
    %v1995 = vpack.c.bf16 %v1946, %v1945
    %v1996 = vpack.c.bf16 %v1948, %v1947
    %v1997 = vpack.c.bf16 %v1950, %v1949
    %v1998 = vpack.c.bf16 %v1952, %v1951
    %v1999 = vpack.c.bf16 %v1954, %v1953
    %v2000 = vpack.c.bf16 %v1956, %v1955
    %v2001 = vpack.c.bf16 %v1958, %v1957
    %v2002 = vpack.c.bf16 %v1960, %v1959
    %v2003 = vpack.c.bf16 %v1962, %v1961
    %v2004 = vpack.c.bf16 %v1964, %v1963
    %v2005 = vpack.c.bf16 %v1966, %v1965
    %v2006 = vpack.c.bf16 %v1968, %v1967
    %v2007 = vpack.c.bf16 %v1970, %v1969
    %v2008 = vpack.c.bf16 %v1972, %v1971
    %v2009 = vpack.c.bf16 %v1974, %v1973
    %v2010 = vpack.c.bf16 %v1976, %v1975
    %v2011 = vpack.c.bf16 %v1978, %v1977
    %v2012 = vpack.c.bf16 %v1980, %v1979
    %2045 = vrot.lane.b32.xlu0 %v1981, 56
    %v2046 = vpop.permute.xlu0 %2045
    %2047 = vrot.lane.b32.xlu0 %v1982, 56
    %v2048 = vpop.permute.xlu0 %2047
    %2049 = vrot.lane.b32.xlu0 %v1983, 56
    %v2050 = vpop.permute.xlu0 %2049
    %2051 = vrot.lane.b32.xlu0 %v1984, 56
    %v2052 = vpop.permute.xlu0 %2051
    %2053 = vrot.lane.b32.xlu0 %v1985, 56
    %v2054 = vpop.permute.xlu0 %2053
    %2055 = vrot.lane.b32.xlu0 %v1986, 56
    %v2056 = vpop.permute.xlu0 %2055
    %2057 = vrot.lane.b32.xlu0 %v1987, 56
    %v2058 = vpop.permute.xlu0 %2057
    %2059 = vrot.lane.b32.xlu0 %v1988, 56
    %v2060 = vpop.permute.xlu0 %2059
    %2061 = vrot.lane.b32.xlu0 %v1989, 56
    %v2062 = vpop.permute.xlu0 %2061
    %2063 = vrot.lane.b32.xlu0 %v1990, 56
    %v2064 = vpop.permute.xlu0 %2063
    %2065 = vrot.lane.b32.xlu0 %v1991, 56
    %v2066 = vpop.permute.xlu0 %2065
    %2067 = vrot.lane.b32.xlu0 %v1992, 56
    %v2068 = vpop.permute.xlu0 %2067
    %2069 = vrot.lane.b32.xlu0 %v1993, 56
    %v2070 = vpop.permute.xlu0 %2069
    %2071 = vrot.lane.b32.xlu0 %v1994, 56
    %v2072 = vpop.permute.xlu0 %2071
    %2073 = vrot.lane.b32.xlu0 %v1995, 56
    %v2074 = vpop.permute.xlu0 %2073
    %2075 = vrot.lane.b32.xlu0 %v1996, 56
    %v2076 = vpop.permute.xlu0 %2075
    %2077 = vrot.lane.b32.xlu0 %v1997, 56
    %v2078 = vpop.permute.xlu0 %2077
    %2079 = vrot.lane.b32.xlu0 %v1998, 56
    %v2080 = vpop.permute.xlu0 %2079
    %2081 = vrot.lane.b32.xlu0 %v1999, 56
    %v2082 = vpop.permute.xlu0 %2081
    %2083 = vrot.lane.b32.xlu0 %v2000, 56
    %v2084 = vpop.permute.xlu0 %2083
    %2085 = vrot.lane.b32.xlu0 %v2001, 56
    %v2086 = vpop.permute.xlu0 %2085
    %2087 = vrot.lane.b32.xlu0 %v2002, 56
    %v2088 = vpop.permute.xlu0 %2087
    %2089 = vrot.lane.b32.xlu0 %v2003, 56
    %v2090 = vpop.permute.xlu0 %2089
    %2091 = vrot.lane.b32.xlu0 %v2004, 56
    %v2092 = vpop.permute.xlu0 %2091
    %2093 = vrot.lane.b32.xlu0 %v2005, 56
    %v2094 = vpop.permute.xlu0 %2093
    %2095 = vrot.lane.b32.xlu0 %v2006, 56
    %v2096 = vpop.permute.xlu0 %2095
    %2097 = vrot.lane.b32.xlu0 %v2007, 56
    %v2098 = vpop.permute.xlu0 %2097
    %2099 = vrot.lane.b32.xlu0 %v2008, 56
    %v2100 = vpop.permute.xlu0 %2099
    %2101 = vrot.lane.b32.xlu0 %v2009, 56
    %v2102 = vpop.permute.xlu0 %2101
    %2103 = vrot.lane.b32.xlu0 %v2010, 56
    %v2104 = vpop.permute.xlu0 %2103
    %2105 = vrot.lane.b32.xlu0 %v2011, 56
    %v2106 = vpop.permute.xlu0 %2105
    %2107 = vrot.lane.b32.xlu0 %v2012, 56
    %v2108 = vpop.permute.xlu0 %2107
    %vm2141 = vcmask 523712
    %2142 = vst.msk [vmem:[#allocation4] sm:$0xff] %vm2141, %v2046
    %2143 = vst.msk [vmem:[#allocation4 + $0x8] sm:$0xff] %vm2141, %v2048
    %2144 = vst.msk [vmem:[#allocation4 + $0x10] sm:$0xff] %vm2141, %v2050
    %2145 = vst.msk [vmem:[#allocation4 + $0x18] sm:$0xff] %vm2141, %v2052
    %2146 = vst.msk [vmem:[#allocation4 + $0x20] sm:$0xff] %vm2141, %v2054
    %2147 = vst.msk [vmem:[#allocation4 + $0x28] sm:$0xff] %vm2141, %v2056
    %2148 = vst.msk [vmem:[#allocation4 + $0x30] sm:$0xff] %vm2141, %v2058
    %2149 = vst.msk [vmem:[#allocation4 + $0x38] sm:$0xff] %vm2141, %v2060
    %2150 = vst.msk [vmem:[#allocation4 + $0x40] sm:$0xff] %vm2141, %v2062
    %2151 = vst.msk [vmem:[#allocation4 + $0x48] sm:$0xff] %vm2141, %v2064
    %2152 = vst.msk [vmem:[#allocation4 + $0x50] sm:$0xff] %vm2141, %v2066
    %2153 = vst.msk [vmem:[#allocation4 + $0x58] sm:$0xff] %vm2141, %v2068
    %2154 = vst.msk [vmem:[#allocation4 + $0x60] sm:$0xff] %vm2141, %v2070
    %2155 = vst.msk [vmem:[#allocation4 + $0x68] sm:$0xff] %vm2141, %v2072
    %2156 = vst.msk [vmem:[#allocation4 + $0x70] sm:$0xff] %vm2141, %v2074
    %2157 = vst.msk [vmem:[#allocation4 + $0x78] sm:$0xff] %vm2141, %v2076
    %2158 = vst.msk [vmem:[#allocation4 + $0x80] sm:$0xff] %vm2141, %v2078
    %2159 = vst.msk [vmem:[#allocation4 + $0x88] sm:$0xff] %vm2141, %v2080
    %2160 = vst.msk [vmem:[#allocation4 + $0x90] sm:$0xff] %vm2141, %v2082
    %2161 = vst.msk [vmem:[#allocation4 + $0x98] sm:$0xff] %vm2141, %v2084
    %2162 = vst.msk [vmem:[#allocation4 + $0xa0] sm:$0xff] %vm2141, %v2086
    %2163 = vst.msk [vmem:[#allocation4 + $0xa8] sm:$0xff] %vm2141, %v2088
    %2164 = vst.msk [vmem:[#allocation4 + $0xb0] sm:$0xff] %vm2141, %v2090
    %2165 = vst.msk [vmem:[#allocation4 + $0xb8] sm:$0xff] %vm2141, %v2092
    %2166 = vst.msk [vmem:[#allocation4 + $0xc0] sm:$0xff] %vm2141, %v2094
    %2167 = vst.msk [vmem:[#allocation4 + $0xc8] sm:$0xff] %vm2141, %v2096
    %2168 = vst.msk [vmem:[#allocation4 + $0xd0] sm:$0xff] %vm2141, %v2098
    %2169 = vst.msk [vmem:[#allocation4 + $0xd8] sm:$0xff] %vm2141, %v2100
    %2170 = vst.msk [vmem:[#allocation4 + $0xe0] sm:$0xff] %vm2141, %v2102
    %2171 = vst.msk [vmem:[#allocation4 + $0xe8] sm:$0xff] %vm2141, %v2104
    %2172 = vst.msk [vmem:[#allocation4 + $0xf0] sm:$0xff] %vm2141, %v2106
    %2173 = vst.msk [vmem:[#allocation4 + $0xf8] sm:$0xff] %vm2141, %v2108
    %v2174 = vld [vmem:[%s1659 + $0x2] sm:$0xff]
    %v2175 = vld [vmem:[%s1659 + $0xa] sm:$0xff]
    %v2176 = vld [vmem:[%s1659 + $0x1a] sm:$0xff]
    %v2177 = vld [vmem:[%s1659 + $0x22] sm:$0xff]
    %v2178 = vld [vmem:[%s1659 + $0x32] sm:$0xff]
    %v2179 = vld [vmem:[%s1659 + $0x3a] sm:$0xff]
    %v2180 = vld [vmem:[%s1659 + $0x4a] sm:$0xff]
    %v2181 = vld [vmem:[%s1659 + $0x52] sm:$0xff]
    %v2182 = vld [vmem:[%s1659 + $0x62] sm:$0xff]
    %v2183 = vld [vmem:[%s1659 + $0x6a] sm:$0xff]
    %v2184 = vld [vmem:[%s1659 + $0x7a] sm:$0xff]
    %v2185 = vld [vmem:[%s1659 + $0x82] sm:$0xff]
    %v2186 = vld [vmem:[%s1659 + $0x92] sm:$0xff]
    %v2187 = vld [vmem:[%s1659 + $0x9a] sm:$0xff]
    %v2188 = vld [vmem:[%s1659 + $0xaa] sm:$0xff]
    %v2189 = vld [vmem:[%s1659 + $0xb2] sm:$0xff]
    %v2190 = vld [vmem:[%s1659 + $0xc2] sm:$0xff]
    %v2191 = vld [vmem:[%s1659 + $0xca] sm:$0xff]
    %v2192 = vld [vmem:[%s1659 + $0xda] sm:$0xff]
    %v2193 = vld [vmem:[%s1659 + $0xe2] sm:$0xff]
    %v2194 = vld [vmem:[%s1659 + $0xf2] sm:$0xff]
    %v2195 = vld [vmem:[%s1659 + $0xfa] sm:$0xff]
    %v2196 = vld [vmem:[%s1659 + $0x10a] sm:$0xff]
    %v2197 = vld [vmem:[%s1659 + $0x112] sm:$0xff]
    %v2198 = vld [vmem:[%s1659 + $0x122] sm:$0xff]
    %v2199 = vld [vmem:[%s1659 + $0x12a] sm:$0xff]
    %v2200 = vld [vmem:[%s1659 + $0x13a] sm:$0xff]
    %v2201 = vld [vmem:[%s1659 + $0x142] sm:$0xff]
    %v2202 = vld [vmem:[%s1659 + $0x152] sm:$0xff]
    %v2203 = vld [vmem:[%s1659 + $0x15a] sm:$0xff]
    %v2204 = vld [vmem:[%s1659 + $0x16a] sm:$0xff]
    %v2205 = vld [vmem:[%s1659 + $0x172] sm:$0xff]
    %v2206 = vld [vmem:[%s1659 + $0x1b2] sm:$0xff]
    %v2207 = vld [vmem:[%s1659 + $0x1ba] sm:$0xff]
    %v2208 = vld [vmem:[%s1659 + $0x1ca] sm:$0xff]
    %v2209 = vld [vmem:[%s1659 + $0x1d2] sm:$0xff]
    %v2210 = vld [vmem:[%s1659 + $0x1e2] sm:$0xff]
    %v2211 = vld [vmem:[%s1659 + $0x1ea] sm:$0xff]
    %v2212 = vld [vmem:[%s1659 + $0x1fa] sm:$0xff]
    %v2213 = vld [vmem:[%s1659 + $0x202] sm:$0xff]
    %v2214 = vld [vmem:[%s1659 + $0x212] sm:$0xff]
    %v2215 = vld [vmem:[%s1659 + $0x21a] sm:$0xff]
    %v2216 = vld [vmem:[%s1659 + $0x22a] sm:$0xff]
    %v2217 = vld [vmem:[%s1659 + $0x232] sm:$0xff]
    %v2218 = vld [vmem:[%s1659 + $0x242] sm:$0xff]
    %v2219 = vld [vmem:[%s1659 + $0x24a] sm:$0xff]
    %v2220 = vld [vmem:[%s1659 + $0x25a] sm:$0xff]
    %v2221 = vld [vmem:[%s1659 + $0x262] sm:$0xff]
    %v2222 = vld [vmem:[%s1659 + $0x272] sm:$0xff]
    %v2223 = vld [vmem:[%s1659 + $0x27a] sm:$0xff]
    %v2224 = vld [vmem:[%s1659 + $0x28a] sm:$0xff]
    %v2225 = vld [vmem:[%s1659 + $0x292] sm:$0xff]
    %v2226 = vld [vmem:[%s1659 + $0x2a2] sm:$0xff]
    %v2227 = vld [vmem:[%s1659 + $0x2aa] sm:$0xff]
    %v2228 = vld [vmem:[%s1659 + $0x2ba] sm:$0xff]
    %v2229 = vld [vmem:[%s1659 + $0x2c2] sm:$0xff]
    %v2230 = vld [vmem:[%s1659 + $0x2d2] sm:$0xff]
    %v2231 = vld [vmem:[%s1659 + $0x2da] sm:$0xff]
    %v2232 = vld [vmem:[%s1659 + $0x2ea] sm:$0xff]
    %v2233 = vld [vmem:[%s1659 + $0x2f2] sm:$0xff]
    %v2234 = vld [vmem:[%s1659 + $0x302] sm:$0xff]
    %v2235 = vld [vmem:[%s1659 + $0x30a] sm:$0xff]
    %v2236 = vld [vmem:[%s1659 + $0x31a] sm:$0xff]
    %v2237 = vld [vmem:[%s1659 + $0x322] sm:$0xff]
    %v2238 = vpack.c.bf16 %v2175, %v2174
    %v2239 = vpack.c.bf16 %v2177, %v2176
    %v2240 = vpack.c.bf16 %v2179, %v2178
    %v2241 = vpack.c.bf16 %v2181, %v2180
    %v2242 = vpack.c.bf16 %v2183, %v2182
    %v2243 = vpack.c.bf16 %v2185, %v2184
    %v2244 = vpack.c.bf16 %v2187, %v2186
    %v2245 = vpack.c.bf16 %v2189, %v2188
    %v2246 = vpack.c.bf16 %v2191, %v2190
    %v2247 = vpack.c.bf16 %v2193, %v2192
    %v2248 = vpack.c.bf16 %v2195, %v2194
    %v2249 = vpack.c.bf16 %v2197, %v2196
    %v2250 = vpack.c.bf16 %v2199, %v2198
    %v2251 = vpack.c.bf16 %v2201, %v2200
    %v2252 = vpack.c.bf16 %v2203, %v2202
    %v2253 = vpack.c.bf16 %v2205, %v2204
    %v2254 = vpack.c.bf16 %v2207, %v2206
    %v2255 = vpack.c.bf16 %v2209, %v2208
    %v2256 = vpack.c.bf16 %v2211, %v2210
    %v2257 = vpack.c.bf16 %v2213, %v2212
    %v2258 = vpack.c.bf16 %v2215, %v2214
    %v2259 = vpack.c.bf16 %v2217, %v2216
    %v2260 = vpack.c.bf16 %v2219, %v2218
    %v2261 = vpack.c.bf16 %v2221, %v2220
    %v2262 = vpack.c.bf16 %v2223, %v2222
    %v2263 = vpack.c.bf16 %v2225, %v2224
    %v2264 = vpack.c.bf16 %v2227, %v2226
    %v2265 = vpack.c.bf16 %v2229, %v2228
    %v2266 = vpack.c.bf16 %v2231, %v2230
    %v2267 = vpack.c.bf16 %v2233, %v2232
    %v2268 = vpack.c.bf16 %v2235, %v2234
    %v2269 = vpack.c.bf16 %v2237, %v2236
    %2302 = vrot.lane.b32.xlu0 %v2238, 64
    %v2303 = vpop.permute.xlu0 %2302
    %2304 = vrot.lane.b32.xlu0 %v2239, 64
    %v2305 = vpop.permute.xlu0 %2304
    %2306 = vrot.lane.b32.xlu0 %v2240, 64
    %v2307 = vpop.permute.xlu0 %2306
    %2308 = vrot.lane.b32.xlu0 %v2241, 64
    %v2309 = vpop.permute.xlu0 %2308
    %2310 = vrot.lane.b32.xlu0 %v2242, 64
    %v2311 = vpop.permute.xlu0 %2310
    %2312 = vrot.lane.b32.xlu0 %v2243, 64
    %v2313 = vpop.permute.xlu0 %2312
    %2314 = vrot.lane.b32.xlu0 %v2244, 64
    %v2315 = vpop.permute.xlu0 %2314
    %2316 = vrot.lane.b32.xlu0 %v2245, 64
    %v2317 = vpop.permute.xlu0 %2316
    %2318 = vrot.lane.b32.xlu0 %v2246, 64
    %v2319 = vpop.permute.xlu0 %2318
    %2320 = vrot.lane.b32.xlu0 %v2247, 64
    %v2321 = vpop.permute.xlu0 %2320
    %2322 = vrot.lane.b32.xlu0 %v2248, 64
    %v2323 = vpop.permute.xlu0 %2322
    %2324 = vrot.lane.b32.xlu0 %v2249, 64
    %v2325 = vpop.permute.xlu0 %2324
    %2326 = vrot.lane.b32.xlu0 %v2250, 64
    %v2327 = vpop.permute.xlu0 %2326
    %2328 = vrot.lane.b32.xlu0 %v2251, 64
    %v2329 = vpop.permute.xlu0 %2328
    %2330 = vrot.lane.b32.xlu0 %v2252, 64
    %v2331 = vpop.permute.xlu0 %2330
    %2332 = vrot.lane.b32.xlu0 %v2253, 64
    %v2333 = vpop.permute.xlu0 %2332
    %2334 = vrot.lane.b32.xlu0 %v2254, 64
    %v2335 = vpop.permute.xlu0 %2334
    %2336 = vrot.lane.b32.xlu0 %v2255, 64
    %v2337 = vpop.permute.xlu0 %2336
    %2338 = vrot.lane.b32.xlu0 %v2256, 64
    %v2339 = vpop.permute.xlu0 %2338
    %2340 = vrot.lane.b32.xlu0 %v2257, 64
    %v2341 = vpop.permute.xlu0 %2340
    %2342 = vrot.lane.b32.xlu0 %v2258, 64
    %v2343 = vpop.permute.xlu0 %2342
    %2344 = vrot.lane.b32.xlu0 %v2259, 64
    %v2345 = vpop.permute.xlu0 %2344
    %2346 = vrot.lane.b32.xlu0 %v2260, 64
    %v2347 = vpop.permute.xlu0 %2346
    %2348 = vrot.lane.b32.xlu0 %v2261, 64
    %v2349 = vpop.permute.xlu0 %2348
    %2350 = vrot.lane.b32.xlu0 %v2262, 64
    %v2351 = vpop.permute.xlu0 %2350
    %2352 = vrot.lane.b32.xlu0 %v2263, 64
    %v2353 = vpop.permute.xlu0 %2352
    %2354 = vrot.lane.b32.xlu0 %v2264, 64
    %v2355 = vpop.permute.xlu0 %2354
    %2356 = vrot.lane.b32.xlu0 %v2265, 64
    %v2357 = vpop.permute.xlu0 %2356
    %2358 = vrot.lane.b32.xlu0 %v2266, 64
    %v2359 = vpop.permute.xlu0 %2358
    %2360 = vrot.lane.b32.xlu0 %v2267, 64
    %v2361 = vpop.permute.xlu0 %2360
    %2362 = vrot.lane.b32.xlu0 %v2268, 64
    %v2363 = vpop.permute.xlu0 %2362
    %2364 = vrot.lane.b32.xlu0 %v2269, 64
    %v2365 = vpop.permute.xlu0 %2364
    %vm2398 = vcmask 589312
    %2399 = vst.msk [vmem:[#allocation4] sm:$0xff] %vm2398, %v2303
    %2400 = vst.msk [vmem:[#allocation4 + $0x8] sm:$0xff] %vm2398, %v2305
    %2401 = vst.msk [vmem:[#allocation4 + $0x10] sm:$0xff] %vm2398, %v2307
    %2402 = vst.msk [vmem:[#allocation4 + $0x18] sm:$0xff] %vm2398, %v2309
    %2403 = vst.msk [vmem:[#allocation4 + $0x20] sm:$0xff] %vm2398, %v2311
    %2404 = vst.msk [vmem:[#allocation4 + $0x28] sm:$0xff] %vm2398, %v2313
    %2405 = vst.msk [vmem:[#allocation4 + $0x30] sm:$0xff] %vm2398, %v2315
    %2406 = vst.msk [vmem:[#allocation4 + $0x38] sm:$0xff] %vm2398, %v2317
    %2407 = vst.msk [vmem:[#allocation4 + $0x40] sm:$0xff] %vm2398, %v2319
    %2408 = vst.msk [vmem:[#allocation4 + $0x48] sm:$0xff] %vm2398, %v2321
    %2409 = vst.msk [vmem:[#allocation4 + $0x50] sm:$0xff] %vm2398, %v2323
    %2410 = vst.msk [vmem:[#allocation4 + $0x58] sm:$0xff] %vm2398, %v2325
    %2411 = vst.msk [vmem:[#allocation4 + $0x60] sm:$0xff] %vm2398, %v2327
    %2412 = vst.msk [vmem:[#allocation4 + $0x68] sm:$0xff] %vm2398, %v2329
    %2413 = vst.msk [vmem:[#allocation4 + $0x70] sm:$0xff] %vm2398, %v2331
    %2414 = vst.msk [vmem:[#allocation4 + $0x78] sm:$0xff] %vm2398, %v2333
    %2415 = vst.msk [vmem:[#allocation4 + $0x80] sm:$0xff] %vm2398, %v2335
    %2416 = vst.msk [vmem:[#allocation4 + $0x88] sm:$0xff] %vm2398, %v2337
    %2417 = vst.msk [vmem:[#allocation4 + $0x90] sm:$0xff] %vm2398, %v2339
    %2418 = vst.msk [vmem:[#allocation4 + $0x98] sm:$0xff] %vm2398, %v2341
    %2419 = vst.msk [vmem:[#allocation4 + $0xa0] sm:$0xff] %vm2398, %v2343
    %2420 = vst.msk [vmem:[#allocation4 + $0xa8] sm:$0xff] %vm2398, %v2345
    %2421 = vst.msk [vmem:[#allocation4 + $0xb0] sm:$0xff] %vm2398, %v2347
    %2422 = vst.msk [vmem:[#allocation4 + $0xb8] sm:$0xff] %vm2398, %v2349
    %2423 = vst.msk [vmem:[#allocation4 + $0xc0] sm:$0xff] %vm2398, %v2351
    %2424 = vst.msk [vmem:[#allocation4 + $0xc8] sm:$0xff] %vm2398, %v2353
    %2425 = vst.msk [vmem:[#allocation4 + $0xd0] sm:$0xff] %vm2398, %v2355
    %2426 = vst.msk [vmem:[#allocation4 + $0xd8] sm:$0xff] %vm2398, %v2357
    %2427 = vst.msk [vmem:[#allocation4 + $0xe0] sm:$0xff] %vm2398, %v2359
    %2428 = vst.msk [vmem:[#allocation4 + $0xe8] sm:$0xff] %vm2398, %v2361
    %2429 = vst.msk [vmem:[#allocation4 + $0xf0] sm:$0xff] %vm2398, %v2363
    %2430 = vst.msk [vmem:[#allocation4 + $0xf8] sm:$0xff] %vm2398, %v2365
    %v2431 = vld [vmem:[#allocation4] sm:$0xff]
    %v2432 = vld [vmem:[#allocation4 + $0x8] sm:$0xff]
    %v2433 = vld [vmem:[#allocation4 + $0x10] sm:$0xff]
    %v2434 = vld [vmem:[#allocation4 + $0x18] sm:$0xff]
    %v2435 = vld [vmem:[#allocation4 + $0x20] sm:$0xff]
    %v2436 = vld [vmem:[#allocation4 + $0x28] sm:$0xff]
    %v2437 = vld [vmem:[#allocation4 + $0x30] sm:$0xff]
    %v2438 = vld [vmem:[#allocation4 + $0x38] sm:$0xff]
    %v2439 = vld [vmem:[#allocation4 + $0x40] sm:$0xff]
    %v2440 = vld [vmem:[#allocation4 + $0x48] sm:$0xff]
    %v2441 = vld [vmem:[#allocation4 + $0x50] sm:$0xff]
    %v2442 = vld [vmem:[#allocation4 + $0x58] sm:$0xff]
    %v2443 = vld [vmem:[#allocation4 + $0x60] sm:$0xff]
    %v2444 = vld [vmem:[#allocation4 + $0x68] sm:$0xff]
    %v2445 = vld [vmem:[#allocation4 + $0x70] sm:$0xff]
    %v2446 = vld [vmem:[#allocation4 + $0x78] sm:$0xff]
    %v2447 = vld [vmem:[#allocation4 + $0x80] sm:$0xff]
    %v2448 = vld [vmem:[#allocation4 + $0x88] sm:$0xff]
    %v2449 = vld [vmem:[#allocation4 + $0x90] sm:$0xff]
    %v2450 = vld [vmem:[#allocation4 + $0x98] sm:$0xff]
    %v2451 = vld [vmem:[#allocation4 + $0xa0] sm:$0xff]
    %v2452 = vld [vmem:[#allocation4 + $0xa8] sm:$0xff]
    %v2453 = vld [vmem:[#allocation4 + $0xb0] sm:$0xff]
    %v2454 = vld [vmem:[#allocation4 + $0xb8] sm:$0xff]
    %v2455 = vld [vmem:[#allocation4 + $0xc0] sm:$0xff]
    %v2456 = vld [vmem:[#allocation4 + $0xc8] sm:$0xff]
    %v2457 = vld [vmem:[#allocation4 + $0xd0] sm:$0xff]
    %v2458 = vld [vmem:[#allocation4 + $0xd8] sm:$0xff]
    %v2459 = vld [vmem:[#allocation4 + $0xe0] sm:$0xff]
    %v2460 = vld [vmem:[#allocation4 + $0xe8] sm:$0xff]
    %v2461 = vld [vmem:[#allocation4 + $0xf0] sm:$0xff]
    %v2462 = vld [vmem:[#allocation4 + $0xf8] sm:$0xff]
    %v2463 = vld [vmem:[%s1] sm:$0xf]
    %v2464 = vld [vmem:[%s1 + $0x4] sm:$0xf]
    %v2465 = vld [vmem:[%s1 + $0x8] sm:$0xf]
    %v2466 = vld [vmem:[%s1 + $0xc] sm:$0xf]
    %v2467 = vld [vmem:[%s1 + $0x10] sm:$0xf]
    %v2468 = vld [vmem:[%s1 + $0x14] sm:$0xf]
    %v2469 = vld [vmem:[%s1 + $0x18] sm:$0xf]
    %v2470 = vld [vmem:[%s1 + $0x1c] sm:$0xf]
    %v2471 = vld [vmem:[%s1 + $0x20] sm:$0xf]
    %v2473 = vlaneseq
    %v2474 = vshrl.u32 %v2473, 7
    %v2475 = vsub.s32 0, %v2474
    %v2476 = vrot.slane %v245, %v2475
    %v2487 = vunpack.c.l.b16 %v2463
    %v2488 = vunpack.c.l.b16 %v2464
    %v2489 = vunpack.c.l.b16 %v2465
    %v2490 = vunpack.c.l.b16 %v2466
    %v2491 = vunpack.c.l.b16 %v2467
    %v2492 = vunpack.c.l.b16 %v2468
    %v2493 = vunpack.c.l.b16 %v2469
    %v2494 = vunpack.c.l.b16 %v2470
    %v2495 = vunpack.c.l.b16 %v2471
    %v2496 = vpack.c.b16 %v2488, %v2487
    %v2497 = vpack.c.b16 %v2490, %v2489
    %v2498 = vpack.c.b16 %v2492, %v2491
    %v2499 = vpack.c.b16 %v2494, %v2493
    %v2500 = vpack.c.b16 %v2495, %v2495
    %vm2505 = vcmask 588800
    %v2507 = vsel %vm2505, %v2431, 0
    %v2510 = vsel %vm2505, %v2432, 0
    %v2513 = vsel %vm2505, %v2433, 0
    %v2516 = vsel %vm2505, %v2434, 0
    %v2519 = vsel %vm2505, %v2435, 0
    %v2522 = vsel %vm2505, %v2436, 0
    %v2525 = vsel %vm2505, %v2437, 0
    %v2528 = vsel %vm2505, %v2438, 0
    %v2531 = vsel %vm2505, %v2439, 0
    %v2534 = vsel %vm2505, %v2440, 0
    %v2537 = vsel %vm2505, %v2441, 0
    %v2540 = vsel %vm2505, %v2442, 0
    %v2543 = vsel %vm2505, %v2443, 0
    %v2546 = vsel %vm2505, %v2444, 0
    %v2549 = vsel %vm2505, %v2445, 0
    %v2552 = vsel %vm2505, %v2446, 0
    %v2555 = vsel %vm2505, %v2447, 0
    %v2558 = vsel %vm2505, %v2448, 0
    %v2561 = vsel %vm2505, %v2449, 0
    %v2564 = vsel %vm2505, %v2450, 0
    %v2567 = vsel %vm2505, %v2451, 0
    %v2570 = vsel %vm2505, %v2452, 0
    %v2573 = vsel %vm2505, %v2453, 0
    %v2576 = vsel %vm2505, %v2454, 0
    %v2579 = vsel %vm2505, %v2455, 0
    %v2582 = vsel %vm2505, %v2456, 0
    %v2585 = vsel %vm2505, %v2457, 0
    %v2588 = vsel %vm2505, %v2458, 0
    %v2591 = vsel %vm2505, %v2459, 0
    %v2594 = vsel %vm2505, %v2460, 0
    %v2597 = vsel %vm2505, %v2461, 0
    %v2600 = vsel %vm2505, %v2462, 0
    %vm2602 = vcmask 1043456
    %v2604 = vsel %vm2602, %v2500, 0
    %2606 = vmatprep.subr.bf16.mxu0 0
    %2607 = vmatpush1.bf16.msra.mxu0 %v2496
    %2608 = vmatprep.subr.bf16.mxu0 0
    %2609 = vmatpush1.bf16.msra.mxu0 %v2497
    %2610 = vmatprep.subr.bf16.mxu0 0
    %2611 = vmatpush1.bf16.msra.mxu0 %v2498
    %2612 = vmatprep.subr.bf16.mxu0 0
    %2613 = vmatpush1.bf16.msra.mxu0 %v2499
    %2614 = vmatprep.subr.bf16.mxu0 0
    %2615 = vmatpush1.bf16.msra.mxu0 %v2604
    %2616 = vmatprep.subr.bf16.mxu0 0
    %2617 = vmatpush1.bf16.msra.mxu0 0
    %2618 = vmatprep.subr.bf16.mxu0 0
    %2619 = vmatpush1.bf16.msra.mxu0 0
    %2620 = vmatprep.subr.bf16.mxu0 0
    %2621 = vmatpush1.bf16.msra.mxu0 0
    %2622 = vmatprep.subr.bf16.mxu0 0
    %2623 = vmatpush1.bf16.msra.mxu0 0
    %2624 = vmatprep.subr.bf16.mxu0 0
    %2625 = vmatpush1.bf16.msra.mxu0 0
    %2626 = vmatprep.subr.bf16.mxu0 0
    %2627 = vmatpush1.bf16.msra.mxu0 0
    %2628 = vmatprep.subr.bf16.mxu0 0
    %2629 = vmatpush1.bf16.msra.mxu0 0
    %2630 = vmatprep.subr.bf16.mxu0 0
    %2631 = vmatpush1.bf16.msra.mxu0 0
    %2632 = vmatprep.subr.bf16.mxu0 0
    %2633 = vmatpush1.bf16.msra.mxu0 0
    %2634 = vmatprep.subr.bf16.mxu0 0
    %2635 = vmatpush1.bf16.msra.mxu0 0
    %2636 = vmatprep.subr.bf16.mxu0 0
    %2637 = vmatpush1.bf16.msra.mxu0 0
    %2638 = vmatprep.mubr.bf16.mxu0 0
    %2639 = vmatmul.mubr.bf16.gmra.mrb[0].mxu0 %v2507
    %v2640 = vpop.f32.mrb[0].mxu0
    %v2641 = vadd.f32 %v2476, %v2640
    %v2642 = vpop.f32.mrb[0].mxu0
    %v2643 = vpop.f32.mrb[0].mxu0
    %v2644 = vadd.f32 %v2476, %v2643
    %v2645 = vpop.f32.mrb[0].mxu0
    %2646 = vmatprep.mubr.bf16.mxu0 0
    %2647 = vmatmul.mubr.bf16.gmra.mrb[0].mxu0 %v2510
    %v2648 = vpop.f32.mrb[0].mxu0
    %v2649 = vadd.f32 %v2476, %v2648
    %v2650 = vpop.f32.mrb[0].mxu0
    %v2651 = vpop.f32.mrb[0].mxu0
    %v2652 = vadd.f32 %v2476, %v2651
    %v2653 = vpop.f32.mrb[0].mxu0
    %2654 = vmatprep.mubr.bf16.mxu0 0
    %2655 = vmatmul.mubr.bf16.gmra.mrb[0].mxu0 %v2513
    %v2656 = vpop.f32.mrb[0].mxu0
    %v2657 = vadd.f32 %v2476, %v2656
    %v2658 = vpop.f32.mrb[0].mxu0
    %v2659 = vpop.f32.mrb[0].mxu0
    %v2660 = vadd.f32 %v2476, %v2659
    %v2661 = vpop.f32.mrb[0].mxu0
    %2662 = vmatprep.mubr.bf16.mxu0 0
    %2663 = vmatmul.mubr.bf16.gmra.mrb[0].mxu0 %v2516
    %v2664 = vpop.f32.mrb[0].mxu0
    %v2665 = vadd.f32 %v2476, %v2664
    %v2666 = vpop.f32.mrb[0].mxu0
    %v2667 = vpop.f32.mrb[0].mxu0
    %v2668 = vadd.f32 %v2476, %v2667
    %v2669 = vpop.f32.mrb[0].mxu0
    %2670 = vmatprep.mubr.bf16.mxu0 0
    %2671 = vmatmul.mubr.bf16.gmra.mrb[0].mxu0 %v2519
    %v2672 = vpop.f32.mrb[0].mxu0
    %v2673 = vadd.f32 %v2476, %v2672
    %v2674 = vpop.f32.mrb[0].mxu0
    %v2675 = vpop.f32.mrb[0].mxu0
    %v2676 = vadd.f32 %v2476, %v2675
    %v2677 = vpop.f32.mrb[0].mxu0
    %2678 = vmatprep.mubr.bf16.mxu0 0
    %2679 = vmatmul.mubr.bf16.gmra.mrb[0].mxu0 %v2522
    %v2680 = vpop.f32.mrb[0].mxu0
    %v2681 = vadd.f32 %v2476, %v2680
    %v2682 = vpop.f32.mrb[0].mxu0
    %v2683 = vpop.f32.mrb[0].mxu0
    %v2684 = vadd.f32 %v2476, %v2683
    %v2685 = vpop.f32.mrb[0].mxu0
    %2686 = vmatprep.mubr.bf16.mxu0 0
    %2687 = vmatmul.mubr.bf16.gmra.mrb[0].mxu0 %v2525
    %v2688 = vpop.f32.mrb[0].mxu0
    %v2689 = vadd.f32 %v2476, %v2688
    %v2690 = vpop.f32.mrb[0].mxu0
    %v2691 = vpop.f32.mrb[0].mxu0
    %v2692 = vadd.f32 %v2476, %v2691
    %v2693 = vpop.f32.mrb[0].mxu0
    %2694 = vmatprep.mubr.bf16.mxu0 0
    %2695 = vmatmul.mubr.bf16.gmra.mrb[0].mxu0 %v2528
    %v2696 = vpop.f32.mrb[0].mxu0
    %v2697 = vadd.f32 %v2476, %v2696
    %v2698 = vpop.f32.mrb[0].mxu0
    %v2699 = vpop.f32.mrb[0].mxu0
    %v2700 = vadd.f32 %v2476, %v2699
    %v2701 = vpop.f32.mrb[0].mxu0
    %2702 = vmatprep.mubr.bf16.mxu0 0
    %2703 = vmatmul.mubr.bf16.gmra.mrb[0].mxu0 %v2531
    %v2704 = vpop.f32.mrb[0].mxu0
    %v2705 = vadd.f32 %v2476, %v2704
    %v2706 = vpop.f32.mrb[0].mxu0
    %v2707 = vpop.f32.mrb[0].mxu0
    %v2708 = vadd.f32 %v2476, %v2707
    %v2709 = vpop.f32.mrb[0].mxu0
    %2710 = vmatprep.mubr.bf16.mxu0 0
    %2711 = vmatmul.mubr.bf16.gmra.mrb[0].mxu0 %v2534
    %v2712 = vpop.f32.mrb[0].mxu0
    %v2713 = vadd.f32 %v2476, %v2712
    %v2714 = vpop.f32.mrb[0].mxu0
    %v2715 = vpop.f32.mrb[0].mxu0
    %v2716 = vadd.f32 %v2476, %v2715
    %v2717 = vpop.f32.mrb[0].mxu0
    %2718 = vmatprep.mubr.bf16.mxu0 0
    %2719 = vmatmul.mubr.bf16.gmra.mrb[0].mxu0 %v2537
    %v2720 = vpop.f32.mrb[0].mxu0
    %v2721 = vadd.f32 %v2476, %v2720
    %v2722 = vpop.f32.mrb[0].mxu0
    %v2723 = vpop.f32.mrb[0].mxu0
    %v2724 = vadd.f32 %v2476, %v2723
    %v2725 = vpop.f32.mrb[0].mxu0
    %2726 = vmatprep.mubr.bf16.mxu0 0
    %2727 = vmatmul.mubr.bf16.gmra.mrb[0].mxu0 %v2540
    %v2728 = vpop.f32.mrb[0].mxu0
    %v2729 = vadd.f32 %v2476, %v2728
    %v2730 = vpop.f32.mrb[0].mxu0
    %v2731 = vpop.f32.mrb[0].mxu0
    %v2732 = vadd.f32 %v2476, %v2731
    %v2733 = vpop.f32.mrb[0].mxu0
    %2734 = vmatprep.mubr.bf16.mxu0 0
    %2735 = vmatmul.mubr.bf16.gmra.mrb[0].mxu0 %v2543
    %v2736 = vpop.f32.mrb[0].mxu0
    %v2737 = vadd.f32 %v2476, %v2736
    %v2738 = vpop.f32.mrb[0].mxu0
    %v2739 = vpop.f32.mrb[0].mxu0
    %v2740 = vadd.f32 %v2476, %v2739
    %v2741 = vpop.f32.mrb[0].mxu0
    %2742 = vmatprep.mubr.bf16.mxu0 0
    %2743 = vmatmul.mubr.bf16.gmra.mrb[0].mxu0 %v2546
    %v2744 = vpop.f32.mrb[0].mxu0
    %v2745 = vadd.f32 %v2476, %v2744
    %v2746 = vpop.f32.mrb[0].mxu0
    %v2747 = vpop.f32.mrb[0].mxu0
    %v2748 = vadd.f32 %v2476, %v2747
    %v2749 = vpop.f32.mrb[0].mxu0
    %2750 = vmatprep.mubr.bf16.mxu0 0
    %2751 = vmatmul.mubr.bf16.gmra.mrb[0].mxu0 %v2549
    %v2752 = vpop.f32.mrb[0].mxu0
    %v2753 = vadd.f32 %v2476, %v2752
    %v2754 = vpop.f32.mrb[0].mxu0
    %v2755 = vpop.f32.mrb[0].mxu0
    %v2756 = vadd.f32 %v2476, %v2755
    %v2757 = vpop.f32.mrb[0].mxu0
    %2758 = vmatprep.mubr.bf16.mxu0 0
    %2759 = vmatmul.mubr.bf16.gmra.mrb[0].mxu0 %v2552
    %v2760 = vpop.f32.mrb[0].mxu0
    %v2761 = vadd.f32 %v2476, %v2760
    %v2762 = vpop.f32.mrb[0].mxu0
    %v2763 = vpop.f32.mrb[0].mxu0
    %v2764 = vadd.f32 %v2476, %v2763
    %v2765 = vpop.f32.mrb[0].mxu0
    %2766 = vmatprep.mubr.bf16.mxu0 0
    %2767 = vmatmul.mubr.bf16.gmra.mrb[0].mxu0 %v2555
    %v2768 = vpop.f32.mrb[0].mxu0
    %v2769 = vadd.f32 %v2476, %v2768
    %v2770 = vpop.f32.mrb[0].mxu0
    %v2771 = vpop.f32.mrb[0].mxu0
    %v2772 = vadd.f32 %v2476, %v2771
    %v2773 = vpop.f32.mrb[0].mxu0
    %2774 = vmatprep.mubr.bf16.mxu0 0
    %2775 = vmatmul.mubr.bf16.gmra.mrb[0].mxu0 %v2558
    %v2776 = vpop.f32.mrb[0].mxu0
    %v2777 = vadd.f32 %v2476, %v2776
    %v2778 = vpop.f32.mrb[0].mxu0
    %v2779 = vpop.f32.mrb[0].mxu0
    %v2780 = vadd.f32 %v2476, %v2779
    %v2781 = vpop.f32.mrb[0].mxu0
    %2782 = vmatprep.mubr.bf16.mxu0 0
    %2783 = vmatmul.mubr.bf16.gmra.mrb[0].mxu0 %v2561
    %v2784 = vpop.f32.mrb[0].mxu0
    %v2785 = vadd.f32 %v2476, %v2784
    %v2786 = vpop.f32.mrb[0].mxu0
    %v2787 = vpop.f32.mrb[0].mxu0
    %v2788 = vadd.f32 %v2476, %v2787
    %v2789 = vpop.f32.mrb[0].mxu0
    %2790 = vmatprep.mubr.bf16.mxu0 0
    %2791 = vmatmul.mubr.bf16.gmra.mrb[0].mxu0 %v2564
    %v2792 = vpop.f32.mrb[0].mxu0
    %v2793 = vadd.f32 %v2476, %v2792
    %v2794 = vpop.f32.mrb[0].mxu0
    %v2795 = vpop.f32.mrb[0].mxu0
    %v2796 = vadd.f32 %v2476, %v2795
    %v2797 = vpop.f32.mrb[0].mxu0
    %2798 = vmatprep.mubr.bf16.mxu0 0
    %2799 = vmatmul.mubr.bf16.gmra.mrb[0].mxu0 %v2567
    %v2800 = vpop.f32.mrb[0].mxu0
    %v2801 = vadd.f32 %v2476, %v2800
    %v2802 = vpop.f32.mrb[0].mxu0
    %v2803 = vpop.f32.mrb[0].mxu0
    %v2804 = vadd.f32 %v2476, %v2803
    %v2805 = vpop.f32.mrb[0].mxu0
    %2806 = vmatprep.mubr.bf16.mxu0 0
    %2807 = vmatmul.mubr.bf16.gmra.mrb[0].mxu0 %v2570
    %v2808 = vpop.f32.mrb[0].mxu0
    %v2809 = vadd.f32 %v2476, %v2808
    %v2810 = vpop.f32.mrb[0].mxu0
    %v2811 = vpop.f32.mrb[0].mxu0
    %v2812 = vadd.f32 %v2476, %v2811
    %v2813 = vpop.f32.mrb[0].mxu0
    %2814 = vmatprep.mubr.bf16.mxu0 0
    %2815 = vmatmul.mubr.bf16.gmra.mrb[0].mxu0 %v2573
    %v2816 = vpop.f32.mrb[0].mxu0
    %v2817 = vadd.f32 %v2476, %v2816
    %v2818 = vpop.f32.mrb[0].mxu0
    %v2819 = vpop.f32.mrb[0].mxu0
    %v2820 = vadd.f32 %v2476, %v2819
    %v2821 = vpop.f32.mrb[0].mxu0
    %2822 = vmatprep.mubr.bf16.mxu0 0
    %2823 = vmatmul.mubr.bf16.gmra.mrb[0].mxu0 %v2576
    %v2824 = vpop.f32.mrb[0].mxu0
    %v2825 = vadd.f32 %v2476, %v2824
    %v2826 = vpop.f32.mrb[0].mxu0
    %v2827 = vpop.f32.mrb[0].mxu0
    %v2828 = vadd.f32 %v2476, %v2827
    %v2829 = vpop.f32.mrb[0].mxu0
    %2830 = vmatprep.mubr.bf16.mxu0 0
    %2831 = vmatmul.mubr.bf16.gmra.mrb[0].mxu0 %v2579
    %v2832 = vpop.f32.mrb[0].mxu0
    %v2833 = vadd.f32 %v2476, %v2832
    %v2834 = vpop.f32.mrb[0].mxu0
    %v2835 = vpop.f32.mrb[0].mxu0
    %v2836 = vadd.f32 %v2476, %v2835
    %v2837 = vpop.f32.mrb[0].mxu0
    %2838 = vmatprep.mubr.bf16.mxu0 0
    %2839 = vmatmul.mubr.bf16.gmra.mrb[0].mxu0 %v2582
    %v2840 = vpop.f32.mrb[0].mxu0
    %v2841 = vadd.f32 %v2476, %v2840
    %v2842 = vpop.f32.mrb[0].mxu0
    %v2843 = vpop.f32.mrb[0].mxu0
    %v2844 = vadd.f32 %v2476, %v2843
    %v2845 = vpop.f32.mrb[0].mxu0
    %2846 = vmatprep.mubr.bf16.mxu0 0
    %2847 = vmatmul.mubr.bf16.gmra.mrb[0].mxu0 %v2585
    %v2848 = vpop.f32.mrb[0].mxu0
    %v2849 = vadd.f32 %v2476, %v2848
    %v2850 = vpop.f32.mrb[0].mxu0
    %v2851 = vpop.f32.mrb[0].mxu0
    %v2852 = vadd.f32 %v2476, %v2851
    %v2853 = vpop.f32.mrb[0].mxu0
    %2854 = vmatprep.mubr.bf16.mxu0 0
    %2855 = vmatmul.mubr.bf16.gmra.mrb[0].mxu0 %v2588
    %v2856 = vpop.f32.mrb[0].mxu0
    %v2857 = vadd.f32 %v2476, %v2856
    %v2858 = vpop.f32.mrb[0].mxu0
    %v2859 = vpop.f32.mrb[0].mxu0
    %v2860 = vadd.f32 %v2476, %v2859
    %v2861 = vpop.f32.mrb[0].mxu0
    %2862 = vmatprep.mubr.bf16.mxu0 0
    %2863 = vmatmul.mubr.bf16.gmra.mrb[0].mxu0 %v2591
    %v2864 = vpop.f32.mrb[0].mxu0
    %v2865 = vadd.f32 %v2476, %v2864
    %v2866 = vpop.f32.mrb[0].mxu0
    %v2867 = vpop.f32.mrb[0].mxu0
    %v2868 = vadd.f32 %v2476, %v2867
    %v2869 = vpop.f32.mrb[0].mxu0
    %2870 = vmatprep.mubr.bf16.mxu0 0
    %2871 = vmatmul.mubr.bf16.gmra.mrb[0].mxu0 %v2594
    %v2872 = vpop.f32.mrb[0].mxu0
    %v2873 = vadd.f32 %v2476, %v2872
    %v2874 = vpop.f32.mrb[0].mxu0
    %v2875 = vpop.f32.mrb[0].mxu0
    %v2876 = vadd.f32 %v2476, %v2875
    %v2877 = vpop.f32.mrb[0].mxu0
    %2878 = vmatprep.mubr.bf16.mxu0 0
    %2879 = vmatmul.mubr.bf16.gmra.mrb[0].mxu0 %v2597
    %v2880 = vpop.f32.mrb[0].mxu0
    %v2881 = vadd.f32 %v2476, %v2880
    %v2882 = vpop.f32.mrb[0].mxu0
    %v2883 = vpop.f32.mrb[0].mxu0
    %v2884 = vadd.f32 %v2476, %v2883
    %v2885 = vpop.f32.mrb[0].mxu0
    %2886 = vmatprep.mubr.bf16.mxu0 0
    %2887 = vmatmul.mubr.bf16.gmra.mrb[0].mxu0 %v2600
    %v2888 = vpop.f32.mrb[0].mxu0
    %v2889 = vadd.f32 %v2476, %v2888
    %v2890 = vpop.f32.mrb[0].mxu0
    %v2891 = vpop.f32.mrb[0].mxu0
    %v2892 = vadd.f32 %v2476, %v2891
    %v2893 = vpop.f32.mrb[0].mxu0
    %2894 = vdwg.mxu0
    %v2895 = vmax.f32 %v2641, 0.0
    %v2896 = vmax.f32 %v2644, 0.0
    %v2897 = vmax.f32 %v2649, 0.0
    %v2898 = vmax.f32 %v2652, 0.0
    %v2899 = vmax.f32 %v2657, 0.0
    %v2900 = vmax.f32 %v2660, 0.0
    %v2901 = vmax.f32 %v2665, 0.0
    %v2902 = vmax.f32 %v2668, 0.0
    %v2903 = vmax.f32 %v2673, 0.0
    %v2904 = vmax.f32 %v2676, 0.0
    %v2905 = vmax.f32 %v2681, 0.0
    %v2906 = vmax.f32 %v2684, 0.0
    %v2907 = vmax.f32 %v2689, 0.0
    %v2908 = vmax.f32 %v2692, 0.0
    %v2909 = vmax.f32 %v2697, 0.0
    %v2910 = vmax.f32 %v2700, 0.0
    %v2911 = vmax.f32 %v2705, 0.0
    %v2912 = vmax.f32 %v2708, 0.0
    %v2913 = vmax.f32 %v2713, 0.0
    %v2914 = vmax.f32 %v2716, 0.0
    %v2915 = vmax.f32 %v2721, 0.0
    %v2916 = vmax.f32 %v2724, 0.0
    %v2917 = vmax.f32 %v2729, 0.0
    %v2918 = vmax.f32 %v2732, 0.0
    %v2919 = vmax.f32 %v2737, 0.0
    %v2920 = vmax.f32 %v2740, 0.0
    %v2921 = vmax.f32 %v2745, 0.0
    %v2922 = vmax.f32 %v2748, 0.0
    %v2923 = vmax.f32 %v2753, 0.0
    %v2924 = vmax.f32 %v2756, 0.0
    %v2925 = vmax.f32 %v2761, 0.0
    %v2926 = vmax.f32 %v2764, 0.0
    %v2927 = vmax.f32 %v2769, 0.0
    %v2928 = vmax.f32 %v2772, 0.0
    %v2929 = vmax.f32 %v2777, 0.0
    %v2930 = vmax.f32 %v2780, 0.0
    %v2931 = vmax.f32 %v2785, 0.0
    %v2932 = vmax.f32 %v2788, 0.0
    %v2933 = vmax.f32 %v2793, 0.0
    %v2934 = vmax.f32 %v2796, 0.0
    %v2935 = vmax.f32 %v2801, 0.0
    %v2936 = vmax.f32 %v2804, 0.0
    %v2937 = vmax.f32 %v2809, 0.0
    %v2938 = vmax.f32 %v2812, 0.0
    %v2939 = vmax.f32 %v2817, 0.0
    %v2940 = vmax.f32 %v2820, 0.0
    %v2941 = vmax.f32 %v2825, 0.0
    %v2942 = vmax.f32 %v2828, 0.0
    %v2943 = vmax.f32 %v2833, 0.0
    %v2944 = vmax.f32 %v2836, 0.0
    %v2945 = vmax.f32 %v2841, 0.0
    %v2946 = vmax.f32 %v2844, 0.0
    %v2947 = vmax.f32 %v2849, 0.0
    %v2948 = vmax.f32 %v2852, 0.0
    %v2949 = vmax.f32 %v2857, 0.0
    %v2950 = vmax.f32 %v2860, 0.0
    %v2951 = vmax.f32 %v2865, 0.0
    %v2952 = vmax.f32 %v2868, 0.0
    %v2953 = vmax.f32 %v2873, 0.0
    %v2954 = vmax.f32 %v2876, 0.0
    %v2955 = vmax.f32 %v2881, 0.0
    %v2956 = vmax.f32 %v2884, 0.0
    %v2957 = vmax.f32 %v2889, 0.0
    %v2958 = vmax.f32 %v2892, 0.0
    %2959 = vst.msk [vmem:[#allocation3] sm:$0xff] %vm28, 0.0
    %2960 = vst.msk [vmem:[#allocation3 + $0x8] sm:$0xff] %vm28, 0.0
    %2961 = vst.msk [vmem:[#allocation3 + $0x10] sm:$0x3] %vm31, 0.0
    %2962 = vst.msk [vmem:[#allocation3 + $0x1b0] sm:$0xff] %vm28, 0.0
    %2963 = vst.msk [vmem:[#allocation3 + $0x1b8] sm:$0xff] %vm28, 0.0
    %2964 = vst.msk [vmem:[#allocation3 + $0x1c0] sm:$0x3] %vm31, 0.0
    %s2965 = scalar_lea.vmem [#allocation3], 408
    %2966 = vst.msk [vmem:[%s2965] sm:$0xff] %vm28, 0.0
    %2967 = vst.msk [vmem:[%s2965 + $0x8] sm:$0xff] %vm28, 0.0
    %2968 = vst.msk [vmem:[%s2965 + $0x10] sm:$0x3] %vm31, 0.0
    %2969 = vst.msk [vmem:[%s2965 + $0x1b0] sm:$0xff] %vm28, 0.0
    %2970 = vst.msk [vmem:[%s2965 + $0x1b8] sm:$0xff] %vm28, 0.0
    %2971 = vst.msk [vmem:[%s2965 + $0x1c0] sm:$0x3] %vm31, 0.0
    %2972 = vst.msk [vmem:[#allocation3] sm:$0x1] %vm43, 0.0
    %2973 = vst.msk [vmem:[#allocation3 + $0x18] sm:$0x1] %vm43, 0.0
    %2974 = vst.msk [vmem:[#allocation3 + $0x30] sm:$0x1] %vm43, 0.0
    %2975 = vst.msk [vmem:[#allocation3 + $0x48] sm:$0x1] %vm43, 0.0
    %2976 = vst.msk [vmem:[#allocation3 + $0x60] sm:$0x1] %vm43, 0.0
    %2977 = vst.msk [vmem:[#allocation3 + $0x78] sm:$0x1] %vm43, 0.0
    %2978 = vst.msk [vmem:[#allocation3 + $0x90] sm:$0x1] %vm43, 0.0
    %2979 = vst.msk [vmem:[#allocation3 + $0xa8] sm:$0x1] %vm43, 0.0
    %2980 = vst.msk [vmem:[#allocation3 + $0xc0] sm:$0x1] %vm43, 0.0
    %2981 = vst.msk [vmem:[#allocation3 + $0xd8] sm:$0x1] %vm43, 0.0
    %2982 = vst.msk [vmem:[#allocation3 + $0xf0] sm:$0x1] %vm43, 0.0
    %2983 = vst.msk [vmem:[#allocation3 + $0x108] sm:$0x1] %vm43, 0.0
    %2984 = vst.msk [vmem:[#allocation3 + $0x120] sm:$0x1] %vm43, 0.0
    %2985 = vst.msk [vmem:[#allocation3 + $0x138] sm:$0x1] %vm43, 0.0
    %2986 = vst.msk [vmem:[#allocation3 + $0x150] sm:$0x1] %vm43, 0.0
    %2987 = vst.msk [vmem:[#allocation3 + $0x168] sm:$0x1] %vm43, 0.0
    %2988 = vst.msk [vmem:[#allocation3 + $0x180] sm:$0x1] %vm43, 0.0
    %2989 = vst.msk [vmem:[#allocation3 + $0x198] sm:$0x1] %vm43, 0.0
    %2990 = vst.msk [vmem:[#allocation3 + $0x1b0] sm:$0x1] %vm43, 0.0
    %2991 = vst.msk [vmem:[#allocation3 + $0x1c8] sm:$0x1] %vm43, 0.0
    %2992 = vst.msk [vmem:[#allocation3 + $0x1e0] sm:$0x1] %vm43, 0.0
    %2993 = vst.msk [vmem:[#allocation3 + $0x1f8] sm:$0x1] %vm43, 0.0
    %2994 = vst.msk [vmem:[#allocation3 + $0x210] sm:$0x1] %vm43, 0.0
    %2995 = vst.msk [vmem:[#allocation3 + $0x228] sm:$0x1] %vm43, 0.0
    %2996 = vst.msk [vmem:[#allocation3 + $0x240] sm:$0x1] %vm43, 0.0
    %2997 = vst.msk [vmem:[#allocation3 + $0x258] sm:$0x1] %vm43, 0.0
    %2998 = vst.msk [vmem:[#allocation3 + $0x270] sm:$0x1] %vm43, 0.0
    %2999 = vst.msk [vmem:[#allocation3 + $0x288] sm:$0x1] %vm43, 0.0
    %3000 = vst.msk [vmem:[#allocation3 + $0x2a0] sm:$0x1] %vm43, 0.0
    %3001 = vst.msk [vmem:[#allocation3 + $0x2b8] sm:$0x1] %vm43, 0.0
    %3002 = vst.msk [vmem:[#allocation3 + $0x2d0] sm:$0x1] %vm43, 0.0
    %3003 = vst.msk [vmem:[#allocation3 + $0x2e8] sm:$0x1] %vm43, 0.0
    %3004 = vst.msk [vmem:[#allocation3 + $0x300] sm:$0x1] %vm43, 0.0
    %3005 = vst.msk [vmem:[#allocation3 + $0x318] sm:$0x1] %vm43, 0.0
    %3006 = vst.msk [vmem:[#allocation3 + $0x330] sm:$0x1] %vm43, 0.0
    %3007 = vst.msk [vmem:[#allocation3 + $0x348] sm:$0x1] %vm43, 0.0
    %3008 = vst.msk [vmem:[#allocation3 + $0x11] sm:$0x1] %vm43, 0.0
    %3009 = vst.msk [vmem:[#allocation3 + $0x29] sm:$0x1] %vm43, 0.0
    %3010 = vst.msk [vmem:[#allocation3 + $0x41] sm:$0x1] %vm43, 0.0
    %3011 = vst.msk [vmem:[#allocation3 + $0x59] sm:$0x1] %vm43, 0.0
    %3012 = vst.msk [vmem:[#allocation3 + $0x71] sm:$0x1] %vm43, 0.0
    %3013 = vst.msk [vmem:[#allocation3 + $0x89] sm:$0x1] %vm43, 0.0
    %3014 = vst.msk [vmem:[#allocation3 + $0xa1] sm:$0x1] %vm43, 0.0
    %3015 = vst.msk [vmem:[#allocation3 + $0xb9] sm:$0x1] %vm43, 0.0
    %3016 = vst.msk [vmem:[#allocation3 + $0xd1] sm:$0x1] %vm43, 0.0
    %3017 = vst.msk [vmem:[#allocation3 + $0xe9] sm:$0x1] %vm43, 0.0
    %3018 = vst.msk [vmem:[#allocation3 + $0x101] sm:$0x1] %vm43, 0.0
    %3019 = vst.msk [vmem:[#allocation3 + $0x119] sm:$0x1] %vm43, 0.0
    %3020 = vst.msk [vmem:[#allocation3 + $0x131] sm:$0x1] %vm43, 0.0
    %3021 = vst.msk [vmem:[#allocation3 + $0x149] sm:$0x1] %vm43, 0.0
    %3022 = vst.msk [vmem:[#allocation3 + $0x161] sm:$0x1] %vm43, 0.0
    %3023 = vst.msk [vmem:[#allocation3 + $0x179] sm:$0x1] %vm43, 0.0
    %3024 = vst.msk [vmem:[#allocation3 + $0x191] sm:$0x1] %vm43, 0.0
    %3025 = vst.msk [vmem:[#allocation3 + $0x1a9] sm:$0x1] %vm43, 0.0
    %3026 = vst.msk [vmem:[#allocation3 + $0x1c1] sm:$0x1] %vm43, 0.0
    %3027 = vst.msk [vmem:[#allocation3 + $0x1d9] sm:$0x1] %vm43, 0.0
    %3028 = vst.msk [vmem:[#allocation3 + $0x1f1] sm:$0x1] %vm43, 0.0
    %3029 = vst.msk [vmem:[#allocation3 + $0x209] sm:$0x1] %vm43, 0.0
    %3030 = vst.msk [vmem:[#allocation3 + $0x221] sm:$0x1] %vm43, 0.0
    %3031 = vst.msk [vmem:[#allocation3 + $0x239] sm:$0x1] %vm43, 0.0
    %3032 = vst.msk [vmem:[#allocation3 + $0x251] sm:$0x1] %vm43, 0.0
    %3033 = vst.msk [vmem:[#allocation3 + $0x269] sm:$0x1] %vm43, 0.0
    %3034 = vst.msk [vmem:[#allocation3 + $0x281] sm:$0x1] %vm43, 0.0
    %3035 = vst.msk [vmem:[#allocation3 + $0x299] sm:$0x1] %vm43, 0.0
    %3036 = vst.msk [vmem:[#allocation3 + $0x2b1] sm:$0x1] %vm43, 0.0
    %3037 = vst.msk [vmem:[#allocation3 + $0x2c9] sm:$0x1] %vm43, 0.0
    %3038 = vst.msk [vmem:[#allocation3 + $0x2e1] sm:$0x1] %vm43, 0.0
    %3039 = vst.msk [vmem:[#allocation3 + $0x2f9] sm:$0x1] %vm43, 0.0
    %3040 = vst.msk [vmem:[#allocation3 + $0x311] sm:$0x1] %vm43, 0.0
    %3041 = vst.msk [vmem:[#allocation3 + $0x329] sm:$0x1] %vm43, 0.0
    %3042 = vst.msk [vmem:[#allocation3 + $0x341] sm:$0x1] %vm43, 0.0
    %3043 = vst.msk [vmem:[#allocation3 + $0x359] sm:$0x1] %vm43, 0.0
    %s3044 = scalar_lea.vmem [#allocation3], 24
    %3045 = vst.msk [vmem:[%s3044 + $0x1] sm:$0xff] %vm28, %v2895
    %3046 = vst.msk [vmem:[%s3044 + $0x9] sm:$0xff] %vm28, %v2896
    %3047 = vst.msk [vmem:[%s3044 + $0x19] sm:$0xff] %vm28, %v2897
    %3048 = vst.msk [vmem:[%s3044 + $0x21] sm:$0xff] %vm28, %v2898
    %3049 = vst.msk [vmem:[%s3044 + $0x31] sm:$0xff] %vm28, %v2899
    %3050 = vst.msk [vmem:[%s3044 + $0x39] sm:$0xff] %vm28, %v2900
    %3051 = vst.msk [vmem:[%s3044 + $0x49] sm:$0xff] %vm28, %v2901
    %3052 = vst.msk [vmem:[%s3044 + $0x51] sm:$0xff] %vm28, %v2902
    %3053 = vst.msk [vmem:[%s3044 + $0x61] sm:$0xff] %vm28, %v2903
    %3054 = vst.msk [vmem:[%s3044 + $0x69] sm:$0xff] %vm28, %v2904
    %3055 = vst.msk [vmem:[%s3044 + $0x79] sm:$0xff] %vm28, %v2905
    %3056 = vst.msk [vmem:[%s3044 + $0x81] sm:$0xff] %vm28, %v2906
    %3057 = vst.msk [vmem:[%s3044 + $0x91] sm:$0xff] %vm28, %v2907
    %3058 = vst.msk [vmem:[%s3044 + $0x99] sm:$0xff] %vm28, %v2908
    %3059 = vst.msk [vmem:[%s3044 + $0xa9] sm:$0xff] %vm28, %v2909
    %3060 = vst.msk [vmem:[%s3044 + $0xb1] sm:$0xff] %vm28, %v2910
    %3061 = vst.msk [vmem:[%s3044 + $0xc1] sm:$0xff] %vm28, %v2911
    %3062 = vst.msk [vmem:[%s3044 + $0xc9] sm:$0xff] %vm28, %v2912
    %3063 = vst.msk [vmem:[%s3044 + $0xd9] sm:$0xff] %vm28, %v2913
    %3064 = vst.msk [vmem:[%s3044 + $0xe1] sm:$0xff] %vm28, %v2914
    %3065 = vst.msk [vmem:[%s3044 + $0xf1] sm:$0xff] %vm28, %v2915
    %3066 = vst.msk [vmem:[%s3044 + $0xf9] sm:$0xff] %vm28, %v2916
    %3067 = vst.msk [vmem:[%s3044 + $0x109] sm:$0xff] %vm28, %v2917
    %3068 = vst.msk [vmem:[%s3044 + $0x111] sm:$0xff] %vm28, %v2918
    %3069 = vst.msk [vmem:[%s3044 + $0x121] sm:$0xff] %vm28, %v2919
    %3070 = vst.msk [vmem:[%s3044 + $0x129] sm:$0xff] %vm28, %v2920
    %3071 = vst.msk [vmem:[%s3044 + $0x139] sm:$0xff] %vm28, %v2921
    %3072 = vst.msk [vmem:[%s3044 + $0x141] sm:$0xff] %vm28, %v2922
    %3073 = vst.msk [vmem:[%s3044 + $0x151] sm:$0xff] %vm28, %v2923
    %3074 = vst.msk [vmem:[%s3044 + $0x159] sm:$0xff] %vm28, %v2924
    %3075 = vst.msk [vmem:[%s3044 + $0x169] sm:$0xff] %vm28, %v2925
    %3076 = vst.msk [vmem:[%s3044 + $0x171] sm:$0xff] %vm28, %v2926
    %3077 = vst.msk [vmem:[%s3044 + $0x1b1] sm:$0xff] %vm28, %v2927
    %3078 = vst.msk [vmem:[%s3044 + $0x1b9] sm:$0xff] %vm28, %v2928
    %3079 = vst.msk [vmem:[%s3044 + $0x1c9] sm:$0xff] %vm28, %v2929
    %3080 = vst.msk [vmem:[%s3044 + $0x1d1] sm:$0xff] %vm28, %v2930
    %3081 = vst.msk [vmem:[%s3044 + $0x1e1] sm:$0xff] %vm28, %v2931
    %3082 = vst.msk [vmem:[%s3044 + $0x1e9] sm:$0xff] %vm28, %v2932
    %3083 = vst.msk [vmem:[%s3044 + $0x1f9] sm:$0xff] %vm28, %v2933
    %3084 = vst.msk [vmem:[%s3044 + $0x201] sm:$0xff] %vm28, %v2934
    %3085 = vst.msk [vmem:[%s3044 + $0x211] sm:$0xff] %vm28, %v2935
    %3086 = vst.msk [vmem:[%s3044 + $0x219] sm:$0xff] %vm28, %v2936
    %3087 = vst.msk [vmem:[%s3044 + $0x229] sm:$0xff] %vm28, %v2937
    %3088 = vst.msk [vmem:[%s3044 + $0x231] sm:$0xff] %vm28, %v2938
    %3089 = vst.msk [vmem:[%s3044 + $0x241] sm:$0xff] %vm28, %v2939
    %3090 = vst.msk [vmem:[%s3044 + $0x249] sm:$0xff] %vm28, %v2940
    %3091 = vst.msk [vmem:[%s3044 + $0x259] sm:$0xff] %vm28, %v2941
    %3092 = vst.msk [vmem:[%s3044 + $0x261] sm:$0xff] %vm28, %v2942
    %3093 = vst.msk [vmem:[%s3044 + $0x271] sm:$0xff] %vm28, %v2943
    %3094 = vst.msk [vmem:[%s3044 + $0x279] sm:$0xff] %vm28, %v2944
    %3095 = vst.msk [vmem:[%s3044 + $0x289] sm:$0xff] %vm28, %v2945
    %3096 = vst.msk [vmem:[%s3044 + $0x291] sm:$0xff] %vm28, %v2946
    %3097 = vst.msk [vmem:[%s3044 + $0x2a1] sm:$0xff] %vm28, %v2947
    %3098 = vst.msk [vmem:[%s3044 + $0x2a9] sm:$0xff] %vm28, %v2948
    %3099 = vst.msk [vmem:[%s3044 + $0x2b9] sm:$0xff] %vm28, %v2949
    %3100 = vst.msk [vmem:[%s3044 + $0x2c1] sm:$0xff] %vm28, %v2950
    %3101 = vst.msk [vmem:[%s3044 + $0x2d1] sm:$0xff] %vm28, %v2951
    %3102 = vst.msk [vmem:[%s3044 + $0x2d9] sm:$0xff] %vm28, %v2952
    %3103 = vst.msk [vmem:[%s3044 + $0x2e9] sm:$0xff] %vm28, %v2953
    %3104 = vst.msk [vmem:[%s3044 + $0x2f1] sm:$0xff] %vm28, %v2954
    %3105 = vst.msk [vmem:[%s3044 + $0x301] sm:$0xff] %vm28, %v2955
    %3106 = vst.msk [vmem:[%s3044 + $0x309] sm:$0xff] %vm28, %v2956
    %3107 = vst.msk [vmem:[%s3044 + $0x319] sm:$0xff] %vm28, %v2957
    %3108 = vst.msk [vmem:[%s3044 + $0x321] sm:$0xff] %vm28, %v2958
    %v3109 = vld [vmem:[%s4] sm:$0x1]
    %v3110 = vld [vmem:[#allocation3] sm:$0xff]
    %v3111 = vld [vmem:[#allocation3 + $0x8] sm:$0xff]
    %v3112 = vld [vmem:[#allocation3 + $0x18] sm:$0xff]
    %v3113 = vld [vmem:[#allocation3 + $0x20] sm:$0xff]
    %v3114 = vld [vmem:[#allocation3 + $0x30] sm:$0xff]
    %v3115 = vld [vmem:[#allocation3 + $0x38] sm:$0xff]
    %v3116 = vld [vmem:[#allocation3 + $0x48] sm:$0xff]
    %v3117 = vld [vmem:[#allocation3 + $0x50] sm:$0xff]
    %v3118 = vld [vmem:[#allocation3 + $0x60] sm:$0xff]
    %v3119 = vld [vmem:[#allocation3 + $0x68] sm:$0xff]
    %v3120 = vld [vmem:[#allocation3 + $0x78] sm:$0xff]
    %v3121 = vld [vmem:[#allocation3 + $0x80] sm:$0xff]
    %v3122 = vld [vmem:[#allocation3 + $0x90] sm:$0xff]
    %v3123 = vld [vmem:[#allocation3 + $0x98] sm:$0xff]
    %v3124 = vld [vmem:[#allocation3 + $0xa8] sm:$0xff]
    %v3125 = vld [vmem:[#allocation3 + $0xb0] sm:$0xff]
    %v3126 = vld [vmem:[#allocation3 + $0xc0] sm:$0xff]
    %v3127 = vld [vmem:[#allocation3 + $0xc8] sm:$0xff]
    %v3128 = vld [vmem:[#allocation3 + $0xd8] sm:$0xff]
    %v3129 = vld [vmem:[#allocation3 + $0xe0] sm:$0xff]
    %v3130 = vld [vmem:[#allocation3 + $0xf0] sm:$0xff]
    %v3131 = vld [vmem:[#allocation3 + $0xf8] sm:$0xff]
    %v3132 = vld [vmem:[#allocation3 + $0x108] sm:$0xff]
    %v3133 = vld [vmem:[#allocation3 + $0x110] sm:$0xff]
    %v3134 = vld [vmem:[#allocation3 + $0x120] sm:$0xff]
    %v3135 = vld [vmem:[#allocation3 + $0x128] sm:$0xff]
    %v3136 = vld [vmem:[#allocation3 + $0x138] sm:$0xff]
    %v3137 = vld [vmem:[#allocation3 + $0x140] sm:$0xff]
    %v3138 = vld [vmem:[#allocation3 + $0x150] sm:$0xff]
    %v3139 = vld [vmem:[#allocation3 + $0x158] sm:$0xff]
    %v3140 = vld [vmem:[#allocation3 + $0x168] sm:$0xff]
    %v3141 = vld [vmem:[#allocation3 + $0x170] sm:$0xff]
    %v3142 = vld [vmem:[#allocation3 + $0x1b0] sm:$0xff]
    %v3143 = vld [vmem:[#allocation3 + $0x1b8] sm:$0xff]
    %v3144 = vld [vmem:[#allocation3 + $0x1c8] sm:$0xff]
    %v3145 = vld [vmem:[#allocation3 + $0x1d0] sm:$0xff]
    %v3146 = vld [vmem:[#allocation3 + $0x1e0] sm:$0xff]
    %v3147 = vld [vmem:[#allocation3 + $0x1e8] sm:$0xff]
    %v3148 = vld [vmem:[#allocation3 + $0x1f8] sm:$0xff]
    %v3149 = vld [vmem:[#allocation3 + $0x200] sm:$0xff]
    %v3150 = vld [vmem:[#allocation3 + $0x210] sm:$0xff]
    %v3151 = vld [vmem:[#allocation3 + $0x218] sm:$0xff]
    %v3152 = vld [vmem:[#allocation3 + $0x228] sm:$0xff]
    %v3153 = vld [vmem:[#allocation3 + $0x230] sm:$0xff]
    %v3154 = vld [vmem:[#allocation3 + $0x240] sm:$0xff]
    %v3155 = vld [vmem:[#allocation3 + $0x248] sm:$0xff]
    %v3156 = vld [vmem:[#allocation3 + $0x258] sm:$0xff]
    %v3157 = vld [vmem:[#allocation3 + $0x260] sm:$0xff]
    %v3158 = vld [vmem:[#allocation3 + $0x270] sm:$0xff]
    %v3159 = vld [vmem:[#allocation3 + $0x278] sm:$0xff]
    %v3160 = vld [vmem:[#allocation3 + $0x288] sm:$0xff]
    %v3161 = vld [vmem:[#allocation3 + $0x290] sm:$0xff]
    %v3162 = vld [vmem:[#allocation3 + $0x2a0] sm:$0xff]
    %v3163 = vld [vmem:[#allocation3 + $0x2a8] sm:$0xff]
    %v3164 = vld [vmem:[#allocation3 + $0x2b8] sm:$0xff]
    %v3165 = vld [vmem:[#allocation3 + $0x2c0] sm:$0xff]
    %v3166 = vld [vmem:[#allocation3 + $0x2d0] sm:$0xff]
    %v3167 = vld [vmem:[#allocation3 + $0x2d8] sm:$0xff]
    %v3168 = vld [vmem:[#allocation3 + $0x2e8] sm:$0xff]
    %v3169 = vld [vmem:[#allocation3 + $0x2f0] sm:$0xff]
    %v3170 = vld [vmem:[#allocation3 + $0x300] sm:$0xff]
    %v3171 = vld [vmem:[#allocation3 + $0x308] sm:$0xff]
    %v3172 = vld [vmem:[#allocation3 + $0x318] sm:$0xff]
    %v3173 = vld [vmem:[#allocation3 + $0x320] sm:$0xff]
    %v3174 = vpack.c.bf16 %v3111, %v3110
    %v3175 = vpack.c.bf16 %v3113, %v3112
    %v3176 = vpack.c.bf16 %v3115, %v3114
    %v3177 = vpack.c.bf16 %v3117, %v3116
    %v3178 = vpack.c.bf16 %v3119, %v3118
    %v3179 = vpack.c.bf16 %v3121, %v3120
    %v3180 = vpack.c.bf16 %v3123, %v3122
    %v3181 = vpack.c.bf16 %v3125, %v3124
    %v3182 = vpack.c.bf16 %v3127, %v3126
    %v3183 = vpack.c.bf16 %v3129, %v3128
    %v3184 = vpack.c.bf16 %v3131, %v3130
    %v3185 = vpack.c.bf16 %v3133, %v3132
    %v3186 = vpack.c.bf16 %v3135, %v3134
    %v3187 = vpack.c.bf16 %v3137, %v3136
    %v3188 = vpack.c.bf16 %v3139, %v3138
    %v3189 = vpack.c.bf16 %v3141, %v3140
    %v3190 = vpack.c.bf16 %v3143, %v3142
    %v3191 = vpack.c.bf16 %v3145, %v3144
    %v3192 = vpack.c.bf16 %v3147, %v3146
    %v3193 = vpack.c.bf16 %v3149, %v3148
    %v3194 = vpack.c.bf16 %v3151, %v3150
    %v3195 = vpack.c.bf16 %v3153, %v3152
    %v3196 = vpack.c.bf16 %v3155, %v3154
    %v3197 = vpack.c.bf16 %v3157, %v3156
    %v3198 = vpack.c.bf16 %v3159, %v3158
    %v3199 = vpack.c.bf16 %v3161, %v3160
    %v3200 = vpack.c.bf16 %v3163, %v3162
    %v3201 = vpack.c.bf16 %v3165, %v3164
    %v3202 = vpack.c.bf16 %v3167, %v3166
    %v3203 = vpack.c.bf16 %v3169, %v3168
    %v3204 = vpack.c.bf16 %v3171, %v3170
    %v3205 = vpack.c.bf16 %v3173, %v3172
    %3206 = vst.msk [vmem:[#allocation5] sm:$0xff] %vm28, %v3174
    %3207 = vst.msk [vmem:[#allocation5 + $0x8] sm:$0xff] %vm28, %v3175
    %3208 = vst.msk [vmem:[#allocation5 + $0x10] sm:$0xff] %vm28, %v3176
    %3209 = vst.msk [vmem:[#allocation5 + $0x18] sm:$0xff] %vm28, %v3177
    %3210 = vst.msk [vmem:[#allocation5 + $0x20] sm:$0xff] %vm28, %v3178
    %3211 = vst.msk [vmem:[#allocation5 + $0x28] sm:$0xff] %vm28, %v3179
    %3212 = vst.msk [vmem:[#allocation5 + $0x30] sm:$0xff] %vm28, %v3180
    %3213 = vst.msk [vmem:[#allocation5 + $0x38] sm:$0xff] %vm28, %v3181
    %3214 = vst.msk [vmem:[#allocation5 + $0x40] sm:$0xff] %vm28, %v3182
    %3215 = vst.msk [vmem:[#allocation5 + $0x48] sm:$0xff] %vm28, %v3183
    %3216 = vst.msk [vmem:[#allocation5 + $0x50] sm:$0xff] %vm28, %v3184
    %3217 = vst.msk [vmem:[#allocation5 + $0x58] sm:$0xff] %vm28, %v3185
    %3218 = vst.msk [vmem:[#allocation5 + $0x60] sm:$0xff] %vm28, %v3186
    %3219 = vst.msk [vmem:[#allocation5 + $0x68] sm:$0xff] %vm28, %v3187
    %3220 = vst.msk [vmem:[#allocation5 + $0x70] sm:$0xff] %vm28, %v3188
    %3221 = vst.msk [vmem:[#allocation5 + $0x78] sm:$0xff] %vm28, %v3189
    %3222 = vst.msk [vmem:[#allocation5 + $0x80] sm:$0xff] %vm28, %v3190
    %3223 = vst.msk [vmem:[#allocation5 + $0x88] sm:$0xff] %vm28, %v3191
    %3224 = vst.msk [vmem:[#allocation5 + $0x90] sm:$0xff] %vm28, %v3192
    %3225 = vst.msk [vmem:[#allocation5 + $0x98] sm:$0xff] %vm28, %v3193
    %3226 = vst.msk [vmem:[#allocation5 + $0xa0] sm:$0xff] %vm28, %v3194
    %3227 = vst.msk [vmem:[#allocation5 + $0xa8] sm:$0xff] %vm28, %v3195
    %3228 = vst.msk [vmem:[#allocation5 + $0xb0] sm:$0xff] %vm28, %v3196
    %3229 = vst.msk [vmem:[#allocation5 + $0xb8] sm:$0xff] %vm28, %v3197
    %3230 = vst.msk [vmem:[#allocation5 + $0xc0] sm:$0xff] %vm28, %v3198
    %3231 = vst.msk [vmem:[#allocation5 + $0xc8] sm:$0xff] %vm28, %v3199
    %3232 = vst.msk [vmem:[#allocation5 + $0xd0] sm:$0xff] %vm28, %v3200
    %3233 = vst.msk [vmem:[#allocation5 + $0xd8] sm:$0xff] %vm28, %v3201
    %3234 = vst.msk [vmem:[#allocation5 + $0xe0] sm:$0xff] %vm28, %v3202
    %3235 = vst.msk [vmem:[#allocation5 + $0xe8] sm:$0xff] %vm28, %v3203
    %3236 = vst.msk [vmem:[#allocation5 + $0xf0] sm:$0xff] %vm28, %v3204
    %3237 = vst.msk [vmem:[#allocation5 + $0xf8] sm:$0xff] %vm28, %v3205
    %v3238 = vld [vmem:[#allocation3 + $0x1] sm:$0xff]
    %v3239 = vld [vmem:[#allocation3 + $0x9] sm:$0xff]
    %v3240 = vld [vmem:[#allocation3 + $0x19] sm:$0xff]
    %v3241 = vld [vmem:[#allocation3 + $0x21] sm:$0xff]
    %v3242 = vld [vmem:[#allocation3 + $0x31] sm:$0xff]
    %v3243 = vld [vmem:[#allocation3 + $0x39] sm:$0xff]
    %v3244 = vld [vmem:[#allocation3 + $0x49] sm:$0xff]
    %v3245 = vld [vmem:[#allocation3 + $0x51] sm:$0xff]
    %v3246 = vld [vmem:[#allocation3 + $0x61] sm:$0xff]
    %v3247 = vld [vmem:[#allocation3 + $0x69] sm:$0xff]
    %v3248 = vld [vmem:[#allocation3 + $0x79] sm:$0xff]
    %v3249 = vld [vmem:[#allocation3 + $0x81] sm:$0xff]
    %v3250 = vld [vmem:[#allocation3 + $0x91] sm:$0xff]
    %v3251 = vld [vmem:[#allocation3 + $0x99] sm:$0xff]
    %v3252 = vld [vmem:[#allocation3 + $0xa9] sm:$0xff]
    %v3253 = vld [vmem:[#allocation3 + $0xb1] sm:$0xff]
    %v3254 = vld [vmem:[#allocation3 + $0xc1] sm:$0xff]
    %v3255 = vld [vmem:[#allocation3 + $0xc9] sm:$0xff]
    %v3256 = vld [vmem:[#allocation3 + $0xd9] sm:$0xff]
    %v3257 = vld [vmem:[#allocation3 + $0xe1] sm:$0xff]
    %v3258 = vld [vmem:[#allocation3 + $0xf1] sm:$0xff]
    %v3259 = vld [vmem:[#allocation3 + $0xf9] sm:$0xff]
    %v3260 = vld [vmem:[#allocation3 + $0x109] sm:$0xff]
    %v3261 = vld [vmem:[#allocation3 + $0x111] sm:$0xff]
    %v3262 = vld [vmem:[#allocation3 + $0x121] sm:$0xff]
    %v3263 = vld [vmem:[#allocation3 + $0x129] sm:$0xff]
    %v3264 = vld [vmem:[#allocation3 + $0x139] sm:$0xff]
    %v3265 = vld [vmem:[#allocation3 + $0x141] sm:$0xff]
    %v3266 = vld [vmem:[#allocation3 + $0x151] sm:$0xff]
    %v3267 = vld [vmem:[#allocation3 + $0x159] sm:$0xff]
    %v3268 = vld [vmem:[#allocation3 + $0x169] sm:$0xff]
    %v3269 = vld [vmem:[#allocation3 + $0x171] sm:$0xff]
    %v3270 = vld [vmem:[#allocation3 + $0x1b1] sm:$0xff]
    %v3271 = vld [vmem:[#allocation3 + $0x1b9] sm:$0xff]
    %v3272 = vld [vmem:[#allocation3 + $0x1c9] sm:$0xff]
    %v3273 = vld [vmem:[#allocation3 + $0x1d1] sm:$0xff]
    %v3274 = vld [vmem:[#allocation3 + $0x1e1] sm:$0xff]
    %v3275 = vld [vmem:[#allocation3 + $0x1e9] sm:$0xff]
    %v3276 = vld [vmem:[#allocation3 + $0x1f9] sm:$0xff]
    %v3277 = vld [vmem:[#allocation3 + $0x201] sm:$0xff]
    %v3278 = vld [vmem:[#allocation3 + $0x211] sm:$0xff]
    %v3279 = vld [vmem:[#allocation3 + $0x219] sm:$0xff]
    %v3280 = vld [vmem:[#allocation3 + $0x229] sm:$0xff]
    %v3281 = vld [vmem:[#allocation3 + $0x231] sm:$0xff]
    %v3282 = vld [vmem:[#allocation3 + $0x241] sm:$0xff]
    %v3283 = vld [vmem:[#allocation3 + $0x249] sm:$0xff]
    %v3284 = vld [vmem:[#allocation3 + $0x259] sm:$0xff]
    %v3285 = vld [vmem:[#allocation3 + $0x261] sm:$0xff]
    %v3286 = vld [vmem:[#allocation3 + $0x271] sm:$0xff]
    %v3287 = vld [vmem:[#allocation3 + $0x279] sm:$0xff]
    %v3288 = vld [vmem:[#allocation3 + $0x289] sm:$0xff]
    %v3289 = vld [vmem:[#allocation3 + $0x291] sm:$0xff]
    %v3290 = vld [vmem:[#allocation3 + $0x2a1] sm:$0xff]
    %v3291 = vld [vmem:[#allocation3 + $0x2a9] sm:$0xff]
    %v3292 = vld [vmem:[#allocation3 + $0x2b9] sm:$0xff]
    %v3293 = vld [vmem:[#allocation3 + $0x2c1] sm:$0xff]
    %v3294 = vld [vmem:[#allocation3 + $0x2d1] sm:$0xff]
    %v3295 = vld [vmem:[#allocation3 + $0x2d9] sm:$0xff]
    %v3296 = vld [vmem:[#allocation3 + $0x2e9] sm:$0xff]
    %v3297 = vld [vmem:[#allocation3 + $0x2f1] sm:$0xff]
    %v3298 = vld [vmem:[#allocation3 + $0x301] sm:$0xff]
    %v3299 = vld [vmem:[#allocation3 + $0x309] sm:$0xff]
    %v3300 = vld [vmem:[#allocation3 + $0x319] sm:$0xff]
    %v3301 = vld [vmem:[#allocation3 + $0x321] sm:$0xff]
    %v3302 = vpack.c.bf16 %v3239, %v3238
    %v3303 = vpack.c.bf16 %v3241, %v3240
    %v3304 = vpack.c.bf16 %v3243, %v3242
    %v3305 = vpack.c.bf16 %v3245, %v3244
    %v3306 = vpack.c.bf16 %v3247, %v3246
    %v3307 = vpack.c.bf16 %v3249, %v3248
    %v3308 = vpack.c.bf16 %v3251, %v3250
    %v3309 = vpack.c.bf16 %v3253, %v3252
    %v3310 = vpack.c.bf16 %v3255, %v3254
    %v3311 = vpack.c.bf16 %v3257, %v3256
    %v3312 = vpack.c.bf16 %v3259, %v3258
    %v3313 = vpack.c.bf16 %v3261, %v3260
    %v3314 = vpack.c.bf16 %v3263, %v3262
    %v3315 = vpack.c.bf16 %v3265, %v3264
    %v3316 = vpack.c.bf16 %v3267, %v3266
    %v3317 = vpack.c.bf16 %v3269, %v3268
    %v3318 = vpack.c.bf16 %v3271, %v3270
    %v3319 = vpack.c.bf16 %v3273, %v3272
    %v3320 = vpack.c.bf16 %v3275, %v3274
    %v3321 = vpack.c.bf16 %v3277, %v3276
    %v3322 = vpack.c.bf16 %v3279, %v3278
    %v3323 = vpack.c.bf16 %v3281, %v3280
    %v3324 = vpack.c.bf16 %v3283, %v3282
    %v3325 = vpack.c.bf16 %v3285, %v3284
    %v3326 = vpack.c.bf16 %v3287, %v3286
    %v3327 = vpack.c.bf16 %v3289, %v3288
    %v3328 = vpack.c.bf16 %v3291, %v3290
    %v3329 = vpack.c.bf16 %v3293, %v3292
    %v3330 = vpack.c.bf16 %v3295, %v3294
    %v3331 = vpack.c.bf16 %v3297, %v3296
    %v3332 = vpack.c.bf16 %v3299, %v3298
    %v3333 = vpack.c.bf16 %v3301, %v3300
    %3366 = vrot.lane.b32.xlu0 %v3302, 8
    %v3367 = vpop.permute.xlu0 %3366
    %3368 = vrot.lane.b32.xlu0 %v3303, 8
    %v3369 = vpop.permute.xlu0 %3368
    %3370 = vrot.lane.b32.xlu0 %v3304, 8
    %v3371 = vpop.permute.xlu0 %3370
    %3372 = vrot.lane.b32.xlu0 %v3305, 8
    %v3373 = vpop.permute.xlu0 %3372
    %3374 = vrot.lane.b32.xlu0 %v3306, 8
    %v3375 = vpop.permute.xlu0 %3374
    %3376 = vrot.lane.b32.xlu0 %v3307, 8
    %v3377 = vpop.permute.xlu0 %3376
    %3378 = vrot.lane.b32.xlu0 %v3308, 8
    %v3379 = vpop.permute.xlu0 %3378
    %3380 = vrot.lane.b32.xlu0 %v3309, 8
    %v3381 = vpop.permute.xlu0 %3380
    %3382 = vrot.lane.b32.xlu0 %v3310, 8
    %v3383 = vpop.permute.xlu0 %3382
    %3384 = vrot.lane.b32.xlu0 %v3311, 8
    %v3385 = vpop.permute.xlu0 %3384
    %3386 = vrot.lane.b32.xlu0 %v3312, 8
    %v3387 = vpop.permute.xlu0 %3386
    %3388 = vrot.lane.b32.xlu0 %v3313, 8
    %v3389 = vpop.permute.xlu0 %3388
    %3390 = vrot.lane.b32.xlu0 %v3314, 8
    %v3391 = vpop.permute.xlu0 %3390
    %3392 = vrot.lane.b32.xlu0 %v3315, 8
    %v3393 = vpop.permute.xlu0 %3392
    %3394 = vrot.lane.b32.xlu0 %v3316, 8
    %v3395 = vpop.permute.xlu0 %3394
    %3396 = vrot.lane.b32.xlu0 %v3317, 8
    %v3397 = vpop.permute.xlu0 %3396
    %3398 = vrot.lane.b32.xlu0 %v3318, 8
    %v3399 = vpop.permute.xlu0 %3398
    %3400 = vrot.lane.b32.xlu0 %v3319, 8
    %v3401 = vpop.permute.xlu0 %3400
    %3402 = vrot.lane.b32.xlu0 %v3320, 8
    %v3403 = vpop.permute.xlu0 %3402
    %3404 = vrot.lane.b32.xlu0 %v3321, 8
    %v3405 = vpop.permute.xlu0 %3404
    %3406 = vrot.lane.b32.xlu0 %v3322, 8
    %v3407 = vpop.permute.xlu0 %3406
    %3408 = vrot.lane.b32.xlu0 %v3323, 8
    %v3409 = vpop.permute.xlu0 %3408
    %3410 = vrot.lane.b32.xlu0 %v3324, 8
    %v3411 = vpop.permute.xlu0 %3410
    %3412 = vrot.lane.b32.xlu0 %v3325, 8
    %v3413 = vpop.permute.xlu0 %3412
    %3414 = vrot.lane.b32.xlu0 %v3326, 8
    %v3415 = vpop.permute.xlu0 %3414
    %3416 = vrot.lane.b32.xlu0 %v3327, 8
    %v3417 = vpop.permute.xlu0 %3416
    %3418 = vrot.lane.b32.xlu0 %v3328, 8
    %v3419 = vpop.permute.xlu0 %3418
    %3420 = vrot.lane.b32.xlu0 %v3329, 8
    %v3421 = vpop.permute.xlu0 %3420
    %3422 = vrot.lane.b32.xlu0 %v3330, 8
    %v3423 = vpop.permute.xlu0 %3422
    %3424 = vrot.lane.b32.xlu0 %v3331, 8
    %v3425 = vpop.permute.xlu0 %3424
    %3426 = vrot.lane.b32.xlu0 %v3332, 8
    %v3427 = vpop.permute.xlu0 %3426
    %3428 = vrot.lane.b32.xlu0 %v3333, 8
    %v3429 = vpop.permute.xlu0 %3428
    %3462 = vst.msk [vmem:[#allocation5] sm:$0xff] %vm598, %v3367
    %3463 = vst.msk [vmem:[#allocation5 + $0x8] sm:$0xff] %vm598, %v3369
    %3464 = vst.msk [vmem:[#allocation5 + $0x10] sm:$0xff] %vm598, %v3371
    %3465 = vst.msk [vmem:[#allocation5 + $0x18] sm:$0xff] %vm598, %v3373
    %3466 = vst.msk [vmem:[#allocation5 + $0x20] sm:$0xff] %vm598, %v3375
    %3467 = vst.msk [vmem:[#allocation5 + $0x28] sm:$0xff] %vm598, %v3377
    %3468 = vst.msk [vmem:[#allocation5 + $0x30] sm:$0xff] %vm598, %v3379
    %3469 = vst.msk [vmem:[#allocation5 + $0x38] sm:$0xff] %vm598, %v3381
    %3470 = vst.msk [vmem:[#allocation5 + $0x40] sm:$0xff] %vm598, %v3383
    %3471 = vst.msk [vmem:[#allocation5 + $0x48] sm:$0xff] %vm598, %v3385
    %3472 = vst.msk [vmem:[#allocation5 + $0x50] sm:$0xff] %vm598, %v3387
    %3473 = vst.msk [vmem:[#allocation5 + $0x58] sm:$0xff] %vm598, %v3389
    %3474 = vst.msk [vmem:[#allocation5 + $0x60] sm:$0xff] %vm598, %v3391
    %3475 = vst.msk [vmem:[#allocation5 + $0x68] sm:$0xff] %vm598, %v3393
    %3476 = vst.msk [vmem:[#allocation5 + $0x70] sm:$0xff] %vm598, %v3395
    %3477 = vst.msk [vmem:[#allocation5 + $0x78] sm:$0xff] %vm598, %v3397
    %3478 = vst.msk [vmem:[#allocation5 + $0x80] sm:$0xff] %vm598, %v3399
    %3479 = vst.msk [vmem:[#allocation5 + $0x88] sm:$0xff] %vm598, %v3401
    %3480 = vst.msk [vmem:[#allocation5 + $0x90] sm:$0xff] %vm598, %v3403
    %3481 = vst.msk [vmem:[#allocation5 + $0x98] sm:$0xff] %vm598, %v3405
    %3482 = vst.msk [vmem:[#allocation5 + $0xa0] sm:$0xff] %vm598, %v3407
    %3483 = vst.msk [vmem:[#allocation5 + $0xa8] sm:$0xff] %vm598, %v3409
    %3484 = vst.msk [vmem:[#allocation5 + $0xb0] sm:$0xff] %vm598, %v3411
    %3485 = vst.msk [vmem:[#allocation5 + $0xb8] sm:$0xff] %vm598, %v3413
    %3486 = vst.msk [vmem:[#allocation5 + $0xc0] sm:$0xff] %vm598, %v3415
    %3487 = vst.msk [vmem:[#allocation5 + $0xc8] sm:$0xff] %vm598, %v3417
    %3488 = vst.msk [vmem:[#allocation5 + $0xd0] sm:$0xff] %vm598, %v3419
    %3489 = vst.msk [vmem:[#allocation5 + $0xd8] sm:$0xff] %vm598, %v3421
    %3490 = vst.msk [vmem:[#allocation5 + $0xe0] sm:$0xff] %vm598, %v3423
    %3491 = vst.msk [vmem:[#allocation5 + $0xe8] sm:$0xff] %vm598, %v3425
    %3492 = vst.msk [vmem:[#allocation5 + $0xf0] sm:$0xff] %vm598, %v3427
    %3493 = vst.msk [vmem:[#allocation5 + $0xf8] sm:$0xff] %vm598, %v3429
    %v3494 = vld [vmem:[#allocation3 + $0x2] sm:$0xff]
    %v3495 = vld [vmem:[#allocation3 + $0xa] sm:$0xff]
    %v3496 = vld [vmem:[#allocation3 + $0x1a] sm:$0xff]
    %v3497 = vld [vmem:[#allocation3 + $0x22] sm:$0xff]
    %v3498 = vld [vmem:[#allocation3 + $0x32] sm:$0xff]
    %v3499 = vld [vmem:[#allocation3 + $0x3a] sm:$0xff]
    %v3500 = vld [vmem:[#allocation3 + $0x4a] sm:$0xff]
    %v3501 = vld [vmem:[#allocation3 + $0x52] sm:$0xff]
    %v3502 = vld [vmem:[#allocation3 + $0x62] sm:$0xff]
    %v3503 = vld [vmem:[#allocation3 + $0x6a] sm:$0xff]
    %v3504 = vld [vmem:[#allocation3 + $0x7a] sm:$0xff]
    %v3505 = vld [vmem:[#allocation3 + $0x82] sm:$0xff]
    %v3506 = vld [vmem:[#allocation3 + $0x92] sm:$0xff]
    %v3507 = vld [vmem:[#allocation3 + $0x9a] sm:$0xff]
    %v3508 = vld [vmem:[#allocation3 + $0xaa] sm:$0xff]
    %v3509 = vld [vmem:[#allocation3 + $0xb2] sm:$0xff]
    %v3510 = vld [vmem:[#allocation3 + $0xc2] sm:$0xff]
    %v3511 = vld [vmem:[#allocation3 + $0xca] sm:$0xff]
    %v3512 = vld [vmem:[#allocation3 + $0xda] sm:$0xff]
    %v3513 = vld [vmem:[#allocation3 + $0xe2] sm:$0xff]
    %v3514 = vld [vmem:[#allocation3 + $0xf2] sm:$0xff]
    %v3515 = vld [vmem:[#allocation3 + $0xfa] sm:$0xff]
    %v3516 = vld [vmem:[#allocation3 + $0x10a] sm:$0xff]
    %v3517 = vld [vmem:[#allocation3 + $0x112] sm:$0xff]
    %v3518 = vld [vmem:[#allocation3 + $0x122] sm:$0xff]
    %v3519 = vld [vmem:[#allocation3 + $0x12a] sm:$0xff]
    %v3520 = vld [vmem:[#allocation3 + $0x13a] sm:$0xff]
    %v3521 = vld [vmem:[#allocation3 + $0x142] sm:$0xff]
    %v3522 = vld [vmem:[#allocation3 + $0x152] sm:$0xff]
    %v3523 = vld [vmem:[#allocation3 + $0x15a] sm:$0xff]
    %v3524 = vld [vmem:[#allocation3 + $0x16a] sm:$0xff]
    %v3525 = vld [vmem:[#allocation3 + $0x172] sm:$0xff]
    %v3526 = vld [vmem:[#allocation3 + $0x1b2] sm:$0xff]
    %v3527 = vld [vmem:[#allocation3 + $0x1ba] sm:$0xff]
    %v3528 = vld [vmem:[#allocation3 + $0x1ca] sm:$0xff]
    %v3529 = vld [vmem:[#allocation3 + $0x1d2] sm:$0xff]
    %v3530 = vld [vmem:[#allocation3 + $0x1e2] sm:$0xff]
    %v3531 = vld [vmem:[#allocation3 + $0x1ea] sm:$0xff]
    %v3532 = vld [vmem:[#allocation3 + $0x1fa] sm:$0xff]
    %v3533 = vld [vmem:[#allocation3 + $0x202] sm:$0xff]
    %v3534 = vld [vmem:[#allocation3 + $0x212] sm:$0xff]
    %v3535 = vld [vmem:[#allocation3 + $0x21a] sm:$0xff]
    %v3536 = vld [vmem:[#allocation3 + $0x22a] sm:$0xff]
    %v3537 = vld [vmem:[#allocation3 + $0x232] sm:$0xff]
    %v3538 = vld [vmem:[#allocation3 + $0x242] sm:$0xff]
    %v3539 = vld [vmem:[#allocation3 + $0x24a] sm:$0xff]
    %v3540 = vld [vmem:[#allocation3 + $0x25a] sm:$0xff]
    %v3541 = vld [vmem:[#allocation3 + $0x262] sm:$0xff]
    %v3542 = vld [vmem:[#allocation3 + $0x272] sm:$0xff]
    %v3543 = vld [vmem:[#allocation3 + $0x27a] sm:$0xff]
    %v3544 = vld [vmem:[#allocation3 + $0x28a] sm:$0xff]
    %v3545 = vld [vmem:[#allocation3 + $0x292] sm:$0xff]
    %v3546 = vld [vmem:[#allocation3 + $0x2a2] sm:$0xff]
    %v3547 = vld [vmem:[#allocation3 + $0x2aa] sm:$0xff]
    %v3548 = vld [vmem:[#allocation3 + $0x2ba] sm:$0xff]
    %v3549 = vld [vmem:[#allocation3 + $0x2c2] sm:$0xff]
    %v3550 = vld [vmem:[#allocation3 + $0x2d2] sm:$0xff]
    %v3551 = vld [vmem:[#allocation3 + $0x2da] sm:$0xff]
    %v3552 = vld [vmem:[#allocation3 + $0x2ea] sm:$0xff]
    %v3553 = vld [vmem:[#allocation3 + $0x2f2] sm:$0xff]
    %v3554 = vld [vmem:[#allocation3 + $0x302] sm:$0xff]
    %v3555 = vld [vmem:[#allocation3 + $0x30a] sm:$0xff]
    %v3556 = vld [vmem:[#allocation3 + $0x31a] sm:$0xff]
    %v3557 = vld [vmem:[#allocation3 + $0x322] sm:$0xff]
    %v3558 = vpack.c.bf16 %v3495, %v3494
    %v3559 = vpack.c.bf16 %v3497, %v3496
    %v3560 = vpack.c.bf16 %v3499, %v3498
    %v3561 = vpack.c.bf16 %v3501, %v3500
    %v3562 = vpack.c.bf16 %v3503, %v3502
    %v3563 = vpack.c.bf16 %v3505, %v3504
    %v3564 = vpack.c.bf16 %v3507, %v3506
    %v3565 = vpack.c.bf16 %v3509, %v3508
    %v3566 = vpack.c.bf16 %v3511, %v3510
    %v3567 = vpack.c.bf16 %v3513, %v3512
    %v3568 = vpack.c.bf16 %v3515, %v3514
    %v3569 = vpack.c.bf16 %v3517, %v3516
    %v3570 = vpack.c.bf16 %v3519, %v3518
    %v3571 = vpack.c.bf16 %v3521, %v3520
    %v3572 = vpack.c.bf16 %v3523, %v3522
    %v3573 = vpack.c.bf16 %v3525, %v3524
    %v3574 = vpack.c.bf16 %v3527, %v3526
    %v3575 = vpack.c.bf16 %v3529, %v3528
    %v3576 = vpack.c.bf16 %v3531, %v3530
    %v3577 = vpack.c.bf16 %v3533, %v3532
    %v3578 = vpack.c.bf16 %v3535, %v3534
    %v3579 = vpack.c.bf16 %v3537, %v3536
    %v3580 = vpack.c.bf16 %v3539, %v3538
    %v3581 = vpack.c.bf16 %v3541, %v3540
    %v3582 = vpack.c.bf16 %v3543, %v3542
    %v3583 = vpack.c.bf16 %v3545, %v3544
    %v3584 = vpack.c.bf16 %v3547, %v3546
    %v3585 = vpack.c.bf16 %v3549, %v3548
    %v3586 = vpack.c.bf16 %v3551, %v3550
    %v3587 = vpack.c.bf16 %v3553, %v3552
    %v3588 = vpack.c.bf16 %v3555, %v3554
    %v3589 = vpack.c.bf16 %v3557, %v3556
    %3622 = vrot.lane.b32.xlu0 %v3558, 16
    %v3623 = vpop.permute.xlu0 %3622
    %3624 = vrot.lane.b32.xlu0 %v3559, 16
    %v3625 = vpop.permute.xlu0 %3624
    %3626 = vrot.lane.b32.xlu0 %v3560, 16
    %v3627 = vpop.permute.xlu0 %3626
    %3628 = vrot.lane.b32.xlu0 %v3561, 16
    %v3629 = vpop.permute.xlu0 %3628
    %3630 = vrot.lane.b32.xlu0 %v3562, 16
    %v3631 = vpop.permute.xlu0 %3630
    %3632 = vrot.lane.b32.xlu0 %v3563, 16
    %v3633 = vpop.permute.xlu0 %3632
    %3634 = vrot.lane.b32.xlu0 %v3564, 16
    %v3635 = vpop.permute.xlu0 %3634
    %3636 = vrot.lane.b32.xlu0 %v3565, 16
    %v3637 = vpop.permute.xlu0 %3636
    %3638 = vrot.lane.b32.xlu0 %v3566, 16
    %v3639 = vpop.permute.xlu0 %3638
    %3640 = vrot.lane.b32.xlu0 %v3567, 16
    %v3641 = vpop.permute.xlu0 %3640
    %3642 = vrot.lane.b32.xlu0 %v3568, 16
    %v3643 = vpop.permute.xlu0 %3642
    %3644 = vrot.lane.b32.xlu0 %v3569, 16
    %v3645 = vpop.permute.xlu0 %3644
    %3646 = vrot.lane.b32.xlu0 %v3570, 16
    %v3647 = vpop.permute.xlu0 %3646
    %3648 = vrot.lane.b32.xlu0 %v3571, 16
    %v3649 = vpop.permute.xlu0 %3648
    %3650 = vrot.lane.b32.xlu0 %v3572, 16
    %v3651 = vpop.permute.xlu0 %3650
    %3652 = vrot.lane.b32.xlu0 %v3573, 16
    %v3653 = vpop.permute.xlu0 %3652
    %3654 = vrot.lane.b32.xlu0 %v3574, 16
    %v3655 = vpop.permute.xlu0 %3654
    %3656 = vrot.lane.b32.xlu0 %v3575, 16
    %v3657 = vpop.permute.xlu0 %3656
    %3658 = vrot.lane.b32.xlu0 %v3576, 16
    %v3659 = vpop.permute.xlu0 %3658
    %3660 = vrot.lane.b32.xlu0 %v3577, 16
    %v3661 = vpop.permute.xlu0 %3660
    %3662 = vrot.lane.b32.xlu0 %v3578, 16
    %v3663 = vpop.permute.xlu0 %3662
    %3664 = vrot.lane.b32.xlu0 %v3579, 16
    %v3665 = vpop.permute.xlu0 %3664
    %3666 = vrot.lane.b32.xlu0 %v3580, 16
    %v3667 = vpop.permute.xlu0 %3666
    %3668 = vrot.lane.b32.xlu0 %v3581, 16
    %v3669 = vpop.permute.xlu0 %3668
    %3670 = vrot.lane.b32.xlu0 %v3582, 16
    %v3671 = vpop.permute.xlu0 %3670
    %3672 = vrot.lane.b32.xlu0 %v3583, 16
    %v3673 = vpop.permute.xlu0 %3672
    %3674 = vrot.lane.b32.xlu0 %v3584, 16
    %v3675 = vpop.permute.xlu0 %3674
    %3676 = vrot.lane.b32.xlu0 %v3585, 16
    %v3677 = vpop.permute.xlu0 %3676
    %3678 = vrot.lane.b32.xlu0 %v3586, 16
    %v3679 = vpop.permute.xlu0 %3678
    %3680 = vrot.lane.b32.xlu0 %v3587, 16
    %v3681 = vpop.permute.xlu0 %3680
    %3682 = vrot.lane.b32.xlu0 %v3588, 16
    %v3683 = vpop.permute.xlu0 %3682
    %3684 = vrot.lane.b32.xlu0 %v3589, 16
    %v3685 = vpop.permute.xlu0 %3684
    %3718 = vst.msk [vmem:[#allocation5] sm:$0xff] %vm855, %v3623
    %3719 = vst.msk [vmem:[#allocation5 + $0x8] sm:$0xff] %vm855, %v3625
    %3720 = vst.msk [vmem:[#allocation5 + $0x10] sm:$0xff] %vm855, %v3627
    %3721 = vst.msk [vmem:[#allocation5 + $0x18] sm:$0xff] %vm855, %v3629
    %3722 = vst.msk [vmem:[#allocation5 + $0x20] sm:$0xff] %vm855, %v3631
    %3723 = vst.msk [vmem:[#allocation5 + $0x28] sm:$0xff] %vm855, %v3633
    %3724 = vst.msk [vmem:[#allocation5 + $0x30] sm:$0xff] %vm855, %v3635
    %3725 = vst.msk [vmem:[#allocation5 + $0x38] sm:$0xff] %vm855, %v3637
    %3726 = vst.msk [vmem:[#allocation5 + $0x40] sm:$0xff] %vm855, %v3639
    %3727 = vst.msk [vmem:[#allocation5 + $0x48] sm:$0xff] %vm855, %v3641
    %3728 = vst.msk [vmem:[#allocation5 + $0x50] sm:$0xff] %vm855, %v3643
    %3729 = vst.msk [vmem:[#allocation5 + $0x58] sm:$0xff] %vm855, %v3645
    %3730 = vst.msk [vmem:[#allocation5 + $0x60] sm:$0xff] %vm855, %v3647
    %3731 = vst.msk [vmem:[#allocation5 + $0x68] sm:$0xff] %vm855, %v3649
    %3732 = vst.msk [vmem:[#allocation5 + $0x70] sm:$0xff] %vm855, %v3651
    %3733 = vst.msk [vmem:[#allocation5 + $0x78] sm:$0xff] %vm855, %v3653
    %3734 = vst.msk [vmem:[#allocation5 + $0x80] sm:$0xff] %vm855, %v3655
    %3735 = vst.msk [vmem:[#allocation5 + $0x88] sm:$0xff] %vm855, %v3657
    %3736 = vst.msk [vmem:[#allocation5 + $0x90] sm:$0xff] %vm855, %v3659
    %3737 = vst.msk [vmem:[#allocation5 + $0x98] sm:$0xff] %vm855, %v3661
    %3738 = vst.msk [vmem:[#allocation5 + $0xa0] sm:$0xff] %vm855, %v3663
    %3739 = vst.msk [vmem:[#allocation5 + $0xa8] sm:$0xff] %vm855, %v3665
    %3740 = vst.msk [vmem:[#allocation5 + $0xb0] sm:$0xff] %vm855, %v3667
    %3741 = vst.msk [vmem:[#allocation5 + $0xb8] sm:$0xff] %vm855, %v3669
    %3742 = vst.msk [vmem:[#allocation5 + $0xc0] sm:$0xff] %vm855, %v3671
    %3743 = vst.msk [vmem:[#allocation5 + $0xc8] sm:$0xff] %vm855, %v3673
    %3744 = vst.msk [vmem:[#allocation5 + $0xd0] sm:$0xff] %vm855, %v3675
    %3745 = vst.msk [vmem:[#allocation5 + $0xd8] sm:$0xff] %vm855, %v3677
    %3746 = vst.msk [vmem:[#allocation5 + $0xe0] sm:$0xff] %vm855, %v3679
    %3747 = vst.msk [vmem:[#allocation5 + $0xe8] sm:$0xff] %vm855, %v3681
    %3748 = vst.msk [vmem:[#allocation5 + $0xf0] sm:$0xff] %vm855, %v3683
    %3749 = vst.msk [vmem:[#allocation5 + $0xf8] sm:$0xff] %vm855, %v3685
    %v3750 = vld [vmem:[%s3044] sm:$0xff]
    %v3751 = vld [vmem:[%s3044 + $0x8] sm:$0xff]
    %v3752 = vld [vmem:[%s3044 + $0x18] sm:$0xff]
    %v3753 = vld [vmem:[%s3044 + $0x20] sm:$0xff]
    %v3754 = vld [vmem:[%s3044 + $0x30] sm:$0xff]
    %v3755 = vld [vmem:[%s3044 + $0x38] sm:$0xff]
    %v3756 = vld [vmem:[%s3044 + $0x48] sm:$0xff]
    %v3757 = vld [vmem:[%s3044 + $0x50] sm:$0xff]
    %v3758 = vld [vmem:[%s3044 + $0x60] sm:$0xff]
    %v3759 = vld [vmem:[%s3044 + $0x68] sm:$0xff]
    %v3760 = vld [vmem:[%s3044 + $0x78] sm:$0xff]
    %v3761 = vld [vmem:[%s3044 + $0x80] sm:$0xff]
    %v3762 = vld [vmem:[%s3044 + $0x90] sm:$0xff]
    %v3763 = vld [vmem:[%s3044 + $0x98] sm:$0xff]
    %v3764 = vld [vmem:[%s3044 + $0xa8] sm:$0xff]
    %v3765 = vld [vmem:[%s3044 + $0xb0] sm:$0xff]
    %v3766 = vld [vmem:[%s3044 + $0xc0] sm:$0xff]
    %v3767 = vld [vmem:[%s3044 + $0xc8] sm:$0xff]
    %v3768 = vld [vmem:[%s3044 + $0xd8] sm:$0xff]
    %v3769 = vld [vmem:[%s3044 + $0xe0] sm:$0xff]
    %v3770 = vld [vmem:[%s3044 + $0xf0] sm:$0xff]
    %v3771 = vld [vmem:[%s3044 + $0xf8] sm:$0xff]
    %v3772 = vld [vmem:[%s3044 + $0x108] sm:$0xff]
    %v3773 = vld [vmem:[%s3044 + $0x110] sm:$0xff]
    %v3774 = vld [vmem:[%s3044 + $0x120] sm:$0xff]
    %v3775 = vld [vmem:[%s3044 + $0x128] sm:$0xff]
    %v3776 = vld [vmem:[%s3044 + $0x138] sm:$0xff]
    %v3777 = vld [vmem:[%s3044 + $0x140] sm:$0xff]
    %v3778 = vld [vmem:[%s3044 + $0x150] sm:$0xff]
    %v3779 = vld [vmem:[%s3044 + $0x158] sm:$0xff]
    %v3780 = vld [vmem:[%s3044 + $0x168] sm:$0xff]
    %v3781 = vld [vmem:[%s3044 + $0x170] sm:$0xff]
    %v3782 = vld [vmem:[%s3044 + $0x1b0] sm:$0xff]
    %v3783 = vld [vmem:[%s3044 + $0x1b8] sm:$0xff]
    %v3784 = vld [vmem:[%s3044 + $0x1c8] sm:$0xff]
    %v3785 = vld [vmem:[%s3044 + $0x1d0] sm:$0xff]
    %v3786 = vld [vmem:[%s3044 + $0x1e0] sm:$0xff]
    %v3787 = vld [vmem:[%s3044 + $0x1e8] sm:$0xff]
    %v3788 = vld [vmem:[%s3044 + $0x1f8] sm:$0xff]
    %v3789 = vld [vmem:[%s3044 + $0x200] sm:$0xff]
    %v3790 = vld [vmem:[%s3044 + $0x210] sm:$0xff]
    %v3791 = vld [vmem:[%s3044 + $0x218] sm:$0xff]
    %v3792 = vld [vmem:[%s3044 + $0x228] sm:$0xff]
    %v3793 = vld [vmem:[%s3044 + $0x230] sm:$0xff]
    %v3794 = vld [vmem:[%s3044 + $0x240] sm:$0xff]
    %v3795 = vld [vmem:[%s3044 + $0x248] sm:$0xff]
    %v3796 = vld [vmem:[%s3044 + $0x258] sm:$0xff]
    %v3797 = vld [vmem:[%s3044 + $0x260] sm:$0xff]
    %v3798 = vld [vmem:[%s3044 + $0x270] sm:$0xff]
    %v3799 = vld [vmem:[%s3044 + $0x278] sm:$0xff]
    %v3800 = vld [vmem:[%s3044 + $0x288] sm:$0xff]
    %v3801 = vld [vmem:[%s3044 + $0x290] sm:$0xff]
    %v3802 = vld [vmem:[%s3044 + $0x2a0] sm:$0xff]
    %v3803 = vld [vmem:[%s3044 + $0x2a8] sm:$0xff]
    %v3804 = vld [vmem:[%s3044 + $0x2b8] sm:$0xff]
    %v3805 = vld [vmem:[%s3044 + $0x2c0] sm:$0xff]
    %v3806 = vld [vmem:[%s3044 + $0x2d0] sm:$0xff]
    %v3807 = vld [vmem:[%s3044 + $0x2d8] sm:$0xff]
    %v3808 = vld [vmem:[%s3044 + $0x2e8] sm:$0xff]
    %v3809 = vld [vmem:[%s3044 + $0x2f0] sm:$0xff]
    %v3810 = vld [vmem:[%s3044 + $0x300] sm:$0xff]
    %v3811 = vld [vmem:[%s3044 + $0x308] sm:$0xff]
    %v3812 = vld [vmem:[%s3044 + $0x318] sm:$0xff]
    %v3813 = vld [vmem:[%s3044 + $0x320] sm:$0xff]
    %v3814 = vpack.c.bf16 %v3751, %v3750
    %v3815 = vpack.c.bf16 %v3753, %v3752
    %v3816 = vpack.c.bf16 %v3755, %v3754
    %v3817 = vpack.c.bf16 %v3757, %v3756
    %v3818 = vpack.c.bf16 %v3759, %v3758
    %v3819 = vpack.c.bf16 %v3761, %v3760
    %v3820 = vpack.c.bf16 %v3763, %v3762
    %v3821 = vpack.c.bf16 %v3765, %v3764
    %v3822 = vpack.c.bf16 %v3767, %v3766
    %v3823 = vpack.c.bf16 %v3769, %v3768
    %v3824 = vpack.c.bf16 %v3771, %v3770
    %v3825 = vpack.c.bf16 %v3773, %v3772
    %v3826 = vpack.c.bf16 %v3775, %v3774
    %v3827 = vpack.c.bf16 %v3777, %v3776
    %v3828 = vpack.c.bf16 %v3779, %v3778
    %v3829 = vpack.c.bf16 %v3781, %v3780
    %v3830 = vpack.c.bf16 %v3783, %v3782
    %v3831 = vpack.c.bf16 %v3785, %v3784
    %v3832 = vpack.c.bf16 %v3787, %v3786
    %v3833 = vpack.c.bf16 %v3789, %v3788
    %v3834 = vpack.c.bf16 %v3791, %v3790
    %v3835 = vpack.c.bf16 %v3793, %v3792
    %v3836 = vpack.c.bf16 %v3795, %v3794
    %v3837 = vpack.c.bf16 %v3797, %v3796
    %v3838 = vpack.c.bf16 %v3799, %v3798
    %v3839 = vpack.c.bf16 %v3801, %v3800
    %v3840 = vpack.c.bf16 %v3803, %v3802
    %v3841 = vpack.c.bf16 %v3805, %v3804
    %v3842 = vpack.c.bf16 %v3807, %v3806
    %v3843 = vpack.c.bf16 %v3809, %v3808
    %v3844 = vpack.c.bf16 %v3811, %v3810
    %v3845 = vpack.c.bf16 %v3813, %v3812
    %3878 = vrot.lane.b32.xlu0 %v3814, 24
    %v3879 = vpop.permute.xlu0 %3878
    %3880 = vrot.lane.b32.xlu0 %v3815, 24
    %v3881 = vpop.permute.xlu0 %3880
    %3882 = vrot.lane.b32.xlu0 %v3816, 24
    %v3883 = vpop.permute.xlu0 %3882
    %3884 = vrot.lane.b32.xlu0 %v3817, 24
    %v3885 = vpop.permute.xlu0 %3884
    %3886 = vrot.lane.b32.xlu0 %v3818, 24
    %v3887 = vpop.permute.xlu0 %3886
    %3888 = vrot.lane.b32.xlu0 %v3819, 24
    %v3889 = vpop.permute.xlu0 %3888
    %3890 = vrot.lane.b32.xlu0 %v3820, 24
    %v3891 = vpop.permute.xlu0 %3890
    %3892 = vrot.lane.b32.xlu0 %v3821, 24
    %v3893 = vpop.permute.xlu0 %3892
    %3894 = vrot.lane.b32.xlu0 %v3822, 24
    %v3895 = vpop.permute.xlu0 %3894
    %3896 = vrot.lane.b32.xlu0 %v3823, 24
    %v3897 = vpop.permute.xlu0 %3896
    %3898 = vrot.lane.b32.xlu0 %v3824, 24
    %v3899 = vpop.permute.xlu0 %3898
    %3900 = vrot.lane.b32.xlu0 %v3825, 24
    %v3901 = vpop.permute.xlu0 %3900
    %3902 = vrot.lane.b32.xlu0 %v3826, 24
    %v3903 = vpop.permute.xlu0 %3902
    %3904 = vrot.lane.b32.xlu0 %v3827, 24
    %v3905 = vpop.permute.xlu0 %3904
    %3906 = vrot.lane.b32.xlu0 %v3828, 24
    %v3907 = vpop.permute.xlu0 %3906
    %3908 = vrot.lane.b32.xlu0 %v3829, 24
    %v3909 = vpop.permute.xlu0 %3908
    %3910 = vrot.lane.b32.xlu0 %v3830, 24
    %v3911 = vpop.permute.xlu0 %3910
    %3912 = vrot.lane.b32.xlu0 %v3831, 24
    %v3913 = vpop.permute.xlu0 %3912
    %3914 = vrot.lane.b32.xlu0 %v3832, 24
    %v3915 = vpop.permute.xlu0 %3914
    %3916 = vrot.lane.b32.xlu0 %v3833, 24
    %v3917 = vpop.permute.xlu0 %3916
    %3918 = vrot.lane.b32.xlu0 %v3834, 24
    %v3919 = vpop.permute.xlu0 %3918
    %3920 = vrot.lane.b32.xlu0 %v3835, 24
    %v3921 = vpop.permute.xlu0 %3920
    %3922 = vrot.lane.b32.xlu0 %v3836, 24
    %v3923 = vpop.permute.xlu0 %3922
    %3924 = vrot.lane.b32.xlu0 %v3837, 24
    %v3925 = vpop.permute.xlu0 %3924
    %3926 = vrot.lane.b32.xlu0 %v3838, 24
    %v3927 = vpop.permute.xlu0 %3926
    %3928 = vrot.lane.b32.xlu0 %v3839, 24
    %v3929 = vpop.permute.xlu0 %3928
    %3930 = vrot.lane.b32.xlu0 %v3840, 24
    %v3931 = vpop.permute.xlu0 %3930
    %3932 = vrot.lane.b32.xlu0 %v3841, 24
    %v3933 = vpop.permute.xlu0 %3932
    %3934 = vrot.lane.b32.xlu0 %v3842, 24
    %v3935 = vpop.permute.xlu0 %3934
    %3936 = vrot.lane.b32.xlu0 %v3843, 24
    %v3937 = vpop.permute.xlu0 %3936
    %3938 = vrot.lane.b32.xlu0 %v3844, 24
    %v3939 = vpop.permute.xlu0 %3938
    %3940 = vrot.lane.b32.xlu0 %v3845, 24
    %v3941 = vpop.permute.xlu0 %3940
    %3974 = vst.msk [vmem:[#allocation5] sm:$0xff] %vm1112, %v3879
    %3975 = vst.msk [vmem:[#allocation5 + $0x8] sm:$0xff] %vm1112, %v3881
    %3976 = vst.msk [vmem:[#allocation5 + $0x10] sm:$0xff] %vm1112, %v3883
    %3977 = vst.msk [vmem:[#allocation5 + $0x18] sm:$0xff] %vm1112, %v3885
    %3978 = vst.msk [vmem:[#allocation5 + $0x20] sm:$0xff] %vm1112, %v3887
    %3979 = vst.msk [vmem:[#allocation5 + $0x28] sm:$0xff] %vm1112, %v3889
    %3980 = vst.msk [vmem:[#allocation5 + $0x30] sm:$0xff] %vm1112, %v3891
    %3981 = vst.msk [vmem:[#allocation5 + $0x38] sm:$0xff] %vm1112, %v3893
    %3982 = vst.msk [vmem:[#allocation5 + $0x40] sm:$0xff] %vm1112, %v3895
    %3983 = vst.msk [vmem:[#allocation5 + $0x48] sm:$0xff] %vm1112, %v3897
    %3984 = vst.msk [vmem:[#allocation5 + $0x50] sm:$0xff] %vm1112, %v3899
    %3985 = vst.msk [vmem:[#allocation5 + $0x58] sm:$0xff] %vm1112, %v3901
    %3986 = vst.msk [vmem:[#allocation5 + $0x60] sm:$0xff] %vm1112, %v3903
    %3987 = vst.msk [vmem:[#allocation5 + $0x68] sm:$0xff] %vm1112, %v3905
    %3988 = vst.msk [vmem:[#allocation5 + $0x70] sm:$0xff] %vm1112, %v3907
    %3989 = vst.msk [vmem:[#allocation5 + $0x78] sm:$0xff] %vm1112, %v3909
    %3990 = vst.msk [vmem:[#allocation5 + $0x80] sm:$0xff] %vm1112, %v3911
    %3991 = vst.msk [vmem:[#allocation5 + $0x88] sm:$0xff] %vm1112, %v3913
    %3992 = vst.msk [vmem:[#allocation5 + $0x90] sm:$0xff] %vm1112, %v3915
    %3993 = vst.msk [vmem:[#allocation5 + $0x98] sm:$0xff] %vm1112, %v3917
    %3994 = vst.msk [vmem:[#allocation5 + $0xa0] sm:$0xff] %vm1112, %v3919
    %3995 = vst.msk [vmem:[#allocation5 + $0xa8] sm:$0xff] %vm1112, %v3921
    %3996 = vst.msk [vmem:[#allocation5 + $0xb0] sm:$0xff] %vm1112, %v3923
    %3997 = vst.msk [vmem:[#allocation5 + $0xb8] sm:$0xff] %vm1112, %v3925
    %3998 = vst.msk [vmem:[#allocation5 + $0xc0] sm:$0xff] %vm1112, %v3927
    %3999 = vst.msk [vmem:[#allocation5 + $0xc8] sm:$0xff] %vm1112, %v3929
    %4000 = vst.msk [vmem:[#allocation5 + $0xd0] sm:$0xff] %vm1112, %v3931
    %4001 = vst.msk [vmem:[#allocation5 + $0xd8] sm:$0xff] %vm1112, %v3933
    %4002 = vst.msk [vmem:[#allocation5 + $0xe0] sm:$0xff] %vm1112, %v3935
    %4003 = vst.msk [vmem:[#allocation5 + $0xe8] sm:$0xff] %vm1112, %v3937
    %4004 = vst.msk [vmem:[#allocation5 + $0xf0] sm:$0xff] %vm1112, %v3939
    %4005 = vst.msk [vmem:[#allocation5 + $0xf8] sm:$0xff] %vm1112, %v3941
    %v4006 = vld [vmem:[%s3044 + $0x1] sm:$0xff]
    %v4007 = vld [vmem:[%s3044 + $0x9] sm:$0xff]
    %v4008 = vld [vmem:[%s3044 + $0x19] sm:$0xff]
    %v4009 = vld [vmem:[%s3044 + $0x21] sm:$0xff]
    %v4010 = vld [vmem:[%s3044 + $0x31] sm:$0xff]
    %v4011 = vld [vmem:[%s3044 + $0x39] sm:$0xff]
    %v4012 = vld [vmem:[%s3044 + $0x49] sm:$0xff]
    %v4013 = vld [vmem:[%s3044 + $0x51] sm:$0xff]
    %v4014 = vld [vmem:[%s3044 + $0x61] sm:$0xff]
    %v4015 = vld [vmem:[%s3044 + $0x69] sm:$0xff]
    %v4016 = vld [vmem:[%s3044 + $0x79] sm:$0xff]
    %v4017 = vld [vmem:[%s3044 + $0x81] sm:$0xff]
    %v4018 = vld [vmem:[%s3044 + $0x91] sm:$0xff]
    %v4019 = vld [vmem:[%s3044 + $0x99] sm:$0xff]
    %v4020 = vld [vmem:[%s3044 + $0xa9] sm:$0xff]
    %v4021 = vld [vmem:[%s3044 + $0xb1] sm:$0xff]
    %v4022 = vld [vmem:[%s3044 + $0xc1] sm:$0xff]
    %v4023 = vld [vmem:[%s3044 + $0xc9] sm:$0xff]
    %v4024 = vld [vmem:[%s3044 + $0xd9] sm:$0xff]
    %v4025 = vld [vmem:[%s3044 + $0xe1] sm:$0xff]
    %v4026 = vld [vmem:[%s3044 + $0xf1] sm:$0xff]
    %v4027 = vld [vmem:[%s3044 + $0xf9] sm:$0xff]
    %v4028 = vld [vmem:[%s3044 + $0x109] sm:$0xff]
    %v4029 = vld [vmem:[%s3044 + $0x111] sm:$0xff]
    %v4030 = vld [vmem:[%s3044 + $0x121] sm:$0xff]
    %v4031 = vld [vmem:[%s3044 + $0x129] sm:$0xff]
    %v4032 = vld [vmem:[%s3044 + $0x139] sm:$0xff]
    %v4033 = vld [vmem:[%s3044 + $0x141] sm:$0xff]
    %v4034 = vld [vmem:[%s3044 + $0x151] sm:$0xff]
    %v4035 = vld [vmem:[%s3044 + $0x159] sm:$0xff]
    %v4036 = vld [vmem:[%s3044 + $0x169] sm:$0xff]
    %v4037 = vld [vmem:[%s3044 + $0x171] sm:$0xff]
    %v4038 = vld [vmem:[%s3044 + $0x1b1] sm:$0xff]
    %v4039 = vld [vmem:[%s3044 + $0x1b9] sm:$0xff]
    %v4040 = vld [vmem:[%s3044 + $0x1c9] sm:$0xff]
    %v4041 = vld [vmem:[%s3044 + $0x1d1] sm:$0xff]
    %v4042 = vld [vmem:[%s3044 + $0x1e1] sm:$0xff]
    %v4043 = vld [vmem:[%s3044 + $0x1e9] sm:$0xff]
    %v4044 = vld [vmem:[%s3044 + $0x1f9] sm:$0xff]
    %v4045 = vld [vmem:[%s3044 + $0x201] sm:$0xff]
    %v4046 = vld [vmem:[%s3044 + $0x211] sm:$0xff]
    %v4047 = vld [vmem:[%s3044 + $0x219] sm:$0xff]
    %v4048 = vld [vmem:[%s3044 + $0x229] sm:$0xff]
    %v4049 = vld [vmem:[%s3044 + $0x231] sm:$0xff]
    %v4050 = vld [vmem:[%s3044 + $0x241] sm:$0xff]
    %v4051 = vld [vmem:[%s3044 + $0x249] sm:$0xff]
    %v4052 = vld [vmem:[%s3044 + $0x259] sm:$0xff]
    %v4053 = vld [vmem:[%s3044 + $0x261] sm:$0xff]
    %v4054 = vld [vmem:[%s3044 + $0x271] sm:$0xff]
    %v4055 = vld [vmem:[%s3044 + $0x279] sm:$0xff]
    %v4056 = vld [vmem:[%s3044 + $0x289] sm:$0xff]
    %v4057 = vld [vmem:[%s3044 + $0x291] sm:$0xff]
    %v4058 = vld [vmem:[%s3044 + $0x2a1] sm:$0xff]
    %v4059 = vld [vmem:[%s3044 + $0x2a9] sm:$0xff]
    %v4060 = vld [vmem:[%s3044 + $0x2b9] sm:$0xff]
    %v4061 = vld [vmem:[%s3044 + $0x2c1] sm:$0xff]
    %v4062 = vld [vmem:[%s3044 + $0x2d1] sm:$0xff]
    %v4063 = vld [vmem:[%s3044 + $0x2d9] sm:$0xff]
    %v4064 = vld [vmem:[%s3044 + $0x2e9] sm:$0xff]
    %v4065 = vld [vmem:[%s3044 + $0x2f1] sm:$0xff]
    %v4066 = vld [vmem:[%s3044 + $0x301] sm:$0xff]
    %v4067 = vld [vmem:[%s3044 + $0x309] sm:$0xff]
    %v4068 = vld [vmem:[%s3044 + $0x319] sm:$0xff]
    %v4069 = vld [vmem:[%s3044 + $0x321] sm:$0xff]
    %v4070 = vpack.c.bf16 %v4007, %v4006
    %v4071 = vpack.c.bf16 %v4009, %v4008
    %v4072 = vpack.c.bf16 %v4011, %v4010
    %v4073 = vpack.c.bf16 %v4013, %v4012
    %v4074 = vpack.c.bf16 %v4015, %v4014
    %v4075 = vpack.c.bf16 %v4017, %v4016
    %v4076 = vpack.c.bf16 %v4019, %v4018
    %v4077 = vpack.c.bf16 %v4021, %v4020
    %v4078 = vpack.c.bf16 %v4023, %v4022
    %v4079 = vpack.c.bf16 %v4025, %v4024
    %v4080 = vpack.c.bf16 %v4027, %v4026
    %v4081 = vpack.c.bf16 %v4029, %v4028
    %v4082 = vpack.c.bf16 %v4031, %v4030
    %v4083 = vpack.c.bf16 %v4033, %v4032
    %v4084 = vpack.c.bf16 %v4035, %v4034
    %v4085 = vpack.c.bf16 %v4037, %v4036
    %v4086 = vpack.c.bf16 %v4039, %v4038
    %v4087 = vpack.c.bf16 %v4041, %v4040
    %v4088 = vpack.c.bf16 %v4043, %v4042
    %v4089 = vpack.c.bf16 %v4045, %v4044
    %v4090 = vpack.c.bf16 %v4047, %v4046
    %v4091 = vpack.c.bf16 %v4049, %v4048
    %v4092 = vpack.c.bf16 %v4051, %v4050
    %v4093 = vpack.c.bf16 %v4053, %v4052
    %v4094 = vpack.c.bf16 %v4055, %v4054
    %v4095 = vpack.c.bf16 %v4057, %v4056
    %v4096 = vpack.c.bf16 %v4059, %v4058
    %v4097 = vpack.c.bf16 %v4061, %v4060
    %v4098 = vpack.c.bf16 %v4063, %v4062
    %v4099 = vpack.c.bf16 %v4065, %v4064
    %v4100 = vpack.c.bf16 %v4067, %v4066
    %v4101 = vpack.c.bf16 %v4069, %v4068
    %4134 = vrot.lane.b32.xlu0 %v4070, 32
    %v4135 = vpop.permute.xlu0 %4134
    %4136 = vrot.lane.b32.xlu0 %v4071, 32
    %v4137 = vpop.permute.xlu0 %4136
    %4138 = vrot.lane.b32.xlu0 %v4072, 32
    %v4139 = vpop.permute.xlu0 %4138
    %4140 = vrot.lane.b32.xlu0 %v4073, 32
    %v4141 = vpop.permute.xlu0 %4140
    %4142 = vrot.lane.b32.xlu0 %v4074, 32
    %v4143 = vpop.permute.xlu0 %4142
    %4144 = vrot.lane.b32.xlu0 %v4075, 32
    %v4145 = vpop.permute.xlu0 %4144
    %4146 = vrot.lane.b32.xlu0 %v4076, 32
    %v4147 = vpop.permute.xlu0 %4146
    %4148 = vrot.lane.b32.xlu0 %v4077, 32
    %v4149 = vpop.permute.xlu0 %4148
    %4150 = vrot.lane.b32.xlu0 %v4078, 32
    %v4151 = vpop.permute.xlu0 %4150
    %4152 = vrot.lane.b32.xlu0 %v4079, 32
    %v4153 = vpop.permute.xlu0 %4152
    %4154 = vrot.lane.b32.xlu0 %v4080, 32
    %v4155 = vpop.permute.xlu0 %4154
    %4156 = vrot.lane.b32.xlu0 %v4081, 32
    %v4157 = vpop.permute.xlu0 %4156
    %4158 = vrot.lane.b32.xlu0 %v4082, 32
    %v4159 = vpop.permute.xlu0 %4158
    %4160 = vrot.lane.b32.xlu0 %v4083, 32
    %v4161 = vpop.permute.xlu0 %4160
    %4162 = vrot.lane.b32.xlu0 %v4084, 32
    %v4163 = vpop.permute.xlu0 %4162
    %4164 = vrot.lane.b32.xlu0 %v4085, 32
    %v4165 = vpop.permute.xlu0 %4164
    %4166 = vrot.lane.b32.xlu0 %v4086, 32
    %v4167 = vpop.permute.xlu0 %4166
    %4168 = vrot.lane.b32.xlu0 %v4087, 32
    %v4169 = vpop.permute.xlu0 %4168
    %4170 = vrot.lane.b32.xlu0 %v4088, 32
    %v4171 = vpop.permute.xlu0 %4170
    %4172 = vrot.lane.b32.xlu0 %v4089, 32
    %v4173 = vpop.permute.xlu0 %4172
    %4174 = vrot.lane.b32.xlu0 %v4090, 32
    %v4175 = vpop.permute.xlu0 %4174
    %4176 = vrot.lane.b32.xlu0 %v4091, 32
    %v4177 = vpop.permute.xlu0 %4176
    %4178 = vrot.lane.b32.xlu0 %v4092, 32
    %v4179 = vpop.permute.xlu0 %4178
    %4180 = vrot.lane.b32.xlu0 %v4093, 32
    %v4181 = vpop.permute.xlu0 %4180
    %4182 = vrot.lane.b32.xlu0 %v4094, 32
    %v4183 = vpop.permute.xlu0 %4182
    %4184 = vrot.lane.b32.xlu0 %v4095, 32
    %v4185 = vpop.permute.xlu0 %4184
    %4186 = vrot.lane.b32.xlu0 %v4096, 32
    %v4187 = vpop.permute.xlu0 %4186
    %4188 = vrot.lane.b32.xlu0 %v4097, 32
    %v4189 = vpop.permute.xlu0 %4188
    %4190 = vrot.lane.b32.xlu0 %v4098, 32
    %v4191 = vpop.permute.xlu0 %4190
    %4192 = vrot.lane.b32.xlu0 %v4099, 32
    %v4193 = vpop.permute.xlu0 %4192
    %4194 = vrot.lane.b32.xlu0 %v4100, 32
    %v4195 = vpop.permute.xlu0 %4194
    %4196 = vrot.lane.b32.xlu0 %v4101, 32
    %v4197 = vpop.permute.xlu0 %4196
    %4230 = vst.msk [vmem:[#allocation5] sm:$0xff] %vm1369, %v4135
    %4231 = vst.msk [vmem:[#allocation5 + $0x8] sm:$0xff] %vm1369, %v4137
    %4232 = vst.msk [vmem:[#allocation5 + $0x10] sm:$0xff] %vm1369, %v4139
    %4233 = vst.msk [vmem:[#allocation5 + $0x18] sm:$0xff] %vm1369, %v4141
    %4234 = vst.msk [vmem:[#allocation5 + $0x20] sm:$0xff] %vm1369, %v4143
    %4235 = vst.msk [vmem:[#allocation5 + $0x28] sm:$0xff] %vm1369, %v4145
    %4236 = vst.msk [vmem:[#allocation5 + $0x30] sm:$0xff] %vm1369, %v4147
    %4237 = vst.msk [vmem:[#allocation5 + $0x38] sm:$0xff] %vm1369, %v4149
    %4238 = vst.msk [vmem:[#allocation5 + $0x40] sm:$0xff] %vm1369, %v4151
    %4239 = vst.msk [vmem:[#allocation5 + $0x48] sm:$0xff] %vm1369, %v4153
    %4240 = vst.msk [vmem:[#allocation5 + $0x50] sm:$0xff] %vm1369, %v4155
    %4241 = vst.msk [vmem:[#allocation5 + $0x58] sm:$0xff] %vm1369, %v4157
    %4242 = vst.msk [vmem:[#allocation5 + $0x60] sm:$0xff] %vm1369, %v4159
    %4243 = vst.msk [vmem:[#allocation5 + $0x68] sm:$0xff] %vm1369, %v4161
    %4244 = vst.msk [vmem:[#allocation5 + $0x70] sm:$0xff] %vm1369, %v4163
    %4245 = vst.msk [vmem:[#allocation5 + $0x78] sm:$0xff] %vm1369, %v4165
    %4246 = vst.msk [vmem:[#allocation5 + $0x80] sm:$0xff] %vm1369, %v4167
    %4247 = vst.msk [vmem:[#allocation5 + $0x88] sm:$0xff] %vm1369, %v4169
    %4248 = vst.msk [vmem:[#allocation5 + $0x90] sm:$0xff] %vm1369, %v4171
    %4249 = vst.msk [vmem:[#allocation5 + $0x98] sm:$0xff] %vm1369, %v4173
    %4250 = vst.msk [vmem:[#allocation5 + $0xa0] sm:$0xff] %vm1369, %v4175
    %4251 = vst.msk [vmem:[#allocation5 + $0xa8] sm:$0xff] %vm1369, %v4177
    %4252 = vst.msk [vmem:[#allocation5 + $0xb0] sm:$0xff] %vm1369, %v4179
    %4253 = vst.msk [vmem:[#allocation5 + $0xb8] sm:$0xff] %vm1369, %v4181
    %4254 = vst.msk [vmem:[#allocation5 + $0xc0] sm:$0xff] %vm1369, %v4183
    %4255 = vst.msk [vmem:[#allocation5 + $0xc8] sm:$0xff] %vm1369, %v4185
    %4256 = vst.msk [vmem:[#allocation5 + $0xd0] sm:$0xff] %vm1369, %v4187
    %4257 = vst.msk [vmem:[#allocation5 + $0xd8] sm:$0xff] %vm1369, %v4189
    %4258 = vst.msk [vmem:[#allocation5 + $0xe0] sm:$0xff] %vm1369, %v4191
    %4259 = vst.msk [vmem:[#allocation5 + $0xe8] sm:$0xff] %vm1369, %v4193
    %4260 = vst.msk [vmem:[#allocation5 + $0xf0] sm:$0xff] %vm1369, %v4195
    %4261 = vst.msk [vmem:[#allocation5 + $0xf8] sm:$0xff] %vm1369, %v4197
    %v4262 = vld [vmem:[%s3044 + $0x2] sm:$0xff]
    %v4263 = vld [vmem:[%s3044 + $0xa] sm:$0xff]
    %v4264 = vld [vmem:[%s3044 + $0x1a] sm:$0xff]
    %v4265 = vld [vmem:[%s3044 + $0x22] sm:$0xff]
    %v4266 = vld [vmem:[%s3044 + $0x32] sm:$0xff]
    %v4267 = vld [vmem:[%s3044 + $0x3a] sm:$0xff]
    %v4268 = vld [vmem:[%s3044 + $0x4a] sm:$0xff]
    %v4269 = vld [vmem:[%s3044 + $0x52] sm:$0xff]
    %v4270 = vld [vmem:[%s3044 + $0x62] sm:$0xff]
    %v4271 = vld [vmem:[%s3044 + $0x6a] sm:$0xff]
    %v4272 = vld [vmem:[%s3044 + $0x7a] sm:$0xff]
    %v4273 = vld [vmem:[%s3044 + $0x82] sm:$0xff]
    %v4274 = vld [vmem:[%s3044 + $0x92] sm:$0xff]
    %v4275 = vld [vmem:[%s3044 + $0x9a] sm:$0xff]
    %v4276 = vld [vmem:[%s3044 + $0xaa] sm:$0xff]
    %v4277 = vld [vmem:[%s3044 + $0xb2] sm:$0xff]
    %v4278 = vld [vmem:[%s3044 + $0xc2] sm:$0xff]
    %v4279 = vld [vmem:[%s3044 + $0xca] sm:$0xff]
    %v4280 = vld [vmem:[%s3044 + $0xda] sm:$0xff]
    %v4281 = vld [vmem:[%s3044 + $0xe2] sm:$0xff]
    %v4282 = vld [vmem:[%s3044 + $0xf2] sm:$0xff]
    %v4283 = vld [vmem:[%s3044 + $0xfa] sm:$0xff]
    %v4284 = vld [vmem:[%s3044 + $0x10a] sm:$0xff]
    %v4285 = vld [vmem:[%s3044 + $0x112] sm:$0xff]
    %v4286 = vld [vmem:[%s3044 + $0x122] sm:$0xff]
    %v4287 = vld [vmem:[%s3044 + $0x12a] sm:$0xff]
    %v4288 = vld [vmem:[%s3044 + $0x13a] sm:$0xff]
    %v4289 = vld [vmem:[%s3044 + $0x142] sm:$0xff]
    %v4290 = vld [vmem:[%s3044 + $0x152] sm:$0xff]
    %v4291 = vld [vmem:[%s3044 + $0x15a] sm:$0xff]
    %v4292 = vld [vmem:[%s3044 + $0x16a] sm:$0xff]
    %v4293 = vld [vmem:[%s3044 + $0x172] sm:$0xff]
    %v4294 = vld [vmem:[%s3044 + $0x1b2] sm:$0xff]
    %v4295 = vld [vmem:[%s3044 + $0x1ba] sm:$0xff]
    %v4296 = vld [vmem:[%s3044 + $0x1ca] sm:$0xff]
    %v4297 = vld [vmem:[%s3044 + $0x1d2] sm:$0xff]
    %v4298 = vld [vmem:[%s3044 + $0x1e2] sm:$0xff]
    %v4299 = vld [vmem:[%s3044 + $0x1ea] sm:$0xff]
    %v4300 = vld [vmem:[%s3044 + $0x1fa] sm:$0xff]
    %v4301 = vld [vmem:[%s3044 + $0x202] sm:$0xff]
    %v4302 = vld [vmem:[%s3044 + $0x212] sm:$0xff]
    %v4303 = vld [vmem:[%s3044 + $0x21a] sm:$0xff]
    %v4304 = vld [vmem:[%s3044 + $0x22a] sm:$0xff]
    %v4305 = vld [vmem:[%s3044 + $0x232] sm:$0xff]
    %v4306 = vld [vmem:[%s3044 + $0x242] sm:$0xff]
    %v4307 = vld [vmem:[%s3044 + $0x24a] sm:$0xff]
    %v4308 = vld [vmem:[%s3044 + $0x25a] sm:$0xff]
    %v4309 = vld [vmem:[%s3044 + $0x262] sm:$0xff]
    %v4310 = vld [vmem:[%s3044 + $0x272] sm:$0xff]
    %v4311 = vld [vmem:[%s3044 + $0x27a] sm:$0xff]
    %v4312 = vld [vmem:[%s3044 + $0x28a] sm:$0xff]
    %v4313 = vld [vmem:[%s3044 + $0x292] sm:$0xff]
    %v4314 = vld [vmem:[%s3044 + $0x2a2] sm:$0xff]
    %v4315 = vld [vmem:[%s3044 + $0x2aa] sm:$0xff]
    %v4316 = vld [vmem:[%s3044 + $0x2ba] sm:$0xff]
    %v4317 = vld [vmem:[%s3044 + $0x2c2] sm:$0xff]
    %v4318 = vld [vmem:[%s3044 + $0x2d2] sm:$0xff]
    %v4319 = vld [vmem:[%s3044 + $0x2da] sm:$0xff]
    %v4320 = vld [vmem:[%s3044 + $0x2ea] sm:$0xff]
    %v4321 = vld [vmem:[%s3044 + $0x2f2] sm:$0xff]
    %v4322 = vld [vmem:[%s3044 + $0x302] sm:$0xff]
    %v4323 = vld [vmem:[%s3044 + $0x30a] sm:$0xff]
    %v4324 = vld [vmem:[%s3044 + $0x31a] sm:$0xff]
    %v4325 = vld [vmem:[%s3044 + $0x322] sm:$0xff]
    %v4326 = vpack.c.bf16 %v4263, %v4262
    %v4327 = vpack.c.bf16 %v4265, %v4264
    %v4328 = vpack.c.bf16 %v4267, %v4266
    %v4329 = vpack.c.bf16 %v4269, %v4268
    %v4330 = vpack.c.bf16 %v4271, %v4270
    %v4331 = vpack.c.bf16 %v4273, %v4272
    %v4332 = vpack.c.bf16 %v4275, %v4274
    %v4333 = vpack.c.bf16 %v4277, %v4276
    %v4334 = vpack.c.bf16 %v4279, %v4278
    %v4335 = vpack.c.bf16 %v4281, %v4280
    %v4336 = vpack.c.bf16 %v4283, %v4282
    %v4337 = vpack.c.bf16 %v4285, %v4284
    %v4338 = vpack.c.bf16 %v4287, %v4286
    %v4339 = vpack.c.bf16 %v4289, %v4288
    %v4340 = vpack.c.bf16 %v4291, %v4290
    %v4341 = vpack.c.bf16 %v4293, %v4292
    %v4342 = vpack.c.bf16 %v4295, %v4294
    %v4343 = vpack.c.bf16 %v4297, %v4296
    %v4344 = vpack.c.bf16 %v4299, %v4298
    %v4345 = vpack.c.bf16 %v4301, %v4300
    %v4346 = vpack.c.bf16 %v4303, %v4302
    %v4347 = vpack.c.bf16 %v4305, %v4304
    %v4348 = vpack.c.bf16 %v4307, %v4306
    %v4349 = vpack.c.bf16 %v4309, %v4308
    %v4350 = vpack.c.bf16 %v4311, %v4310
    %v4351 = vpack.c.bf16 %v4313, %v4312
    %v4352 = vpack.c.bf16 %v4315, %v4314
    %v4353 = vpack.c.bf16 %v4317, %v4316
    %v4354 = vpack.c.bf16 %v4319, %v4318
    %v4355 = vpack.c.bf16 %v4321, %v4320
    %v4356 = vpack.c.bf16 %v4323, %v4322
    %v4357 = vpack.c.bf16 %v4325, %v4324
    %4390 = vrot.lane.b32.xlu0 %v4326, 40
    %v4391 = vpop.permute.xlu0 %4390
    %4392 = vrot.lane.b32.xlu0 %v4327, 40
    %v4393 = vpop.permute.xlu0 %4392
    %4394 = vrot.lane.b32.xlu0 %v4328, 40
    %v4395 = vpop.permute.xlu0 %4394
    %4396 = vrot.lane.b32.xlu0 %v4329, 40
    %v4397 = vpop.permute.xlu0 %4396
    %4398 = vrot.lane.b32.xlu0 %v4330, 40
    %v4399 = vpop.permute.xlu0 %4398
    %4400 = vrot.lane.b32.xlu0 %v4331, 40
    %v4401 = vpop.permute.xlu0 %4400
    %4402 = vrot.lane.b32.xlu0 %v4332, 40
    %v4403 = vpop.permute.xlu0 %4402
    %4404 = vrot.lane.b32.xlu0 %v4333, 40
    %v4405 = vpop.permute.xlu0 %4404
    %4406 = vrot.lane.b32.xlu0 %v4334, 40
    %v4407 = vpop.permute.xlu0 %4406
    %4408 = vrot.lane.b32.xlu0 %v4335, 40
    %v4409 = vpop.permute.xlu0 %4408
    %4410 = vrot.lane.b32.xlu0 %v4336, 40
    %v4411 = vpop.permute.xlu0 %4410
    %4412 = vrot.lane.b32.xlu0 %v4337, 40
    %v4413 = vpop.permute.xlu0 %4412
    %4414 = vrot.lane.b32.xlu0 %v4338, 40
    %v4415 = vpop.permute.xlu0 %4414
    %4416 = vrot.lane.b32.xlu0 %v4339, 40
    %v4417 = vpop.permute.xlu0 %4416
    %4418 = vrot.lane.b32.xlu0 %v4340, 40
    %v4419 = vpop.permute.xlu0 %4418
    %4420 = vrot.lane.b32.xlu0 %v4341, 40
    %v4421 = vpop.permute.xlu0 %4420
    %4422 = vrot.lane.b32.xlu0 %v4342, 40
    %v4423 = vpop.permute.xlu0 %4422
    %4424 = vrot.lane.b32.xlu0 %v4343, 40
    %v4425 = vpop.permute.xlu0 %4424
    %4426 = vrot.lane.b32.xlu0 %v4344, 40
    %v4427 = vpop.permute.xlu0 %4426
    %4428 = vrot.lane.b32.xlu0 %v4345, 40
    %v4429 = vpop.permute.xlu0 %4428
    %4430 = vrot.lane.b32.xlu0 %v4346, 40
    %v4431 = vpop.permute.xlu0 %4430
    %4432 = vrot.lane.b32.xlu0 %v4347, 40
    %v4433 = vpop.permute.xlu0 %4432
    %4434 = vrot.lane.b32.xlu0 %v4348, 40
    %v4435 = vpop.permute.xlu0 %4434
    %4436 = vrot.lane.b32.xlu0 %v4349, 40
    %v4437 = vpop.permute.xlu0 %4436
    %4438 = vrot.lane.b32.xlu0 %v4350, 40
    %v4439 = vpop.permute.xlu0 %4438
    %4440 = vrot.lane.b32.xlu0 %v4351, 40
    %v4441 = vpop.permute.xlu0 %4440
    %4442 = vrot.lane.b32.xlu0 %v4352, 40
    %v4443 = vpop.permute.xlu0 %4442
    %4444 = vrot.lane.b32.xlu0 %v4353, 40
    %v4445 = vpop.permute.xlu0 %4444
    %4446 = vrot.lane.b32.xlu0 %v4354, 40
    %v4447 = vpop.permute.xlu0 %4446
    %4448 = vrot.lane.b32.xlu0 %v4355, 40
    %v4449 = vpop.permute.xlu0 %4448
    %4450 = vrot.lane.b32.xlu0 %v4356, 40
    %v4451 = vpop.permute.xlu0 %4450
    %4452 = vrot.lane.b32.xlu0 %v4357, 40
    %v4453 = vpop.permute.xlu0 %4452
    %4486 = vst.msk [vmem:[#allocation5] sm:$0xff] %vm1626, %v4391
    %4487 = vst.msk [vmem:[#allocation5 + $0x8] sm:$0xff] %vm1626, %v4393
    %4488 = vst.msk [vmem:[#allocation5 + $0x10] sm:$0xff] %vm1626, %v4395
    %4489 = vst.msk [vmem:[#allocation5 + $0x18] sm:$0xff] %vm1626, %v4397
    %4490 = vst.msk [vmem:[#allocation5 + $0x20] sm:$0xff] %vm1626, %v4399
    %4491 = vst.msk [vmem:[#allocation5 + $0x28] sm:$0xff] %vm1626, %v4401
    %4492 = vst.msk [vmem:[#allocation5 + $0x30] sm:$0xff] %vm1626, %v4403
    %4493 = vst.msk [vmem:[#allocation5 + $0x38] sm:$0xff] %vm1626, %v4405
    %4494 = vst.msk [vmem:[#allocation5 + $0x40] sm:$0xff] %vm1626, %v4407
    %4495 = vst.msk [vmem:[#allocation5 + $0x48] sm:$0xff] %vm1626, %v4409
    %4496 = vst.msk [vmem:[#allocation5 + $0x50] sm:$0xff] %vm1626, %v4411
    %4497 = vst.msk [vmem:[#allocation5 + $0x58] sm:$0xff] %vm1626, %v4413
    %4498 = vst.msk [vmem:[#allocation5 + $0x60] sm:$0xff] %vm1626, %v4415
    %4499 = vst.msk [vmem:[#allocation5 + $0x68] sm:$0xff] %vm1626, %v4417
    %4500 = vst.msk [vmem:[#allocation5 + $0x70] sm:$0xff] %vm1626, %v4419
    %4501 = vst.msk [vmem:[#allocation5 + $0x78] sm:$0xff] %vm1626, %v4421
    %4502 = vst.msk [vmem:[#allocation5 + $0x80] sm:$0xff] %vm1626, %v4423
    %4503 = vst.msk [vmem:[#allocation5 + $0x88] sm:$0xff] %vm1626, %v4425
    %4504 = vst.msk [vmem:[#allocation5 + $0x90] sm:$0xff] %vm1626, %v4427
    %4505 = vst.msk [vmem:[#allocation5 + $0x98] sm:$0xff] %vm1626, %v4429
    %4506 = vst.msk [vmem:[#allocation5 + $0xa0] sm:$0xff] %vm1626, %v4431
    %4507 = vst.msk [vmem:[#allocation5 + $0xa8] sm:$0xff] %vm1626, %v4433
    %4508 = vst.msk [vmem:[#allocation5 + $0xb0] sm:$0xff] %vm1626, %v4435
    %4509 = vst.msk [vmem:[#allocation5 + $0xb8] sm:$0xff] %vm1626, %v4437
    %4510 = vst.msk [vmem:[#allocation5 + $0xc0] sm:$0xff] %vm1626, %v4439
    %4511 = vst.msk [vmem:[#allocation5 + $0xc8] sm:$0xff] %vm1626, %v4441
    %4512 = vst.msk [vmem:[#allocation5 + $0xd0] sm:$0xff] %vm1626, %v4443
    %4513 = vst.msk [vmem:[#allocation5 + $0xd8] sm:$0xff] %vm1626, %v4445
    %4514 = vst.msk [vmem:[#allocation5 + $0xe0] sm:$0xff] %vm1626, %v4447
    %4515 = vst.msk [vmem:[#allocation5 + $0xe8] sm:$0xff] %vm1626, %v4449
    %4516 = vst.msk [vmem:[#allocation5 + $0xf0] sm:$0xff] %vm1626, %v4451
    %4517 = vst.msk [vmem:[#allocation5 + $0xf8] sm:$0xff] %vm1626, %v4453
    %s4518 = scalar_lea.vmem [#allocation3], 48
    %v4519 = vld [vmem:[%s4518] sm:$0xff]
    %v4520 = vld [vmem:[%s4518 + $0x8] sm:$0xff]
    %v4521 = vld [vmem:[%s4518 + $0x18] sm:$0xff]
    %v4522 = vld [vmem:[%s4518 + $0x20] sm:$0xff]
    %v4523 = vld [vmem:[%s4518 + $0x30] sm:$0xff]
    %v4524 = vld [vmem:[%s4518 + $0x38] sm:$0xff]
    %v4525 = vld [vmem:[%s4518 + $0x48] sm:$0xff]
    %v4526 = vld [vmem:[%s4518 + $0x50] sm:$0xff]
    %v4527 = vld [vmem:[%s4518 + $0x60] sm:$0xff]
    %v4528 = vld [vmem:[%s4518 + $0x68] sm:$0xff]
    %v4529 = vld [vmem:[%s4518 + $0x78] sm:$0xff]
    %v4530 = vld [vmem:[%s4518 + $0x80] sm:$0xff]
    %v4531 = vld [vmem:[%s4518 + $0x90] sm:$0xff]
    %v4532 = vld [vmem:[%s4518 + $0x98] sm:$0xff]
    %v4533 = vld [vmem:[%s4518 + $0xa8] sm:$0xff]
    %v4534 = vld [vmem:[%s4518 + $0xb0] sm:$0xff]
    %v4535 = vld [vmem:[%s4518 + $0xc0] sm:$0xff]
    %v4536 = vld [vmem:[%s4518 + $0xc8] sm:$0xff]
    %v4537 = vld [vmem:[%s4518 + $0xd8] sm:$0xff]
    %v4538 = vld [vmem:[%s4518 + $0xe0] sm:$0xff]
    %v4539 = vld [vmem:[%s4518 + $0xf0] sm:$0xff]
    %v4540 = vld [vmem:[%s4518 + $0xf8] sm:$0xff]
    %v4541 = vld [vmem:[%s4518 + $0x108] sm:$0xff]
    %v4542 = vld [vmem:[%s4518 + $0x110] sm:$0xff]
    %v4543 = vld [vmem:[%s4518 + $0x120] sm:$0xff]
    %v4544 = vld [vmem:[%s4518 + $0x128] sm:$0xff]
    %v4545 = vld [vmem:[%s4518 + $0x138] sm:$0xff]
    %v4546 = vld [vmem:[%s4518 + $0x140] sm:$0xff]
    %v4547 = vld [vmem:[%s4518 + $0x150] sm:$0xff]
    %v4548 = vld [vmem:[%s4518 + $0x158] sm:$0xff]
    %v4549 = vld [vmem:[%s4518 + $0x168] sm:$0xff]
    %v4550 = vld [vmem:[%s4518 + $0x170] sm:$0xff]
    %v4551 = vld [vmem:[%s4518 + $0x1b0] sm:$0xff]
    %v4552 = vld [vmem:[%s4518 + $0x1b8] sm:$0xff]
    %v4553 = vld [vmem:[%s4518 + $0x1c8] sm:$0xff]
    %v4554 = vld [vmem:[%s4518 + $0x1d0] sm:$0xff]
    %v4555 = vld [vmem:[%s4518 + $0x1e0] sm:$0xff]
    %v4556 = vld [vmem:[%s4518 + $0x1e8] sm:$0xff]
    %v4557 = vld [vmem:[%s4518 + $0x1f8] sm:$0xff]
    %v4558 = vld [vmem:[%s4518 + $0x200] sm:$0xff]
    %v4559 = vld [vmem:[%s4518 + $0x210] sm:$0xff]
    %v4560 = vld [vmem:[%s4518 + $0x218] sm:$0xff]
    %v4561 = vld [vmem:[%s4518 + $0x228] sm:$0xff]
    %v4562 = vld [vmem:[%s4518 + $0x230] sm:$0xff]
    %v4563 = vld [vmem:[%s4518 + $0x240] sm:$0xff]
    %v4564 = vld [vmem:[%s4518 + $0x248] sm:$0xff]
    %v4565 = vld [vmem:[%s4518 + $0x258] sm:$0xff]
    %v4566 = vld [vmem:[%s4518 + $0x260] sm:$0xff]
    %v4567 = vld [vmem:[%s4518 + $0x270] sm:$0xff]
    %v4568 = vld [vmem:[%s4518 + $0x278] sm:$0xff]
    %v4569 = vld [vmem:[%s4518 + $0x288] sm:$0xff]
    %v4570 = vld [vmem:[%s4518 + $0x290] sm:$0xff]
    %v4571 = vld [vmem:[%s4518 + $0x2a0] sm:$0xff]
    %v4572 = vld [vmem:[%s4518 + $0x2a8] sm:$0xff]
    %v4573 = vld [vmem:[%s4518 + $0x2b8] sm:$0xff]
    %v4574 = vld [vmem:[%s4518 + $0x2c0] sm:$0xff]
    %v4575 = vld [vmem:[%s4518 + $0x2d0] sm:$0xff]
    %v4576 = vld [vmem:[%s4518 + $0x2d8] sm:$0xff]
    %v4577 = vld [vmem:[%s4518 + $0x2e8] sm:$0xff]
    %v4578 = vld [vmem:[%s4518 + $0x2f0] sm:$0xff]
    %v4579 = vld [vmem:[%s4518 + $0x300] sm:$0xff]
    %v4580 = vld [vmem:[%s4518 + $0x308] sm:$0xff]
    %v4581 = vld [vmem:[%s4518 + $0x318] sm:$0xff]
    %v4582 = vld [vmem:[%s4518 + $0x320] sm:$0xff]
    %v4583 = vpack.c.bf16 %v4520, %v4519
    %v4584 = vpack.c.bf16 %v4522, %v4521
    %v4585 = vpack.c.bf16 %v4524, %v4523
    %v4586 = vpack.c.bf16 %v4526, %v4525
    %v4587 = vpack.c.bf16 %v4528, %v4527
    %v4588 = vpack.c.bf16 %v4530, %v4529
    %v4589 = vpack.c.bf16 %v4532, %v4531
    %v4590 = vpack.c.bf16 %v4534, %v4533
    %v4591 = vpack.c.bf16 %v4536, %v4535
    %v4592 = vpack.c.bf16 %v4538, %v4537
    %v4593 = vpack.c.bf16 %v4540, %v4539
    %v4594 = vpack.c.bf16 %v4542, %v4541
    %v4595 = vpack.c.bf16 %v4544, %v4543
    %v4596 = vpack.c.bf16 %v4546, %v4545
    %v4597 = vpack.c.bf16 %v4548, %v4547
    %v4598 = vpack.c.bf16 %v4550, %v4549
    %v4599 = vpack.c.bf16 %v4552, %v4551
    %v4600 = vpack.c.bf16 %v4554, %v4553
    %v4601 = vpack.c.bf16 %v4556, %v4555
    %v4602 = vpack.c.bf16 %v4558, %v4557
    %v4603 = vpack.c.bf16 %v4560, %v4559
    %v4604 = vpack.c.bf16 %v4562, %v4561
    %v4605 = vpack.c.bf16 %v4564, %v4563
    %v4606 = vpack.c.bf16 %v4566, %v4565
    %v4607 = vpack.c.bf16 %v4568, %v4567
    %v4608 = vpack.c.bf16 %v4570, %v4569
    %v4609 = vpack.c.bf16 %v4572, %v4571
    %v4610 = vpack.c.bf16 %v4574, %v4573
    %v4611 = vpack.c.bf16 %v4576, %v4575
    %v4612 = vpack.c.bf16 %v4578, %v4577
    %v4613 = vpack.c.bf16 %v4580, %v4579
    %v4614 = vpack.c.bf16 %v4582, %v4581
    %4647 = vrot.lane.b32.xlu0 %v4583, 48
    %v4648 = vpop.permute.xlu0 %4647
    %4649 = vrot.lane.b32.xlu0 %v4584, 48
    %v4650 = vpop.permute.xlu0 %4649
    %4651 = vrot.lane.b32.xlu0 %v4585, 48
    %v4652 = vpop.permute.xlu0 %4651
    %4653 = vrot.lane.b32.xlu0 %v4586, 48
    %v4654 = vpop.permute.xlu0 %4653
    %4655 = vrot.lane.b32.xlu0 %v4587, 48
    %v4656 = vpop.permute.xlu0 %4655
    %4657 = vrot.lane.b32.xlu0 %v4588, 48
    %v4658 = vpop.permute.xlu0 %4657
    %4659 = vrot.lane.b32.xlu0 %v4589, 48
    %v4660 = vpop.permute.xlu0 %4659
    %4661 = vrot.lane.b32.xlu0 %v4590, 48
    %v4662 = vpop.permute.xlu0 %4661
    %4663 = vrot.lane.b32.xlu0 %v4591, 48
    %v4664 = vpop.permute.xlu0 %4663
    %4665 = vrot.lane.b32.xlu0 %v4592, 48
    %v4666 = vpop.permute.xlu0 %4665
    %4667 = vrot.lane.b32.xlu0 %v4593, 48
    %v4668 = vpop.permute.xlu0 %4667
    %4669 = vrot.lane.b32.xlu0 %v4594, 48
    %v4670 = vpop.permute.xlu0 %4669
    %4671 = vrot.lane.b32.xlu0 %v4595, 48
    %v4672 = vpop.permute.xlu0 %4671
    %4673 = vrot.lane.b32.xlu0 %v4596, 48
    %v4674 = vpop.permute.xlu0 %4673
    %4675 = vrot.lane.b32.xlu0 %v4597, 48
    %v4676 = vpop.permute.xlu0 %4675
    %4677 = vrot.lane.b32.xlu0 %v4598, 48
    %v4678 = vpop.permute.xlu0 %4677
    %4679 = vrot.lane.b32.xlu0 %v4599, 48
    %v4680 = vpop.permute.xlu0 %4679
    %4681 = vrot.lane.b32.xlu0 %v4600, 48
    %v4682 = vpop.permute.xlu0 %4681
    %4683 = vrot.lane.b32.xlu0 %v4601, 48
    %v4684 = vpop.permute.xlu0 %4683
    %4685 = vrot.lane.b32.xlu0 %v4602, 48
    %v4686 = vpop.permute.xlu0 %4685
    %4687 = vrot.lane.b32.xlu0 %v4603, 48
    %v4688 = vpop.permute.xlu0 %4687
    %4689 = vrot.lane.b32.xlu0 %v4604, 48
    %v4690 = vpop.permute.xlu0 %4689
    %4691 = vrot.lane.b32.xlu0 %v4605, 48
    %v4692 = vpop.permute.xlu0 %4691
    %4693 = vrot.lane.b32.xlu0 %v4606, 48
    %v4694 = vpop.permute.xlu0 %4693
    %4695 = vrot.lane.b32.xlu0 %v4607, 48
    %v4696 = vpop.permute.xlu0 %4695
    %4697 = vrot.lane.b32.xlu0 %v4608, 48
    %v4698 = vpop.permute.xlu0 %4697
    %4699 = vrot.lane.b32.xlu0 %v4609, 48
    %v4700 = vpop.permute.xlu0 %4699
    %4701 = vrot.lane.b32.xlu0 %v4610, 48
    %v4702 = vpop.permute.xlu0 %4701
    %4703 = vrot.lane.b32.xlu0 %v4611, 48
    %v4704 = vpop.permute.xlu0 %4703
    %4705 = vrot.lane.b32.xlu0 %v4612, 48
    %v4706 = vpop.permute.xlu0 %4705
    %4707 = vrot.lane.b32.xlu0 %v4613, 48
    %v4708 = vpop.permute.xlu0 %4707
    %4709 = vrot.lane.b32.xlu0 %v4614, 48
    %v4710 = vpop.permute.xlu0 %4709
    %4743 = vst.msk [vmem:[#allocation5] sm:$0xff] %vm1884, %v4648
    %4744 = vst.msk [vmem:[#allocation5 + $0x8] sm:$0xff] %vm1884, %v4650
    %4745 = vst.msk [vmem:[#allocation5 + $0x10] sm:$0xff] %vm1884, %v4652
    %4746 = vst.msk [vmem:[#allocation5 + $0x18] sm:$0xff] %vm1884, %v4654
    %4747 = vst.msk [vmem:[#allocation5 + $0x20] sm:$0xff] %vm1884, %v4656
    %4748 = vst.msk [vmem:[#allocation5 + $0x28] sm:$0xff] %vm1884, %v4658
    %4749 = vst.msk [vmem:[#allocation5 + $0x30] sm:$0xff] %vm1884, %v4660
    %4750 = vst.msk [vmem:[#allocation5 + $0x38] sm:$0xff] %vm1884, %v4662
    %4751 = vst.msk [vmem:[#allocation5 + $0x40] sm:$0xff] %vm1884, %v4664
    %4752 = vst.msk [vmem:[#allocation5 + $0x48] sm:$0xff] %vm1884, %v4666
    %4753 = vst.msk [vmem:[#allocation5 + $0x50] sm:$0xff] %vm1884, %v4668
    %4754 = vst.msk [vmem:[#allocation5 + $0x58] sm:$0xff] %vm1884, %v4670
    %4755 = vst.msk [vmem:[#allocation5 + $0x60] sm:$0xff] %vm1884, %v4672
    %4756 = vst.msk [vmem:[#allocation5 + $0x68] sm:$0xff] %vm1884, %v4674
    %4757 = vst.msk [vmem:[#allocation5 + $0x70] sm:$0xff] %vm1884, %v4676
    %4758 = vst.msk [vmem:[#allocation5 + $0x78] sm:$0xff] %vm1884, %v4678
    %4759 = vst.msk [vmem:[#allocation5 + $0x80] sm:$0xff] %vm1884, %v4680
    %4760 = vst.msk [vmem:[#allocation5 + $0x88] sm:$0xff] %vm1884, %v4682
    %4761 = vst.msk [vmem:[#allocation5 + $0x90] sm:$0xff] %vm1884, %v4684
    %4762 = vst.msk [vmem:[#allocation5 + $0x98] sm:$0xff] %vm1884, %v4686
    %4763 = vst.msk [vmem:[#allocation5 + $0xa0] sm:$0xff] %vm1884, %v4688
    %4764 = vst.msk [vmem:[#allocation5 + $0xa8] sm:$0xff] %vm1884, %v4690
    %4765 = vst.msk [vmem:[#allocation5 + $0xb0] sm:$0xff] %vm1884, %v4692
    %4766 = vst.msk [vmem:[#allocation5 + $0xb8] sm:$0xff] %vm1884, %v4694
    %4767 = vst.msk [vmem:[#allocation5 + $0xc0] sm:$0xff] %vm1884, %v4696
    %4768 = vst.msk [vmem:[#allocation5 + $0xc8] sm:$0xff] %vm1884, %v4698
    %4769 = vst.msk [vmem:[#allocation5 + $0xd0] sm:$0xff] %vm1884, %v4700
    %4770 = vst.msk [vmem:[#allocation5 + $0xd8] sm:$0xff] %vm1884, %v4702
    %4771 = vst.msk [vmem:[#allocation5 + $0xe0] sm:$0xff] %vm1884, %v4704
    %4772 = vst.msk [vmem:[#allocation5 + $0xe8] sm:$0xff] %vm1884, %v4706
    %4773 = vst.msk [vmem:[#allocation5 + $0xf0] sm:$0xff] %vm1884, %v4708
    %4774 = vst.msk [vmem:[#allocation5 + $0xf8] sm:$0xff] %vm1884, %v4710
    %v4775 = vld [vmem:[%s4518 + $0x1] sm:$0xff]
    %v4776 = vld [vmem:[%s4518 + $0x9] sm:$0xff]
    %v4777 = vld [vmem:[%s4518 + $0x19] sm:$0xff]
    %v4778 = vld [vmem:[%s4518 + $0x21] sm:$0xff]
    %v4779 = vld [vmem:[%s4518 + $0x31] sm:$0xff]
    %v4780 = vld [vmem:[%s4518 + $0x39] sm:$0xff]
    %v4781 = vld [vmem:[%s4518 + $0x49] sm:$0xff]
    %v4782 = vld [vmem:[%s4518 + $0x51] sm:$0xff]
    %v4783 = vld [vmem:[%s4518 + $0x61] sm:$0xff]
    %v4784 = vld [vmem:[%s4518 + $0x69] sm:$0xff]
    %v4785 = vld [vmem:[%s4518 + $0x79] sm:$0xff]
    %v4786 = vld [vmem:[%s4518 + $0x81] sm:$0xff]
    %v4787 = vld [vmem:[%s4518 + $0x91] sm:$0xff]
    %v4788 = vld [vmem:[%s4518 + $0x99] sm:$0xff]
    %v4789 = vld [vmem:[%s4518 + $0xa9] sm:$0xff]
    %v4790 = vld [vmem:[%s4518 + $0xb1] sm:$0xff]
    %v4791 = vld [vmem:[%s4518 + $0xc1] sm:$0xff]
    %v4792 = vld [vmem:[%s4518 + $0xc9] sm:$0xff]
    %v4793 = vld [vmem:[%s4518 + $0xd9] sm:$0xff]
    %v4794 = vld [vmem:[%s4518 + $0xe1] sm:$0xff]
    %v4795 = vld [vmem:[%s4518 + $0xf1] sm:$0xff]
    %v4796 = vld [vmem:[%s4518 + $0xf9] sm:$0xff]
    %v4797 = vld [vmem:[%s4518 + $0x109] sm:$0xff]
    %v4798 = vld [vmem:[%s4518 + $0x111] sm:$0xff]
    %v4799 = vld [vmem:[%s4518 + $0x121] sm:$0xff]
    %v4800 = vld [vmem:[%s4518 + $0x129] sm:$0xff]
    %v4801 = vld [vmem:[%s4518 + $0x139] sm:$0xff]
    %v4802 = vld [vmem:[%s4518 + $0x141] sm:$0xff]
    %v4803 = vld [vmem:[%s4518 + $0x151] sm:$0xff]
    %v4804 = vld [vmem:[%s4518 + $0x159] sm:$0xff]
    %v4805 = vld [vmem:[%s4518 + $0x169] sm:$0xff]
    %v4806 = vld [vmem:[%s4518 + $0x171] sm:$0xff]
    %v4807 = vld [vmem:[%s4518 + $0x1b1] sm:$0xff]
    %v4808 = vld [vmem:[%s4518 + $0x1b9] sm:$0xff]
    %v4809 = vld [vmem:[%s4518 + $0x1c9] sm:$0xff]
    %v4810 = vld [vmem:[%s4518 + $0x1d1] sm:$0xff]
    %v4811 = vld [vmem:[%s4518 + $0x1e1] sm:$0xff]
    %v4812 = vld [vmem:[%s4518 + $0x1e9] sm:$0xff]
    %v4813 = vld [vmem:[%s4518 + $0x1f9] sm:$0xff]
    %v4814 = vld [vmem:[%s4518 + $0x201] sm:$0xff]
    %v4815 = vld [vmem:[%s4518 + $0x211] sm:$0xff]
    %v4816 = vld [vmem:[%s4518 + $0x219] sm:$0xff]
    %v4817 = vld [vmem:[%s4518 + $0x229] sm:$0xff]
    %v4818 = vld [vmem:[%s4518 + $0x231] sm:$0xff]
    %v4819 = vld [vmem:[%s4518 + $0x241] sm:$0xff]
    %v4820 = vld [vmem:[%s4518 + $0x249] sm:$0xff]
    %v4821 = vld [vmem:[%s4518 + $0x259] sm:$0xff]
    %v4822 = vld [vmem:[%s4518 + $0x261] sm:$0xff]
    %v4823 = vld [vmem:[%s4518 + $0x271] sm:$0xff]
    %v4824 = vld [vmem:[%s4518 + $0x279] sm:$0xff]
    %v4825 = vld [vmem:[%s4518 + $0x289] sm:$0xff]
    %v4826 = vld [vmem:[%s4518 + $0x291] sm:$0xff]
    %v4827 = vld [vmem:[%s4518 + $0x2a1] sm:$0xff]
    %v4828 = vld [vmem:[%s4518 + $0x2a9] sm:$0xff]
    %v4829 = vld [vmem:[%s4518 + $0x2b9] sm:$0xff]
    %v4830 = vld [vmem:[%s4518 + $0x2c1] sm:$0xff]
    %v4831 = vld [vmem:[%s4518 + $0x2d1] sm:$0xff]
    %v4832 = vld [vmem:[%s4518 + $0x2d9] sm:$0xff]
    %v4833 = vld [vmem:[%s4518 + $0x2e9] sm:$0xff]
    %v4834 = vld [vmem:[%s4518 + $0x2f1] sm:$0xff]
    %v4835 = vld [vmem:[%s4518 + $0x301] sm:$0xff]
    %v4836 = vld [vmem:[%s4518 + $0x309] sm:$0xff]
    %v4837 = vld [vmem:[%s4518 + $0x319] sm:$0xff]
    %v4838 = vld [vmem:[%s4518 + $0x321] sm:$0xff]
    %v4839 = vpack.c.bf16 %v4776, %v4775
    %v4840 = vpack.c.bf16 %v4778, %v4777
    %v4841 = vpack.c.bf16 %v4780, %v4779
    %v4842 = vpack.c.bf16 %v4782, %v4781
    %v4843 = vpack.c.bf16 %v4784, %v4783
    %v4844 = vpack.c.bf16 %v4786, %v4785
    %v4845 = vpack.c.bf16 %v4788, %v4787
    %v4846 = vpack.c.bf16 %v4790, %v4789
    %v4847 = vpack.c.bf16 %v4792, %v4791
    %v4848 = vpack.c.bf16 %v4794, %v4793
    %v4849 = vpack.c.bf16 %v4796, %v4795
    %v4850 = vpack.c.bf16 %v4798, %v4797
    %v4851 = vpack.c.bf16 %v4800, %v4799
    %v4852 = vpack.c.bf16 %v4802, %v4801
    %v4853 = vpack.c.bf16 %v4804, %v4803
    %v4854 = vpack.c.bf16 %v4806, %v4805
    %v4855 = vpack.c.bf16 %v4808, %v4807
    %v4856 = vpack.c.bf16 %v4810, %v4809
    %v4857 = vpack.c.bf16 %v4812, %v4811
    %v4858 = vpack.c.bf16 %v4814, %v4813
    %v4859 = vpack.c.bf16 %v4816, %v4815
    %v4860 = vpack.c.bf16 %v4818, %v4817
    %v4861 = vpack.c.bf16 %v4820, %v4819
    %v4862 = vpack.c.bf16 %v4822, %v4821
    %v4863 = vpack.c.bf16 %v4824, %v4823
    %v4864 = vpack.c.bf16 %v4826, %v4825
    %v4865 = vpack.c.bf16 %v4828, %v4827
    %v4866 = vpack.c.bf16 %v4830, %v4829
    %v4867 = vpack.c.bf16 %v4832, %v4831
    %v4868 = vpack.c.bf16 %v4834, %v4833
    %v4869 = vpack.c.bf16 %v4836, %v4835
    %v4870 = vpack.c.bf16 %v4838, %v4837
    %4903 = vrot.lane.b32.xlu0 %v4839, 56
    %v4904 = vpop.permute.xlu0 %4903
    %4905 = vrot.lane.b32.xlu0 %v4840, 56
    %v4906 = vpop.permute.xlu0 %4905
    %4907 = vrot.lane.b32.xlu0 %v4841, 56
    %v4908 = vpop.permute.xlu0 %4907
    %4909 = vrot.lane.b32.xlu0 %v4842, 56
    %v4910 = vpop.permute.xlu0 %4909
    %4911 = vrot.lane.b32.xlu0 %v4843, 56
    %v4912 = vpop.permute.xlu0 %4911
    %4913 = vrot.lane.b32.xlu0 %v4844, 56
    %v4914 = vpop.permute.xlu0 %4913
    %4915 = vrot.lane.b32.xlu0 %v4845, 56
    %v4916 = vpop.permute.xlu0 %4915
    %4917 = vrot.lane.b32.xlu0 %v4846, 56
    %v4918 = vpop.permute.xlu0 %4917
    %4919 = vrot.lane.b32.xlu0 %v4847, 56
    %v4920 = vpop.permute.xlu0 %4919
    %4921 = vrot.lane.b32.xlu0 %v4848, 56
    %v4922 = vpop.permute.xlu0 %4921
    %4923 = vrot.lane.b32.xlu0 %v4849, 56
    %v4924 = vpop.permute.xlu0 %4923
    %4925 = vrot.lane.b32.xlu0 %v4850, 56
    %v4926 = vpop.permute.xlu0 %4925
    %4927 = vrot.lane.b32.xlu0 %v4851, 56
    %v4928 = vpop.permute.xlu0 %4927
    %4929 = vrot.lane.b32.xlu0 %v4852, 56
    %v4930 = vpop.permute.xlu0 %4929
    %4931 = vrot.lane.b32.xlu0 %v4853, 56
    %v4932 = vpop.permute.xlu0 %4931
    %4933 = vrot.lane.b32.xlu0 %v4854, 56
    %v4934 = vpop.permute.xlu0 %4933
    %4935 = vrot.lane.b32.xlu0 %v4855, 56
    %v4936 = vpop.permute.xlu0 %4935
    %4937 = vrot.lane.b32.xlu0 %v4856, 56
    %v4938 = vpop.permute.xlu0 %4937
    %4939 = vrot.lane.b32.xlu0 %v4857, 56
    %v4940 = vpop.permute.xlu0 %4939
    %4941 = vrot.lane.b32.xlu0 %v4858, 56
    %v4942 = vpop.permute.xlu0 %4941
    %4943 = vrot.lane.b32.xlu0 %v4859, 56
    %v4944 = vpop.permute.xlu0 %4943
    %4945 = vrot.lane.b32.xlu0 %v4860, 56
    %v4946 = vpop.permute.xlu0 %4945
    %4947 = vrot.lane.b32.xlu0 %v4861, 56
    %v4948 = vpop.permute.xlu0 %4947
    %4949 = vrot.lane.b32.xlu0 %v4862, 56
    %v4950 = vpop.permute.xlu0 %4949
    %4951 = vrot.lane.b32.xlu0 %v4863, 56
    %v4952 = vpop.permute.xlu0 %4951
    %4953 = vrot.lane.b32.xlu0 %v4864, 56
    %v4954 = vpop.permute.xlu0 %4953
    %4955 = vrot.lane.b32.xlu0 %v4865, 56
    %v4956 = vpop.permute.xlu0 %4955
    %4957 = vrot.lane.b32.xlu0 %v4866, 56
    %v4958 = vpop.permute.xlu0 %4957
    %4959 = vrot.lane.b32.xlu0 %v4867, 56
    %v4960 = vpop.permute.xlu0 %4959
    %4961 = vrot.lane.b32.xlu0 %v4868, 56
    %v4962 = vpop.permute.xlu0 %4961
    %4963 = vrot.lane.b32.xlu0 %v4869, 56
    %v4964 = vpop.permute.xlu0 %4963
    %4965 = vrot.lane.b32.xlu0 %v4870, 56
    %v4966 = vpop.permute.xlu0 %4965
    %4999 = vst.msk [vmem:[#allocation5] sm:$0xff] %vm2141, %v4904
    %5000 = vst.msk [vmem:[#allocation5 + $0x8] sm:$0xff] %vm2141, %v4906
    %5001 = vst.msk [vmem:[#allocation5 + $0x10] sm:$0xff] %vm2141, %v4908
    %5002 = vst.msk [vmem:[#allocation5 + $0x18] sm:$0xff] %vm2141, %v4910
    %5003 = vst.msk [vmem:[#allocation5 + $0x20] sm:$0xff] %vm2141, %v4912
    %5004 = vst.msk [vmem:[#allocation5 + $0x28] sm:$0xff] %vm2141, %v4914
    %5005 = vst.msk [vmem:[#allocation5 + $0x30] sm:$0xff] %vm2141, %v4916
    %5006 = vst.msk [vmem:[#allocation5 + $0x38] sm:$0xff] %vm2141, %v4918
    %5007 = vst.msk [vmem:[#allocation5 + $0x40] sm:$0xff] %vm2141, %v4920
    %5008 = vst.msk [vmem:[#allocation5 + $0x48] sm:$0xff] %vm2141, %v4922
    %5009 = vst.msk [vmem:[#allocation5 + $0x50] sm:$0xff] %vm2141, %v4924
    %5010 = vst.msk [vmem:[#allocation5 + $0x58] sm:$0xff] %vm2141, %v4926
    %5011 = vst.msk [vmem:[#allocation5 + $0x60] sm:$0xff] %vm2141, %v4928
    %5012 = vst.msk [vmem:[#allocation5 + $0x68] sm:$0xff] %vm2141, %v4930
    %5013 = vst.msk [vmem:[#allocation5 + $0x70] sm:$0xff] %vm2141, %v4932
    %5014 = vst.msk [vmem:[#allocation5 + $0x78] sm:$0xff] %vm2141, %v4934
    %5015 = vst.msk [vmem:[#allocation5 + $0x80] sm:$0xff] %vm2141, %v4936
    %5016 = vst.msk [vmem:[#allocation5 + $0x88] sm:$0xff] %vm2141, %v4938
    %5017 = vst.msk [vmem:[#allocation5 + $0x90] sm:$0xff] %vm2141, %v4940
    %5018 = vst.msk [vmem:[#allocation5 + $0x98] sm:$0xff] %vm2141, %v4942
    %5019 = vst.msk [vmem:[#allocation5 + $0xa0] sm:$0xff] %vm2141, %v4944
    %5020 = vst.msk [vmem:[#allocation5 + $0xa8] sm:$0xff] %vm2141, %v4946
    %5021 = vst.msk [vmem:[#allocation5 + $0xb0] sm:$0xff] %vm2141, %v4948
    %5022 = vst.msk [vmem:[#allocation5 + $0xb8] sm:$0xff] %vm2141, %v4950
    %5023 = vst.msk [vmem:[#allocation5 + $0xc0] sm:$0xff] %vm2141, %v4952
    %5024 = vst.msk [vmem:[#allocation5 + $0xc8] sm:$0xff] %vm2141, %v4954
    %5025 = vst.msk [vmem:[#allocation5 + $0xd0] sm:$0xff] %vm2141, %v4956
    %5026 = vst.msk [vmem:[#allocation5 + $0xd8] sm:$0xff] %vm2141, %v4958
    %5027 = vst.msk [vmem:[#allocation5 + $0xe0] sm:$0xff] %vm2141, %v4960
    %5028 = vst.msk [vmem:[#allocation5 + $0xe8] sm:$0xff] %vm2141, %v4962
    %5029 = vst.msk [vmem:[#allocation5 + $0xf0] sm:$0xff] %vm2141, %v4964
    %5030 = vst.msk [vmem:[#allocation5 + $0xf8] sm:$0xff] %vm2141, %v4966
    %v5031 = vld [vmem:[%s4518 + $0x2] sm:$0xff]
    %v5032 = vld [vmem:[%s4518 + $0xa] sm:$0xff]
    %v5033 = vld [vmem:[%s4518 + $0x1a] sm:$0xff]
    %v5034 = vld [vmem:[%s4518 + $0x22] sm:$0xff]
    %v5035 = vld [vmem:[%s4518 + $0x32] sm:$0xff]
    %v5036 = vld [vmem:[%s4518 + $0x3a] sm:$0xff]
    %v5037 = vld [vmem:[%s4518 + $0x4a] sm:$0xff]
    %v5038 = vld [vmem:[%s4518 + $0x52] sm:$0xff]
    %v5039 = vld [vmem:[%s4518 + $0x62] sm:$0xff]
    %v5040 = vld [vmem:[%s4518 + $0x6a] sm:$0xff]
    %v5041 = vld [vmem:[%s4518 + $0x7a] sm:$0xff]
    %v5042 = vld [vmem:[%s4518 + $0x82] sm:$0xff]
    %v5043 = vld [vmem:[%s4518 + $0x92] sm:$0xff]
    %v5044 = vld [vmem:[%s4518 + $0x9a] sm:$0xff]
    %v5045 = vld [vmem:[%s4518 + $0xaa] sm:$0xff]
    %v5046 = vld [vmem:[%s4518 + $0xb2] sm:$0xff]
    %v5047 = vld [vmem:[%s4518 + $0xc2] sm:$0xff]
    %v5048 = vld [vmem:[%s4518 + $0xca] sm:$0xff]
    %v5049 = vld [vmem:[%s4518 + $0xda] sm:$0xff]
    %v5050 = vld [vmem:[%s4518 + $0xe2] sm:$0xff]
    %v5051 = vld [vmem:[%s4518 + $0xf2] sm:$0xff]
    %v5052 = vld [vmem:[%s4518 + $0xfa] sm:$0xff]
    %v5053 = vld [vmem:[%s4518 + $0x10a] sm:$0xff]
    %v5054 = vld [vmem:[%s4518 + $0x112] sm:$0xff]
    %v5055 = vld [vmem:[%s4518 + $0x122] sm:$0xff]
    %v5056 = vld [vmem:[%s4518 + $0x12a] sm:$0xff]
    %v5057 = vld [vmem:[%s4518 + $0x13a] sm:$0xff]
    %v5058 = vld [vmem:[%s4518 + $0x142] sm:$0xff]
    %v5059 = vld [vmem:[%s4518 + $0x152] sm:$0xff]
    %v5060 = vld [vmem:[%s4518 + $0x15a] sm:$0xff]
    %v5061 = vld [vmem:[%s4518 + $0x16a] sm:$0xff]
    %v5062 = vld [vmem:[%s4518 + $0x172] sm:$0xff]
    %v5063 = vld [vmem:[%s4518 + $0x1b2] sm:$0xff]
    %v5064 = vld [vmem:[%s4518 + $0x1ba] sm:$0xff]
    %v5065 = vld [vmem:[%s4518 + $0x1ca] sm:$0xff]
    %v5066 = vld [vmem:[%s4518 + $0x1d2] sm:$0xff]
    %v5067 = vld [vmem:[%s4518 + $0x1e2] sm:$0xff]
    %v5068 = vld [vmem:[%s4518 + $0x1ea] sm:$0xff]
    %v5069 = vld [vmem:[%s4518 + $0x1fa] sm:$0xff]
    %v5070 = vld [vmem:[%s4518 + $0x202] sm:$0xff]
    %v5071 = vld [vmem:[%s4518 + $0x212] sm:$0xff]
    %v5072 = vld [vmem:[%s4518 + $0x21a] sm:$0xff]
    %v5073 = vld [vmem:[%s4518 + $0x22a] sm:$0xff]
    %v5074 = vld [vmem:[%s4518 + $0x232] sm:$0xff]
    %v5075 = vld [vmem:[%s4518 + $0x242] sm:$0xff]
    %v5076 = vld [vmem:[%s4518 + $0x24a] sm:$0xff]
    %v5077 = vld [vmem:[%s4518 + $0x25a] sm:$0xff]
    %v5078 = vld [vmem:[%s4518 + $0x262] sm:$0xff]
    %v5079 = vld [vmem:[%s4518 + $0x272] sm:$0xff]
    %v5080 = vld [vmem:[%s4518 + $0x27a] sm:$0xff]
    %v5081 = vld [vmem:[%s4518 + $0x28a] sm:$0xff]
    %v5082 = vld [vmem:[%s4518 + $0x292] sm:$0xff]
    %v5083 = vld [vmem:[%s4518 + $0x2a2] sm:$0xff]
    %v5084 = vld [vmem:[%s4518 + $0x2aa] sm:$0xff]
    %v5085 = vld [vmem:[%s4518 + $0x2ba] sm:$0xff]
    %v5086 = vld [vmem:[%s4518 + $0x2c2] sm:$0xff]
    %v5087 = vld [vmem:[%s4518 + $0x2d2] sm:$0xff]
    %v5088 = vld [vmem:[%s4518 + $0x2da] sm:$0xff]
    %v5089 = vld [vmem:[%s4518 + $0x2ea] sm:$0xff]
    %v5090 = vld [vmem:[%s4518 + $0x2f2] sm:$0xff]
    %v5091 = vld [vmem:[%s4518 + $0x302] sm:$0xff]
    %v5092 = vld [vmem:[%s4518 + $0x30a] sm:$0xff]
    %v5093 = vld [vmem:[%s4518 + $0x31a] sm:$0xff]
    %v5094 = vld [vmem:[%s4518 + $0x322] sm:$0xff]
    %v5095 = vpack.c.bf16 %v5032, %v5031
    %v5096 = vpack.c.bf16 %v5034, %v5033
    %v5097 = vpack.c.bf16 %v5036, %v5035
    %v5098 = vpack.c.bf16 %v5038, %v5037
    %v5099 = vpack.c.bf16 %v5040, %v5039
    %v5100 = vpack.c.bf16 %v5042, %v5041
    %v5101 = vpack.c.bf16 %v5044, %v5043
    %v5102 = vpack.c.bf16 %v5046, %v5045
    %v5103 = vpack.c.bf16 %v5048, %v5047
    %v5104 = vpack.c.bf16 %v5050, %v5049
    %v5105 = vpack.c.bf16 %v5052, %v5051
    %v5106 = vpack.c.bf16 %v5054, %v5053
    %v5107 = vpack.c.bf16 %v5056, %v5055
    %v5108 = vpack.c.bf16 %v5058, %v5057
    %v5109 = vpack.c.bf16 %v5060, %v5059
    %v5110 = vpack.c.bf16 %v5062, %v5061
    %v5111 = vpack.c.bf16 %v5064, %v5063
    %v5112 = vpack.c.bf16 %v5066, %v5065
    %v5113 = vpack.c.bf16 %v5068, %v5067
    %v5114 = vpack.c.bf16 %v5070, %v5069
    %v5115 = vpack.c.bf16 %v5072, %v5071
    %v5116 = vpack.c.bf16 %v5074, %v5073
    %v5117 = vpack.c.bf16 %v5076, %v5075
    %v5118 = vpack.c.bf16 %v5078, %v5077
    %v5119 = vpack.c.bf16 %v5080, %v5079
    %v5120 = vpack.c.bf16 %v5082, %v5081
    %v5121 = vpack.c.bf16 %v5084, %v5083
    %v5122 = vpack.c.bf16 %v5086, %v5085
    %v5123 = vpack.c.bf16 %v5088, %v5087
    %v5124 = vpack.c.bf16 %v5090, %v5089
    %v5125 = vpack.c.bf16 %v5092, %v5091
    %v5126 = vpack.c.bf16 %v5094, %v5093
    %5159 = vrot.lane.b32.xlu0 %v5095, 64
    %v5160 = vpop.permute.xlu0 %5159
    %5161 = vrot.lane.b32.xlu0 %v5096, 64
    %v5162 = vpop.permute.xlu0 %5161
    %5163 = vrot.lane.b32.xlu0 %v5097, 64
    %v5164 = vpop.permute.xlu0 %5163
    %5165 = vrot.lane.b32.xlu0 %v5098, 64
    %v5166 = vpop.permute.xlu0 %5165
    %5167 = vrot.lane.b32.xlu0 %v5099, 64
    %v5168 = vpop.permute.xlu0 %5167
    %5169 = vrot.lane.b32.xlu0 %v5100, 64
    %v5170 = vpop.permute.xlu0 %5169
    %5171 = vrot.lane.b32.xlu0 %v5101, 64
    %v5172 = vpop.permute.xlu0 %5171
    %5173 = vrot.lane.b32.xlu0 %v5102, 64
    %v5174 = vpop.permute.xlu0 %5173
    %5175 = vrot.lane.b32.xlu0 %v5103, 64
    %v5176 = vpop.permute.xlu0 %5175
    %5177 = vrot.lane.b32.xlu0 %v5104, 64
    %v5178 = vpop.permute.xlu0 %5177
    %5179 = vrot.lane.b32.xlu0 %v5105, 64
    %v5180 = vpop.permute.xlu0 %5179
    %5181 = vrot.lane.b32.xlu0 %v5106, 64
    %v5182 = vpop.permute.xlu0 %5181
    %5183 = vrot.lane.b32.xlu0 %v5107, 64
    %v5184 = vpop.permute.xlu0 %5183
    %5185 = vrot.lane.b32.xlu0 %v5108, 64
    %v5186 = vpop.permute.xlu0 %5185
    %5187 = vrot.lane.b32.xlu0 %v5109, 64
    %v5188 = vpop.permute.xlu0 %5187
    %5189 = vrot.lane.b32.xlu0 %v5110, 64
    %v5190 = vpop.permute.xlu0 %5189
    %5191 = vrot.lane.b32.xlu0 %v5111, 64
    %v5192 = vpop.permute.xlu0 %5191
    %5193 = vrot.lane.b32.xlu0 %v5112, 64
    %v5194 = vpop.permute.xlu0 %5193
    %5195 = vrot.lane.b32.xlu0 %v5113, 64
    %v5196 = vpop.permute.xlu0 %5195
    %5197 = vrot.lane.b32.xlu0 %v5114, 64
    %v5198 = vpop.permute.xlu0 %5197
    %5199 = vrot.lane.b32.xlu0 %v5115, 64
    %v5200 = vpop.permute.xlu0 %5199
    %5201 = vrot.lane.b32.xlu0 %v5116, 64
    %v5202 = vpop.permute.xlu0 %5201
    %5203 = vrot.lane.b32.xlu0 %v5117, 64
    %v5204 = vpop.permute.xlu0 %5203
    %5205 = vrot.lane.b32.xlu0 %v5118, 64
    %v5206 = vpop.permute.xlu0 %5205
    %5207 = vrot.lane.b32.xlu0 %v5119, 64
    %v5208 = vpop.permute.xlu0 %5207
    %5209 = vrot.lane.b32.xlu0 %v5120, 64
    %v5210 = vpop.permute.xlu0 %5209
    %5211 = vrot.lane.b32.xlu0 %v5121, 64
    %v5212 = vpop.permute.xlu0 %5211
    %5213 = vrot.lane.b32.xlu0 %v5122, 64
    %v5214 = vpop.permute.xlu0 %5213
    %5215 = vrot.lane.b32.xlu0 %v5123, 64
    %v5216 = vpop.permute.xlu0 %5215
    %5217 = vrot.lane.b32.xlu0 %v5124, 64
    %v5218 = vpop.permute.xlu0 %5217
    %5219 = vrot.lane.b32.xlu0 %v5125, 64
    %v5220 = vpop.permute.xlu0 %5219
    %5221 = vrot.lane.b32.xlu0 %v5126, 64
    %v5222 = vpop.permute.xlu0 %5221
    %5255 = vst.msk [vmem:[#allocation5] sm:$0xff] %vm2398, %v5160
    %5256 = vst.msk [vmem:[#allocation5 + $0x8] sm:$0xff] %vm2398, %v5162
    %5257 = vst.msk [vmem:[#allocation5 + $0x10] sm:$0xff] %vm2398, %v5164
    %5258 = vst.msk [vmem:[#allocation5 + $0x18] sm:$0xff] %vm2398, %v5166
    %5259 = vst.msk [vmem:[#allocation5 + $0x20] sm:$0xff] %vm2398, %v5168
    %5260 = vst.msk [vmem:[#allocation5 + $0x28] sm:$0xff] %vm2398, %v5170
    %5261 = vst.msk [vmem:[#allocation5 + $0x30] sm:$0xff] %vm2398, %v5172
    %5262 = vst.msk [vmem:[#allocation5 + $0x38] sm:$0xff] %vm2398, %v5174
    %5263 = vst.msk [vmem:[#allocation5 + $0x40] sm:$0xff] %vm2398, %v5176
    %5264 = vst.msk [vmem:[#allocation5 + $0x48] sm:$0xff] %vm2398, %v5178
    %5265 = vst.msk [vmem:[#allocation5 + $0x50] sm:$0xff] %vm2398, %v5180
    %5266 = vst.msk [vmem:[#allocation5 + $0x58] sm:$0xff] %vm2398, %v5182
    %5267 = vst.msk [vmem:[#allocation5 + $0x60] sm:$0xff] %vm2398, %v5184
    %5268 = vst.msk [vmem:[#allocation5 + $0x68] sm:$0xff] %vm2398, %v5186
    %5269 = vst.msk [vmem:[#allocation5 + $0x70] sm:$0xff] %vm2398, %v5188
    %5270 = vst.msk [vmem:[#allocation5 + $0x78] sm:$0xff] %vm2398, %v5190
    %5271 = vst.msk [vmem:[#allocation5 + $0x80] sm:$0xff] %vm2398, %v5192
    %5272 = vst.msk [vmem:[#allocation5 + $0x88] sm:$0xff] %vm2398, %v5194
    %5273 = vst.msk [vmem:[#allocation5 + $0x90] sm:$0xff] %vm2398, %v5196
    %5274 = vst.msk [vmem:[#allocation5 + $0x98] sm:$0xff] %vm2398, %v5198
    %5275 = vst.msk [vmem:[#allocation5 + $0xa0] sm:$0xff] %vm2398, %v5200
    %5276 = vst.msk [vmem:[#allocation5 + $0xa8] sm:$0xff] %vm2398, %v5202
    %5277 = vst.msk [vmem:[#allocation5 + $0xb0] sm:$0xff] %vm2398, %v5204
    %5278 = vst.msk [vmem:[#allocation5 + $0xb8] sm:$0xff] %vm2398, %v5206
    %5279 = vst.msk [vmem:[#allocation5 + $0xc0] sm:$0xff] %vm2398, %v5208
    %5280 = vst.msk [vmem:[#allocation5 + $0xc8] sm:$0xff] %vm2398, %v5210
    %5281 = vst.msk [vmem:[#allocation5 + $0xd0] sm:$0xff] %vm2398, %v5212
    %5282 = vst.msk [vmem:[#allocation5 + $0xd8] sm:$0xff] %vm2398, %v5214
    %5283 = vst.msk [vmem:[#allocation5 + $0xe0] sm:$0xff] %vm2398, %v5216
    %5284 = vst.msk [vmem:[#allocation5 + $0xe8] sm:$0xff] %vm2398, %v5218
    %5285 = vst.msk [vmem:[#allocation5 + $0xf0] sm:$0xff] %vm2398, %v5220
    %5286 = vst.msk [vmem:[#allocation5 + $0xf8] sm:$0xff] %vm2398, %v5222
    %v5287 = vld [vmem:[#allocation5] sm:$0xff]
    %v5288 = vld [vmem:[#allocation5 + $0x8] sm:$0xff]
    %v5289 = vld [vmem:[#allocation5 + $0x10] sm:$0xff]
    %v5290 = vld [vmem:[#allocation5 + $0x18] sm:$0xff]
    %v5291 = vld [vmem:[#allocation5 + $0x20] sm:$0xff]
    %v5292 = vld [vmem:[#allocation5 + $0x28] sm:$0xff]
    %v5293 = vld [vmem:[#allocation5 + $0x30] sm:$0xff]
    %v5294 = vld [vmem:[#allocation5 + $0x38] sm:$0xff]
    %v5295 = vld [vmem:[#allocation5 + $0x40] sm:$0xff]
    %v5296 = vld [vmem:[#allocation5 + $0x48] sm:$0xff]
    %v5297 = vld [vmem:[#allocation5 + $0x50] sm:$0xff]
    %v5298 = vld [vmem:[#allocation5 + $0x58] sm:$0xff]
    %v5299 = vld [vmem:[#allocation5 + $0x60] sm:$0xff]
    %v5300 = vld [vmem:[#allocation5 + $0x68] sm:$0xff]
    %v5301 = vld [vmem:[#allocation5 + $0x70] sm:$0xff]
    %v5302 = vld [vmem:[#allocation5 + $0x78] sm:$0xff]
    %v5303 = vld [vmem:[#allocation5 + $0x80] sm:$0xff]
    %v5304 = vld [vmem:[#allocation5 + $0x88] sm:$0xff]
    %v5305 = vld [vmem:[#allocation5 + $0x90] sm:$0xff]
    %v5306 = vld [vmem:[#allocation5 + $0x98] sm:$0xff]
    %v5307 = vld [vmem:[#allocation5 + $0xa0] sm:$0xff]
    %v5308 = vld [vmem:[#allocation5 + $0xa8] sm:$0xff]
    %v5309 = vld [vmem:[#allocation5 + $0xb0] sm:$0xff]
    %v5310 = vld [vmem:[#allocation5 + $0xb8] sm:$0xff]
    %v5311 = vld [vmem:[#allocation5 + $0xc0] sm:$0xff]
    %v5312 = vld [vmem:[#allocation5 + $0xc8] sm:$0xff]
    %v5313 = vld [vmem:[#allocation5 + $0xd0] sm:$0xff]
    %v5314 = vld [vmem:[#allocation5 + $0xd8] sm:$0xff]
    %v5315 = vld [vmem:[#allocation5 + $0xe0] sm:$0xff]
    %v5316 = vld [vmem:[#allocation5 + $0xe8] sm:$0xff]
    %v5317 = vld [vmem:[#allocation5 + $0xf0] sm:$0xff]
    %v5318 = vld [vmem:[#allocation5 + $0xf8] sm:$0xff]
    %v5319 = vld [vmem:[%s3] sm:$0xf]
    %v5320 = vld [vmem:[%s3 + $0x4] sm:$0xf]
    %v5321 = vld [vmem:[%s3 + $0x8] sm:$0xf]
    %v5322 = vld [vmem:[%s3 + $0xc] sm:$0xf]
    %v5323 = vld [vmem:[%s3 + $0x10] sm:$0xf]
    %v5324 = vld [vmem:[%s3 + $0x14] sm:$0xf]
    %v5325 = vld [vmem:[%s3 + $0x18] sm:$0xf]
    %v5326 = vld [vmem:[%s3 + $0x1c] sm:$0xf]
    %v5327 = vld [vmem:[%s3 + $0x20] sm:$0xf]
    %v5329 = vlaneseq
    %v5330 = vshrl.u32 %v5329, 7
    %v5331 = vsub.s32 0, %v5330
    %v5332 = vrot.slane %v3109, %v5331
    %v5343 = vunpack.c.l.b16 %v5319
    %v5344 = vunpack.c.l.b16 %v5320
    %v5345 = vunpack.c.l.b16 %v5321
    %v5346 = vunpack.c.l.b16 %v5322
    %v5347 = vunpack.c.l.b16 %v5323
    %v5348 = vunpack.c.l.b16 %v5324
    %v5349 = vunpack.c.l.b16 %v5325
    %v5350 = vunpack.c.l.b16 %v5326
    %v5351 = vunpack.c.l.b16 %v5327
    %v5352 = vpack.c.b16 %v5344, %v5343
    %v5353 = vpack.c.b16 %v5346, %v5345
    %v5354 = vpack.c.b16 %v5348, %v5347
    %v5355 = vpack.c.b16 %v5350, %v5349
    %v5356 = vpack.c.b16 %v5351, %v5351
    %v5362 = vsel %vm2505, %v5287, 0
    %v5365 = vsel %vm2505, %v5288, 0
    %v5368 = vsel %vm2505, %v5289, 0
    %v5371 = vsel %vm2505, %v5290, 0
    %v5374 = vsel %vm2505, %v5291, 0
    %v5377 = vsel %vm2505, %v5292, 0
    %v5380 = vsel %vm2505, %v5293, 0
    %v5383 = vsel %vm2505, %v5294, 0
    %v5386 = vsel %vm2505, %v5295, 0
    %v5389 = vsel %vm2505, %v5296, 0
    %v5392 = vsel %vm2505, %v5297, 0
    %v5395 = vsel %vm2505, %v5298, 0
    %v5398 = vsel %vm2505, %v5299, 0
    %v5401 = vsel %vm2505, %v5300, 0
    %v5404 = vsel %vm2505, %v5301, 0
    %v5407 = vsel %vm2505, %v5302, 0
    %v5410 = vsel %vm2505, %v5303, 0
    %v5413 = vsel %vm2505, %v5304, 0
    %v5416 = vsel %vm2505, %v5305, 0
    %v5419 = vsel %vm2505, %v5306, 0
    %v5422 = vsel %vm2505, %v5307, 0
    %v5425 = vsel %vm2505, %v5308, 0
    %v5428 = vsel %vm2505, %v5309, 0
    %v5431 = vsel %vm2505, %v5310, 0
    %v5434 = vsel %vm2505, %v5311, 0
    %v5437 = vsel %vm2505, %v5312, 0
    %v5440 = vsel %vm2505, %v5313, 0
    %v5443 = vsel %vm2505, %v5314, 0
    %v5446 = vsel %vm2505, %v5315, 0
    %v5449 = vsel %vm2505, %v5316, 0
    %v5452 = vsel %vm2505, %v5317, 0
    %v5455 = vsel %vm2505, %v5318, 0
    %v5458 = vsel %vm2602, %v5356, 0
    %5460 = vmatprep.subr.bf16.mxu0 0
    %5461 = vmatpush1.bf16.msra.mxu0 %v5352
    %5462 = vmatprep.subr.bf16.mxu0 0
    %5463 = vmatpush1.bf16.msra.mxu0 %v5353
    %5464 = vmatprep.subr.bf16.mxu0 0
    %5465 = vmatpush1.bf16.msra.mxu0 %v5354
    %5466 = vmatprep.subr.bf16.mxu0 0
    %5467 = vmatpush1.bf16.msra.mxu0 %v5355
    %5468 = vmatprep.subr.bf16.mxu0 0
    %5469 = vmatpush1.bf16.msra.mxu0 %v5458
    %5470 = vmatprep.subr.bf16.mxu0 0
    %5471 = vmatpush1.bf16.msra.mxu0 0
    %5472 = vmatprep.subr.bf16.mxu0 0
    %5473 = vmatpush1.bf16.msra.mxu0 0
    %5474 = vmatprep.subr.bf16.mxu0 0
    %5475 = vmatpush1.bf16.msra.mxu0 0
    %5476 = vmatprep.subr.bf16.mxu0 0
    %5477 = vmatpush1.bf16.msra.mxu0 0
    %5478 = vmatprep.subr.bf16.mxu0 0
    %5479 = vmatpush1.bf16.msra.mxu0 0
    %5480 = vmatprep.subr.bf16.mxu0 0
    %5481 = vmatpush1.bf16.msra.mxu0 0
    %5482 = vmatprep.subr.bf16.mxu0 0
    %5483 = vmatpush1.bf16.msra.mxu0 0
    %5484 = vmatprep.subr.bf16.mxu0 0
    %5485 = vmatpush1.bf16.msra.mxu0 0
    %5486 = vmatprep.subr.bf16.mxu0 0
    %5487 = vmatpush1.bf16.msra.mxu0 0
    %5488 = vmatprep.subr.bf16.mxu0 0
    %5489 = vmatpush1.bf16.msra.mxu0 0
    %5490 = vmatprep.subr.bf16.mxu0 0
    %5491 = vmatpush1.bf16.msra.mxu0 0
    %5492 = vmatprep.mubr.bf16.mxu0 0
    %5493 = vmatmul.mubr.bf16.gmra.mrb[0].mxu0 %v5362
    %v5494 = vpop.f32.mrb[0].mxu0
    %v5495 = vadd.f32 %v5332, %v5494
    %v5496 = vpop.f32.mrb[0].mxu0
    %v5497 = vpop.f32.mrb[0].mxu0
    %v5498 = vadd.f32 %v5332, %v5497
    %v5499 = vpop.f32.mrb[0].mxu0
    %5500 = vmatprep.mubr.bf16.mxu0 0
    %5501 = vmatmul.mubr.bf16.gmra.mrb[0].mxu0 %v5365
    %v5502 = vpop.f32.mrb[0].mxu0
    %v5503 = vadd.f32 %v5332, %v5502
    %v5504 = vpop.f32.mrb[0].mxu0
    %v5505 = vpop.f32.mrb[0].mxu0
    %v5506 = vadd.f32 %v5332, %v5505
    %v5507 = vpop.f32.mrb[0].mxu0
    %5508 = vmatprep.mubr.bf16.mxu0 0
    %5509 = vmatmul.mubr.bf16.gmra.mrb[0].mxu0 %v5368
    %v5510 = vpop.f32.mrb[0].mxu0
    %v5511 = vadd.f32 %v5332, %v5510
    %v5512 = vpop.f32.mrb[0].mxu0
    %v5513 = vpop.f32.mrb[0].mxu0
    %v5514 = vadd.f32 %v5332, %v5513
    %v5515 = vpop.f32.mrb[0].mxu0
    %5516 = vmatprep.mubr.bf16.mxu0 0
    %5517 = vmatmul.mubr.bf16.gmra.mrb[0].mxu0 %v5371
    %v5518 = vpop.f32.mrb[0].mxu0
    %v5519 = vadd.f32 %v5332, %v5518
    %v5520 = vpop.f32.mrb[0].mxu0
    %v5521 = vpop.f32.mrb[0].mxu0
    %v5522 = vadd.f32 %v5332, %v5521
    %v5523 = vpop.f32.mrb[0].mxu0
    %5524 = vmatprep.mubr.bf16.mxu0 0
    %5525 = vmatmul.mubr.bf16.gmra.mrb[0].mxu0 %v5374
    %v5526 = vpop.f32.mrb[0].mxu0
    %v5527 = vadd.f32 %v5332, %v5526
    %v5528 = vpop.f32.mrb[0].mxu0
    %v5529 = vpop.f32.mrb[0].mxu0
    %v5530 = vadd.f32 %v5332, %v5529
    %v5531 = vpop.f32.mrb[0].mxu0
    %5532 = vmatprep.mubr.bf16.mxu0 0
    %5533 = vmatmul.mubr.bf16.gmra.mrb[0].mxu0 %v5377
    %v5534 = vpop.f32.mrb[0].mxu0
    %v5535 = vadd.f32 %v5332, %v5534
    %v5536 = vpop.f32.mrb[0].mxu0
    %v5537 = vpop.f32.mrb[0].mxu0
    %v5538 = vadd.f32 %v5332, %v5537
    %v5539 = vpop.f32.mrb[0].mxu0
    %5540 = vmatprep.mubr.bf16.mxu0 0
    %5541 = vmatmul.mubr.bf16.gmra.mrb[0].mxu0 %v5380
    %v5542 = vpop.f32.mrb[0].mxu0
    %v5543 = vadd.f32 %v5332, %v5542
    %v5544 = vpop.f32.mrb[0].mxu0
    %v5545 = vpop.f32.mrb[0].mxu0
    %v5546 = vadd.f32 %v5332, %v5545
    %v5547 = vpop.f32.mrb[0].mxu0
    %5548 = vmatprep.mubr.bf16.mxu0 0
    %5549 = vmatmul.mubr.bf16.gmra.mrb[0].mxu0 %v5383
    %v5550 = vpop.f32.mrb[0].mxu0
    %v5551 = vadd.f32 %v5332, %v5550
    %v5552 = vpop.f32.mrb[0].mxu0
    %v5553 = vpop.f32.mrb[0].mxu0
    %v5554 = vadd.f32 %v5332, %v5553
    %v5555 = vpop.f32.mrb[0].mxu0
    %5556 = vmatprep.mubr.bf16.mxu0 0
    %5557 = vmatmul.mubr.bf16.gmra.mrb[0].mxu0 %v5386
    %v5558 = vpop.f32.mrb[0].mxu0
    %v5559 = vadd.f32 %v5332, %v5558
    %v5560 = vpop.f32.mrb[0].mxu0
    %v5561 = vpop.f32.mrb[0].mxu0
    %v5562 = vadd.f32 %v5332, %v5561
    %v5563 = vpop.f32.mrb[0].mxu0
    %5564 = vmatprep.mubr.bf16.mxu0 0
    %5565 = vmatmul.mubr.bf16.gmra.mrb[0].mxu0 %v5389
    %v5566 = vpop.f32.mrb[0].mxu0
    %v5567 = vadd.f32 %v5332, %v5566
    %v5568 = vpop.f32.mrb[0].mxu0
    %v5569 = vpop.f32.mrb[0].mxu0
    %v5570 = vadd.f32 %v5332, %v5569
    %v5571 = vpop.f32.mrb[0].mxu0
    %5572 = vmatprep.mubr.bf16.mxu0 0
    %5573 = vmatmul.mubr.bf16.gmra.mrb[0].mxu0 %v5392
    %v5574 = vpop.f32.mrb[0].mxu0
    %v5575 = vadd.f32 %v5332, %v5574
    %v5576 = vpop.f32.mrb[0].mxu0
    %v5577 = vpop.f32.mrb[0].mxu0
    %v5578 = vadd.f32 %v5332, %v5577
    %v5579 = vpop.f32.mrb[0].mxu0
    %5580 = vmatprep.mubr.bf16.mxu0 0
    %5581 = vmatmul.mubr.bf16.gmra.mrb[0].mxu0 %v5395
    %v5582 = vpop.f32.mrb[0].mxu0
    %v5583 = vadd.f32 %v5332, %v5582
    %v5584 = vpop.f32.mrb[0].mxu0
    %v5585 = vpop.f32.mrb[0].mxu0
    %v5586 = vadd.f32 %v5332, %v5585
    %v5587 = vpop.f32.mrb[0].mxu0
    %5588 = vmatprep.mubr.bf16.mxu0 0
    %5589 = vmatmul.mubr.bf16.gmra.mrb[0].mxu0 %v5398
    %v5590 = vpop.f32.mrb[0].mxu0
    %v5591 = vadd.f32 %v5332, %v5590
    %v5592 = vpop.f32.mrb[0].mxu0
    %v5593 = vpop.f32.mrb[0].mxu0
    %v5594 = vadd.f32 %v5332, %v5593
    %v5595 = vpop.f32.mrb[0].mxu0
    %5596 = vmatprep.mubr.bf16.mxu0 0
    %5597 = vmatmul.mubr.bf16.gmra.mrb[0].mxu0 %v5401
    %v5598 = vpop.f32.mrb[0].mxu0
    %v5599 = vadd.f32 %v5332, %v5598
    %v5600 = vpop.f32.mrb[0].mxu0
    %v5601 = vpop.f32.mrb[0].mxu0
    %v5602 = vadd.f32 %v5332, %v5601
    %v5603 = vpop.f32.mrb[0].mxu0
    %5604 = vmatprep.mubr.bf16.mxu0 0
    %5605 = vmatmul.mubr.bf16.gmra.mrb[0].mxu0 %v5404
    %v5606 = vpop.f32.mrb[0].mxu0
    %v5607 = vadd.f32 %v5332, %v5606
    %v5608 = vpop.f32.mrb[0].mxu0
    %v5609 = vpop.f32.mrb[0].mxu0
    %v5610 = vadd.f32 %v5332, %v5609
    %v5611 = vpop.f32.mrb[0].mxu0
    %5612 = vmatprep.mubr.bf16.mxu0 0
    %5613 = vmatmul.mubr.bf16.gmra.mrb[0].mxu0 %v5407
    %v5614 = vpop.f32.mrb[0].mxu0
    %v5615 = vadd.f32 %v5332, %v5614
    %v5616 = vpop.f32.mrb[0].mxu0
    %v5617 = vpop.f32.mrb[0].mxu0
    %v5618 = vadd.f32 %v5332, %v5617
    %v5619 = vpop.f32.mrb[0].mxu0
    %5620 = vmatprep.mubr.bf16.mxu0 0
    %5621 = vmatmul.mubr.bf16.gmra.mrb[0].mxu0 %v5410
    %v5622 = vpop.f32.mrb[0].mxu0
    %v5623 = vadd.f32 %v5332, %v5622
    %v5624 = vpop.f32.mrb[0].mxu0
    %v5625 = vpop.f32.mrb[0].mxu0
    %v5626 = vadd.f32 %v5332, %v5625
    %v5627 = vpop.f32.mrb[0].mxu0
    %5628 = vmatprep.mubr.bf16.mxu0 0
    %5629 = vmatmul.mubr.bf16.gmra.mrb[0].mxu0 %v5413
    %v5630 = vpop.f32.mrb[0].mxu0
    %v5631 = vadd.f32 %v5332, %v5630
    %v5632 = vpop.f32.mrb[0].mxu0
    %v5633 = vpop.f32.mrb[0].mxu0
    %v5634 = vadd.f32 %v5332, %v5633
    %v5635 = vpop.f32.mrb[0].mxu0
    %5636 = vmatprep.mubr.bf16.mxu0 0
    %5637 = vmatmul.mubr.bf16.gmra.mrb[0].mxu0 %v5416
    %v5638 = vpop.f32.mrb[0].mxu0
    %v5639 = vadd.f32 %v5332, %v5638
    %v5640 = vpop.f32.mrb[0].mxu0
    %v5641 = vpop.f32.mrb[0].mxu0
    %v5642 = vadd.f32 %v5332, %v5641
    %v5643 = vpop.f32.mrb[0].mxu0
    %5644 = vmatprep.mubr.bf16.mxu0 0
    %5645 = vmatmul.mubr.bf16.gmra.mrb[0].mxu0 %v5419
    %v5646 = vpop.f32.mrb[0].mxu0
    %v5647 = vadd.f32 %v5332, %v5646
    %v5648 = vpop.f32.mrb[0].mxu0
    %v5649 = vpop.f32.mrb[0].mxu0
    %v5650 = vadd.f32 %v5332, %v5649
    %v5651 = vpop.f32.mrb[0].mxu0
    %5652 = vmatprep.mubr.bf16.mxu0 0
    %5653 = vmatmul.mubr.bf16.gmra.mrb[0].mxu0 %v5422
    %v5654 = vpop.f32.mrb[0].mxu0
    %v5655 = vadd.f32 %v5332, %v5654
    %v5656 = vpop.f32.mrb[0].mxu0
    %v5657 = vpop.f32.mrb[0].mxu0
    %v5658 = vadd.f32 %v5332, %v5657
    %v5659 = vpop.f32.mrb[0].mxu0
    %5660 = vmatprep.mubr.bf16.mxu0 0
    %5661 = vmatmul.mubr.bf16.gmra.mrb[0].mxu0 %v5425
    %v5662 = vpop.f32.mrb[0].mxu0
    %v5663 = vadd.f32 %v5332, %v5662
    %v5664 = vpop.f32.mrb[0].mxu0
    %v5665 = vpop.f32.mrb[0].mxu0
    %v5666 = vadd.f32 %v5332, %v5665
    %v5667 = vpop.f32.mrb[0].mxu0
    %5668 = vmatprep.mubr.bf16.mxu0 0
    %5669 = vmatmul.mubr.bf16.gmra.mrb[0].mxu0 %v5428
    %v5670 = vpop.f32.mrb[0].mxu0
    %v5671 = vadd.f32 %v5332, %v5670
    %v5672 = vpop.f32.mrb[0].mxu0
    %v5673 = vpop.f32.mrb[0].mxu0
    %v5674 = vadd.f32 %v5332, %v5673
    %v5675 = vpop.f32.mrb[0].mxu0
    %5676 = vmatprep.mubr.bf16.mxu0 0
    %5677 = vmatmul.mubr.bf16.gmra.mrb[0].mxu0 %v5431
    %v5678 = vpop.f32.mrb[0].mxu0
    %v5679 = vadd.f32 %v5332, %v5678
    %v5680 = vpop.f32.mrb[0].mxu0
    %v5681 = vpop.f32.mrb[0].mxu0
    %v5682 = vadd.f32 %v5332, %v5681
    %v5683 = vpop.f32.mrb[0].mxu0
    %5684 = vmatprep.mubr.bf16.mxu0 0
    %5685 = vmatmul.mubr.bf16.gmra.mrb[0].mxu0 %v5434
    %v5686 = vpop.f32.mrb[0].mxu0
    %v5687 = vadd.f32 %v5332, %v5686
    %v5688 = vpop.f32.mrb[0].mxu0
    %v5689 = vpop.f32.mrb[0].mxu0
    %v5690 = vadd.f32 %v5332, %v5689
    %v5691 = vpop.f32.mrb[0].mxu0
    %5692 = vmatprep.mubr.bf16.mxu0 0
    %5693 = vmatmul.mubr.bf16.gmra.mrb[0].mxu0 %v5437
    %v5694 = vpop.f32.mrb[0].mxu0
    %v5695 = vadd.f32 %v5332, %v5694
    %v5696 = vpop.f32.mrb[0].mxu0
    %v5697 = vpop.f32.mrb[0].mxu0
    %v5698 = vadd.f32 %v5332, %v5697
    %v5699 = vpop.f32.mrb[0].mxu0
    %5700 = vmatprep.mubr.bf16.mxu0 0
    %5701 = vmatmul.mubr.bf16.gmra.mrb[0].mxu0 %v5440
    %v5702 = vpop.f32.mrb[0].mxu0
    %v5703 = vadd.f32 %v5332, %v5702
    %v5704 = vpop.f32.mrb[0].mxu0
    %v5705 = vpop.f32.mrb[0].mxu0
    %v5706 = vadd.f32 %v5332, %v5705
    %v5707 = vpop.f32.mrb[0].mxu0
    %5708 = vmatprep.mubr.bf16.mxu0 0
    %5709 = vmatmul.mubr.bf16.gmra.mrb[0].mxu0 %v5443
    %v5710 = vpop.f32.mrb[0].mxu0
    %v5711 = vadd.f32 %v5332, %v5710
    %v5712 = vpop.f32.mrb[0].mxu0
    %v5713 = vpop.f32.mrb[0].mxu0
    %v5714 = vadd.f32 %v5332, %v5713
    %v5715 = vpop.f32.mrb[0].mxu0
    %5716 = vmatprep.mubr.bf16.mxu0 0
    %5717 = vmatmul.mubr.bf16.gmra.mrb[0].mxu0 %v5446
    %v5718 = vpop.f32.mrb[0].mxu0
    %v5719 = vadd.f32 %v5332, %v5718
    %v5720 = vpop.f32.mrb[0].mxu0
    %v5721 = vpop.f32.mrb[0].mxu0
    %v5722 = vadd.f32 %v5332, %v5721
    %v5723 = vpop.f32.mrb[0].mxu0
    %5724 = vmatprep.mubr.bf16.mxu0 0
    %5725 = vmatmul.mubr.bf16.gmra.mrb[0].mxu0 %v5449
    %v5726 = vpop.f32.mrb[0].mxu0
    %v5727 = vadd.f32 %v5332, %v5726
    %v5728 = vpop.f32.mrb[0].mxu0
    %v5729 = vpop.f32.mrb[0].mxu0
    %v5730 = vadd.f32 %v5332, %v5729
    %v5731 = vpop.f32.mrb[0].mxu0
    %5732 = vmatprep.mubr.bf16.mxu0 0
    %5733 = vmatmul.mubr.bf16.gmra.mrb[0].mxu0 %v5452
    %v5734 = vpop.f32.mrb[0].mxu0
    %v5735 = vadd.f32 %v5332, %v5734
    %v5736 = vpop.f32.mrb[0].mxu0
    %v5737 = vpop.f32.mrb[0].mxu0
    %v5738 = vadd.f32 %v5332, %v5737
    %v5739 = vpop.f32.mrb[0].mxu0
    %5740 = vmatprep.mubr.bf16.mxu0 0
    %5741 = vmatmul.mubr.bf16.gmra.mrb[0].mxu0 %v5455
    %v5742 = vpop.f32.mrb[0].mxu0
    %v5743 = vadd.f32 %v5332, %v5742
    %v5744 = vpop.f32.mrb[0].mxu0
    %v5745 = vpop.f32.mrb[0].mxu0
    %v5746 = vadd.f32 %v5332, %v5745
    %v5747 = vpop.f32.mrb[0].mxu0
    %5748 = vdwg.mxu0
    %v5749 = vld [vmem:[%s180 + $0x1] sm:$0xff]
    %v5750 = vld [vmem:[%s180 + $0x9] sm:$0xff]
    %v5751 = vld [vmem:[%s180 + $0x19] sm:$0xff]
    %v5752 = vld [vmem:[%s180 + $0x21] sm:$0xff]
    %v5753 = vld [vmem:[%s180 + $0x31] sm:$0xff]
    %v5754 = vld [vmem:[%s180 + $0x39] sm:$0xff]
    %v5755 = vld [vmem:[%s180 + $0x49] sm:$0xff]
    %v5756 = vld [vmem:[%s180 + $0x51] sm:$0xff]
    %v5757 = vld [vmem:[%s180 + $0x61] sm:$0xff]
    %v5758 = vld [vmem:[%s180 + $0x69] sm:$0xff]
    %v5759 = vld [vmem:[%s180 + $0x79] sm:$0xff]
    %v5760 = vld [vmem:[%s180 + $0x81] sm:$0xff]
    %v5761 = vld [vmem:[%s180 + $0x91] sm:$0xff]
    %v5762 = vld [vmem:[%s180 + $0x99] sm:$0xff]
    %v5763 = vld [vmem:[%s180 + $0xa9] sm:$0xff]
    %v5764 = vld [vmem:[%s180 + $0xb1] sm:$0xff]
    %v5765 = vld [vmem:[%s180 + $0xc1] sm:$0xff]
    %v5766 = vld [vmem:[%s180 + $0xc9] sm:$0xff]
    %v5767 = vld [vmem:[%s180 + $0xd9] sm:$0xff]
    %v5768 = vld [vmem:[%s180 + $0xe1] sm:$0xff]
    %v5769 = vld [vmem:[%s180 + $0xf1] sm:$0xff]
    %v5770 = vld [vmem:[%s180 + $0xf9] sm:$0xff]
    %v5771 = vld [vmem:[%s180 + $0x109] sm:$0xff]
    %v5772 = vld [vmem:[%s180 + $0x111] sm:$0xff]
    %v5773 = vld [vmem:[%s180 + $0x121] sm:$0xff]
    %v5774 = vld [vmem:[%s180 + $0x129] sm:$0xff]
    %v5775 = vld [vmem:[%s180 + $0x139] sm:$0xff]
    %v5776 = vld [vmem:[%s180 + $0x141] sm:$0xff]
    %v5777 = vld [vmem:[%s180 + $0x151] sm:$0xff]
    %v5778 = vld [vmem:[%s180 + $0x159] sm:$0xff]
    %v5779 = vld [vmem:[%s180 + $0x169] sm:$0xff]
    %v5780 = vld [vmem:[%s180 + $0x171] sm:$0xff]
    %v5781 = vld [vmem:[%s180 + $0x1b1] sm:$0xff]
    %v5782 = vld [vmem:[%s180 + $0x1b9] sm:$0xff]
    %v5783 = vld [vmem:[%s180 + $0x1c9] sm:$0xff]
    %v5784 = vld [vmem:[%s180 + $0x1d1] sm:$0xff]
    %v5785 = vld [vmem:[%s180 + $0x1e1] sm:$0xff]
    %v5786 = vld [vmem:[%s180 + $0x1e9] sm:$0xff]
    %v5787 = vld [vmem:[%s180 + $0x1f9] sm:$0xff]
    %v5788 = vld [vmem:[%s180 + $0x201] sm:$0xff]
    %v5789 = vld [vmem:[%s180 + $0x211] sm:$0xff]
    %v5790 = vld [vmem:[%s180 + $0x219] sm:$0xff]
    %v5791 = vld [vmem:[%s180 + $0x229] sm:$0xff]
    %v5792 = vld [vmem:[%s180 + $0x231] sm:$0xff]
    %v5793 = vld [vmem:[%s180 + $0x241] sm:$0xff]
    %v5794 = vld [vmem:[%s180 + $0x249] sm:$0xff]
    %v5795 = vld [vmem:[%s180 + $0x259] sm:$0xff]
    %v5796 = vld [vmem:[%s180 + $0x261] sm:$0xff]
    %v5797 = vld [vmem:[%s180 + $0x271] sm:$0xff]
    %v5798 = vld [vmem:[%s180 + $0x279] sm:$0xff]
    %v5799 = vld [vmem:[%s180 + $0x289] sm:$0xff]
    %v5800 = vld [vmem:[%s180 + $0x291] sm:$0xff]
    %v5801 = vld [vmem:[%s180 + $0x2a1] sm:$0xff]
    %v5802 = vld [vmem:[%s180 + $0x2a9] sm:$0xff]
    %v5803 = vld [vmem:[%s180 + $0x2b9] sm:$0xff]
    %v5804 = vld [vmem:[%s180 + $0x2c1] sm:$0xff]
    %v5805 = vld [vmem:[%s180 + $0x2d1] sm:$0xff]
    %v5806 = vld [vmem:[%s180 + $0x2d9] sm:$0xff]
    %v5807 = vld [vmem:[%s180 + $0x2e9] sm:$0xff]
    %v5808 = vld [vmem:[%s180 + $0x2f1] sm:$0xff]
    %v5809 = vld [vmem:[%s180 + $0x301] sm:$0xff]
    %v5810 = vld [vmem:[%s180 + $0x309] sm:$0xff]
    %v5811 = vld [vmem:[%s180 + $0x319] sm:$0xff]
    %v5812 = vld [vmem:[%s180 + $0x321] sm:$0xff]
    %v5813 = vpack.c.bf16 %v5750, %v5749
    %v5814 = vpack.c.bf16 %v5752, %v5751
    %v5815 = vpack.c.bf16 %v5754, %v5753
    %v5816 = vpack.c.bf16 %v5756, %v5755
    %v5817 = vpack.c.bf16 %v5758, %v5757
    %v5818 = vpack.c.bf16 %v5760, %v5759
    %v5819 = vpack.c.bf16 %v5762, %v5761
    %v5820 = vpack.c.bf16 %v5764, %v5763
    %v5821 = vpack.c.bf16 %v5766, %v5765
    %v5822 = vpack.c.bf16 %v5768, %v5767
    %v5823 = vpack.c.bf16 %v5770, %v5769
    %v5824 = vpack.c.bf16 %v5772, %v5771
    %v5825 = vpack.c.bf16 %v5774, %v5773
    %v5826 = vpack.c.bf16 %v5776, %v5775
    %v5827 = vpack.c.bf16 %v5778, %v5777
    %v5828 = vpack.c.bf16 %v5780, %v5779
    %v5829 = vpack.c.bf16 %v5782, %v5781
    %v5830 = vpack.c.bf16 %v5784, %v5783
    %v5831 = vpack.c.bf16 %v5786, %v5785
    %v5832 = vpack.c.bf16 %v5788, %v5787
    %v5833 = vpack.c.bf16 %v5790, %v5789
    %v5834 = vpack.c.bf16 %v5792, %v5791
    %v5835 = vpack.c.bf16 %v5794, %v5793
    %v5836 = vpack.c.bf16 %v5796, %v5795
    %v5837 = vpack.c.bf16 %v5798, %v5797
    %v5838 = vpack.c.bf16 %v5800, %v5799
    %v5839 = vpack.c.bf16 %v5802, %v5801
    %v5840 = vpack.c.bf16 %v5804, %v5803
    %v5841 = vpack.c.bf16 %v5806, %v5805
    %v5842 = vpack.c.bf16 %v5808, %v5807
    %v5843 = vpack.c.bf16 %v5810, %v5809
    %v5844 = vpack.c.bf16 %v5812, %v5811
    %v5845 = vld [vmem:[%s5] sm:$0xf]
    %v5846 = vld [vmem:[%s6] sm:$0x1]
    %v5848 = vlaneseq
    %v5849 = vshrl.u32 %v5848, 7
    %v5850 = vsub.s32 0, %v5849
    %v5851 = vrot.slane %v5846, %v5850
    %v5854 = vsel %vm28, %v5813, 0
    %v5857 = vsel %vm28, %v5814, 0
    %v5860 = vsel %vm28, %v5815, 0
    %v5863 = vsel %vm28, %v5816, 0
    %v5866 = vsel %vm28, %v5817, 0
    %v5869 = vsel %vm28, %v5818, 0
    %v5872 = vsel %vm28, %v5819, 0
    %v5875 = vsel %vm28, %v5820, 0
    %v5878 = vsel %vm28, %v5821, 0
    %v5881 = vsel %vm28, %v5822, 0
    %v5884 = vsel %vm28, %v5823, 0
    %v5887 = vsel %vm28, %v5824, 0
    %v5890 = vsel %vm28, %v5825, 0
    %v5893 = vsel %vm28, %v5826, 0
    %v5896 = vsel %vm28, %v5827, 0
    %v5899 = vsel %vm28, %v5828, 0
    %v5902 = vsel %vm28, %v5829, 0
    %v5905 = vsel %vm28, %v5830, 0
    %v5908 = vsel %vm28, %v5831, 0
    %v5911 = vsel %vm28, %v5832, 0
    %v5914 = vsel %vm28, %v5833, 0
    %v5917 = vsel %vm28, %v5834, 0
    %v5920 = vsel %vm28, %v5835, 0
    %v5923 = vsel %vm28, %v5836, 0
    %v5926 = vsel %vm28, %v5837, 0
    %v5929 = vsel %vm28, %v5838, 0
    %v5932 = vsel %vm28, %v5839, 0
    %v5935 = vsel %vm28, %v5840, 0
    %v5938 = vsel %vm28, %v5841, 0
    %v5941 = vsel %vm28, %v5842, 0
    %v5944 = vsel %vm28, %v5843, 0
    %v5947 = vsel %vm28, %v5844, 0
    %v5950 = vsel %vm2602, %v5845, 0
    %5952 = vmatprep.subr.bf16.mxu0 0
    %5953 = vmatpush1.bf16.msra.mxu0 %v5950
    %5954 = vmatprep.subr.bf16.mxu0 0
    %5955 = vmatpush1.bf16.msra.mxu0 0
    %5956 = vmatprep.subr.bf16.mxu0 0
    %5957 = vmatpush1.bf16.msra.mxu0 0
    %5958 = vmatprep.subr.bf16.mxu0 0
    %5959 = vmatpush1.bf16.msra.mxu0 0
    %5960 = vmatprep.subr.bf16.mxu0 0
    %5961 = vmatpush1.bf16.msra.mxu0 0
    %5962 = vmatprep.subr.bf16.mxu0 0
    %5963 = vmatpush1.bf16.msra.mxu0 0
    %5964 = vmatprep.subr.bf16.mxu0 0
    %5965 = vmatpush1.bf16.msra.mxu0 0
    %5966 = vmatprep.subr.bf16.mxu0 0
    %5967 = vmatpush1.bf16.msra.mxu0 0
    %5968 = vmatprep.subr.bf16.mxu0 0
    %5969 = vmatpush1.bf16.msra.mxu0 0
    %5970 = vmatprep.subr.bf16.mxu0 0
    %5971 = vmatpush1.bf16.msra.mxu0 0
    %5972 = vmatprep.subr.bf16.mxu0 0
    %5973 = vmatpush1.bf16.msra.mxu0 0
    %5974 = vmatprep.subr.bf16.mxu0 0
    %5975 = vmatpush1.bf16.msra.mxu0 0
    %5976 = vmatprep.subr.bf16.mxu0 0
    %5977 = vmatpush1.bf16.msra.mxu0 0
    %5978 = vmatprep.subr.bf16.mxu0 0
    %5979 = vmatpush1.bf16.msra.mxu0 0
    %5980 = vmatprep.subr.bf16.mxu0 0
    %5981 = vmatpush1.bf16.msra.mxu0 0
    %5982 = vmatprep.subr.bf16.mxu0 0
    %5983 = vmatpush1.bf16.msra.mxu0 0
    %5984 = vmatprep.mubr.bf16.mxu0 0
    %5985 = vmatmul.mubr.bf16.gmra.mrb[0].mxu0 %v5854
    %v5986 = vpop.f32.mrb[0].mxu0
    %v5987 = vadd.f32 %v5851, %v5986
    %v5988 = vpop.f32.mrb[0].mxu0
    %v5989 = vpop.f32.mrb[0].mxu0
    %v5990 = vadd.f32 %v5851, %v5989
    %v5991 = vpop.f32.mrb[0].mxu0
    %5992 = vmatprep.mubr.bf16.mxu0 0
    %5993 = vmatmul.mubr.bf16.gmra.mrb[0].mxu0 %v5857
    %v5994 = vpop.f32.mrb[0].mxu0
    %v5995 = vadd.f32 %v5851, %v5994
    %v5996 = vpop.f32.mrb[0].mxu0
    %v5997 = vpop.f32.mrb[0].mxu0
    %v5998 = vadd.f32 %v5851, %v5997
    %v5999 = vpop.f32.mrb[0].mxu0
    %6000 = vmatprep.mubr.bf16.mxu0 0
    %6001 = vmatmul.mubr.bf16.gmra.mrb[0].mxu0 %v5860
    %v6002 = vpop.f32.mrb[0].mxu0
    %v6003 = vadd.f32 %v5851, %v6002
    %v6004 = vpop.f32.mrb[0].mxu0
    %v6005 = vpop.f32.mrb[0].mxu0
    %v6006 = vadd.f32 %v5851, %v6005
    %v6007 = vpop.f32.mrb[0].mxu0
    %6008 = vmatprep.mubr.bf16.mxu0 0
    %6009 = vmatmul.mubr.bf16.gmra.mrb[0].mxu0 %v5863
    %v6010 = vpop.f32.mrb[0].mxu0
    %v6011 = vadd.f32 %v5851, %v6010
    %v6012 = vpop.f32.mrb[0].mxu0
    %v6013 = vpop.f32.mrb[0].mxu0
    %v6014 = vadd.f32 %v5851, %v6013
    %v6015 = vpop.f32.mrb[0].mxu0
    %6016 = vmatprep.mubr.bf16.mxu0 0
    %6017 = vmatmul.mubr.bf16.gmra.mrb[0].mxu0 %v5866
    %v6018 = vpop.f32.mrb[0].mxu0
    %v6019 = vadd.f32 %v5851, %v6018
    %v6020 = vpop.f32.mrb[0].mxu0
    %v6021 = vpop.f32.mrb[0].mxu0
    %v6022 = vadd.f32 %v5851, %v6021
    %v6023 = vpop.f32.mrb[0].mxu0
    %6024 = vmatprep.mubr.bf16.mxu0 0
    %6025 = vmatmul.mubr.bf16.gmra.mrb[0].mxu0 %v5869
    %v6026 = vpop.f32.mrb[0].mxu0
    %v6027 = vadd.f32 %v5851, %v6026
    %v6028 = vpop.f32.mrb[0].mxu0
    %v6029 = vpop.f32.mrb[0].mxu0
    %v6030 = vadd.f32 %v5851, %v6029
    %v6031 = vpop.f32.mrb[0].mxu0
    %6032 = vmatprep.mubr.bf16.mxu0 0
    %6033 = vmatmul.mubr.bf16.gmra.mrb[0].mxu0 %v5872
    %v6034 = vpop.f32.mrb[0].mxu0
    %v6035 = vadd.f32 %v5851, %v6034
    %v6036 = vpop.f32.mrb[0].mxu0
    %v6037 = vpop.f32.mrb[0].mxu0
    %v6038 = vadd.f32 %v5851, %v6037
    %v6039 = vpop.f32.mrb[0].mxu0
    %6040 = vmatprep.mubr.bf16.mxu0 0
    %6041 = vmatmul.mubr.bf16.gmra.mrb[0].mxu0 %v5875
    %v6042 = vpop.f32.mrb[0].mxu0
    %v6043 = vadd.f32 %v5851, %v6042
    %v6044 = vpop.f32.mrb[0].mxu0
    %v6045 = vpop.f32.mrb[0].mxu0
    %v6046 = vadd.f32 %v5851, %v6045
    %v6047 = vpop.f32.mrb[0].mxu0
    %6048 = vmatprep.mubr.bf16.mxu0 0
    %6049 = vmatmul.mubr.bf16.gmra.mrb[0].mxu0 %v5878
    %v6050 = vpop.f32.mrb[0].mxu0
    %v6051 = vadd.f32 %v5851, %v6050
    %v6052 = vpop.f32.mrb[0].mxu0
    %v6053 = vpop.f32.mrb[0].mxu0
    %v6054 = vadd.f32 %v5851, %v6053
    %v6055 = vpop.f32.mrb[0].mxu0
    %6056 = vmatprep.mubr.bf16.mxu0 0
    %6057 = vmatmul.mubr.bf16.gmra.mrb[0].mxu0 %v5881
    %v6058 = vpop.f32.mrb[0].mxu0
    %v6059 = vadd.f32 %v5851, %v6058
    %v6060 = vpop.f32.mrb[0].mxu0
    %v6061 = vpop.f32.mrb[0].mxu0
    %v6062 = vadd.f32 %v5851, %v6061
    %v6063 = vpop.f32.mrb[0].mxu0
    %6064 = vmatprep.mubr.bf16.mxu0 0
    %6065 = vmatmul.mubr.bf16.gmra.mrb[0].mxu0 %v5884
    %v6066 = vpop.f32.mrb[0].mxu0
    %v6067 = vadd.f32 %v5851, %v6066
    %v6068 = vpop.f32.mrb[0].mxu0
    %v6069 = vpop.f32.mrb[0].mxu0
    %v6070 = vadd.f32 %v5851, %v6069
    %v6071 = vpop.f32.mrb[0].mxu0
    %6072 = vmatprep.mubr.bf16.mxu0 0
    %6073 = vmatmul.mubr.bf16.gmra.mrb[0].mxu0 %v5887
    %v6074 = vpop.f32.mrb[0].mxu0
    %v6075 = vadd.f32 %v5851, %v6074
    %v6076 = vpop.f32.mrb[0].mxu0
    %v6077 = vpop.f32.mrb[0].mxu0
    %v6078 = vadd.f32 %v5851, %v6077
    %v6079 = vpop.f32.mrb[0].mxu0
    %6080 = vmatprep.mubr.bf16.mxu0 0
    %6081 = vmatmul.mubr.bf16.gmra.mrb[0].mxu0 %v5890
    %v6082 = vpop.f32.mrb[0].mxu0
    %v6083 = vadd.f32 %v5851, %v6082
    %v6084 = vpop.f32.mrb[0].mxu0
    %v6085 = vpop.f32.mrb[0].mxu0
    %v6086 = vadd.f32 %v5851, %v6085
    %v6087 = vpop.f32.mrb[0].mxu0
    %6088 = vmatprep.mubr.bf16.mxu0 0
    %6089 = vmatmul.mubr.bf16.gmra.mrb[0].mxu0 %v5893
    %v6090 = vpop.f32.mrb[0].mxu0
    %v6091 = vadd.f32 %v5851, %v6090
    %v6092 = vpop.f32.mrb[0].mxu0
    %v6093 = vpop.f32.mrb[0].mxu0
    %v6094 = vadd.f32 %v5851, %v6093
    %v6095 = vpop.f32.mrb[0].mxu0
    %6096 = vmatprep.mubr.bf16.mxu0 0
    %6097 = vmatmul.mubr.bf16.gmra.mrb[0].mxu0 %v5896
    %v6098 = vpop.f32.mrb[0].mxu0
    %v6099 = vadd.f32 %v5851, %v6098
    %v6100 = vpop.f32.mrb[0].mxu0
    %v6101 = vpop.f32.mrb[0].mxu0
    %v6102 = vadd.f32 %v5851, %v6101
    %v6103 = vpop.f32.mrb[0].mxu0
    %6104 = vmatprep.mubr.bf16.mxu0 0
    %6105 = vmatmul.mubr.bf16.gmra.mrb[0].mxu0 %v5899
    %v6106 = vpop.f32.mrb[0].mxu0
    %v6107 = vadd.f32 %v5851, %v6106
    %v6108 = vpop.f32.mrb[0].mxu0
    %v6109 = vpop.f32.mrb[0].mxu0
    %v6110 = vadd.f32 %v5851, %v6109
    %v6111 = vpop.f32.mrb[0].mxu0
    %6112 = vmatprep.mubr.bf16.mxu0 0
    %6113 = vmatmul.mubr.bf16.gmra.mrb[0].mxu0 %v5902
    %v6114 = vpop.f32.mrb[0].mxu0
    %v6115 = vadd.f32 %v5851, %v6114
    %v6116 = vpop.f32.mrb[0].mxu0
    %v6117 = vpop.f32.mrb[0].mxu0
    %v6118 = vadd.f32 %v5851, %v6117
    %v6119 = vpop.f32.mrb[0].mxu0
    %6120 = vmatprep.mubr.bf16.mxu0 0
    %6121 = vmatmul.mubr.bf16.gmra.mrb[0].mxu0 %v5905
    %v6122 = vpop.f32.mrb[0].mxu0
    %v6123 = vadd.f32 %v5851, %v6122
    %v6124 = vpop.f32.mrb[0].mxu0
    %v6125 = vpop.f32.mrb[0].mxu0
    %v6126 = vadd.f32 %v5851, %v6125
    %v6127 = vpop.f32.mrb[0].mxu0
    %6128 = vmatprep.mubr.bf16.mxu0 0
    %6129 = vmatmul.mubr.bf16.gmra.mrb[0].mxu0 %v5908
    %v6130 = vpop.f32.mrb[0].mxu0
    %v6131 = vadd.f32 %v5851, %v6130
    %v6132 = vpop.f32.mrb[0].mxu0
    %v6133 = vpop.f32.mrb[0].mxu0
    %v6134 = vadd.f32 %v5851, %v6133
    %v6135 = vpop.f32.mrb[0].mxu0
    %6136 = vmatprep.mubr.bf16.mxu0 0
    %6137 = vmatmul.mubr.bf16.gmra.mrb[0].mxu0 %v5911
    %v6138 = vpop.f32.mrb[0].mxu0
    %v6139 = vadd.f32 %v5851, %v6138
    %v6140 = vpop.f32.mrb[0].mxu0
    %v6141 = vpop.f32.mrb[0].mxu0
    %v6142 = vadd.f32 %v5851, %v6141
    %v6143 = vpop.f32.mrb[0].mxu0
    %6144 = vmatprep.mubr.bf16.mxu0 0
    %6145 = vmatmul.mubr.bf16.gmra.mrb[0].mxu0 %v5914
    %v6146 = vpop.f32.mrb[0].mxu0
    %v6147 = vadd.f32 %v5851, %v6146
    %v6148 = vpop.f32.mrb[0].mxu0
    %v6149 = vpop.f32.mrb[0].mxu0
    %v6150 = vadd.f32 %v5851, %v6149
    %v6151 = vpop.f32.mrb[0].mxu0
    %6152 = vmatprep.mubr.bf16.mxu0 0
    %6153 = vmatmul.mubr.bf16.gmra.mrb[0].mxu0 %v5917
    %v6154 = vpop.f32.mrb[0].mxu0
    %v6155 = vadd.f32 %v5851, %v6154
    %v6156 = vpop.f32.mrb[0].mxu0
    %v6157 = vpop.f32.mrb[0].mxu0
    %v6158 = vadd.f32 %v5851, %v6157
    %v6159 = vpop.f32.mrb[0].mxu0
    %6160 = vmatprep.mubr.bf16.mxu0 0
    %6161 = vmatmul.mubr.bf16.gmra.mrb[0].mxu0 %v5920
    %v6162 = vpop.f32.mrb[0].mxu0
    %v6163 = vadd.f32 %v5851, %v6162
    %v6164 = vpop.f32.mrb[0].mxu0
    %v6165 = vpop.f32.mrb[0].mxu0
    %v6166 = vadd.f32 %v5851, %v6165
    %v6167 = vpop.f32.mrb[0].mxu0
    %6168 = vmatprep.mubr.bf16.mxu0 0
    %6169 = vmatmul.mubr.bf16.gmra.mrb[0].mxu0 %v5923
    %v6170 = vpop.f32.mrb[0].mxu0
    %v6171 = vadd.f32 %v5851, %v6170
    %v6172 = vpop.f32.mrb[0].mxu0
    %v6173 = vpop.f32.mrb[0].mxu0
    %v6174 = vadd.f32 %v5851, %v6173
    %v6175 = vpop.f32.mrb[0].mxu0
    %6176 = vmatprep.mubr.bf16.mxu0 0
    %6177 = vmatmul.mubr.bf16.gmra.mrb[0].mxu0 %v5926
    %v6178 = vpop.f32.mrb[0].mxu0
    %v6179 = vadd.f32 %v5851, %v6178
    %v6180 = vpop.f32.mrb[0].mxu0
    %v6181 = vpop.f32.mrb[0].mxu0
    %v6182 = vadd.f32 %v5851, %v6181
    %v6183 = vpop.f32.mrb[0].mxu0
    %6184 = vmatprep.mubr.bf16.mxu0 0
    %6185 = vmatmul.mubr.bf16.gmra.mrb[0].mxu0 %v5929
    %v6186 = vpop.f32.mrb[0].mxu0
    %v6187 = vadd.f32 %v5851, %v6186
    %v6188 = vpop.f32.mrb[0].mxu0
    %v6189 = vpop.f32.mrb[0].mxu0
    %v6190 = vadd.f32 %v5851, %v6189
    %v6191 = vpop.f32.mrb[0].mxu0
    %6192 = vmatprep.mubr.bf16.mxu0 0
    %6193 = vmatmul.mubr.bf16.gmra.mrb[0].mxu0 %v5932
    %v6194 = vpop.f32.mrb[0].mxu0
    %v6195 = vadd.f32 %v5851, %v6194
    %v6196 = vpop.f32.mrb[0].mxu0
    %v6197 = vpop.f32.mrb[0].mxu0
    %v6198 = vadd.f32 %v5851, %v6197
    %v6199 = vpop.f32.mrb[0].mxu0
    %6200 = vmatprep.mubr.bf16.mxu0 0
    %6201 = vmatmul.mubr.bf16.gmra.mrb[0].mxu0 %v5935
    %v6202 = vpop.f32.mrb[0].mxu0
    %v6203 = vadd.f32 %v5851, %v6202
    %v6204 = vpop.f32.mrb[0].mxu0
    %v6205 = vpop.f32.mrb[0].mxu0
    %v6206 = vadd.f32 %v5851, %v6205
    %v6207 = vpop.f32.mrb[0].mxu0
    %6208 = vmatprep.mubr.bf16.mxu0 0
    %6209 = vmatmul.mubr.bf16.gmra.mrb[0].mxu0 %v5938
    %v6210 = vpop.f32.mrb[0].mxu0
    %v6211 = vadd.f32 %v5851, %v6210
    %v6212 = vpop.f32.mrb[0].mxu0
    %v6213 = vpop.f32.mrb[0].mxu0
    %v6214 = vadd.f32 %v5851, %v6213
    %v6215 = vpop.f32.mrb[0].mxu0
    %6216 = vmatprep.mubr.bf16.mxu0 0
    %6217 = vmatmul.mubr.bf16.gmra.mrb[0].mxu0 %v5941
    %v6218 = vpop.f32.mrb[0].mxu0
    %v6219 = vadd.f32 %v5851, %v6218
    %v6220 = vpop.f32.mrb[0].mxu0
    %v6221 = vpop.f32.mrb[0].mxu0
    %v6222 = vadd.f32 %v5851, %v6221
    %v6223 = vpop.f32.mrb[0].mxu0
    %6224 = vmatprep.mubr.bf16.mxu0 0
    %6225 = vmatmul.mubr.bf16.gmra.mrb[0].mxu0 %v5944
    %v6226 = vpop.f32.mrb[0].mxu0
    %v6227 = vadd.f32 %v5851, %v6226
    %v6228 = vpop.f32.mrb[0].mxu0
    %v6229 = vpop.f32.mrb[0].mxu0
    %v6230 = vadd.f32 %v5851, %v6229
    %v6231 = vpop.f32.mrb[0].mxu0
    %6232 = vmatprep.mubr.bf16.mxu0 0
    %6233 = vmatmul.mubr.bf16.gmra.mrb[0].mxu0 %v5947
    %v6234 = vpop.f32.mrb[0].mxu0
    %v6235 = vadd.f32 %v5851, %v6234
    %v6236 = vpop.f32.mrb[0].mxu0
    %v6237 = vpop.f32.mrb[0].mxu0
    %v6238 = vadd.f32 %v5851, %v6237
    %v6239 = vpop.f32.mrb[0].mxu0
    %6240 = vdwg.mxu0
    %v6241 = vadd.f32 %v5495, %v5987
    %v6242 = vadd.f32 %v5498, %v5990
    %v6243 = vadd.f32 %v5503, %v5995
    %v6244 = vadd.f32 %v5506, %v5998
    %v6245 = vadd.f32 %v5511, %v6003
    %v6246 = vadd.f32 %v5514, %v6006
    %v6247 = vadd.f32 %v5519, %v6011
    %v6248 = vadd.f32 %v5522, %v6014
    %v6249 = vadd.f32 %v5527, %v6019
    %v6250 = vadd.f32 %v5530, %v6022
    %v6251 = vadd.f32 %v5535, %v6027
    %v6252 = vadd.f32 %v5538, %v6030
    %v6253 = vadd.f32 %v5543, %v6035
    %v6254 = vadd.f32 %v5546, %v6038
    %v6255 = vadd.f32 %v5551, %v6043
    %v6256 = vadd.f32 %v5554, %v6046
    %v6257 = vadd.f32 %v5559, %v6051
    %v6258 = vadd.f32 %v5562, %v6054
    %v6259 = vadd.f32 %v5567, %v6059
    %v6260 = vadd.f32 %v5570, %v6062
    %v6261 = vadd.f32 %v5575, %v6067
    %v6262 = vadd.f32 %v5578, %v6070
    %v6263 = vadd.f32 %v5583, %v6075
    %v6264 = vadd.f32 %v5586, %v6078
    %v6265 = vadd.f32 %v5591, %v6083
    %v6266 = vadd.f32 %v5594, %v6086
    %v6267 = vadd.f32 %v5599, %v6091
    %v6268 = vadd.f32 %v5602, %v6094
    %v6269 = vadd.f32 %v5607, %v6099
    %v6270 = vadd.f32 %v5610, %v6102
    %v6271 = vadd.f32 %v5615, %v6107
    %v6272 = vadd.f32 %v5618, %v6110
    %v6273 = vadd.f32 %v5623, %v6115
    %v6274 = vadd.f32 %v5626, %v6118
    %v6275 = vadd.f32 %v5631, %v6123
    %v6276 = vadd.f32 %v5634, %v6126
    %v6277 = vadd.f32 %v5639, %v6131
    %v6278 = vadd.f32 %v5642, %v6134
    %v6279 = vadd.f32 %v5647, %v6139
    %v6280 = vadd.f32 %v5650, %v6142
    %v6281 = vadd.f32 %v5655, %v6147
    %v6282 = vadd.f32 %v5658, %v6150
    %v6283 = vadd.f32 %v5663, %v6155
    %v6284 = vadd.f32 %v5666, %v6158
    %v6285 = vadd.f32 %v5671, %v6163
    %v6286 = vadd.f32 %v5674, %v6166
    %v6287 = vadd.f32 %v5679, %v6171
    %v6288 = vadd.f32 %v5682, %v6174
    %v6289 = vadd.f32 %v5687, %v6179
    %v6290 = vadd.f32 %v5690, %v6182
    %v6291 = vadd.f32 %v5695, %v6187
    %v6292 = vadd.f32 %v5698, %v6190
    %v6293 = vadd.f32 %v5703, %v6195
    %v6294 = vadd.f32 %v5706, %v6198
    %v6295 = vadd.f32 %v5711, %v6203
    %v6296 = vadd.f32 %v5714, %v6206
    %v6297 = vadd.f32 %v5719, %v6211
    %v6298 = vadd.f32 %v5722, %v6214
    %v6299 = vadd.f32 %v5727, %v6219
    %v6300 = vadd.f32 %v5730, %v6222
    %v6301 = vadd.f32 %v5735, %v6227
    %v6302 = vadd.f32 %v5738, %v6230
    %v6303 = vadd.f32 %v5743, %v6235
    %v6304 = vadd.f32 %v5746, %v6238
    %v6305 = vmax.f32 %v6241, 0.0
    %v6306 = vmax.f32 %v6242, 0.0
    %v6307 = vmax.f32 %v6243, 0.0
    %v6308 = vmax.f32 %v6244, 0.0
    %v6309 = vmax.f32 %v6245, 0.0
    %v6310 = vmax.f32 %v6246, 0.0
    %v6311 = vmax.f32 %v6247, 0.0
    %v6312 = vmax.f32 %v6248, 0.0
    %v6313 = vmax.f32 %v6249, 0.0
    %v6314 = vmax.f32 %v6250, 0.0
    %v6315 = vmax.f32 %v6251, 0.0
    %v6316 = vmax.f32 %v6252, 0.0
    %v6317 = vmax.f32 %v6253, 0.0
    %v6318 = vmax.f32 %v6254, 0.0
    %v6319 = vmax.f32 %v6255, 0.0
    %v6320 = vmax.f32 %v6256, 0.0
    %v6321 = vmax.f32 %v6257, 0.0
    %v6322 = vmax.f32 %v6258, 0.0
    %v6323 = vmax.f32 %v6259, 0.0
    %v6324 = vmax.f32 %v6260, 0.0
    %v6325 = vmax.f32 %v6261, 0.0
    %v6326 = vmax.f32 %v6262, 0.0
    %v6327 = vmax.f32 %v6263, 0.0
    %v6328 = vmax.f32 %v6264, 0.0
    %v6329 = vmax.f32 %v6265, 0.0
    %v6330 = vmax.f32 %v6266, 0.0
    %v6331 = vmax.f32 %v6267, 0.0
    %v6332 = vmax.f32 %v6268, 0.0
    %v6333 = vmax.f32 %v6269, 0.0
    %v6334 = vmax.f32 %v6270, 0.0
    %v6335 = vmax.f32 %v6271, 0.0
    %v6336 = vmax.f32 %v6272, 0.0
    %v6337 = vmax.f32 %v6273, 0.0
    %v6338 = vmax.f32 %v6274, 0.0
    %v6339 = vmax.f32 %v6275, 0.0
    %v6340 = vmax.f32 %v6276, 0.0
    %v6341 = vmax.f32 %v6277, 0.0
    %v6342 = vmax.f32 %v6278, 0.0
    %v6343 = vmax.f32 %v6279, 0.0
    %v6344 = vmax.f32 %v6280, 0.0
    %v6345 = vmax.f32 %v6281, 0.0
    %v6346 = vmax.f32 %v6282, 0.0
    %v6347 = vmax.f32 %v6283, 0.0
    %v6348 = vmax.f32 %v6284, 0.0
    %v6349 = vmax.f32 %v6285, 0.0
    %v6350 = vmax.f32 %v6286, 0.0
    %v6351 = vmax.f32 %v6287, 0.0
    %v6352 = vmax.f32 %v6288, 0.0
    %v6353 = vmax.f32 %v6289, 0.0
    %v6354 = vmax.f32 %v6290, 0.0
    %v6355 = vmax.f32 %v6291, 0.0
    %v6356 = vmax.f32 %v6292, 0.0
    %v6357 = vmax.f32 %v6293, 0.0
    %v6358 = vmax.f32 %v6294, 0.0
    %v6359 = vmax.f32 %v6295, 0.0
    %v6360 = vmax.f32 %v6296, 0.0
    %v6361 = vmax.f32 %v6297, 0.0
    %v6362 = vmax.f32 %v6298, 0.0
    %v6363 = vmax.f32 %v6299, 0.0
    %v6364 = vmax.f32 %v6300, 0.0
    %v6365 = vmax.f32 %v6301, 0.0
    %v6366 = vmax.f32 %v6302, 0.0
    %v6367 = vmax.f32 %v6303, 0.0
    %v6368 = vmax.f32 %v6304, 0.0
    %6369 = vst [vmem:[#allocation6] sm:$0xff] %v6305
    %6370 = vst [vmem:[#allocation6 + $0x8] sm:$0xff] %v6306
    %6371 = vst [vmem:[#allocation6 + $0x10] sm:$0xff] %v6307
    %6372 = vst [vmem:[#allocation6 + $0x18] sm:$0xff] %v6308
    %6373 = vst [vmem:[#allocation6 + $0x20] sm:$0xff] %v6309
    %6374 = vst [vmem:[#allocation6 + $0x28] sm:$0xff] %v6310
    %6375 = vst [vmem:[#allocation6 + $0x30] sm:$0xff] %v6311
    %6376 = vst [vmem:[#allocation6 + $0x38] sm:$0xff] %v6312
    %6377 = vst [vmem:[#allocation6 + $0x40] sm:$0xff] %v6313
    %6378 = vst [vmem:[#allocation6 + $0x48] sm:$0xff] %v6314
    %6379 = vst [vmem:[#allocation6 + $0x50] sm:$0xff] %v6315
    %6380 = vst [vmem:[#allocation6 + $0x58] sm:$0xff] %v6316
    %6381 = vst [vmem:[#allocation6 + $0x60] sm:$0xff] %v6317
    %6382 = vst [vmem:[#allocation6 + $0x68] sm:$0xff] %v6318
    %6383 = vst [vmem:[#allocation6 + $0x70] sm:$0xff] %v6319
    %6384 = vst [vmem:[#allocation6 + $0x78] sm:$0xff] %v6320
    %6385 = vst [vmem:[#allocation6 + $0x80] sm:$0xff] %v6321
    %6386 = vst [vmem:[#allocation6 + $0x88] sm:$0xff] %v6322
    %6387 = vst [vmem:[#allocation6 + $0x90] sm:$0xff] %v6323
    %6388 = vst [vmem:[#allocation6 + $0x98] sm:$0xff] %v6324
    %6389 = vst [vmem:[#allocation6 + $0xa0] sm:$0xff] %v6325
    %6390 = vst [vmem:[#allocation6 + $0xa8] sm:$0xff] %v6326
    %6391 = vst [vmem:[#allocation6 + $0xb0] sm:$0xff] %v6327
    %6392 = vst [vmem:[#allocation6 + $0xb8] sm:$0xff] %v6328
    %6393 = vst [vmem:[#allocation6 + $0xc0] sm:$0xff] %v6329
    %6394 = vst [vmem:[#allocation6 + $0xc8] sm:$0xff] %v6330
    %6395 = vst [vmem:[#allocation6 + $0xd0] sm:$0xff] %v6331
    %6396 = vst [vmem:[#allocation6 + $0xd8] sm:$0xff] %v6332
    %6397 = vst [vmem:[#allocation6 + $0xe0] sm:$0xff] %v6333
    %6398 = vst [vmem:[#allocation6 + $0xe8] sm:$0xff] %v6334
    %6399 = vst [vmem:[#allocation6 + $0xf0] sm:$0xff] %v6335
    %6400 = vst [vmem:[#allocation6 + $0xf8] sm:$0xff] %v6336
    %6401 = vst [vmem:[#allocation6 + $0x100] sm:$0xff] %v6337
    %6402 = vst [vmem:[#allocation6 + $0x108] sm:$0xff] %v6338
    %6403 = vst [vmem:[#allocation6 + $0x110] sm:$0xff] %v6339
    %6404 = vst [vmem:[#allocation6 + $0x118] sm:$0xff] %v6340
    %6405 = vst [vmem:[#allocation6 + $0x120] sm:$0xff] %v6341
    %6406 = vst [vmem:[#allocation6 + $0x128] sm:$0xff] %v6342
    %6407 = vst [vmem:[#allocation6 + $0x130] sm:$0xff] %v6343
    %6408 = vst [vmem:[#allocation6 + $0x138] sm:$0xff] %v6344
    %6409 = vst [vmem:[#allocation6 + $0x140] sm:$0xff] %v6345
    %6410 = vst [vmem:[#allocation6 + $0x148] sm:$0xff] %v6346
    %6411 = vst [vmem:[#allocation6 + $0x150] sm:$0xff] %v6347
    %6412 = vst [vmem:[#allocation6 + $0x158] sm:$0xff] %v6348
    %6413 = vst [vmem:[#allocation6 + $0x160] sm:$0xff] %v6349
    %6414 = vst [vmem:[#allocation6 + $0x168] sm:$0xff] %v6350
    %6415 = vst [vmem:[#allocation6 + $0x170] sm:$0xff] %v6351
    %6416 = vst [vmem:[#allocation6 + $0x178] sm:$0xff] %v6352
    %6417 = vst [vmem:[#allocation6 + $0x180] sm:$0xff] %v6353
    %6418 = vst [vmem:[#allocation6 + $0x188] sm:$0xff] %v6354
    %6419 = vst [vmem:[#allocation6 + $0x190] sm:$0xff] %v6355
    %6420 = vst [vmem:[#allocation6 + $0x198] sm:$0xff] %v6356
    %6421 = vst [vmem:[#allocation6 + $0x1a0] sm:$0xff] %v6357
    %6422 = vst [vmem:[#allocation6 + $0x1a8] sm:$0xff] %v6358
    %6423 = vst [vmem:[#allocation6 + $0x1b0] sm:$0xff] %v6359
    %6424 = vst [vmem:[#allocation6 + $0x1b8] sm:$0xff] %v6360
    %6425 = vst [vmem:[#allocation6 + $0x1c0] sm:$0xff] %v6361
    %6426 = vst [vmem:[#allocation6 + $0x1c8] sm:$0xff] %v6362
    %6427 = vst [vmem:[#allocation6 + $0x1d0] sm:$0xff] %v6363
    %6428 = vst [vmem:[#allocation6 + $0x1d8] sm:$0xff] %v6364
    %6429 = vst [vmem:[#allocation6 + $0x1e0] sm:$0xff] %v6365
    %6430 = vst [vmem:[#allocation6 + $0x1e8] sm:$0xff] %v6366
    %6431 = vst [vmem:[#allocation6 + $0x1f0] sm:$0xff] %v6367
    %6432 = vst [vmem:[#allocation6 + $0x1f8] sm:$0xff] %v6368
    // Predicated region
    $region30: #{tpu_custom_call.1} parent=1 // pred_check
      _
    $region31: #{tpu_custom_call.1} parent=1 // pred_check_branch
      %6434 = sbr.rel (0) target = $region33
    $region32: #{tpu_custom_call.1} parent=1 // pred_region
      %s6436 = ssub.s32 8192, 8192
      %6437 = vsyncadd [#allocation7], %s6436
      %s6438 = sshll.u32 [#allocation6], 4
      %s6439 = int_to_ptr.vmem [resolvable:$true] %s6438
      %6444 = dma.vmem_to_hbm [thread:$0]  %s6439, 8192, %s7, [#allocation7], 128, 128, 8
    $region33: #{tpu_custom_call.1} parent=1 // pred_fallthru
      _
    // Predicated region
    $region34: #{tpu_custom_call.1} parent=1 // pred_check
      _
    $region35: #{tpu_custom_call.1} parent=1 // pred_check_branch
      %6446 = sbr.rel (0) target = $region37
    $region36: #{tpu_custom_call.1} parent=1 // pred_region
      %6447 = dma.done [#allocation7], 8192
    $region37: #{tpu_custom_call.1} parent=1 // pred_fallthru
      _
    %6448 = vsyncpa [#allocation7], 1

</llo_original>
